<compile_context>
chip_gen: v7x
topology: tpu7x:2x2x1
jax: 0.10.0
libtpu: 0.0.40
codegen_flags: <defaults>
</compile_context>

<pallas_src>
import functools

import jax
import jax.numpy as jnp
from jax.experimental import pallas as pl
from jax.experimental.pallas import tpu as pltpu

NEG_SLOPE = 0.1  # LeakyReLU negative slope used everywhere in the module


def _leaky(x):
    return jnp.where(x > 0, x, NEG_SLOPE * x)


# ----------------------------------------------------------------------------
# Fused Predictor kernel (one batch element per grid step)
# ----------------------------------------------------------------------------
def predictor_kernel(xpad_ref, w1_ref, w3_ref, we_ref, wd_ref, wp_ref, o_ref,
                     out1_s, y_s, hpad_s, pad2_s, *,
                     H, W, dim, hid, depth, unroll, rb):
    # Zero the haloed scratches for this image (borders provide the conv
    # zero-padding; interiors are rewritten below).  Done unconditionally so it
    # is correct even when the batch axis is split across TensorCores (v7x).
    hpad_s[...] = jnp.zeros_like(hpad_s)
    pad2_s[...] = jnp.zeros_like(pad2_s)

    # ------------------ conv1: 3x3 (Cin=1) + LeakyReLU -> out1 ------------------
    xp = xpad_ref[0]                                       # (H+2, W+2, 1)
    acc1 = jnp.zeros((H * W, dim), jnp.float32)
    for kh in range(3):
        for kw in range(3):
            patch = xp[kh:kh + H, kw:kw + W, :].reshape(H * W, 1)
            acc1 = acc1 + patch * w1_ref[kh * 3 + kw]      # (H*W,1)*(1,dim)
    out1 = _leaky(acc1).reshape(H, W, dim)
    out1_s[...] = out1
    y_s[...] = out1

    n_rb = H // rb

    def layer_step(l):
        we = we_ref[l]                                     # (dim, hid) bf16
        wp = wp_ref[l]                                     # (hid, dim) bf16
        wd = wd_ref[l]                                     # (25, 1, hid) f32

        # ---- pass 1: 1x1 expand + LeakyReLU, write interior of haloed scratch
        @pl.loop(0, n_rb)
        def _(r):
            r0 = pl.multiple_of(r * rb, rb)
            yblk = y_s[pl.ds(r0, rb), :, :].reshape(rb * W, dim)
            hblk = _leaky(jnp.dot(yblk.astype(jnp.bfloat16), we,
                                  preferred_element_type=jnp.float32))
            hpad_s[pl.ds(r0 + 2, rb), pl.ds(2, W), :] = hblk.reshape(rb, W, hid)

        # ---- pass 2: depthwise 5x5 + LeakyReLU + 1x1 project + residual
        #      + outer LeakyReLU (from the Sequential), row-tiled accumulator
        @pl.loop(0, n_rb)
        def _(r):
            r0 = pl.multiple_of(r * rb, rb)
            acc = jnp.zeros((rb, W, hid), jnp.float32)
            for kh in range(5):
                for kw in range(5):
                    win = hpad_s[pl.ds(r0 + kh, rb), pl.ds(kw, W), :]
                    acc = acc + win * wd[kh * 5 + kw]      # (rb,W,hid)*(1,hid)
            acc = _leaky(acc)
            proj = jnp.dot(acc.reshape(rb * W, hid).astype(jnp.bfloat16), wp,
                           preferred_element_type=jnp.float32)
            yblk = y_s[pl.ds(r0, rb), :, :].reshape(rb * W, dim)
            y_s[pl.ds(r0, rb), :, :] = _leaky(yblk + proj).reshape(rb, W, dim)

    # --------------- recurrence: unroll x (depth layers) + skip ---------------
    @pl.loop(0, unroll)
    def _(step):
        for l in range(depth):
            layer_step(l)
        y_s[...] = y_s[...] + out1_s[...]                  # out2 = conv2(out2)+out1

    # ------------------ conv3: 3x3 (Cout=1), no activation ------------------
    pad2_s[pl.ds(1, H), pl.ds(1, W), :] = y_s[...]
    acc3 = jnp.zeros((H * W, 1), jnp.float32)
    for kh in range(3):
        for kw in range(3):
            patch = pad2_s[kh:kh + H, kw:kw + W, :].reshape(H * W, dim)
            acc3 = acc3 + jnp.sum(patch * w3_ref[kh * 3 + kw],
                                  axis=-1, keepdims=True)
    o_ref[0] = acc3.reshape(H, W, 1)


# ----------------------------------------------------------------------------
# Wrapper: single pallas_call over the batch
# ----------------------------------------------------------------------------
def predictor_forward(x_nchw, params, *, unroll):
    # x_nchw: (N, 1, H, W) float32  ->  (N, 1, H, W)
    x = jnp.transpose(x_nchw, (0, 2, 3, 1)).astype(jnp.float32)   # NCHW -> NHWC
    N, H, W, _ = x.shape

    w1 = params["conv1_w"]                      # (9, 1, dim) f32
    w3 = params["conv3_w"]                      # (9, 1, dim) f32
    we_all = params["we"].astype(jnp.bfloat16)  # (depth, dim, hid)  MXU operand
    wd_all = params["wd"]                       # (depth, 25, 1, hid) f32 (VPU)
    wp_all = params["wp"].astype(jnp.bfloat16)  # (depth, hid, dim)  MXU operand

    depth = we_all.shape[0]
    dim = we_all.shape[1]
    hid = we_all.shape[2]

    rb = 8 if H % 8 == 0 else H                 # row tile for the depthwise stage

    # conv1 input pad: one-shot, tiny (N,H,W,1) tensor -> cheap wrapper-side pad.
    xpad = jnp.pad(x, ((0, 0), (1, 1), (1, 1), (0, 0)))

    # Scoped-VMEM limit: scratch + blocks, with headroom; capped below v7x's
    # 64 MiB physical VMEM so the same code runs on v5e/v6e/v7x.
    scratch_bytes = 4 * (2 * H * W * dim
                         + (H + 4) * (W + 4) * hid
                         + (H + 2) * (W + 2) * dim)
    vmem_limit = int(min(48 * 1024 * 1024,
                         max(32 * 1024 * 1024, 4 * scratch_bytes)))

    kern = functools.partial(predictor_kernel, H=H, W=W, dim=dim, hid=hid,
                             depth=depth, unroll=unroll, rb=rb)

    out = pl.pallas_call(
        kern,
        out_shape=jax.ShapeDtypeStruct((N, H, W, 1), jnp.float32),
        grid=(N,),
        in_specs=[
            pl.BlockSpec((1, H + 2, W + 2, 1), lambda b: (b, 0, 0, 0)),
            pl.BlockSpec((9, 1, dim), lambda b: (0, 0, 0)),
            pl.BlockSpec((9, 1, dim), lambda b: (0, 0, 0)),
            pl.BlockSpec((depth, dim, hid), lambda b: (0, 0, 0)),
            pl.BlockSpec((depth, 25, 1, hid), lambda b: (0, 0, 0, 0)),
            pl.BlockSpec((depth, hid, dim), lambda b: (0, 0, 0)),
        ],
        out_specs=pl.BlockSpec((1, H, W, 1), lambda b: (b, 0, 0, 0)),
        scratch_shapes=[
            pltpu.VMEM((H, W, dim), jnp.float32),           # out1 (skip source)
            pltpu.VMEM((H, W, dim), jnp.float32),           # recurrent state out2
            pltpu.VMEM((H + 4, W + 4, hid), jnp.float32),   # haloed hidden (dw 5x5)
            pltpu.VMEM((H + 2, W + 2, dim), jnp.float32),   # haloed state (conv3)
        ],
        compiler_params=pltpu.CompilerParams(
            dimension_semantics=("parallel",),
            vmem_limit_bytes=vmem_limit,
        ),
    )(xpad, w1, w3, we_all, wd_all, wp_all)

    return jnp.transpose(out, (0, 3, 1, 2))                 # NHWC -> NCHW


def init_params(key, dim, depth, expand_ratio=6, scale=0.05):
    hid = dim * expand_ratio
    k = jax.random.split(key, 5)
    return {
        "conv1_w": scale * jax.random.normal(k[0], (9, 1, dim), jnp.float32),
        "conv3_w": scale * jax.random.normal(k[1], (9, 1, dim), jnp.float32),
        "we": scale * jax.random.normal(k[2], (depth, dim, hid), jnp.float32),
        "wd": scale * jax.random.normal(k[3], (depth, 25, 1, hid), jnp.float32),
        "wp": scale * jax.random.normal(k[4], (depth, hid, dim), jnp.float32),
    }


if __name__ == "__main__":
    # Small, forward-consistent shapes (module defaults are dim=58, unroll=48):
    # batch=2, 1 input channel, 16x16 spatial, dim=8 (hid=48), depth=2, unroll=4.
    dim, depth, unroll = 8, 2, 4
    N, H, W = 2, 16, 16

    key = jax.random.PRNGKey(0)
    pkey, xkey = jax.random.split(key)
    params = init_params(pkey, dim, depth)
    x = jax.random.normal(xkey, (N, 1, H, W), jnp.float32)

    fwd = jax.jit(functools.partial(predictor_forward, unroll=unroll))
    out = fwd(x, params)
    jax.block_until_ready(out)

    assert out.shape == (N, 1, H, W), out.shape
    assert bool(jnp.all(jnp.isfinite(out)))
    # TODO(synk): optional channel padding of dim/hid to 128-lane multiples and
    # pltpu.roll-based tap shifts are further micro-opts not applied here.
    print("KERNEL_OK")
</pallas_src>

<mosaic_0001>
module attributes {stable_mosaic.version = 11 : i64} {
  func.func @predictor_kernel(%arg0: i32, %arg1: memref<1x18x18x1xf32, #tpu.memory_space<vmem>>, %arg2: memref<9x1x8xf32, #tpu.memory_space<vmem>>, %arg3: memref<9x1x8xf32, #tpu.memory_space<vmem>>, %arg4: memref<2x8x48xbf16, #tpu.memory_space<vmem>>, %arg5: memref<2x25x1x48xf32, #tpu.memory_space<vmem>>, %arg6: memref<2x48x8xbf16, #tpu.memory_space<vmem>>, %arg7: memref<1x16x16x1xf32, #tpu.memory_space<vmem>>, %arg8: memref<16x16x8xf32, #tpu.memory_space<vmem>>, %arg9: memref<16x16x8xf32, #tpu.memory_space<vmem>>, %arg10: memref<20x20x48xf32, #tpu.memory_space<vmem>>, %arg11: memref<18x18x8xf32, #tpu.memory_space<vmem>>) attributes {dimension_semantics = [#tpu.dimension_semantics<parallel>], iteration_bounds = array<i64: 2>, scalar_prefetch = 0 : i64, scratch_operands = 4 : i64, tpu.core_type = #tpu.core_type<tc>, window_params = [{transform_indices = @transform_0, window_bounds = array<i64: 1, 18, 18, 1>}, {pipeline_mode = #tpu.pipeline_mode<synchronous>, transform_indices = @transform_1, window_bounds = array<i64: 9, 1, 8>}, {pipeline_mode = #tpu.pipeline_mode<synchronous>, transform_indices = @transform_2, window_bounds = array<i64: 9, 1, 8>}, {pipeline_mode = #tpu.pipeline_mode<synchronous>, transform_indices = @transform_3, window_bounds = array<i64: 2, 8, 48>}, {pipeline_mode = #tpu.pipeline_mode<synchronous>, transform_indices = @transform_4, window_bounds = array<i64: 2, 25, 1, 48>}, {pipeline_mode = #tpu.pipeline_mode<synchronous>, transform_indices = @transform_5, window_bounds = array<i64: 2, 48, 8>}, {transform_indices = @transform_6, window_bounds = array<i64: 1, 16, 16, 1>}]} {
    %cst = arith.constant 0.000000e+00 : f32
    %0 = vector.broadcast %cst : f32 to vector<20x20x48xf32>
    %c0 = arith.constant 0 : index
    %c0_0 = arith.constant 0 : index
    %c0_1 = arith.constant 0 : index
    %1 = vector.load %arg10[%c0, %c0_0, %c0_1] : memref<20x20x48xf32, #tpu.memory_space<vmem>>, vector<20x20x48xf32>
    tpu.vector_store %arg10[%c0, %c0_0, %c0_1], %0 {strides = array<i32>} : memref<20x20x48xf32, #tpu.memory_space<vmem>>, vector<20x20x48xf32>,
    %cst_2 = arith.constant 0.000000e+00 : f32
    %2 = vector.broadcast %cst_2 : f32 to vector<18x18x8xf32>
    %c0_3 = arith.constant 0 : index
    %c0_4 = arith.constant 0 : index
    %c0_5 = arith.constant 0 : index
    %3 = vector.load %arg11[%c0_3, %c0_4, %c0_5] : memref<18x18x8xf32, #tpu.memory_space<vmem>>, vector<18x18x8xf32>
    tpu.vector_store %arg11[%c0_3, %c0_4, %c0_5], %2 {strides = array<i32>} : memref<18x18x8xf32, #tpu.memory_space<vmem>>, vector<18x18x8xf32>,
    %c0_6 = arith.constant 0 : index
    %c0_7 = arith.constant 0 : index
    %c0_8 = arith.constant 0 : index
    %c0_9 = arith.constant 0 : index
    %4 = vector.load %arg1[%c0_6, %c0_7, %c0_8, %c0_9] : memref<1x18x18x1xf32, #tpu.memory_space<vmem>>, vector<1x18x18x1xf32>
    %5 = vector.shape_cast %4 : vector<1x18x18x1xf32> to vector<18x18x1xf32>
    %cst_10 = arith.constant 0.000000e+00 : f32
    %6 = vector.broadcast %cst_10 : f32 to vector<256x8xf32>
    %7 = vector.extract_strided_slice %5 {offsets = [0, 0, 0], sizes = [16, 16, 1], strides = [1, 1, 1]} : vector<18x18x1xf32> to vector<16x16x1xf32>
    %8 = vector.shape_cast %7 : vector<16x16x1xf32> to vector<256x1xf32>
    %c0_11 = arith.constant 0 : index
    %c0_12 = arith.constant 0 : index
    %c0_13 = arith.constant 0 : index
    %9 = vector.load %arg2[%c0_11, %c0_12, %c0_13] : memref<9x1x8xf32, #tpu.memory_space<vmem>>, vector<1x1x8xf32>
    %10 = vector.shape_cast %9 : vector<1x1x8xf32> to vector<1x8xf32>
    %11 = vector.broadcast %8 : vector<256x1xf32> to vector<256x8xf32>
    %12 = vector.broadcast %10 : vector<1x8xf32> to vector<256x8xf32>
    %13 = arith.mulf %11, %12 : vector<256x8xf32>
    %14 = arith.addf %6, %13 : vector<256x8xf32>
    %15 = vector.extract_strided_slice %5 {offsets = [0, 1, 0], sizes = [16, 16, 1], strides = [1, 1, 1]} : vector<18x18x1xf32> to vector<16x16x1xf32>
    %16 = vector.shape_cast %15 : vector<16x16x1xf32> to vector<256x1xf32>
    %c1 = arith.constant 1 : index
    %c0_14 = arith.constant 0 : index
    %c0_15 = arith.constant 0 : index
    %17 = vector.load %arg2[%c1, %c0_14, %c0_15] : memref<9x1x8xf32, #tpu.memory_space<vmem>>, vector<1x1x8xf32>
    %18 = vector.shape_cast %17 : vector<1x1x8xf32> to vector<1x8xf32>
    %19 = vector.broadcast %16 : vector<256x1xf32> to vector<256x8xf32>
    %20 = vector.broadcast %18 : vector<1x8xf32> to vector<256x8xf32>
    %21 = arith.mulf %19, %20 : vector<256x8xf32>
    %22 = arith.addf %14, %21 : vector<256x8xf32>
    %23 = vector.extract_strided_slice %5 {offsets = [0, 2, 0], sizes = [16, 16, 1], strides = [1, 1, 1]} : vector<18x18x1xf32> to vector<16x16x1xf32>
    %24 = vector.shape_cast %23 : vector<16x16x1xf32> to vector<256x1xf32>
    %c2 = arith.constant 2 : index
    %c0_16 = arith.constant 0 : index
    %c0_17 = arith.constant 0 : index
    %25 = vector.load %arg2[%c2, %c0_16, %c0_17] : memref<9x1x8xf32, #tpu.memory_space<vmem>>, vector<1x1x8xf32>
    %26 = vector.shape_cast %25 : vector<1x1x8xf32> to vector<1x8xf32>
    %27 = vector.broadcast %24 : vector<256x1xf32> to vector<256x8xf32>
    %28 = vector.broadcast %26 : vector<1x8xf32> to vector<256x8xf32>
    %29 = arith.mulf %27, %28 : vector<256x8xf32>
    %30 = arith.addf %22, %29 : vector<256x8xf32>
    %31 = vector.extract_strided_slice %5 {offsets = [1, 0, 0], sizes = [16, 16, 1], strides = [1, 1, 1]} : vector<18x18x1xf32> to vector<16x16x1xf32>
    %32 = vector.shape_cast %31 : vector<16x16x1xf32> to vector<256x1xf32>
    %c3 = arith.constant 3 : index
    %c0_18 = arith.constant 0 : index
    %c0_19 = arith.constant 0 : index
    %33 = vector.load %arg2[%c3, %c0_18, %c0_19] : memref<9x1x8xf32, #tpu.memory_space<vmem>>, vector<1x1x8xf32>
    %34 = vector.shape_cast %33 : vector<1x1x8xf32> to vector<1x8xf32>
    %35 = vector.broadcast %32 : vector<256x1xf32> to vector<256x8xf32>
    %36 = vector.broadcast %34 : vector<1x8xf32> to vector<256x8xf32>
    %37 = arith.mulf %35, %36 : vector<256x8xf32>
    %38 = arith.addf %30, %37 : vector<256x8xf32>
    %39 = vector.extract_strided_slice %5 {offsets = [1, 1, 0], sizes = [16, 16, 1], strides = [1, 1, 1]} : vector<18x18x1xf32> to vector<16x16x1xf32>
    %40 = vector.shape_cast %39 : vector<16x16x1xf32> to vector<256x1xf32>
    %c4 = arith.constant 4 : index
    %c0_20 = arith.constant 0 : index
    %c0_21 = arith.constant 0 : index
    %41 = vector.load %arg2[%c4, %c0_20, %c0_21] : memref<9x1x8xf32, #tpu.memory_space<vmem>>, vector<1x1x8xf32>
    %42 = vector.shape_cast %41 : vector<1x1x8xf32> to vector<1x8xf32>
    %43 = vector.broadcast %40 : vector<256x1xf32> to vector<256x8xf32>
    %44 = vector.broadcast %42 : vector<1x8xf32> to vector<256x8xf32>
    %45 = arith.mulf %43, %44 : vector<256x8xf32>
    %46 = arith.addf %38, %45 : vector<256x8xf32>
    %47 = vector.extract_strided_slice %5 {offsets = [1, 2, 0], sizes = [16, 16, 1], strides = [1, 1, 1]} : vector<18x18x1xf32> to vector<16x16x1xf32>
    %48 = vector.shape_cast %47 : vector<16x16x1xf32> to vector<256x1xf32>
    %c5 = arith.constant 5 : index
    %c0_22 = arith.constant 0 : index
    %c0_23 = arith.constant 0 : index
    %49 = vector.load %arg2[%c5, %c0_22, %c0_23] : memref<9x1x8xf32, #tpu.memory_space<vmem>>, vector<1x1x8xf32>
    %50 = vector.shape_cast %49 : vector<1x1x8xf32> to vector<1x8xf32>
    %51 = vector.broadcast %48 : vector<256x1xf32> to vector<256x8xf32>
    %52 = vector.broadcast %50 : vector<1x8xf32> to vector<256x8xf32>
    %53 = arith.mulf %51, %52 : vector<256x8xf32>
    %54 = arith.addf %46, %53 : vector<256x8xf32>
    %55 = vector.extract_strided_slice %5 {offsets = [2, 0, 0], sizes = [16, 16, 1], strides = [1, 1, 1]} : vector<18x18x1xf32> to vector<16x16x1xf32>
    %56 = vector.shape_cast %55 : vector<16x16x1xf32> to vector<256x1xf32>
    %c6 = arith.constant 6 : index
    %c0_24 = arith.constant 0 : index
    %c0_25 = arith.constant 0 : index
    %57 = vector.load %arg2[%c6, %c0_24, %c0_25] : memref<9x1x8xf32, #tpu.memory_space<vmem>>, vector<1x1x8xf32>
    %58 = vector.shape_cast %57 : vector<1x1x8xf32> to vector<1x8xf32>
    %59 = vector.broadcast %56 : vector<256x1xf32> to vector<256x8xf32>
    %60 = vector.broadcast %58 : vector<1x8xf32> to vector<256x8xf32>
    %61 = arith.mulf %59, %60 : vector<256x8xf32>
    %62 = arith.addf %54, %61 : vector<256x8xf32>
    %63 = vector.extract_strided_slice %5 {offsets = [2, 1, 0], sizes = [16, 16, 1], strides = [1, 1, 1]} : vector<18x18x1xf32> to vector<16x16x1xf32>
    %64 = vector.shape_cast %63 : vector<16x16x1xf32> to vector<256x1xf32>
    %c7 = arith.constant 7 : index
    %c0_26 = arith.constant 0 : index
    %c0_27 = arith.constant 0 : index
    %65 = vector.load %arg2[%c7, %c0_26, %c0_27] : memref<9x1x8xf32, #tpu.memory_space<vmem>>, vector<1x1x8xf32>
    %66 = vector.shape_cast %65 : vector<1x1x8xf32> to vector<1x8xf32>
    %67 = vector.broadcast %64 : vector<256x1xf32> to vector<256x8xf32>
    %68 = vector.broadcast %66 : vector<1x8xf32> to vector<256x8xf32>
    %69 = arith.mulf %67, %68 : vector<256x8xf32>
    %70 = arith.addf %62, %69 : vector<256x8xf32>
    %71 = vector.extract_strided_slice %5 {offsets = [2, 2, 0], sizes = [16, 16, 1], strides = [1, 1, 1]} : vector<18x18x1xf32> to vector<16x16x1xf32>
    %72 = vector.shape_cast %71 : vector<16x16x1xf32> to vector<256x1xf32>
    %c8 = arith.constant 8 : index
    %c0_28 = arith.constant 0 : index
    %c0_29 = arith.constant 0 : index
    %73 = vector.load %arg2[%c8, %c0_28, %c0_29] : memref<9x1x8xf32, #tpu.memory_space<vmem>>, vector<1x1x8xf32>
    %74 = vector.shape_cast %73 : vector<1x1x8xf32> to vector<1x8xf32>
    %75 = vector.broadcast %72 : vector<256x1xf32> to vector<256x8xf32>
    %76 = vector.broadcast %74 : vector<1x8xf32> to vector<256x8xf32>
    %77 = arith.mulf %75, %76 : vector<256x8xf32>
    %78 = arith.addf %70, %77 : vector<256x8xf32>
    %cst_30 = arith.constant 0.000000e+00 : f32
    %79 = vector.broadcast %cst_30 : f32 to vector<256x8xf32>
    %80 = arith.cmpf ogt, %78, %79 : vector<256x8xf32>
    %cst_31 = arith.constant 1.000000e-01 : f32
    %81 = vector.broadcast %cst_31 : f32 to vector<256x8xf32>
    %82 = arith.mulf %81, %78 : vector<256x8xf32>
    %83 = arith.select %80, %78, %82 : vector<256x8xi1>, vector<256x8xf32>
    %84 = vector.shape_cast %83 : vector<256x8xf32> to vector<16x16x8xf32>
    %c0_32 = arith.constant 0 : index
    %c0_33 = arith.constant 0 : index
    %c0_34 = arith.constant 0 : index
    %85 = vector.load %arg8[%c0_32, %c0_33, %c0_34] : memref<16x16x8xf32, #tpu.memory_space<vmem>>, vector<16x16x8xf32>
    tpu.vector_store %arg8[%c0_32, %c0_33, %c0_34], %84 {strides = array<i32>} : memref<16x16x8xf32, #tpu.memory_space<vmem>>, vector<16x16x8xf32>,
    %c0_35 = arith.constant 0 : index
    %c0_36 = arith.constant 0 : index
    %c0_37 = arith.constant 0 : index
    %86 = vector.load %arg9[%c0_35, %c0_36, %c0_37] : memref<16x16x8xf32, #tpu.memory_space<vmem>>, vector<16x16x8xf32>
    tpu.vector_store %arg9[%c0_35, %c0_36, %c0_37], %84 {strides = array<i32>} : memref<16x16x8xf32, #tpu.memory_space<vmem>>, vector<16x16x8xf32>,
    %c0_i32 = arith.constant 0 : i32
    %c4_i32 = arith.constant 4 : i32
    %87 = arith.addi %c0_i32, %c4_i32 : i32
    %c1_i32 = arith.constant 1 : i32
    scf.for %arg12 = %c0_i32 to %87 step %c1_i32  : i32 {
      %c0_112 = arith.constant 0 : index
      %c0_113 = arith.constant 0 : index
      %c0_114 = arith.constant 0 : index
      %176 = vector.load %arg4[%c0_112, %c0_113, %c0_114] : memref<2x8x48xbf16, #tpu.memory_space<vmem>>, vector<1x8x48xbf16>
      %177 = vector.shape_cast %176 : vector<1x8x48xbf16> to vector<8x48xbf16>
      %c0_115 = arith.constant 0 : index
      %c0_116 = arith.constant 0 : index
      %c0_117 = arith.constant 0 : index
      %178 = vector.load %arg6[%c0_115, %c0_116, %c0_117] : memref<2x48x8xbf16, #tpu.memory_space<vmem>>, vector<1x48x8xbf16>
      %179 = vector.shape_cast %178 : vector<1x48x8xbf16> to vector<48x8xbf16>
      %c0_118 = arith.constant 0 : index
      %c0_119 = arith.constant 0 : index
      %c0_120 = arith.constant 0 : index
      %c0_121 = arith.constant 0 : index
      %180 = vector.load %arg5[%c0_118, %c0_119, %c0_120, %c0_121] : memref<2x25x1x48xf32, #tpu.memory_space<vmem>>, vector<1x25x1x48xf32>
      %181 = vector.shape_cast %180 : vector<1x25x1x48xf32> to vector<25x1x48xf32>
      %c0_i32_122 = arith.constant 0 : i32
      %c2_i32 = arith.constant 2 : i32
      %182 = arith.addi %c0_i32_122, %c2_i32 : i32
      %c1_i32_123 = arith.constant 1 : i32
      scf.for %arg13 = %c0_i32_122 to %182 step %c1_i32_123  : i32 {
        %c1_i32_156 = arith.constant 1 : i32
        %196 = arith.muli %arg13, %c1_i32_156 : i32
        %c0_i32_157 = arith.constant 0 : i32
        %197 = arith.addi %c0_i32_157, %196 : i32
        %c8_i32 = arith.constant 8 : i32
        %198 = arith.muli %197, %c8_i32 : i32
        %199 = tpu.assume_multiple %198, 8 : i32
        %200 = arith.index_cast %199 : i32 to index
        %c0_158 = arith.constant 0 : index
        %c0_159 = arith.constant 0 : index
        %201 = vector.load %arg9[%200, %c0_158, %c0_159] : memref<16x16x8xf32, #tpu.memory_space<vmem>>, vector<8x16x8xf32>
        %202 = vector.shape_cast %201 : vector<8x16x8xf32> to vector<128x8xf32>
        %203 = arith.truncf %202 : vector<128x8xf32> to vector<128x8xbf16>
        %cst_160 = arith.constant dense<0.000000e+00> : vector<128x48xf32>
        %204 = tpu.matmul %203, %177, %cst_160 {dimension_numbers = #tpu.dot_dimension_numbers<[1], [0], [0], [1], [0, 0, 1, 1], [], []>} : vector<128x8xbf16>, vector<8x48xbf16>, vector<128x48xf32> -> vector<128x48xf32>
        %cst_161 = arith.constant 0.000000e+00 : f32
        %205 = vector.broadcast %cst_161 : f32 to vector<128x48xf32>
        %206 = arith.cmpf ogt, %204, %205 : vector<128x48xf32>
        %cst_162 = arith.constant 1.000000e-01 : f32
        %207 = vector.broadcast %cst_162 : f32 to vector<128x48xf32>
        %208 = arith.mulf %207, %204 : vector<128x48xf32>
        %209 = arith.select %206, %204, %208 : vector<128x48xi1>, vector<128x48xf32>
        %210 = vector.shape_cast %209 : vector<128x48xf32> to vector<8x16x48xf32>
        %c2_i32_163 = arith.constant 2 : i32
        %211 = arith.addi %199, %c2_i32_163 : i32
        %212 = arith.index_cast %211 : i32 to index
        %c2_164 = arith.constant 2 : index
        %c0_165 = arith.constant 0 : index
        %213 = vector.load %arg10[%212, %c2_164, %c0_165] : memref<20x20x48xf32, #tpu.memory_space<vmem>>, vector<8x16x48xf32>
        tpu.vector_store %arg10[%212, %c2_164, %c0_165], %210 {strides = array<i32>} : memref<20x20x48xf32, #tpu.memory_space<vmem>>, vector<8x16x48xf32>,
      }
      %c2_i32_124 = arith.constant 2 : i32
      %c0_i32_125 = arith.constant 0 : i32
      %c2_i32_126 = arith.constant 2 : i32
      %183 = arith.addi %c0_i32_125, %c2_i32_126 : i32
      %c1_i32_127 = arith.constant 1 : i32
      scf.for %arg13 = %c0_i32_125 to %183 step %c1_i32_127  : i32 {
        %c1_i32_156 = arith.constant 1 : i32
        %196 = arith.muli %arg13, %c1_i32_156 : i32
        %c0_i32_157 = arith.constant 0 : i32
        %197 = arith.addi %c0_i32_157, %196 : i32
        %c8_i32 = arith.constant 8 : i32
        %198 = arith.muli %197, %c8_i32 : i32
        %199 = tpu.assume_multiple %198, 8 : i32
        %cst_158 = arith.constant 0.000000e+00 : f32
        %200 = vector.broadcast %cst_158 : f32 to vector<8x16x48xf32>
        %c0_i32_159 = arith.constant 0 : i32
        %201 = arith.addi %199, %c0_i32_159 : i32
        %202 = arith.index_cast %201 : i32 to index
        %c0_160 = arith.constant 0 : index
        %c0_161 = arith.constant 0 : index
        %203 = vector.load %arg10[%202, %c0_160, %c0_161] : memref<20x20x48xf32, #tpu.memory_space<vmem>>, vector<8x16x48xf32>
        %204 = vector.extract_strided_slice %181 {offsets = [0, 0, 0], sizes = [1, 1, 48], strides = [1, 1, 1]} : vector<25x1x48xf32> to vector<1x1x48xf32>
        %205 = vector.shape_cast %204 : vector<1x1x48xf32> to vector<1x48xf32>
        %206 = vector.shape_cast %205 : vector<1x48xf32> to vector<1x1x48xf32>
        %207 = vector.broadcast %206 : vector<1x1x48xf32> to vector<8x16x48xf32>
        %208 = arith.mulf %203, %207 : vector<8x16x48xf32>
        %209 = arith.addf %200, %208 : vector<8x16x48xf32>
        %c0_i32_162 = arith.constant 0 : i32
        %210 = arith.addi %199, %c0_i32_162 : i32
        %211 = arith.index_cast %210 : i32 to index
        %c1_163 = arith.constant 1 : index
        %c0_164 = arith.constant 0 : index
        %212 = vector.load %arg10[%211, %c1_163, %c0_164] : memref<20x20x48xf32, #tpu.memory_space<vmem>>, vector<8x16x48xf32>
        %213 = vector.extract_strided_slice %181 {offsets = [1, 0, 0], sizes = [1, 1, 48], strides = [1, 1, 1]} : vector<25x1x48xf32> to vector<1x1x48xf32>
        %214 = vector.shape_cast %213 : vector<1x1x48xf32> to vector<1x48xf32>
        %215 = vector.shape_cast %214 : vector<1x48xf32> to vector<1x1x48xf32>
        %216 = vector.broadcast %215 : vector<1x1x48xf32> to vector<8x16x48xf32>
        %217 = arith.mulf %212, %216 : vector<8x16x48xf32>
        %218 = arith.addf %209, %217 : vector<8x16x48xf32>
        %c0_i32_165 = arith.constant 0 : i32
        %219 = arith.addi %199, %c0_i32_165 : i32
        %220 = arith.index_cast %219 : i32 to index
        %c2_166 = arith.constant 2 : index
        %c0_167 = arith.constant 0 : index
        %221 = vector.load %arg10[%220, %c2_166, %c0_167] : memref<20x20x48xf32, #tpu.memory_space<vmem>>, vector<8x16x48xf32>
        %222 = vector.extract_strided_slice %181 {offsets = [2, 0, 0], sizes = [1, 1, 48], strides = [1, 1, 1]} : vector<25x1x48xf32> to vector<1x1x48xf32>
        %223 = vector.shape_cast %222 : vector<1x1x48xf32> to vector<1x48xf32>
        %224 = vector.shape_cast %223 : vector<1x48xf32> to vector<1x1x48xf32>
        %225 = vector.broadcast %224 : vector<1x1x48xf32> to vector<8x16x48xf32>
        %226 = arith.mulf %221, %225 : vector<8x16x48xf32>
        %227 = arith.addf %218, %226 : vector<8x16x48xf32>
        %c0_i32_168 = arith.constant 0 : i32
        %228 = arith.addi %199, %c0_i32_168 : i32
        %229 = arith.index_cast %228 : i32 to index
        %c3_169 = arith.constant 3 : index
        %c0_170 = arith.constant 0 : index
        %230 = vector.load %arg10[%229, %c3_169, %c0_170] : memref<20x20x48xf32, #tpu.memory_space<vmem>>, vector<8x16x48xf32>
        %231 = vector.extract_strided_slice %181 {offsets = [3, 0, 0], sizes = [1, 1, 48], strides = [1, 1, 1]} : vector<25x1x48xf32> to vector<1x1x48xf32>
        %232 = vector.shape_cast %231 : vector<1x1x48xf32> to vector<1x48xf32>
        %233 = vector.shape_cast %232 : vector<1x48xf32> to vector<1x1x48xf32>
        %234 = vector.broadcast %233 : vector<1x1x48xf32> to vector<8x16x48xf32>
        %235 = arith.mulf %230, %234 : vector<8x16x48xf32>
        %236 = arith.addf %227, %235 : vector<8x16x48xf32>
        %c0_i32_171 = arith.constant 0 : i32
        %237 = arith.addi %199, %c0_i32_171 : i32
        %238 = arith.index_cast %237 : i32 to index
        %c4_172 = arith.constant 4 : index
        %c0_173 = arith.constant 0 : index
        %239 = vector.load %arg10[%238, %c4_172, %c0_173] : memref<20x20x48xf32, #tpu.memory_space<vmem>>, vector<8x16x48xf32>
        %240 = vector.extract_strided_slice %181 {offsets = [4, 0, 0], sizes = [1, 1, 48], strides = [1, 1, 1]} : vector<25x1x48xf32> to vector<1x1x48xf32>
        %241 = vector.shape_cast %240 : vector<1x1x48xf32> to vector<1x48xf32>
        %242 = vector.shape_cast %241 : vector<1x48xf32> to vector<1x1x48xf32>
        %243 = vector.broadcast %242 : vector<1x1x48xf32> to vector<8x16x48xf32>
        %244 = arith.mulf %239, %243 : vector<8x16x48xf32>
        %245 = arith.addf %236, %244 : vector<8x16x48xf32>
        %c1_i32_174 = arith.constant 1 : i32
        %246 = arith.addi %199, %c1_i32_174 : i32
        %247 = arith.index_cast %246 : i32 to index
        %c0_175 = arith.constant 0 : index
        %c0_176 = arith.constant 0 : index
        %248 = vector.load %arg10[%247, %c0_175, %c0_176] : memref<20x20x48xf32, #tpu.memory_space<vmem>>, vector<8x16x48xf32>
        %249 = vector.extract_strided_slice %181 {offsets = [5, 0, 0], sizes = [1, 1, 48], strides = [1, 1, 1]} : vector<25x1x48xf32> to vector<1x1x48xf32>
        %250 = vector.shape_cast %249 : vector<1x1x48xf32> to vector<1x48xf32>
        %251 = vector.shape_cast %250 : vector<1x48xf32> to vector<1x1x48xf32>
        %252 = vector.broadcast %251 : vector<1x1x48xf32> to vector<8x16x48xf32>
        %253 = arith.mulf %248, %252 : vector<8x16x48xf32>
        %254 = arith.addf %245, %253 : vector<8x16x48xf32>
        %c1_i32_177 = arith.constant 1 : i32
        %255 = arith.addi %199, %c1_i32_177 : i32
        %256 = arith.index_cast %255 : i32 to index
        %c1_178 = arith.constant 1 : index
        %c0_179 = arith.constant 0 : index
        %257 = vector.load %arg10[%256, %c1_178, %c0_179] : memref<20x20x48xf32, #tpu.memory_space<vmem>>, vector<8x16x48xf32>
        %258 = vector.extract_strided_slice %181 {offsets = [6, 0, 0], sizes = [1, 1, 48], strides = [1, 1, 1]} : vector<25x1x48xf32> to vector<1x1x48xf32>
        %259 = vector.shape_cast %258 : vector<1x1x48xf32> to vector<1x48xf32>
        %260 = vector.shape_cast %259 : vector<1x48xf32> to vector<1x1x48xf32>
        %261 = vector.broadcast %260 : vector<1x1x48xf32> to vector<8x16x48xf32>
        %262 = arith.mulf %257, %261 : vector<8x16x48xf32>
        %263 = arith.addf %254, %262 : vector<8x16x48xf32>
        %c1_i32_180 = arith.constant 1 : i32
        %264 = arith.addi %199, %c1_i32_180 : i32
        %265 = arith.index_cast %264 : i32 to index
        %c2_181 = arith.constant 2 : index
        %c0_182 = arith.constant 0 : index
        %266 = vector.load %arg10[%265, %c2_181, %c0_182] : memref<20x20x48xf32, #tpu.memory_space<vmem>>, vector<8x16x48xf32>
        %267 = vector.extract_strided_slice %181 {offsets = [7, 0, 0], sizes = [1, 1, 48], strides = [1, 1, 1]} : vector<25x1x48xf32> to vector<1x1x48xf32>
        %268 = vector.shape_cast %267 : vector<1x1x48xf32> to vector<1x48xf32>
        %269 = vector.shape_cast %268 : vector<1x48xf32> to vector<1x1x48xf32>
        %270 = vector.broadcast %269 : vector<1x1x48xf32> to vector<8x16x48xf32>
        %271 = arith.mulf %266, %270 : vector<8x16x48xf32>
        %272 = arith.addf %263, %271 : vector<8x16x48xf32>
        %c1_i32_183 = arith.constant 1 : i32
        %273 = arith.addi %199, %c1_i32_183 : i32
        %274 = arith.index_cast %273 : i32 to index
        %c3_184 = arith.constant 3 : index
        %c0_185 = arith.constant 0 : index
        %275 = vector.load %arg10[%274, %c3_184, %c0_185] : memref<20x20x48xf32, #tpu.memory_space<vmem>>, vector<8x16x48xf32>
        %276 = vector.extract_strided_slice %181 {offsets = [8, 0, 0], sizes = [1, 1, 48], strides = [1, 1, 1]} : vector<25x1x48xf32> to vector<1x1x48xf32>
        %277 = vector.shape_cast %276 : vector<1x1x48xf32> to vector<1x48xf32>
        %278 = vector.shape_cast %277 : vector<1x48xf32> to vector<1x1x48xf32>
        %279 = vector.broadcast %278 : vector<1x1x48xf32> to vector<8x16x48xf32>
        %280 = arith.mulf %275, %279 : vector<8x16x48xf32>
        %281 = arith.addf %272, %280 : vector<8x16x48xf32>
        %c1_i32_186 = arith.constant 1 : i32
        %282 = arith.addi %199, %c1_i32_186 : i32
        %283 = arith.index_cast %282 : i32 to index
        %c4_187 = arith.constant 4 : index
        %c0_188 = arith.constant 0 : index
        %284 = vector.load %arg10[%283, %c4_187, %c0_188] : memref<20x20x48xf32, #tpu.memory_space<vmem>>, vector<8x16x48xf32>
        %285 = vector.extract_strided_slice %181 {offsets = [9, 0, 0], sizes = [1, 1, 48], strides = [1, 1, 1]} : vector<25x1x48xf32> to vector<1x1x48xf32>
        %286 = vector.shape_cast %285 : vector<1x1x48xf32> to vector<1x48xf32>
        %287 = vector.shape_cast %286 : vector<1x48xf32> to vector<1x1x48xf32>
        %288 = vector.broadcast %287 : vector<1x1x48xf32> to vector<8x16x48xf32>
        %289 = arith.mulf %284, %288 : vector<8x16x48xf32>
        %290 = arith.addf %281, %289 : vector<8x16x48xf32>
        %c2_i32_189 = arith.constant 2 : i32
        %291 = arith.addi %199, %c2_i32_189 : i32
        %292 = arith.index_cast %291 : i32 to index
        %c0_190 = arith.constant 0 : index
        %c0_191 = arith.constant 0 : index
        %293 = vector.load %arg10[%292, %c0_190, %c0_191] : memref<20x20x48xf32, #tpu.memory_space<vmem>>, vector<8x16x48xf32>
        %294 = vector.extract_strided_slice %181 {offsets = [10, 0, 0], sizes = [1, 1, 48], strides = [1, 1, 1]} : vector<25x1x48xf32> to vector<1x1x48xf32>
        %295 = vector.shape_cast %294 : vector<1x1x48xf32> to vector<1x48xf32>
        %296 = vector.shape_cast %295 : vector<1x48xf32> to vector<1x1x48xf32>
        %297 = vector.broadcast %296 : vector<1x1x48xf32> to vector<8x16x48xf32>
        %298 = arith.mulf %293, %297 : vector<8x16x48xf32>
        %299 = arith.addf %290, %298 : vector<8x16x48xf32>
        %c2_i32_192 = arith.constant 2 : i32
        %300 = arith.addi %199, %c2_i32_192 : i32
        %301 = arith.index_cast %300 : i32 to index
        %c1_193 = arith.constant 1 : index
        %c0_194 = arith.constant 0 : index
        %302 = vector.load %arg10[%301, %c1_193, %c0_194] : memref<20x20x48xf32, #tpu.memory_space<vmem>>, vector<8x16x48xf32>
        %303 = vector.extract_strided_slice %181 {offsets = [11, 0, 0], sizes = [1, 1, 48], strides = [1, 1, 1]} : vector<25x1x48xf32> to vector<1x1x48xf32>
        %304 = vector.shape_cast %303 : vector<1x1x48xf32> to vector<1x48xf32>
        %305 = vector.shape_cast %304 : vector<1x48xf32> to vector<1x1x48xf32>
        %306 = vector.broadcast %305 : vector<1x1x48xf32> to vector<8x16x48xf32>
        %307 = arith.mulf %302, %306 : vector<8x16x48xf32>
        %308 = arith.addf %299, %307 : vector<8x16x48xf32>
        %c2_i32_195 = arith.constant 2 : i32
        %309 = arith.addi %199, %c2_i32_195 : i32
        %310 = arith.index_cast %309 : i32 to index
        %c2_196 = arith.constant 2 : index
        %c0_197 = arith.constant 0 : index
        %311 = vector.load %arg10[%310, %c2_196, %c0_197] : memref<20x20x48xf32, #tpu.memory_space<vmem>>, vector<8x16x48xf32>
        %312 = vector.extract_strided_slice %181 {offsets = [12, 0, 0], sizes = [1, 1, 48], strides = [1, 1, 1]} : vector<25x1x48xf32> to vector<1x1x48xf32>
        %313 = vector.shape_cast %312 : vector<1x1x48xf32> to vector<1x48xf32>
        %314 = vector.shape_cast %313 : vector<1x48xf32> to vector<1x1x48xf32>
        %315 = vector.broadcast %314 : vector<1x1x48xf32> to vector<8x16x48xf32>
        %316 = arith.mulf %311, %315 : vector<8x16x48xf32>
        %317 = arith.addf %308, %316 : vector<8x16x48xf32>
        %c2_i32_198 = arith.constant 2 : i32
        %318 = arith.addi %199, %c2_i32_198 : i32
        %319 = arith.index_cast %318 : i32 to index
        %c3_199 = arith.constant 3 : index
        %c0_200 = arith.constant 0 : index
        %320 = vector.load %arg10[%319, %c3_199, %c0_200] : memref<20x20x48xf32, #tpu.memory_space<vmem>>, vector<8x16x48xf32>
        %321 = vector.extract_strided_slice %181 {offsets = [13, 0, 0], sizes = [1, 1, 48], strides = [1, 1, 1]} : vector<25x1x48xf32> to vector<1x1x48xf32>
        %322 = vector.shape_cast %321 : vector<1x1x48xf32> to vector<1x48xf32>
        %323 = vector.shape_cast %322 : vector<1x48xf32> to vector<1x1x48xf32>
        %324 = vector.broadcast %323 : vector<1x1x48xf32> to vector<8x16x48xf32>
        %325 = arith.mulf %320, %324 : vector<8x16x48xf32>
        %326 = arith.addf %317, %325 : vector<8x16x48xf32>
        %c2_i32_201 = arith.constant 2 : i32
        %327 = arith.addi %199, %c2_i32_201 : i32
        %328 = arith.index_cast %327 : i32 to index
        %c4_202 = arith.constant 4 : index
        %c0_203 = arith.constant 0 : index
        %329 = vector.load %arg10[%328, %c4_202, %c0_203] : memref<20x20x48xf32, #tpu.memory_space<vmem>>, vector<8x16x48xf32>
        %330 = vector.extract_strided_slice %181 {offsets = [14, 0, 0], sizes = [1, 1, 48], strides = [1, 1, 1]} : vector<25x1x48xf32> to vector<1x1x48xf32>
        %331 = vector.shape_cast %330 : vector<1x1x48xf32> to vector<1x48xf32>
        %332 = vector.shape_cast %331 : vector<1x48xf32> to vector<1x1x48xf32>
        %333 = vector.broadcast %332 : vector<1x1x48xf32> to vector<8x16x48xf32>
        %334 = arith.mulf %329, %333 : vector<8x16x48xf32>
        %335 = arith.addf %326, %334 : vector<8x16x48xf32>
        %c3_i32 = arith.constant 3 : i32
        %336 = arith.addi %199, %c3_i32 : i32
        %337 = arith.index_cast %336 : i32 to index
        %c0_204 = arith.constant 0 : index
        %c0_205 = arith.constant 0 : index
        %338 = vector.load %arg10[%337, %c0_204, %c0_205] : memref<20x20x48xf32, #tpu.memory_space<vmem>>, vector<8x16x48xf32>
        %339 = vector.extract_strided_slice %181 {offsets = [15, 0, 0], sizes = [1, 1, 48], strides = [1, 1, 1]} : vector<25x1x48xf32> to vector<1x1x48xf32>
        %340 = vector.shape_cast %339 : vector<1x1x48xf32> to vector<1x48xf32>
        %341 = vector.shape_cast %340 : vector<1x48xf32> to vector<1x1x48xf32>
        %342 = vector.broadcast %341 : vector<1x1x48xf32> to vector<8x16x48xf32>
        %343 = arith.mulf %338, %342 : vector<8x16x48xf32>
        %344 = arith.addf %335, %343 : vector<8x16x48xf32>
        %c3_i32_206 = arith.constant 3 : i32
        %345 = arith.addi %199, %c3_i32_206 : i32
        %346 = arith.index_cast %345 : i32 to index
        %c1_207 = arith.constant 1 : index
        %c0_208 = arith.constant 0 : index
        %347 = vector.load %arg10[%346, %c1_207, %c0_208] : memref<20x20x48xf32, #tpu.memory_space<vmem>>, vector<8x16x48xf32>
        %348 = vector.extract_strided_slice %181 {offsets = [16, 0, 0], sizes = [1, 1, 48], strides = [1, 1, 1]} : vector<25x1x48xf32> to vector<1x1x48xf32>
        %349 = vector.shape_cast %348 : vector<1x1x48xf32> to vector<1x48xf32>
        %350 = vector.shape_cast %349 : vector<1x48xf32> to vector<1x1x48xf32>
        %351 = vector.broadcast %350 : vector<1x1x48xf32> to vector<8x16x48xf32>
        %352 = arith.mulf %347, %351 : vector<8x16x48xf32>
        %353 = arith.addf %344, %352 : vector<8x16x48xf32>
        %c3_i32_209 = arith.constant 3 : i32
        %354 = arith.addi %199, %c3_i32_209 : i32
        %355 = arith.index_cast %354 : i32 to index
        %c2_210 = arith.constant 2 : index
        %c0_211 = arith.constant 0 : index
        %356 = vector.load %arg10[%355, %c2_210, %c0_211] : memref<20x20x48xf32, #tpu.memory_space<vmem>>, vector<8x16x48xf32>
        %357 = vector.extract_strided_slice %181 {offsets = [17, 0, 0], sizes = [1, 1, 48], strides = [1, 1, 1]} : vector<25x1x48xf32> to vector<1x1x48xf32>
        %358 = vector.shape_cast %357 : vector<1x1x48xf32> to vector<1x48xf32>
        %359 = vector.shape_cast %358 : vector<1x48xf32> to vector<1x1x48xf32>
        %360 = vector.broadcast %359 : vector<1x1x48xf32> to vector<8x16x48xf32>
        %361 = arith.mulf %356, %360 : vector<8x16x48xf32>
        %362 = arith.addf %353, %361 : vector<8x16x48xf32>
        %c3_i32_212 = arith.constant 3 : i32
        %363 = arith.addi %199, %c3_i32_212 : i32
        %364 = arith.index_cast %363 : i32 to index
        %c3_213 = arith.constant 3 : index
        %c0_214 = arith.constant 0 : index
        %365 = vector.load %arg10[%364, %c3_213, %c0_214] : memref<20x20x48xf32, #tpu.memory_space<vmem>>, vector<8x16x48xf32>
        %366 = vector.extract_strided_slice %181 {offsets = [18, 0, 0], sizes = [1, 1, 48], strides = [1, 1, 1]} : vector<25x1x48xf32> to vector<1x1x48xf32>
        %367 = vector.shape_cast %366 : vector<1x1x48xf32> to vector<1x48xf32>
        %368 = vector.shape_cast %367 : vector<1x48xf32> to vector<1x1x48xf32>
        %369 = vector.broadcast %368 : vector<1x1x48xf32> to vector<8x16x48xf32>
        %370 = arith.mulf %365, %369 : vector<8x16x48xf32>
        %371 = arith.addf %362, %370 : vector<8x16x48xf32>
        %c3_i32_215 = arith.constant 3 : i32
        %372 = arith.addi %199, %c3_i32_215 : i32
        %373 = arith.index_cast %372 : i32 to index
        %c4_216 = arith.constant 4 : index
        %c0_217 = arith.constant 0 : index
        %374 = vector.load %arg10[%373, %c4_216, %c0_217] : memref<20x20x48xf32, #tpu.memory_space<vmem>>, vector<8x16x48xf32>
        %375 = vector.extract_strided_slice %181 {offsets = [19, 0, 0], sizes = [1, 1, 48], strides = [1, 1, 1]} : vector<25x1x48xf32> to vector<1x1x48xf32>
        %376 = vector.shape_cast %375 : vector<1x1x48xf32> to vector<1x48xf32>
        %377 = vector.shape_cast %376 : vector<1x48xf32> to vector<1x1x48xf32>
        %378 = vector.broadcast %377 : vector<1x1x48xf32> to vector<8x16x48xf32>
        %379 = arith.mulf %374, %378 : vector<8x16x48xf32>
        %380 = arith.addf %371, %379 : vector<8x16x48xf32>
        %c4_i32_218 = arith.constant 4 : i32
        %381 = arith.addi %199, %c4_i32_218 : i32
        %382 = arith.index_cast %381 : i32 to index
        %c0_219 = arith.constant 0 : index
        %c0_220 = arith.constant 0 : index
        %383 = vector.load %arg10[%382, %c0_219, %c0_220] : memref<20x20x48xf32, #tpu.memory_space<vmem>>, vector<8x16x48xf32>
        %384 = vector.extract_strided_slice %181 {offsets = [20, 0, 0], sizes = [1, 1, 48], strides = [1, 1, 1]} : vector<25x1x48xf32> to vector<1x1x48xf32>
        %385 = vector.shape_cast %384 : vector<1x1x48xf32> to vector<1x48xf32>
        %386 = vector.shape_cast %385 : vector<1x48xf32> to vector<1x1x48xf32>
        %387 = vector.broadcast %386 : vector<1x1x48xf32> to vector<8x16x48xf32>
        %388 = arith.mulf %383, %387 : vector<8x16x48xf32>
        %389 = arith.addf %380, %388 : vector<8x16x48xf32>
        %c4_i32_221 = arith.constant 4 : i32
        %390 = arith.addi %199, %c4_i32_221 : i32
        %391 = arith.index_cast %390 : i32 to index
        %c1_222 = arith.constant 1 : index
        %c0_223 = arith.constant 0 : index
        %392 = vector.load %arg10[%391, %c1_222, %c0_223] : memref<20x20x48xf32, #tpu.memory_space<vmem>>, vector<8x16x48xf32>
        %393 = vector.extract_strided_slice %181 {offsets = [21, 0, 0], sizes = [1, 1, 48], strides = [1, 1, 1]} : vector<25x1x48xf32> to vector<1x1x48xf32>
        %394 = vector.shape_cast %393 : vector<1x1x48xf32> to vector<1x48xf32>
        %395 = vector.shape_cast %394 : vector<1x48xf32> to vector<1x1x48xf32>
        %396 = vector.broadcast %395 : vector<1x1x48xf32> to vector<8x16x48xf32>
        %397 = arith.mulf %392, %396 : vector<8x16x48xf32>
        %398 = arith.addf %389, %397 : vector<8x16x48xf32>
        %c4_i32_224 = arith.constant 4 : i32
        %399 = arith.addi %199, %c4_i32_224 : i32
        %400 = arith.index_cast %399 : i32 to index
        %c2_225 = arith.constant 2 : index
        %c0_226 = arith.constant 0 : index
        %401 = vector.load %arg10[%400, %c2_225, %c0_226] : memref<20x20x48xf32, #tpu.memory_space<vmem>>, vector<8x16x48xf32>
        %402 = vector.extract_strided_slice %181 {offsets = [22, 0, 0], sizes = [1, 1, 48], strides = [1, 1, 1]} : vector<25x1x48xf32> to vector<1x1x48xf32>
        %403 = vector.shape_cast %402 : vector<1x1x48xf32> to vector<1x48xf32>
        %404 = vector.shape_cast %403 : vector<1x48xf32> to vector<1x1x48xf32>
        %405 = vector.broadcast %404 : vector<1x1x48xf32> to vector<8x16x48xf32>
        %406 = arith.mulf %401, %405 : vector<8x16x48xf32>
        %407 = arith.addf %398, %406 : vector<8x16x48xf32>
        %c4_i32_227 = arith.constant 4 : i32
        %408 = arith.addi %199, %c4_i32_227 : i32
        %409 = arith.index_cast %408 : i32 to index
        %c3_228 = arith.constant 3 : index
        %c0_229 = arith.constant 0 : index
        %410 = vector.load %arg10[%409, %c3_228, %c0_229] : memref<20x20x48xf32, #tpu.memory_space<vmem>>, vector<8x16x48xf32>
        %411 = vector.extract_strided_slice %181 {offsets = [23, 0, 0], sizes = [1, 1, 48], strides = [1, 1, 1]} : vector<25x1x48xf32> to vector<1x1x48xf32>
        %412 = vector.shape_cast %411 : vector<1x1x48xf32> to vector<1x48xf32>
        %413 = vector.shape_cast %412 : vector<1x48xf32> to vector<1x1x48xf32>
        %414 = vector.broadcast %413 : vector<1x1x48xf32> to vector<8x16x48xf32>
        %415 = arith.mulf %410, %414 : vector<8x16x48xf32>
        %416 = arith.addf %407, %415 : vector<8x16x48xf32>
        %c4_i32_230 = arith.constant 4 : i32
        %417 = arith.addi %199, %c4_i32_230 : i32
        %418 = arith.index_cast %417 : i32 to index
        %c4_231 = arith.constant 4 : index
        %c0_232 = arith.constant 0 : index
        %419 = vector.load %arg10[%418, %c4_231, %c0_232] : memref<20x20x48xf32, #tpu.memory_space<vmem>>, vector<8x16x48xf32>
        %420 = vector.extract_strided_slice %181 {offsets = [24, 0, 0], sizes = [1, 1, 48], strides = [1, 1, 1]} : vector<25x1x48xf32> to vector<1x1x48xf32>
        %421 = vector.shape_cast %420 : vector<1x1x48xf32> to vector<1x48xf32>
        %422 = vector.shape_cast %421 : vector<1x48xf32> to vector<1x1x48xf32>
        %423 = vector.broadcast %422 : vector<1x1x48xf32> to vector<8x16x48xf32>
        %424 = arith.mulf %419, %423 : vector<8x16x48xf32>
        %425 = arith.addf %416, %424 : vector<8x16x48xf32>
        %cst_233 = arith.constant 0.000000e+00 : f32
        %426 = vector.broadcast %cst_233 : f32 to vector<8x16x48xf32>
        %427 = arith.cmpf ogt, %425, %426 : vector<8x16x48xf32>
        %cst_234 = arith.constant 1.000000e-01 : f32
        %428 = vector.broadcast %cst_234 : f32 to vector<8x16x48xf32>
        %429 = arith.mulf %428, %425 : vector<8x16x48xf32>
        %430 = arith.select %427, %425, %429 : vector<8x16x48xi1>, vector<8x16x48xf32>
        %431 = vector.shape_cast %430 : vector<8x16x48xf32> to vector<128x48xf32>
        %432 = arith.truncf %431 : vector<128x48xf32> to vector<128x48xbf16>
        %cst_235 = arith.constant dense<0.000000e+00> : vector<128x8xf32>
        %433 = tpu.matmul %432, %179, %cst_235 {dimension_numbers = #tpu.dot_dimension_numbers<[1], [0], [0], [1], [0, 0, 1, 1], [], []>} : vector<128x48xbf16>, vector<48x8xbf16>, vector<128x8xf32> -> vector<128x8xf32>
        %434 = arith.index_cast %199 : i32 to index
        %c0_236 = arith.constant 0 : index
        %c0_237 = arith.constant 0 : index
        %435 = vector.load %arg9[%434, %c0_236, %c0_237] : memref<16x16x8xf32, #tpu.memory_space<vmem>>, vector<8x16x8xf32>
        %436 = vector.shape_cast %435 : vector<8x16x8xf32> to vector<128x8xf32>
        %437 = arith.addf %436, %433 : vector<128x8xf32>
        %cst_238 = arith.constant 0.000000e+00 : f32
        %438 = vector.broadcast %cst_238 : f32 to vector<128x8xf32>
        %439 = arith.cmpf ogt, %437, %438 : vector<128x8xf32>
        %cst_239 = arith.constant 1.000000e-01 : f32
        %440 = vector.broadcast %cst_239 : f32 to vector<128x8xf32>
        %441 = arith.mulf %440, %437 : vector<128x8xf32>
        %442 = arith.select %439, %437, %441 : vector<128x8xi1>, vector<128x8xf32>
        %443 = vector.shape_cast %442 : vector<128x8xf32> to vector<8x16x8xf32>
        %444 = arith.index_cast %199 : i32 to index
        %c0_240 = arith.constant 0 : index
        %c0_241 = arith.constant 0 : index
        %445 = vector.load %arg9[%444, %c0_240, %c0_241] : memref<16x16x8xf32, #tpu.memory_space<vmem>>, vector<8x16x8xf32>
        tpu.vector_store %arg9[%444, %c0_240, %c0_241], %443 {strides = array<i32>} : memref<16x16x8xf32, #tpu.memory_space<vmem>>, vector<8x16x8xf32>,
      }
      %c2_i32_128 = arith.constant 2 : i32
      %c1_129 = arith.constant 1 : index
      %c0_130 = arith.constant 0 : index
      %c0_131 = arith.constant 0 : index
      %184 = vector.load %arg4[%c1_129, %c0_130, %c0_131] : memref<2x8x48xbf16, #tpu.memory_space<vmem>>, vector<1x8x48xbf16>
      %185 = vector.shape_cast %184 : vector<1x8x48xbf16> to vector<8x48xbf16>
      %c1_132 = arith.constant 1 : index
      %c0_133 = arith.constant 0 : index
      %c0_134 = arith.constant 0 : index
      %186 = vector.load %arg6[%c1_132, %c0_133, %c0_134] : memref<2x48x8xbf16, #tpu.memory_space<vmem>>, vector<1x48x8xbf16>
      %187 = vector.shape_cast %186 : vector<1x48x8xbf16> to vector<48x8xbf16>
      %c1_135 = arith.constant 1 : index
      %c0_136 = arith.constant 0 : index
      %c0_137 = arith.constant 0 : index
      %c0_138 = arith.constant 0 : index
      %188 = vector.load %arg5[%c1_135, %c0_136, %c0_137, %c0_138] : memref<2x25x1x48xf32, #tpu.memory_space<vmem>>, vector<1x25x1x48xf32>
      %189 = vector.shape_cast %188 : vector<1x25x1x48xf32> to vector<25x1x48xf32>
      %c0_i32_139 = arith.constant 0 : i32
      %c2_i32_140 = arith.constant 2 : i32
      %190 = arith.addi %c0_i32_139, %c2_i32_140 : i32
      %c1_i32_141 = arith.constant 1 : i32
      scf.for %arg13 = %c0_i32_139 to %190 step %c1_i32_141  : i32 {
        %c1_i32_156 = arith.constant 1 : i32
        %196 = arith.muli %arg13, %c1_i32_156 : i32
        %c0_i32_157 = arith.constant 0 : i32
        %197 = arith.addi %c0_i32_157, %196 : i32
        %c8_i32 = arith.constant 8 : i32
        %198 = arith.muli %197, %c8_i32 : i32
        %199 = tpu.assume_multiple %198, 8 : i32
        %200 = arith.index_cast %199 : i32 to index
        %c0_158 = arith.constant 0 : index
        %c0_159 = arith.constant 0 : index
        %201 = vector.load %arg9[%200, %c0_158, %c0_159] : memref<16x16x8xf32, #tpu.memory_space<vmem>>, vector<8x16x8xf32>
        %202 = vector.shape_cast %201 : vector<8x16x8xf32> to vector<128x8xf32>
        %203 = arith.truncf %202 : vector<128x8xf32> to vector<128x8xbf16>
        %cst_160 = arith.constant dense<0.000000e+00> : vector<128x48xf32>
        %204 = tpu.matmul %203, %185, %cst_160 {dimension_numbers = #tpu.dot_dimension_numbers<[1], [0], [0], [1], [0, 0, 1, 1], [], []>} : vector<128x8xbf16>, vector<8x48xbf16>, vector<128x48xf32> -> vector<128x48xf32>
        %cst_161 = arith.constant 0.000000e+00 : f32
        %205 = vector.broadcast %cst_161 : f32 to vector<128x48xf32>
        %206 = arith.cmpf ogt, %204, %205 : vector<128x48xf32>
        %cst_162 = arith.constant 1.000000e-01 : f32
        %207 = vector.broadcast %cst_162 : f32 to vector<128x48xf32>
        %208 = arith.mulf %207, %204 : vector<128x48xf32>
        %209 = arith.select %206, %204, %208 : vector<128x48xi1>, vector<128x48xf32>
        %210 = vector.shape_cast %209 : vector<128x48xf32> to vector<8x16x48xf32>
        %c2_i32_163 = arith.constant 2 : i32
        %211 = arith.addi %199, %c2_i32_163 : i32
        %212 = arith.index_cast %211 : i32 to index
        %c2_164 = arith.constant 2 : index
        %c0_165 = arith.constant 0 : index
        %213 = vector.load %arg10[%212, %c2_164, %c0_165] : memref<20x20x48xf32, #tpu.memory_space<vmem>>, vector<8x16x48xf32>
        tpu.vector_store %arg10[%212, %c2_164, %c0_165], %210 {strides = array<i32>} : memref<20x20x48xf32, #tpu.memory_space<vmem>>, vector<8x16x48xf32>,
      }
      %c2_i32_142 = arith.constant 2 : i32
      %c0_i32_143 = arith.constant 0 : i32
      %c2_i32_144 = arith.constant 2 : i32
      %191 = arith.addi %c0_i32_143, %c2_i32_144 : i32
      %c1_i32_145 = arith.constant 1 : i32
      scf.for %arg13 = %c0_i32_143 to %191 step %c1_i32_145  : i32 {
        %c1_i32_156 = arith.constant 1 : i32
        %196 = arith.muli %arg13, %c1_i32_156 : i32
        %c0_i32_157 = arith.constant 0 : i32
        %197 = arith.addi %c0_i32_157, %196 : i32
        %c8_i32 = arith.constant 8 : i32
        %198 = arith.muli %197, %c8_i32 : i32
        %199 = tpu.assume_multiple %198, 8 : i32
        %cst_158 = arith.constant 0.000000e+00 : f32
        %200 = vector.broadcast %cst_158 : f32 to vector<8x16x48xf32>
        %c0_i32_159 = arith.constant 0 : i32
        %201 = arith.addi %199, %c0_i32_159 : i32
        %202 = arith.index_cast %201 : i32 to index
        %c0_160 = arith.constant 0 : index
        %c0_161 = arith.constant 0 : index
        %203 = vector.load %arg10[%202, %c0_160, %c0_161] : memref<20x20x48xf32, #tpu.memory_space<vmem>>, vector<8x16x48xf32>
        %204 = vector.extract_strided_slice %189 {offsets = [0, 0, 0], sizes = [1, 1, 48], strides = [1, 1, 1]} : vector<25x1x48xf32> to vector<1x1x48xf32>
        %205 = vector.shape_cast %204 : vector<1x1x48xf32> to vector<1x48xf32>
        %206 = vector.shape_cast %205 : vector<1x48xf32> to vector<1x1x48xf32>
        %207 = vector.broadcast %206 : vector<1x1x48xf32> to vector<8x16x48xf32>
        %208 = arith.mulf %203, %207 : vector<8x16x48xf32>
        %209 = arith.addf %200, %208 : vector<8x16x48xf32>
        %c0_i32_162 = arith.constant 0 : i32
        %210 = arith.addi %199, %c0_i32_162 : i32
        %211 = arith.index_cast %210 : i32 to index
        %c1_163 = arith.constant 1 : index
        %c0_164 = arith.constant 0 : index
        %212 = vector.load %arg10[%211, %c1_163, %c0_164] : memref<20x20x48xf32, #tpu.memory_space<vmem>>, vector<8x16x48xf32>
        %213 = vector.extract_strided_slice %189 {offsets = [1, 0, 0], sizes = [1, 1, 48], strides = [1, 1, 1]} : vector<25x1x48xf32> to vector<1x1x48xf32>
        %214 = vector.shape_cast %213 : vector<1x1x48xf32> to vector<1x48xf32>
        %215 = vector.shape_cast %214 : vector<1x48xf32> to vector<1x1x48xf32>
        %216 = vector.broadcast %215 : vector<1x1x48xf32> to vector<8x16x48xf32>
        %217 = arith.mulf %212, %216 : vector<8x16x48xf32>
        %218 = arith.addf %209, %217 : vector<8x16x48xf32>
        %c0_i32_165 = arith.constant 0 : i32
        %219 = arith.addi %199, %c0_i32_165 : i32
        %220 = arith.index_cast %219 : i32 to index
        %c2_166 = arith.constant 2 : index
        %c0_167 = arith.constant 0 : index
        %221 = vector.load %arg10[%220, %c2_166, %c0_167] : memref<20x20x48xf32, #tpu.memory_space<vmem>>, vector<8x16x48xf32>
        %222 = vector.extract_strided_slice %189 {offsets = [2, 0, 0], sizes = [1, 1, 48], strides = [1, 1, 1]} : vector<25x1x48xf32> to vector<1x1x48xf32>
        %223 = vector.shape_cast %222 : vector<1x1x48xf32> to vector<1x48xf32>
        %224 = vector.shape_cast %223 : vector<1x48xf32> to vector<1x1x48xf32>
        %225 = vector.broadcast %224 : vector<1x1x48xf32> to vector<8x16x48xf32>
        %226 = arith.mulf %221, %225 : vector<8x16x48xf32>
        %227 = arith.addf %218, %226 : vector<8x16x48xf32>
        %c0_i32_168 = arith.constant 0 : i32
        %228 = arith.addi %199, %c0_i32_168 : i32
        %229 = arith.index_cast %228 : i32 to index
        %c3_169 = arith.constant 3 : index
        %c0_170 = arith.constant 0 : index
        %230 = vector.load %arg10[%229, %c3_169, %c0_170] : memref<20x20x48xf32, #tpu.memory_space<vmem>>, vector<8x16x48xf32>
        %231 = vector.extract_strided_slice %189 {offsets = [3, 0, 0], sizes = [1, 1, 48], strides = [1, 1, 1]} : vector<25x1x48xf32> to vector<1x1x48xf32>
        %232 = vector.shape_cast %231 : vector<1x1x48xf32> to vector<1x48xf32>
        %233 = vector.shape_cast %232 : vector<1x48xf32> to vector<1x1x48xf32>
        %234 = vector.broadcast %233 : vector<1x1x48xf32> to vector<8x16x48xf32>
        %235 = arith.mulf %230, %234 : vector<8x16x48xf32>
        %236 = arith.addf %227, %235 : vector<8x16x48xf32>
        %c0_i32_171 = arith.constant 0 : i32
        %237 = arith.addi %199, %c0_i32_171 : i32
        %238 = arith.index_cast %237 : i32 to index
        %c4_172 = arith.constant 4 : index
        %c0_173 = arith.constant 0 : index
        %239 = vector.load %arg10[%238, %c4_172, %c0_173] : memref<20x20x48xf32, #tpu.memory_space<vmem>>, vector<8x16x48xf32>
        %240 = vector.extract_strided_slice %189 {offsets = [4, 0, 0], sizes = [1, 1, 48], strides = [1, 1, 1]} : vector<25x1x48xf32> to vector<1x1x48xf32>
        %241 = vector.shape_cast %240 : vector<1x1x48xf32> to vector<1x48xf32>
        %242 = vector.shape_cast %241 : vector<1x48xf32> to vector<1x1x48xf32>
        %243 = vector.broadcast %242 : vector<1x1x48xf32> to vector<8x16x48xf32>
        %244 = arith.mulf %239, %243 : vector<8x16x48xf32>
        %245 = arith.addf %236, %244 : vector<8x16x48xf32>
        %c1_i32_174 = arith.constant 1 : i32
        %246 = arith.addi %199, %c1_i32_174 : i32
        %247 = arith.index_cast %246 : i32 to index
        %c0_175 = arith.constant 0 : index
        %c0_176 = arith.constant 0 : index
        %248 = vector.load %arg10[%247, %c0_175, %c0_176] : memref<20x20x48xf32, #tpu.memory_space<vmem>>, vector<8x16x48xf32>
        %249 = vector.extract_strided_slice %189 {offsets = [5, 0, 0], sizes = [1, 1, 48], strides = [1, 1, 1]} : vector<25x1x48xf32> to vector<1x1x48xf32>
        %250 = vector.shape_cast %249 : vector<1x1x48xf32> to vector<1x48xf32>
        %251 = vector.shape_cast %250 : vector<1x48xf32> to vector<1x1x48xf32>
        %252 = vector.broadcast %251 : vector<1x1x48xf32> to vector<8x16x48xf32>
        %253 = arith.mulf %248, %252 : vector<8x16x48xf32>
        %254 = arith.addf %245, %253 : vector<8x16x48xf32>
        %c1_i32_177 = arith.constant 1 : i32
        %255 = arith.addi %199, %c1_i32_177 : i32
        %256 = arith.index_cast %255 : i32 to index
        %c1_178 = arith.constant 1 : index
        %c0_179 = arith.constant 0 : index
        %257 = vector.load %arg10[%256, %c1_178, %c0_179] : memref<20x20x48xf32, #tpu.memory_space<vmem>>, vector<8x16x48xf32>
        %258 = vector.extract_strided_slice %189 {offsets = [6, 0, 0], sizes = [1, 1, 48], strides = [1, 1, 1]} : vector<25x1x48xf32> to vector<1x1x48xf32>
        %259 = vector.shape_cast %258 : vector<1x1x48xf32> to vector<1x48xf32>
        %260 = vector.shape_cast %259 : vector<1x48xf32> to vector<1x1x48xf32>
        %261 = vector.broadcast %260 : vector<1x1x48xf32> to vector<8x16x48xf32>
        %262 = arith.mulf %257, %261 : vector<8x16x48xf32>
        %263 = arith.addf %254, %262 : vector<8x16x48xf32>
        %c1_i32_180 = arith.constant 1 : i32
        %264 = arith.addi %199, %c1_i32_180 : i32
        %265 = arith.index_cast %264 : i32 to index
        %c2_181 = arith.constant 2 : index
        %c0_182 = arith.constant 0 : index
        %266 = vector.load %arg10[%265, %c2_181, %c0_182] : memref<20x20x48xf32, #tpu.memory_space<vmem>>, vector<8x16x48xf32>
        %267 = vector.extract_strided_slice %189 {offsets = [7, 0, 0], sizes = [1, 1, 48], strides = [1, 1, 1]} : vector<25x1x48xf32> to vector<1x1x48xf32>
        %268 = vector.shape_cast %267 : vector<1x1x48xf32> to vector<1x48xf32>
        %269 = vector.shape_cast %268 : vector<1x48xf32> to vector<1x1x48xf32>
        %270 = vector.broadcast %269 : vector<1x1x48xf32> to vector<8x16x48xf32>
        %271 = arith.mulf %266, %270 : vector<8x16x48xf32>
        %272 = arith.addf %263, %271 : vector<8x16x48xf32>
        %c1_i32_183 = arith.constant 1 : i32
        %273 = arith.addi %199, %c1_i32_183 : i32
        %274 = arith.index_cast %273 : i32 to index
        %c3_184 = arith.constant 3 : index
        %c0_185 = arith.constant 0 : index
        %275 = vector.load %arg10[%274, %c3_184, %c0_185] : memref<20x20x48xf32, #tpu.memory_space<vmem>>, vector<8x16x48xf32>
        %276 = vector.extract_strided_slice %189 {offsets = [8, 0, 0], sizes = [1, 1, 48], strides = [1, 1, 1]} : vector<25x1x48xf32> to vector<1x1x48xf32>
        %277 = vector.shape_cast %276 : vector<1x1x48xf32> to vector<1x48xf32>
        %278 = vector.shape_cast %277 : vector<1x48xf32> to vector<1x1x48xf32>
        %279 = vector.broadcast %278 : vector<1x1x48xf32> to vector<8x16x48xf32>
        %280 = arith.mulf %275, %279 : vector<8x16x48xf32>
        %281 = arith.addf %272, %280 : vector<8x16x48xf32>
        %c1_i32_186 = arith.constant 1 : i32
        %282 = arith.addi %199, %c1_i32_186 : i32
        %283 = arith.index_cast %282 : i32 to index
        %c4_187 = arith.constant 4 : index
        %c0_188 = arith.constant 0 : index
        %284 = vector.load %arg10[%283, %c4_187, %c0_188] : memref<20x20x48xf32, #tpu.memory_space<vmem>>, vector<8x16x48xf32>
        %285 = vector.extract_strided_slice %189 {offsets = [9, 0, 0], sizes = [1, 1, 48], strides = [1, 1, 1]} : vector<25x1x48xf32> to vector<1x1x48xf32>
        %286 = vector.shape_cast %285 : vector<1x1x48xf32> to vector<1x48xf32>
        %287 = vector.shape_cast %286 : vector<1x48xf32> to vector<1x1x48xf32>
        %288 = vector.broadcast %287 : vector<1x1x48xf32> to vector<8x16x48xf32>
        %289 = arith.mulf %284, %288 : vector<8x16x48xf32>
        %290 = arith.addf %281, %289 : vector<8x16x48xf32>
        %c2_i32_189 = arith.constant 2 : i32
        %291 = arith.addi %199, %c2_i32_189 : i32
        %292 = arith.index_cast %291 : i32 to index
        %c0_190 = arith.constant 0 : index
        %c0_191 = arith.constant 0 : index
        %293 = vector.load %arg10[%292, %c0_190, %c0_191] : memref<20x20x48xf32, #tpu.memory_space<vmem>>, vector<8x16x48xf32>
        %294 = vector.extract_strided_slice %189 {offsets = [10, 0, 0], sizes = [1, 1, 48], strides = [1, 1, 1]} : vector<25x1x48xf32> to vector<1x1x48xf32>
        %295 = vector.shape_cast %294 : vector<1x1x48xf32> to vector<1x48xf32>
        %296 = vector.shape_cast %295 : vector<1x48xf32> to vector<1x1x48xf32>
        %297 = vector.broadcast %296 : vector<1x1x48xf32> to vector<8x16x48xf32>
        %298 = arith.mulf %293, %297 : vector<8x16x48xf32>
        %299 = arith.addf %290, %298 : vector<8x16x48xf32>
        %c2_i32_192 = arith.constant 2 : i32
        %300 = arith.addi %199, %c2_i32_192 : i32
        %301 = arith.index_cast %300 : i32 to index
        %c1_193 = arith.constant 1 : index
        %c0_194 = arith.constant 0 : index
        %302 = vector.load %arg10[%301, %c1_193, %c0_194] : memref<20x20x48xf32, #tpu.memory_space<vmem>>, vector<8x16x48xf32>
        %303 = vector.extract_strided_slice %189 {offsets = [11, 0, 0], sizes = [1, 1, 48], strides = [1, 1, 1]} : vector<25x1x48xf32> to vector<1x1x48xf32>
        %304 = vector.shape_cast %303 : vector<1x1x48xf32> to vector<1x48xf32>
        %305 = vector.shape_cast %304 : vector<1x48xf32> to vector<1x1x48xf32>
        %306 = vector.broadcast %305 : vector<1x1x48xf32> to vector<8x16x48xf32>
        %307 = arith.mulf %302, %306 : vector<8x16x48xf32>
        %308 = arith.addf %299, %307 : vector<8x16x48xf32>
        %c2_i32_195 = arith.constant 2 : i32
        %309 = arith.addi %199, %c2_i32_195 : i32
        %310 = arith.index_cast %309 : i32 to index
        %c2_196 = arith.constant 2 : index
        %c0_197 = arith.constant 0 : index
        %311 = vector.load %arg10[%310, %c2_196, %c0_197] : memref<20x20x48xf32, #tpu.memory_space<vmem>>, vector<8x16x48xf32>
        %312 = vector.extract_strided_slice %189 {offsets = [12, 0, 0], sizes = [1, 1, 48], strides = [1, 1, 1]} : vector<25x1x48xf32> to vector<1x1x48xf32>
        %313 = vector.shape_cast %312 : vector<1x1x48xf32> to vector<1x48xf32>
        %314 = vector.shape_cast %313 : vector<1x48xf32> to vector<1x1x48xf32>
        %315 = vector.broadcast %314 : vector<1x1x48xf32> to vector<8x16x48xf32>
        %316 = arith.mulf %311, %315 : vector<8x16x48xf32>
        %317 = arith.addf %308, %316 : vector<8x16x48xf32>
        %c2_i32_198 = arith.constant 2 : i32
        %318 = arith.addi %199, %c2_i32_198 : i32
        %319 = arith.index_cast %318 : i32 to index
        %c3_199 = arith.constant 3 : index
        %c0_200 = arith.constant 0 : index
        %320 = vector.load %arg10[%319, %c3_199, %c0_200] : memref<20x20x48xf32, #tpu.memory_space<vmem>>, vector<8x16x48xf32>
        %321 = vector.extract_strided_slice %189 {offsets = [13, 0, 0], sizes = [1, 1, 48], strides = [1, 1, 1]} : vector<25x1x48xf32> to vector<1x1x48xf32>
        %322 = vector.shape_cast %321 : vector<1x1x48xf32> to vector<1x48xf32>
        %323 = vector.shape_cast %322 : vector<1x48xf32> to vector<1x1x48xf32>
        %324 = vector.broadcast %323 : vector<1x1x48xf32> to vector<8x16x48xf32>
        %325 = arith.mulf %320, %324 : vector<8x16x48xf32>
        %326 = arith.addf %317, %325 : vector<8x16x48xf32>
        %c2_i32_201 = arith.constant 2 : i32
        %327 = arith.addi %199, %c2_i32_201 : i32
        %328 = arith.index_cast %327 : i32 to index
        %c4_202 = arith.constant 4 : index
        %c0_203 = arith.constant 0 : index
        %329 = vector.load %arg10[%328, %c4_202, %c0_203] : memref<20x20x48xf32, #tpu.memory_space<vmem>>, vector<8x16x48xf32>
        %330 = vector.extract_strided_slice %189 {offsets = [14, 0, 0], sizes = [1, 1, 48], strides = [1, 1, 1]} : vector<25x1x48xf32> to vector<1x1x48xf32>
        %331 = vector.shape_cast %330 : vector<1x1x48xf32> to vector<1x48xf32>
        %332 = vector.shape_cast %331 : vector<1x48xf32> to vector<1x1x48xf32>
        %333 = vector.broadcast %332 : vector<1x1x48xf32> to vector<8x16x48xf32>
        %334 = arith.mulf %329, %333 : vector<8x16x48xf32>
        %335 = arith.addf %326, %334 : vector<8x16x48xf32>
        %c3_i32 = arith.constant 3 : i32
        %336 = arith.addi %199, %c3_i32 : i32
        %337 = arith.index_cast %336 : i32 to index
        %c0_204 = arith.constant 0 : index
        %c0_205 = arith.constant 0 : index
        %338 = vector.load %arg10[%337, %c0_204, %c0_205] : memref<20x20x48xf32, #tpu.memory_space<vmem>>, vector<8x16x48xf32>
        %339 = vector.extract_strided_slice %189 {offsets = [15, 0, 0], sizes = [1, 1, 48], strides = [1, 1, 1]} : vector<25x1x48xf32> to vector<1x1x48xf32>
        %340 = vector.shape_cast %339 : vector<1x1x48xf32> to vector<1x48xf32>
        %341 = vector.shape_cast %340 : vector<1x48xf32> to vector<1x1x48xf32>
        %342 = vector.broadcast %341 : vector<1x1x48xf32> to vector<8x16x48xf32>
        %343 = arith.mulf %338, %342 : vector<8x16x48xf32>
        %344 = arith.addf %335, %343 : vector<8x16x48xf32>
        %c3_i32_206 = arith.constant 3 : i32
        %345 = arith.addi %199, %c3_i32_206 : i32
        %346 = arith.index_cast %345 : i32 to index
        %c1_207 = arith.constant 1 : index
        %c0_208 = arith.constant 0 : index
        %347 = vector.load %arg10[%346, %c1_207, %c0_208] : memref<20x20x48xf32, #tpu.memory_space<vmem>>, vector<8x16x48xf32>
        %348 = vector.extract_strided_slice %189 {offsets = [16, 0, 0], sizes = [1, 1, 48], strides = [1, 1, 1]} : vector<25x1x48xf32> to vector<1x1x48xf32>
        %349 = vector.shape_cast %348 : vector<1x1x48xf32> to vector<1x48xf32>
        %350 = vector.shape_cast %349 : vector<1x48xf32> to vector<1x1x48xf32>
        %351 = vector.broadcast %350 : vector<1x1x48xf32> to vector<8x16x48xf32>
        %352 = arith.mulf %347, %351 : vector<8x16x48xf32>
        %353 = arith.addf %344, %352 : vector<8x16x48xf32>
        %c3_i32_209 = arith.constant 3 : i32
        %354 = arith.addi %199, %c3_i32_209 : i32
        %355 = arith.index_cast %354 : i32 to index
        %c2_210 = arith.constant 2 : index
        %c0_211 = arith.constant 0 : index
        %356 = vector.load %arg10[%355, %c2_210, %c0_211] : memref<20x20x48xf32, #tpu.memory_space<vmem>>, vector<8x16x48xf32>
        %357 = vector.extract_strided_slice %189 {offsets = [17, 0, 0], sizes = [1, 1, 48], strides = [1, 1, 1]} : vector<25x1x48xf32> to vector<1x1x48xf32>
        %358 = vector.shape_cast %357 : vector<1x1x48xf32> to vector<1x48xf32>
        %359 = vector.shape_cast %358 : vector<1x48xf32> to vector<1x1x48xf32>
        %360 = vector.broadcast %359 : vector<1x1x48xf32> to vector<8x16x48xf32>
        %361 = arith.mulf %356, %360 : vector<8x16x48xf32>
        %362 = arith.addf %353, %361 : vector<8x16x48xf32>
        %c3_i32_212 = arith.constant 3 : i32
        %363 = arith.addi %199, %c3_i32_212 : i32
        %364 = arith.index_cast %363 : i32 to index
        %c3_213 = arith.constant 3 : index
        %c0_214 = arith.constant 0 : index
        %365 = vector.load %arg10[%364, %c3_213, %c0_214] : memref<20x20x48xf32, #tpu.memory_space<vmem>>, vector<8x16x48xf32>
        %366 = vector.extract_strided_slice %189 {offsets = [18, 0, 0], sizes = [1, 1, 48], strides = [1, 1, 1]} : vector<25x1x48xf32> to vector<1x1x48xf32>
        %367 = vector.shape_cast %366 : vector<1x1x48xf32> to vector<1x48xf32>
        %368 = vector.shape_cast %367 : vector<1x48xf32> to vector<1x1x48xf32>
        %369 = vector.broadcast %368 : vector<1x1x48xf32> to vector<8x16x48xf32>
        %370 = arith.mulf %365, %369 : vector<8x16x48xf32>
        %371 = arith.addf %362, %370 : vector<8x16x48xf32>
        %c3_i32_215 = arith.constant 3 : i32
        %372 = arith.addi %199, %c3_i32_215 : i32
        %373 = arith.index_cast %372 : i32 to index
        %c4_216 = arith.constant 4 : index
        %c0_217 = arith.constant 0 : index
        %374 = vector.load %arg10[%373, %c4_216, %c0_217] : memref<20x20x48xf32, #tpu.memory_space<vmem>>, vector<8x16x48xf32>
        %375 = vector.extract_strided_slice %189 {offsets = [19, 0, 0], sizes = [1, 1, 48], strides = [1, 1, 1]} : vector<25x1x48xf32> to vector<1x1x48xf32>
        %376 = vector.shape_cast %375 : vector<1x1x48xf32> to vector<1x48xf32>
        %377 = vector.shape_cast %376 : vector<1x48xf32> to vector<1x1x48xf32>
        %378 = vector.broadcast %377 : vector<1x1x48xf32> to vector<8x16x48xf32>
        %379 = arith.mulf %374, %378 : vector<8x16x48xf32>
        %380 = arith.addf %371, %379 : vector<8x16x48xf32>
        %c4_i32_218 = arith.constant 4 : i32
        %381 = arith.addi %199, %c4_i32_218 : i32
        %382 = arith.index_cast %381 : i32 to index
        %c0_219 = arith.constant 0 : index
        %c0_220 = arith.constant 0 : index
        %383 = vector.load %arg10[%382, %c0_219, %c0_220] : memref<20x20x48xf32, #tpu.memory_space<vmem>>, vector<8x16x48xf32>
        %384 = vector.extract_strided_slice %189 {offsets = [20, 0, 0], sizes = [1, 1, 48], strides = [1, 1, 1]} : vector<25x1x48xf32> to vector<1x1x48xf32>
        %385 = vector.shape_cast %384 : vector<1x1x48xf32> to vector<1x48xf32>
        %386 = vector.shape_cast %385 : vector<1x48xf32> to vector<1x1x48xf32>
        %387 = vector.broadcast %386 : vector<1x1x48xf32> to vector<8x16x48xf32>
        %388 = arith.mulf %383, %387 : vector<8x16x48xf32>
        %389 = arith.addf %380, %388 : vector<8x16x48xf32>
        %c4_i32_221 = arith.constant 4 : i32
        %390 = arith.addi %199, %c4_i32_221 : i32
        %391 = arith.index_cast %390 : i32 to index
        %c1_222 = arith.constant 1 : index
        %c0_223 = arith.constant 0 : index
        %392 = vector.load %arg10[%391, %c1_222, %c0_223] : memref<20x20x48xf32, #tpu.memory_space<vmem>>, vector<8x16x48xf32>
        %393 = vector.extract_strided_slice %189 {offsets = [21, 0, 0], sizes = [1, 1, 48], strides = [1, 1, 1]} : vector<25x1x48xf32> to vector<1x1x48xf32>
        %394 = vector.shape_cast %393 : vector<1x1x48xf32> to vector<1x48xf32>
        %395 = vector.shape_cast %394 : vector<1x48xf32> to vector<1x1x48xf32>
        %396 = vector.broadcast %395 : vector<1x1x48xf32> to vector<8x16x48xf32>
        %397 = arith.mulf %392, %396 : vector<8x16x48xf32>
        %398 = arith.addf %389, %397 : vector<8x16x48xf32>
        %c4_i32_224 = arith.constant 4 : i32
        %399 = arith.addi %199, %c4_i32_224 : i32
        %400 = arith.index_cast %399 : i32 to index
        %c2_225 = arith.constant 2 : index
        %c0_226 = arith.constant 0 : index
        %401 = vector.load %arg10[%400, %c2_225, %c0_226] : memref<20x20x48xf32, #tpu.memory_space<vmem>>, vector<8x16x48xf32>
        %402 = vector.extract_strided_slice %189 {offsets = [22, 0, 0], sizes = [1, 1, 48], strides = [1, 1, 1]} : vector<25x1x48xf32> to vector<1x1x48xf32>
        %403 = vector.shape_cast %402 : vector<1x1x48xf32> to vector<1x48xf32>
        %404 = vector.shape_cast %403 : vector<1x48xf32> to vector<1x1x48xf32>
        %405 = vector.broadcast %404 : vector<1x1x48xf32> to vector<8x16x48xf32>
        %406 = arith.mulf %401, %405 : vector<8x16x48xf32>
        %407 = arith.addf %398, %406 : vector<8x16x48xf32>
        %c4_i32_227 = arith.constant 4 : i32
        %408 = arith.addi %199, %c4_i32_227 : i32
        %409 = arith.index_cast %408 : i32 to index
        %c3_228 = arith.constant 3 : index
        %c0_229 = arith.constant 0 : index
        %410 = vector.load %arg10[%409, %c3_228, %c0_229] : memref<20x20x48xf32, #tpu.memory_space<vmem>>, vector<8x16x48xf32>
        %411 = vector.extract_strided_slice %189 {offsets = [23, 0, 0], sizes = [1, 1, 48], strides = [1, 1, 1]} : vector<25x1x48xf32> to vector<1x1x48xf32>
        %412 = vector.shape_cast %411 : vector<1x1x48xf32> to vector<1x48xf32>
        %413 = vector.shape_cast %412 : vector<1x48xf32> to vector<1x1x48xf32>
        %414 = vector.broadcast %413 : vector<1x1x48xf32> to vector<8x16x48xf32>
        %415 = arith.mulf %410, %414 : vector<8x16x48xf32>
        %416 = arith.addf %407, %415 : vector<8x16x48xf32>
        %c4_i32_230 = arith.constant 4 : i32
        %417 = arith.addi %199, %c4_i32_230 : i32
        %418 = arith.index_cast %417 : i32 to index
        %c4_231 = arith.constant 4 : index
        %c0_232 = arith.constant 0 : index
        %419 = vector.load %arg10[%418, %c4_231, %c0_232] : memref<20x20x48xf32, #tpu.memory_space<vmem>>, vector<8x16x48xf32>
        %420 = vector.extract_strided_slice %189 {offsets = [24, 0, 0], sizes = [1, 1, 48], strides = [1, 1, 1]} : vector<25x1x48xf32> to vector<1x1x48xf32>
        %421 = vector.shape_cast %420 : vector<1x1x48xf32> to vector<1x48xf32>
        %422 = vector.shape_cast %421 : vector<1x48xf32> to vector<1x1x48xf32>
        %423 = vector.broadcast %422 : vector<1x1x48xf32> to vector<8x16x48xf32>
        %424 = arith.mulf %419, %423 : vector<8x16x48xf32>
        %425 = arith.addf %416, %424 : vector<8x16x48xf32>
        %cst_233 = arith.constant 0.000000e+00 : f32
        %426 = vector.broadcast %cst_233 : f32 to vector<8x16x48xf32>
        %427 = arith.cmpf ogt, %425, %426 : vector<8x16x48xf32>
        %cst_234 = arith.constant 1.000000e-01 : f32
        %428 = vector.broadcast %cst_234 : f32 to vector<8x16x48xf32>
        %429 = arith.mulf %428, %425 : vector<8x16x48xf32>
        %430 = arith.select %427, %425, %429 : vector<8x16x48xi1>, vector<8x16x48xf32>
        %431 = vector.shape_cast %430 : vector<8x16x48xf32> to vector<128x48xf32>
        %432 = arith.truncf %431 : vector<128x48xf32> to vector<128x48xbf16>
        %cst_235 = arith.constant dense<0.000000e+00> : vector<128x8xf32>
        %433 = tpu.matmul %432, %187, %cst_235 {dimension_numbers = #tpu.dot_dimension_numbers<[1], [0], [0], [1], [0, 0, 1, 1], [], []>} : vector<128x48xbf16>, vector<48x8xbf16>, vector<128x8xf32> -> vector<128x8xf32>
        %434 = arith.index_cast %199 : i32 to index
        %c0_236 = arith.constant 0 : index
        %c0_237 = arith.constant 0 : index
        %435 = vector.load %arg9[%434, %c0_236, %c0_237] : memref<16x16x8xf32, #tpu.memory_space<vmem>>, vector<8x16x8xf32>
        %436 = vector.shape_cast %435 : vector<8x16x8xf32> to vector<128x8xf32>
        %437 = arith.addf %436, %433 : vector<128x8xf32>
        %cst_238 = arith.constant 0.000000e+00 : f32
        %438 = vector.broadcast %cst_238 : f32 to vector<128x8xf32>
        %439 = arith.cmpf ogt, %437, %438 : vector<128x8xf32>
        %cst_239 = arith.constant 1.000000e-01 : f32
        %440 = vector.broadcast %cst_239 : f32 to vector<128x8xf32>
        %441 = arith.mulf %440, %437 : vector<128x8xf32>
        %442 = arith.select %439, %437, %441 : vector<128x8xi1>, vector<128x8xf32>
        %443 = vector.shape_cast %442 : vector<128x8xf32> to vector<8x16x8xf32>
        %444 = arith.index_cast %199 : i32 to index
        %c0_240 = arith.constant 0 : index
        %c0_241 = arith.constant 0 : index
        %445 = vector.load %arg9[%444, %c0_240, %c0_241] : memref<16x16x8xf32, #tpu.memory_space<vmem>>, vector<8x16x8xf32>
        tpu.vector_store %arg9[%444, %c0_240, %c0_241], %443 {strides = array<i32>} : memref<16x16x8xf32, #tpu.memory_space<vmem>>, vector<8x16x8xf32>,
      }
      %c2_i32_146 = arith.constant 2 : i32
      %c0_147 = arith.constant 0 : index
      %c0_148 = arith.constant 0 : index
      %c0_149 = arith.constant 0 : index
      %192 = vector.load %arg9[%c0_147, %c0_148, %c0_149] : memref<16x16x8xf32, #tpu.memory_space<vmem>>, vector<16x16x8xf32>
      %c0_150 = arith.constant 0 : index
      %c0_151 = arith.constant 0 : index
      %c0_152 = arith.constant 0 : index
      %193 = vector.load %arg8[%c0_150, %c0_151, %c0_152] : memref<16x16x8xf32, #tpu.memory_space<vmem>>, vector<16x16x8xf32>
      %194 = arith.addf %192, %193 : vector<16x16x8xf32>
      %c0_153 = arith.constant 0 : index
      %c0_154 = arith.constant 0 : index
      %c0_155 = arith.constant 0 : index
      %195 = vector.load %arg9[%c0_153, %c0_154, %c0_155] : memref<16x16x8xf32, #tpu.memory_space<vmem>>, vector<16x16x8xf32>
      tpu.vector_store %arg9[%c0_153, %c0_154, %c0_155], %194 {strides = array<i32>} : memref<16x16x8xf32, #tpu.memory_space<vmem>>, vector<16x16x8xf32>,
    }
    %c0_38 = arith.constant 0 : index
    %c0_39 = arith.constant 0 : index
    %c0_40 = arith.constant 0 : index
    %88 = vector.load %arg9[%c0_38, %c0_39, %c0_40] : memref<16x16x8xf32, #tpu.memory_space<vmem>>, vector<16x16x8xf32>
    %c1_41 = arith.constant 1 : index
    %c1_42 = arith.constant 1 : index
    %c0_43 = arith.constant 0 : index
    %89 = vector.load %arg11[%c1_41, %c1_42, %c0_43] : memref<18x18x8xf32, #tpu.memory_space<vmem>>, vector<16x16x8xf32>
    tpu.vector_store %arg11[%c1_41, %c1_42, %c0_43], %88 {strides = array<i32>} : memref<18x18x8xf32, #tpu.memory_space<vmem>>, vector<16x16x8xf32>,
    %cst_44 = arith.constant 0.000000e+00 : f32
    %90 = vector.broadcast %cst_44 : f32 to vector<256x1xf32>
    %c0_45 = arith.constant 0 : index
    %c0_46 = arith.constant 0 : index
    %c0_47 = arith.constant 0 : index
    %91 = vector.load %arg11[%c0_45, %c0_46, %c0_47] : memref<18x18x8xf32, #tpu.memory_space<vmem>>, vector<16x16x8xf32>
    %92 = vector.shape_cast %91 : vector<16x16x8xf32> to vector<256x8xf32>
    %c0_48 = arith.constant 0 : index
    %c0_49 = arith.constant 0 : index
    %c0_50 = arith.constant 0 : index
    %93 = vector.load %arg3[%c0_48, %c0_49, %c0_50] : memref<9x1x8xf32, #tpu.memory_space<vmem>>, vector<1x1x8xf32>
    %94 = vector.shape_cast %93 : vector<1x1x8xf32> to vector<1x8xf32>
    %95 = vector.broadcast %94 : vector<1x8xf32> to vector<256x8xf32>
    %96 = arith.mulf %92, %95 : vector<256x8xf32>
    %cst_51 = arith.constant dense<0.000000e+00> : vector<256xf32>
    %97 = vector.multi_reduction <add>, %96, %cst_51 [1] : vector<256x8xf32> to vector<256xf32>
    %98 = vector.shape_cast %97 : vector<256xf32> to vector<256x1xf32>
    %99 = arith.addf %90, %98 : vector<256x1xf32>
    %c0_52 = arith.constant 0 : index
    %c1_53 = arith.constant 1 : index
    %c0_54 = arith.constant 0 : index
    %100 = vector.load %arg11[%c0_52, %c1_53, %c0_54] : memref<18x18x8xf32, #tpu.memory_space<vmem>>, vector<16x16x8xf32>
    %101 = vector.shape_cast %100 : vector<16x16x8xf32> to vector<256x8xf32>
    %c1_55 = arith.constant 1 : index
    %c0_56 = arith.constant 0 : index
    %c0_57 = arith.constant 0 : index
    %102 = vector.load %arg3[%c1_55, %c0_56, %c0_57] : memref<9x1x8xf32, #tpu.memory_space<vmem>>, vector<1x1x8xf32>
    %103 = vector.shape_cast %102 : vector<1x1x8xf32> to vector<1x8xf32>
    %104 = vector.broadcast %103 : vector<1x8xf32> to vector<256x8xf32>
    %105 = arith.mulf %101, %104 : vector<256x8xf32>
    %cst_58 = arith.constant dense<0.000000e+00> : vector<256xf32>
    %106 = vector.multi_reduction <add>, %105, %cst_58 [1] : vector<256x8xf32> to vector<256xf32>
    %107 = vector.shape_cast %106 : vector<256xf32> to vector<256x1xf32>
    %108 = arith.addf %99, %107 : vector<256x1xf32>
    %c0_59 = arith.constant 0 : index
    %c2_60 = arith.constant 2 : index
    %c0_61 = arith.constant 0 : index
    %109 = vector.load %arg11[%c0_59, %c2_60, %c0_61] : memref<18x18x8xf32, #tpu.memory_space<vmem>>, vector<16x16x8xf32>
    %110 = vector.shape_cast %109 : vector<16x16x8xf32> to vector<256x8xf32>
    %c2_62 = arith.constant 2 : index
    %c0_63 = arith.constant 0 : index
    %c0_64 = arith.constant 0 : index
    %111 = vector.load %arg3[%c2_62, %c0_63, %c0_64] : memref<9x1x8xf32, #tpu.memory_space<vmem>>, vector<1x1x8xf32>
    %112 = vector.shape_cast %111 : vector<1x1x8xf32> to vector<1x8xf32>
    %113 = vector.broadcast %112 : vector<1x8xf32> to vector<256x8xf32>
    %114 = arith.mulf %110, %113 : vector<256x8xf32>
    %cst_65 = arith.constant dense<0.000000e+00> : vector<256xf32>
    %115 = vector.multi_reduction <add>, %114, %cst_65 [1] : vector<256x8xf32> to vector<256xf32>
    %116 = vector.shape_cast %115 : vector<256xf32> to vector<256x1xf32>
    %117 = arith.addf %108, %116 : vector<256x1xf32>
    %c1_66 = arith.constant 1 : index
    %c0_67 = arith.constant 0 : index
    %c0_68 = arith.constant 0 : index
    %118 = vector.load %arg11[%c1_66, %c0_67, %c0_68] : memref<18x18x8xf32, #tpu.memory_space<vmem>>, vector<16x16x8xf32>
    %119 = vector.shape_cast %118 : vector<16x16x8xf32> to vector<256x8xf32>
    %c3_69 = arith.constant 3 : index
    %c0_70 = arith.constant 0 : index
    %c0_71 = arith.constant 0 : index
    %120 = vector.load %arg3[%c3_69, %c0_70, %c0_71] : memref<9x1x8xf32, #tpu.memory_space<vmem>>, vector<1x1x8xf32>
    %121 = vector.shape_cast %120 : vector<1x1x8xf32> to vector<1x8xf32>
    %122 = vector.broadcast %121 : vector<1x8xf32> to vector<256x8xf32>
    %123 = arith.mulf %119, %122 : vector<256x8xf32>
    %cst_72 = arith.constant dense<0.000000e+00> : vector<256xf32>
    %124 = vector.multi_reduction <add>, %123, %cst_72 [1] : vector<256x8xf32> to vector<256xf32>
    %125 = vector.shape_cast %124 : vector<256xf32> to vector<256x1xf32>
    %126 = arith.addf %117, %125 : vector<256x1xf32>
    %c1_73 = arith.constant 1 : index
    %c1_74 = arith.constant 1 : index
    %c0_75 = arith.constant 0 : index
    %127 = vector.load %arg11[%c1_73, %c1_74, %c0_75] : memref<18x18x8xf32, #tpu.memory_space<vmem>>, vector<16x16x8xf32>
    %128 = vector.shape_cast %127 : vector<16x16x8xf32> to vector<256x8xf32>
    %c4_76 = arith.constant 4 : index
    %c0_77 = arith.constant 0 : index
    %c0_78 = arith.constant 0 : index
    %129 = vector.load %arg3[%c4_76, %c0_77, %c0_78] : memref<9x1x8xf32, #tpu.memory_space<vmem>>, vector<1x1x8xf32>
    %130 = vector.shape_cast %129 : vector<1x1x8xf32> to vector<1x8xf32>
    %131 = vector.broadcast %130 : vector<1x8xf32> to vector<256x8xf32>
    %132 = arith.mulf %128, %131 : vector<256x8xf32>
    %cst_79 = arith.constant dense<0.000000e+00> : vector<256xf32>
    %133 = vector.multi_reduction <add>, %132, %cst_79 [1] : vector<256x8xf32> to vector<256xf32>
    %134 = vector.shape_cast %133 : vector<256xf32> to vector<256x1xf32>
    %135 = arith.addf %126, %134 : vector<256x1xf32>
    %c1_80 = arith.constant 1 : index
    %c2_81 = arith.constant 2 : index
    %c0_82 = arith.constant 0 : index
    %136 = vector.load %arg11[%c1_80, %c2_81, %c0_82] : memref<18x18x8xf32, #tpu.memory_space<vmem>>, vector<16x16x8xf32>
    %137 = vector.shape_cast %136 : vector<16x16x8xf32> to vector<256x8xf32>
    %c5_83 = arith.constant 5 : index
    %c0_84 = arith.constant 0 : index
    %c0_85 = arith.constant 0 : index
    %138 = vector.load %arg3[%c5_83, %c0_84, %c0_85] : memref<9x1x8xf32, #tpu.memory_space<vmem>>, vector<1x1x8xf32>
    %139 = vector.shape_cast %138 : vector<1x1x8xf32> to vector<1x8xf32>
    %140 = vector.broadcast %139 : vector<1x8xf32> to vector<256x8xf32>
    %141 = arith.mulf %137, %140 : vector<256x8xf32>
    %cst_86 = arith.constant dense<0.000000e+00> : vector<256xf32>
    %142 = vector.multi_reduction <add>, %141, %cst_86 [1] : vector<256x8xf32> to vector<256xf32>
    %143 = vector.shape_cast %142 : vector<256xf32> to vector<256x1xf32>
    %144 = arith.addf %135, %143 : vector<256x1xf32>
    %c2_87 = arith.constant 2 : index
    %c0_88 = arith.constant 0 : index
    %c0_89 = arith.constant 0 : index
    %145 = vector.load %arg11[%c2_87, %c0_88, %c0_89] : memref<18x18x8xf32, #tpu.memory_space<vmem>>, vector<16x16x8xf32>
    %146 = vector.shape_cast %145 : vector<16x16x8xf32> to vector<256x8xf32>
    %c6_90 = arith.constant 6 : index
    %c0_91 = arith.constant 0 : index
    %c0_92 = arith.constant 0 : index
    %147 = vector.load %arg3[%c6_90, %c0_91, %c0_92] : memref<9x1x8xf32, #tpu.memory_space<vmem>>, vector<1x1x8xf32>
    %148 = vector.shape_cast %147 : vector<1x1x8xf32> to vector<1x8xf32>
    %149 = vector.broadcast %148 : vector<1x8xf32> to vector<256x8xf32>
    %150 = arith.mulf %146, %149 : vector<256x8xf32>
    %cst_93 = arith.constant dense<0.000000e+00> : vector<256xf32>
    %151 = vector.multi_reduction <add>, %150, %cst_93 [1] : vector<256x8xf32> to vector<256xf32>
    %152 = vector.shape_cast %151 : vector<256xf32> to vector<256x1xf32>
    %153 = arith.addf %144, %152 : vector<256x1xf32>
    %c2_94 = arith.constant 2 : index
    %c1_95 = arith.constant 1 : index
    %c0_96 = arith.constant 0 : index
    %154 = vector.load %arg11[%c2_94, %c1_95, %c0_96] : memref<18x18x8xf32, #tpu.memory_space<vmem>>, vector<16x16x8xf32>
    %155 = vector.shape_cast %154 : vector<16x16x8xf32> to vector<256x8xf32>
    %c7_97 = arith.constant 7 : index
    %c0_98 = arith.constant 0 : index
    %c0_99 = arith.constant 0 : index
    %156 = vector.load %arg3[%c7_97, %c0_98, %c0_99] : memref<9x1x8xf32, #tpu.memory_space<vmem>>, vector<1x1x8xf32>
    %157 = vector.shape_cast %156 : vector<1x1x8xf32> to vector<1x8xf32>
    %158 = vector.broadcast %157 : vector<1x8xf32> to vector<256x8xf32>
    %159 = arith.mulf %155, %158 : vector<256x8xf32>
    %cst_100 = arith.constant dense<0.000000e+00> : vector<256xf32>
    %160 = vector.multi_reduction <add>, %159, %cst_100 [1] : vector<256x8xf32> to vector<256xf32>
    %161 = vector.shape_cast %160 : vector<256xf32> to vector<256x1xf32>
    %162 = arith.addf %153, %161 : vector<256x1xf32>
    %c2_101 = arith.constant 2 : index
    %c2_102 = arith.constant 2 : index
    %c0_103 = arith.constant 0 : index
    %163 = vector.load %arg11[%c2_101, %c2_102, %c0_103] : memref<18x18x8xf32, #tpu.memory_space<vmem>>, vector<16x16x8xf32>
    %164 = vector.shape_cast %163 : vector<16x16x8xf32> to vector<256x8xf32>
    %c8_104 = arith.constant 8 : index
    %c0_105 = arith.constant 0 : index
    %c0_106 = arith.constant 0 : index
    %165 = vector.load %arg3[%c8_104, %c0_105, %c0_106] : memref<9x1x8xf32, #tpu.memory_space<vmem>>, vector<1x1x8xf32>
    %166 = vector.shape_cast %165 : vector<1x1x8xf32> to vector<1x8xf32>
    %167 = vector.broadcast %166 : vector<1x8xf32> to vector<256x8xf32>
    %168 = arith.mulf %164, %167 : vector<256x8xf32>
    %cst_107 = arith.constant dense<0.000000e+00> : vector<256xf32>
    %169 = vector.multi_reduction <add>, %168, %cst_107 [1] : vector<256x8xf32> to vector<256xf32>
    %170 = vector.shape_cast %169 : vector<256xf32> to vector<256x1xf32>
    %171 = arith.addf %162, %170 : vector<256x1xf32>
    %172 = vector.shape_cast %171 : vector<256x1xf32> to vector<16x16x1xf32>
    %c0_108 = arith.constant 0 : index
    %c0_109 = arith.constant 0 : index
    %c0_110 = arith.constant 0 : index
    %c0_111 = arith.constant 0 : index
    %173 = vector.load %arg7[%c0_108, %c0_109, %c0_110, %c0_111] : memref<1x16x16x1xf32, #tpu.memory_space<vmem>>, vector<1x16x16x1xf32>
    %174 = vector.shape_cast %173 : vector<1x16x16x1xf32> to vector<16x16x1xf32>
    %175 = vector.shape_cast %172 : vector<16x16x1xf32> to vector<1x16x16x1xf32>
    tpu.vector_store %arg7[%c0_108, %c0_109, %c0_110, %c0_111], %175 {strides = array<i32>} : memref<1x16x16x1xf32, #tpu.memory_space<vmem>>, vector<1x16x16x1xf32>,
    return
  }
  func.func @transform_0(%arg0: i32) -> (i32, i32, i32, i32) {
    %c0_i32 = arith.constant 0 : i32
    %c0_i32_0 = arith.constant 0 : i32
    %c0_i32_1 = arith.constant 0 : i32
    %c0_i32_2 = arith.constant 0 : i32
    return %arg0, %c0_i32, %c0_i32_0, %c0_i32_1 : i32, i32, i32, i32
  }
  func.func @transform_1(%arg0: i32) -> (i32, i32, i32) {
    %c0_i32 = arith.constant 0 : i32
    %c0_i32_0 = arith.constant 0 : i32
    %c0_i32_1 = arith.constant 0 : i32
    %c0_i32_2 = arith.constant 0 : i32
    return %c0_i32, %c0_i32_0, %c0_i32_1 : i32, i32, i32
  }
  func.func @transform_2(%arg0: i32) -> (i32, i32, i32) {
    %c0_i32 = arith.constant 0 : i32
    %c0_i32_0 = arith.constant 0 : i32
    %c0_i32_1 = arith.constant 0 : i32
    %c0_i32_2 = arith.constant 0 : i32
    return %c0_i32, %c0_i32_0, %c0_i32_1 : i32, i32, i32
  }
  func.func @transform_3(%arg0: i32) -> (i32, i32, i32) {
    %c0_i32 = arith.constant 0 : i32
    %c0_i32_0 = arith.constant 0 : i32
    %c0_i32_1 = arith.constant 0 : i32
    %c0_i32_2 = arith.constant 0 : i32
    return %c0_i32, %c0_i32_0, %c0_i32_1 : i32, i32, i32
  }
  func.func @transform_4(%arg0: i32) -> (i32, i32, i32, i32) {
    %c0_i32 = arith.constant 0 : i32
    %c0_i32_0 = arith.constant 0 : i32
    %c0_i32_1 = arith.constant 0 : i32
    %c0_i32_2 = arith.constant 0 : i32
    %c0_i32_3 = arith.constant 0 : i32
    return %c0_i32, %c0_i32_0, %c0_i32_1, %c0_i32_2 : i32, i32, i32, i32
  }
  func.func @transform_5(%arg0: i32) -> (i32, i32, i32) {
    %c0_i32 = arith.constant 0 : i32
    %c0_i32_0 = arith.constant 0 : i32
    %c0_i32_1 = arith.constant 0 : i32
    %c0_i32_2 = arith.constant 0 : i32
    return %c0_i32, %c0_i32_0, %c0_i32_1 : i32, i32, i32
  }
  func.func @transform_6(%arg0: i32) -> (i32, i32, i32, i32) {
    %c0_i32 = arith.constant 0 : i32
    %c0_i32_0 = arith.constant 0 : i32
    %c0_i32_1 = arith.constant 0 : i32
    %c0_i32_2 = arith.constant 0 : i32
    return %arg0, %c0_i32, %c0_i32_0, %c0_i32_1 : i32, i32, i32, i32
  }
}

</mosaic_0001>

<llo_original>
// kernel: predictor_forward.1
$region0: #{predictor_forward.1}
  #allocation0 [shape = 'u32[]', space=smem, size = 0x4, offset = 0x4, fixed_abs, tag = 'smem constant byte address 0x4 - core index']
  #allocation1 [shape = 'u32[144,128]{1,0:T(1,128)}', space=vmem, size = 0x12000, scoped, tag = 'internal scratch']
  #allocation2 [shape = 'f32[16,16,8]{2,1,0:T(8,128)}', space=vmem, size = 0x20000, scoped, tag = 'scratch operand']
  #allocation3 [shape = 'f32[16,16,8]{2,1,0:T(8,128)}', space=vmem, size = 0x20000, scoped, tag = 'scratch operand']
  #allocation4 [shape = 'f32[20,20,48]{2,1,0:T(8,128)}', space=vmem, size = 0x3c000, scoped, tag = 'scratch operand']
  #allocation5 [shape = 'f32[18,18,8]{2,1,0:T(8,128)}', space=vmem, size = 0x36000, scoped, tag = 'scratch operand']
  %s0 = inlined_call_operand.vmem [shape: f32[2,18,18,1], index: 0, kind: input, shape index: {}]
  %s1 = inlined_call_operand.vmem [shape: f32[9,1,8], index: 1, kind: input, shape index: {}]
  %s2 = inlined_call_operand.vmem [shape: f32[9,1,8], index: 2, kind: input, shape index: {}]
  %s3 = inlined_call_operand.vmem [shape: bf16[2,8,48], index: 3, kind: input, shape index: {}]
  %s4 = inlined_call_operand.vmem [shape: f32[2,25,1,48], index: 4, kind: input, shape index: {}]
  %s5 = inlined_call_operand.vmem [shape: bf16[2,48,8], index: 5, kind: input, shape index: {}]
  %s6 = inlined_call_operand.vmem [shape: f32[2,16,16,1], index: 6, kind: output, shape index: {}]
  %s7 = sld [smem:[#allocation0]]
  $region92: #{predictor_forward.1} parent=0
    _
  %s9 = ssub.s32 1, %s7
  %s10 = scalar_select 0, %s9, %s7
  loop: start=0, step=1, limit=4
  $region2: #{predictor_forward.1} parent=0 // loop_pre_header
    _
  $region3: #{predictor_forward.1} parent=0 // loop_header
    %s12 = sphi 0, %s16
    %p13 = scmp.ge.s32.totalorder %s12, 4
    %s22 = sphi 0, %s24
    %s25 = sphi 0, %s22
    %s26 = sphi 0, %s25
    %s42 = sphi 0, %s26
    %s46 = sphi 0, %s46
    %s48 = sphi 0, %s46
    %s49 = sphi 0, %s48
    %s63 = sphi 0, %s49
    %s67 = sphi 0, %s67
    %s69 = sphi 0, %s67
    %s70 = sphi 0, %s69
    %s84 = sphi 0, %s70
    %s88 = sphi 0, %s88
    %s90 = sphi 0, %s88
    %s91 = sphi 0, %s90
    %s105 = sphi 0, %s91
    %s109 = sphi 0, %s109
    %s111 = sphi 0, %s109
    %s112 = sphi 0, %s111
    %s126 = sphi 0, %s112
    %s130 = sphi 0, %s130
    %s132 = sphi 0, %s130
    %s133 = sphi 0, %s132
    %s147 = sphi 0, %s133
    %s153 = sphi 0, %s155
    %s156 = sphi 0, %s153
    %s157 = sphi 0, %s156
    %s173 = sphi 0, %s157
  $region4: #{predictor_forward.1} parent=0 // loop_header_branch
    %15 = sbr.rel (%p13) target = $region8
  $region5: #{predictor_forward.1} parent=0 // loop_body
    %s17 = ssub.s32 %s12, 1
    %s18 = ssub.s32 %s12, 2
    %s19 = sadd.s32 %s12, 1
    %s20 = ssub.s32 %s12, %s19
    %p21 = scmp.eq.s32.totalorder %s20, 0
    %s23 = sadd.s32 %s22, 1
    %s24 = scalar_select %p21, %s22, %s23
    %p27 = pneg %p21
    %p28 = scmp.eq.s32.totalorder %s12, 1
    %p29 = por %p27, %p28
    %p30 = scmp.ne.s32.totalorder %s22, %s25
    %p31 = scmp.eq.s32.totalorder %s12, 0
    %p32 = por %p30, %p31
    %p33 = scmp.ne.s32.totalorder %s22, %s25
    %p34 = scmp.eq.s32.totalorder %s17, 1
    %p35 = por %p33, %p34
    %p36 = scmp.ne.s32.totalorder %s25, %s26
    %p37 = scmp.eq.s32.totalorder %s17, 0
    %p38 = por %p36, %p37
    %p39 = scmp.ne.s32.totalorder %s25, %s26
    %p40 = scmp.eq.s32.totalorder %s18, 1
    %p41 = por %p39, %p40
    %p43 = scmp.ne.s32.totalorder %s26, %s42
    %p44 = scmp.eq.s32.totalorder %s18, 0
    %p45 = por %p43, %p44
    %s47 = sadd.s32 %s46, 1
    %p50 = scmp.eq.s32.totalorder %s12, 1
    %p51 = scmp.ne.s32.totalorder %s46, %s48
    %p52 = scmp.eq.s32.totalorder %s12, 0
    %p53 = por %p51, %p52
    %p54 = scmp.ne.s32.totalorder %s46, %s48
    %p55 = scmp.eq.s32.totalorder %s17, 1
    %p56 = por %p54, %p55
    %p57 = scmp.ne.s32.totalorder %s48, %s49
    %p58 = scmp.eq.s32.totalorder %s17, 0
    %p59 = por %p57, %p58
    %p60 = scmp.ne.s32.totalorder %s48, %s49
    %p61 = scmp.eq.s32.totalorder %s18, 1
    %p62 = por %p60, %p61
    %p64 = scmp.ne.s32.totalorder %s49, %s63
    %p65 = scmp.eq.s32.totalorder %s18, 0
    %p66 = por %p64, %p65
    %s68 = sadd.s32 %s67, 1
    %p71 = scmp.eq.s32.totalorder %s12, 1
    %p72 = scmp.ne.s32.totalorder %s67, %s69
    %p73 = scmp.eq.s32.totalorder %s12, 0
    %p74 = por %p72, %p73
    %p75 = scmp.ne.s32.totalorder %s67, %s69
    %p76 = scmp.eq.s32.totalorder %s17, 1
    %p77 = por %p75, %p76
    %p78 = scmp.ne.s32.totalorder %s69, %s70
    %p79 = scmp.eq.s32.totalorder %s17, 0
    %p80 = por %p78, %p79
    %p81 = scmp.ne.s32.totalorder %s69, %s70
    %p82 = scmp.eq.s32.totalorder %s18, 1
    %p83 = por %p81, %p82
    %p85 = scmp.ne.s32.totalorder %s70, %s84
    %p86 = scmp.eq.s32.totalorder %s18, 0
    %p87 = por %p85, %p86
    %s89 = sadd.s32 %s88, 1
    %p92 = scmp.eq.s32.totalorder %s12, 1
    %p93 = scmp.ne.s32.totalorder %s88, %s90
    %p94 = scmp.eq.s32.totalorder %s12, 0
    %p95 = por %p93, %p94
    %p96 = scmp.ne.s32.totalorder %s88, %s90
    %p97 = scmp.eq.s32.totalorder %s17, 1
    %p98 = por %p96, %p97
    %p99 = scmp.ne.s32.totalorder %s90, %s91
    %p100 = scmp.eq.s32.totalorder %s17, 0
    %p101 = por %p99, %p100
    %p102 = scmp.ne.s32.totalorder %s90, %s91
    %p103 = scmp.eq.s32.totalorder %s18, 1
    %p104 = por %p102, %p103
    %p106 = scmp.ne.s32.totalorder %s91, %s105
    %p107 = scmp.eq.s32.totalorder %s18, 0
    %p108 = por %p106, %p107
    %s110 = sadd.s32 %s109, 1
    %p113 = scmp.eq.s32.totalorder %s12, 1
    %p114 = scmp.ne.s32.totalorder %s109, %s111
    %p115 = scmp.eq.s32.totalorder %s12, 0
    %p116 = por %p114, %p115
    %p117 = scmp.ne.s32.totalorder %s109, %s111
    %p118 = scmp.eq.s32.totalorder %s17, 1
    %p119 = por %p117, %p118
    %p120 = scmp.ne.s32.totalorder %s111, %s112
    %p121 = scmp.eq.s32.totalorder %s17, 0
    %p122 = por %p120, %p121
    %p123 = scmp.ne.s32.totalorder %s111, %s112
    %p124 = scmp.eq.s32.totalorder %s18, 1
    %p125 = por %p123, %p124
    %p127 = scmp.ne.s32.totalorder %s112, %s126
    %p128 = scmp.eq.s32.totalorder %s18, 0
    %p129 = por %p127, %p128
    %s131 = sadd.s32 %s130, 1
    %p134 = scmp.eq.s32.totalorder %s12, 1
    %p135 = scmp.ne.s32.totalorder %s130, %s132
    %p136 = scmp.eq.s32.totalorder %s12, 0
    %p137 = por %p135, %p136
    %p138 = scmp.ne.s32.totalorder %s130, %s132
    %p139 = scmp.eq.s32.totalorder %s17, 1
    %p140 = por %p138, %p139
    %p141 = scmp.ne.s32.totalorder %s132, %s133
    %p142 = scmp.eq.s32.totalorder %s17, 0
    %p143 = por %p141, %p142
    %p144 = scmp.ne.s32.totalorder %s132, %s133
    %p145 = scmp.eq.s32.totalorder %s18, 1
    %p146 = por %p144, %p145
    %p148 = scmp.ne.s32.totalorder %s133, %s147
    %p149 = scmp.eq.s32.totalorder %s18, 0
    %p150 = por %p148, %p149
    %s151 = ssub.s32 %s12, %s19
    %p152 = scmp.eq.s32.totalorder %s151, 0
    %s154 = sadd.s32 %s153, 1
    %s155 = scalar_select %p152, %s153, %s154
    %p158 = pneg %p152
    %p159 = scmp.eq.s32.totalorder %s12, 1
    %p160 = por %p158, %p159
    %p161 = scmp.ne.s32.totalorder %s153, %s156
    %p162 = scmp.eq.s32.totalorder %s12, 0
    %p163 = por %p161, %p162
    %p164 = scmp.ne.s32.totalorder %s153, %s156
    %p165 = scmp.eq.s32.totalorder %s17, 1
    %p166 = por %p164, %p165
    %p167 = scmp.ne.s32.totalorder %s156, %s157
    %p168 = scmp.eq.s32.totalorder %s17, 0
    %p169 = por %p167, %p168
    %p170 = scmp.ne.s32.totalorder %s156, %s157
    %p171 = scmp.eq.s32.totalorder %s18, 1
    %p172 = por %p170, %p171
    %p174 = scmp.ne.s32.totalorder %s157, %s173
    %p175 = scmp.eq.s32.totalorder %s18, 0
    %p176 = por %p174, %p175
    %p177 = scmp.le.s32.totalorder 1, %s12
    %p178 = scmp.lt.s32.totalorder %s12, 3
    %p179 = pnand %p177, %p178
    %p180 = pneg %p179
    // Predicated region
    $region9: #{predictor_forward.1} parent=5 // pred_check
      _
    $region10: #{predictor_forward.1} parent=5 // pred_check_branch
      %182 = sbr.rel (%p179) target = $region12
    $region11: #{predictor_forward.1} parent=5 // pred_region
      %s183 = ssub.s32 %s12, 1
      // Predicated region
      $region13: #{predictor_forward.1} parent=11 // pred_check
        %p184 = pneg %p59
      $region14: #{predictor_forward.1} parent=11 // pred_check_branch
        %186 = sbr.rel (%p184) target = $region16
      $region15: #{predictor_forward.1} parent=11 // pred_region
        _
      $region16: #{predictor_forward.1} parent=11 // pred_fallthru
        _
      // Predicated region
      $region17: #{predictor_forward.1} parent=11 // pred_check
        %p187 = pneg %p80
      $region18: #{predictor_forward.1} parent=11 // pred_check_branch
        %189 = sbr.rel (%p187) target = $region20
      $region19: #{predictor_forward.1} parent=11 // pred_region
        _
      $region20: #{predictor_forward.1} parent=11 // pred_fallthru
        _
      // Predicated region
      $region21: #{predictor_forward.1} parent=11 // pred_check
        %p190 = pneg %p101
      $region22: #{predictor_forward.1} parent=11 // pred_check_branch
        %192 = sbr.rel (%p190) target = $region24
      $region23: #{predictor_forward.1} parent=11 // pred_region
        _
      $region24: #{predictor_forward.1} parent=11 // pred_fallthru
        _
      // Predicated region
      $region25: #{predictor_forward.1} parent=11 // pred_check
        %p193 = pneg %p122
      $region26: #{predictor_forward.1} parent=11 // pred_check_branch
        %195 = sbr.rel (%p193) target = $region28
      $region27: #{predictor_forward.1} parent=11 // pred_region
        _
      $region28: #{predictor_forward.1} parent=11 // pred_fallthru
        _
      // Predicated region
      $region29: #{predictor_forward.1} parent=11 // pred_check
        %p196 = pneg %p143
      $region30: #{predictor_forward.1} parent=11 // pred_check_branch
        %198 = sbr.rel (%p196) target = $region32
      $region31: #{predictor_forward.1} parent=11 // pred_region
        _
      $region32: #{predictor_forward.1} parent=11 // pred_fallthru
        _
    $region12: #{predictor_forward.1} parent=5 // pred_fallthru
      _
    %p199 = scmp.lt.s32.totalorder %s12, 2
    // Predicated region
    $region33: #{predictor_forward.1} parent=5 // pred_check
      %p200 = pneg %p199
    $region34: #{predictor_forward.1} parent=5 // pred_check_branch
      %202 = sbr.rel (%p200) target = $region36
    $region35: #{predictor_forward.1} parent=5 // pred_region
      // Predicated region
      $region37: #{predictor_forward.1} parent=35 // pred_check
        %p203 = pneg %p32
      $region38: #{predictor_forward.1} parent=35 // pred_check_branch
        %205 = sbr.rel (%p203) target = $region40
      $region39: #{predictor_forward.1} parent=35 // pred_region
        %p206 = scmp.lt.s32.totalorder %s12, 1
        %s207 = scalar_select %p206, %s12, 1
        %s208 = smul.addr %s207, 54
        %s209 = smul.addr %s208, 8
        %s210 = scalar_lea.vmem %s0, %s209
      $region40: #{predictor_forward.1} parent=35 // pred_fallthru
        _
    $region36: #{predictor_forward.1} parent=5 // pred_fallthru
      _
    %p211 = scmp.le.s32.totalorder 1, %s12
    %p212 = scmp.lt.s32.totalorder %s12, 3
    %p213 = pnand %p211, %p212
    %p214 = pneg %p213
    // Predicated region
    $region41: #{predictor_forward.1} parent=5 // pred_check
      _
    $region42: #{predictor_forward.1} parent=5 // pred_check_branch
      %216 = sbr.rel (%p213) target = $region44
    $region43: #{predictor_forward.1} parent=5 // pred_region
      %s217 = ssub.s32 %s12, 1
      %p218 = scmp.lt.s32.totalorder %s17, 1
      %s219 = scalar_select %p218, %s17, 1
      %s220 = smul.addr %s219, 54
      %s221 = smul.addr %s220, 8
      %s222 = scalar_lea.vmem %s0, %s221
      %p223 = pneg %p38
      %p224 = pneg %p35
      %p225 = pneg %p59
      %p226 = pneg %p56
      %p227 = pneg %p80
      %p228 = pneg %p77
      %p229 = pneg %p101
      %p230 = pneg %p98
      %p231 = pneg %p122
      %p232 = pneg %p119
      %p233 = pneg %p143
      %p234 = pneg %p140
      %p235 = pneg %p169
      %p236 = pneg %p166
      %p237 = scmp.lt.s32.totalorder %s17, 1
      %s238 = scalar_select %p237, %s17, 1
      %s239 = smul.addr %s238, 32
      %s240 = smul.addr %s239, 8
      %s241 = scalar_lea.vmem %s6, %s240
      %p242 = scmp.lt.s32.totalorder %s17, 1
      %s243 = scalar_select %p242, %s17, 1
      %s244 = smul.addr %s243, 54
      %s245 = smul.addr %s244, 8
      %s246 = scalar_lea.vmem %s0, %s245
      %p247 = scmp.lt.s32.totalorder %s17, 1
      %s248 = scalar_select %p247, %s17, 1
      %s249 = smul.addr %s248, 32
      %s250 = smul.addr %s249, 8
      %s251 = scalar_lea.vmem %s6, %s250
      %vm253 = vcmask 392192
      %254 = vst.msk [vmem:[#allocation4] sm:$0xff] %vm253, 0.0
      %255 = vst.msk [vmem:[#allocation4 + $0x8] sm:$0xff] %vm253, 0.0
      %vm256 = vcmask 388096
      %257 = vst.msk [vmem:[#allocation4 + $0x10] sm:$0xf] %vm256, 0.0
      %258 = vst.msk [vmem:[#allocation4 + $0x18] sm:$0xff] %vm253, 0.0
      %259 = vst.msk [vmem:[#allocation4 + $0x20] sm:$0xff] %vm253, 0.0
      %260 = vst.msk [vmem:[#allocation4 + $0x28] sm:$0xf] %vm256, 0.0
      %261 = vst.msk [vmem:[#allocation4 + $0x30] sm:$0xff] %vm253, 0.0
      %262 = vst.msk [vmem:[#allocation4 + $0x38] sm:$0xff] %vm253, 0.0
      %263 = vst.msk [vmem:[#allocation4 + $0x40] sm:$0xf] %vm256, 0.0
      %264 = vst.msk [vmem:[#allocation4 + $0x48] sm:$0xff] %vm253, 0.0
      %265 = vst.msk [vmem:[#allocation4 + $0x50] sm:$0xff] %vm253, 0.0
      %266 = vst.msk [vmem:[#allocation4 + $0x58] sm:$0xf] %vm256, 0.0
      %267 = vst.msk [vmem:[#allocation4 + $0x60] sm:$0xff] %vm253, 0.0
      %268 = vst.msk [vmem:[#allocation4 + $0x68] sm:$0xff] %vm253, 0.0
      %269 = vst.msk [vmem:[#allocation4 + $0x70] sm:$0xf] %vm256, 0.0
      %270 = vst.msk [vmem:[#allocation4 + $0x78] sm:$0xff] %vm253, 0.0
      %271 = vst.msk [vmem:[#allocation4 + $0x80] sm:$0xff] %vm253, 0.0
      %272 = vst.msk [vmem:[#allocation4 + $0x88] sm:$0xf] %vm256, 0.0
      %273 = vst.msk [vmem:[#allocation4 + $0x90] sm:$0xff] %vm253, 0.0
      %274 = vst.msk [vmem:[#allocation4 + $0x98] sm:$0xff] %vm253, 0.0
      %275 = vst.msk [vmem:[#allocation4 + $0xa0] sm:$0xf] %vm256, 0.0
      %276 = vst.msk [vmem:[#allocation4 + $0xa8] sm:$0xff] %vm253, 0.0
      %277 = vst.msk [vmem:[#allocation4 + $0xb0] sm:$0xff] %vm253, 0.0
      %278 = vst.msk [vmem:[#allocation4 + $0xb8] sm:$0xf] %vm256, 0.0
      %279 = vst.msk [vmem:[#allocation4 + $0xc0] sm:$0xff] %vm253, 0.0
      %280 = vst.msk [vmem:[#allocation4 + $0xc8] sm:$0xff] %vm253, 0.0
      %281 = vst.msk [vmem:[#allocation4 + $0xd0] sm:$0xf] %vm256, 0.0
      %282 = vst.msk [vmem:[#allocation4 + $0xd8] sm:$0xff] %vm253, 0.0
      %283 = vst.msk [vmem:[#allocation4 + $0xe0] sm:$0xff] %vm253, 0.0
      %284 = vst.msk [vmem:[#allocation4 + $0xe8] sm:$0xf] %vm256, 0.0
      %285 = vst.msk [vmem:[#allocation4 + $0xf0] sm:$0xff] %vm253, 0.0
      %286 = vst.msk [vmem:[#allocation4 + $0xf8] sm:$0xff] %vm253, 0.0
      %287 = vst.msk [vmem:[#allocation4 + $0x100] sm:$0xf] %vm256, 0.0
      %288 = vst.msk [vmem:[#allocation4 + $0x108] sm:$0xff] %vm253, 0.0
      %289 = vst.msk [vmem:[#allocation4 + $0x110] sm:$0xff] %vm253, 0.0
      %290 = vst.msk [vmem:[#allocation4 + $0x118] sm:$0xf] %vm256, 0.0
      %291 = vst.msk [vmem:[#allocation4 + $0x120] sm:$0xff] %vm253, 0.0
      %292 = vst.msk [vmem:[#allocation4 + $0x128] sm:$0xff] %vm253, 0.0
      %293 = vst.msk [vmem:[#allocation4 + $0x130] sm:$0xf] %vm256, 0.0
      %294 = vst.msk [vmem:[#allocation4 + $0x138] sm:$0xff] %vm253, 0.0
      %295 = vst.msk [vmem:[#allocation4 + $0x140] sm:$0xff] %vm253, 0.0
      %296 = vst.msk [vmem:[#allocation4 + $0x148] sm:$0xf] %vm256, 0.0
      %297 = vst.msk [vmem:[#allocation4 + $0x150] sm:$0xff] %vm253, 0.0
      %298 = vst.msk [vmem:[#allocation4 + $0x158] sm:$0xff] %vm253, 0.0
      %299 = vst.msk [vmem:[#allocation4 + $0x160] sm:$0xf] %vm256, 0.0
      %300 = vst.msk [vmem:[#allocation4 + $0x168] sm:$0xff] %vm253, 0.0
      %301 = vst.msk [vmem:[#allocation4 + $0x170] sm:$0xff] %vm253, 0.0
      %302 = vst.msk [vmem:[#allocation4 + $0x178] sm:$0xf] %vm256, 0.0
      %303 = vst.msk [vmem:[#allocation4 + $0x180] sm:$0xff] %vm253, 0.0
      %304 = vst.msk [vmem:[#allocation4 + $0x188] sm:$0xff] %vm253, 0.0
      %305 = vst.msk [vmem:[#allocation4 + $0x190] sm:$0xf] %vm256, 0.0
      %306 = vst.msk [vmem:[#allocation4 + $0x198] sm:$0xff] %vm253, 0.0
      %307 = vst.msk [vmem:[#allocation4 + $0x1a0] sm:$0xff] %vm253, 0.0
      %308 = vst.msk [vmem:[#allocation4 + $0x1a8] sm:$0xf] %vm256, 0.0
      %309 = vst.msk [vmem:[#allocation4 + $0x1b0] sm:$0xff] %vm253, 0.0
      %310 = vst.msk [vmem:[#allocation4 + $0x1b8] sm:$0xff] %vm253, 0.0
      %311 = vst.msk [vmem:[#allocation4 + $0x1c0] sm:$0xf] %vm256, 0.0
      %312 = vst.msk [vmem:[#allocation4 + $0x1c8] sm:$0xff] %vm253, 0.0
      %313 = vst.msk [vmem:[#allocation4 + $0x1d0] sm:$0xff] %vm253, 0.0
      %314 = vst.msk [vmem:[#allocation4 + $0x1d8] sm:$0xf] %vm256, 0.0
      %vm315 = vcmask 64512
      %316 = vst.msk [vmem:[#allocation5] sm:$0xff] %vm315, 0.0
      %317 = vst.msk [vmem:[#allocation5 + $0x8] sm:$0xff] %vm315, 0.0
      %vm318 = vcmask 58368
      %319 = vst.msk [vmem:[#allocation5 + $0x10] sm:$0x3] %vm318, 0.0
      %320 = vst.msk [vmem:[#allocation5 + $0x18] sm:$0xff] %vm315, 0.0
      %321 = vst.msk [vmem:[#allocation5 + $0x20] sm:$0xff] %vm315, 0.0
      %322 = vst.msk [vmem:[#allocation5 + $0x28] sm:$0x3] %vm318, 0.0
      %323 = vst.msk [vmem:[#allocation5 + $0x30] sm:$0xff] %vm315, 0.0
      %324 = vst.msk [vmem:[#allocation5 + $0x38] sm:$0xff] %vm315, 0.0
      %325 = vst.msk [vmem:[#allocation5 + $0x40] sm:$0x3] %vm318, 0.0
      %326 = vst.msk [vmem:[#allocation5 + $0x48] sm:$0xff] %vm315, 0.0
      %327 = vst.msk [vmem:[#allocation5 + $0x50] sm:$0xff] %vm315, 0.0
      %328 = vst.msk [vmem:[#allocation5 + $0x58] sm:$0x3] %vm318, 0.0
      %329 = vst.msk [vmem:[#allocation5 + $0x60] sm:$0xff] %vm315, 0.0
      %330 = vst.msk [vmem:[#allocation5 + $0x68] sm:$0xff] %vm315, 0.0
      %331 = vst.msk [vmem:[#allocation5 + $0x70] sm:$0x3] %vm318, 0.0
      %332 = vst.msk [vmem:[#allocation5 + $0x78] sm:$0xff] %vm315, 0.0
      %333 = vst.msk [vmem:[#allocation5 + $0x80] sm:$0xff] %vm315, 0.0
      %334 = vst.msk [vmem:[#allocation5 + $0x88] sm:$0x3] %vm318, 0.0
      %335 = vst.msk [vmem:[#allocation5 + $0x90] sm:$0xff] %vm315, 0.0
      %336 = vst.msk [vmem:[#allocation5 + $0x98] sm:$0xff] %vm315, 0.0
      %337 = vst.msk [vmem:[#allocation5 + $0xa0] sm:$0x3] %vm318, 0.0
      %338 = vst.msk [vmem:[#allocation5 + $0xa8] sm:$0xff] %vm315, 0.0
      %339 = vst.msk [vmem:[#allocation5 + $0xb0] sm:$0xff] %vm315, 0.0
      %340 = vst.msk [vmem:[#allocation5 + $0xb8] sm:$0x3] %vm318, 0.0
      %341 = vst.msk [vmem:[#allocation5 + $0xc0] sm:$0xff] %vm315, 0.0
      %342 = vst.msk [vmem:[#allocation5 + $0xc8] sm:$0xff] %vm315, 0.0
      %343 = vst.msk [vmem:[#allocation5 + $0xd0] sm:$0x3] %vm318, 0.0
      %344 = vst.msk [vmem:[#allocation5 + $0xd8] sm:$0xff] %vm315, 0.0
      %345 = vst.msk [vmem:[#allocation5 + $0xe0] sm:$0xff] %vm315, 0.0
      %346 = vst.msk [vmem:[#allocation5 + $0xe8] sm:$0x3] %vm318, 0.0
      %347 = vst.msk [vmem:[#allocation5 + $0xf0] sm:$0xff] %vm315, 0.0
      %348 = vst.msk [vmem:[#allocation5 + $0xf8] sm:$0xff] %vm315, 0.0
      %349 = vst.msk [vmem:[#allocation5 + $0x100] sm:$0x3] %vm318, 0.0
      %350 = vst.msk [vmem:[#allocation5 + $0x108] sm:$0xff] %vm315, 0.0
      %351 = vst.msk [vmem:[#allocation5 + $0x110] sm:$0xff] %vm315, 0.0
      %352 = vst.msk [vmem:[#allocation5 + $0x118] sm:$0x3] %vm318, 0.0
      %353 = vst.msk [vmem:[#allocation5 + $0x120] sm:$0xff] %vm315, 0.0
      %354 = vst.msk [vmem:[#allocation5 + $0x128] sm:$0xff] %vm315, 0.0
      %355 = vst.msk [vmem:[#allocation5 + $0x130] sm:$0x3] %vm318, 0.0
      %356 = vst.msk [vmem:[#allocation5 + $0x138] sm:$0xff] %vm315, 0.0
      %357 = vst.msk [vmem:[#allocation5 + $0x140] sm:$0xff] %vm315, 0.0
      %358 = vst.msk [vmem:[#allocation5 + $0x148] sm:$0x3] %vm318, 0.0
      %359 = vst.msk [vmem:[#allocation5 + $0x150] sm:$0xff] %vm315, 0.0
      %360 = vst.msk [vmem:[#allocation5 + $0x158] sm:$0xff] %vm315, 0.0
      %361 = vst.msk [vmem:[#allocation5 + $0x160] sm:$0x3] %vm318, 0.0
      %362 = vst.msk [vmem:[#allocation5 + $0x168] sm:$0xff] %vm315, 0.0
      %363 = vst.msk [vmem:[#allocation5 + $0x170] sm:$0xff] %vm315, 0.0
      %364 = vst.msk [vmem:[#allocation5 + $0x178] sm:$0x3] %vm318, 0.0
      %365 = vst.msk [vmem:[#allocation5 + $0x180] sm:$0xff] %vm315, 0.0
      %366 = vst.msk [vmem:[#allocation5 + $0x188] sm:$0xff] %vm315, 0.0
      %367 = vst.msk [vmem:[#allocation5 + $0x190] sm:$0x3] %vm318, 0.0
      %368 = vst.msk [vmem:[#allocation5 + $0x198] sm:$0xff] %vm315, 0.0
      %369 = vst.msk [vmem:[#allocation5 + $0x1a0] sm:$0xff] %vm315, 0.0
      %370 = vst.msk [vmem:[#allocation5 + $0x1a8] sm:$0x3] %vm318, 0.0
      %v371 = vld [vmem:[%s246] sm:$0xff]
      %v372 = vld [vmem:[%s246 + $0x8] sm:$0xff]
      %v373 = vld [vmem:[%s246 + $0x10] sm:$0x3]
      %v374 = vld [vmem:[%s246 + $0x18] sm:$0xff]
      %v375 = vld [vmem:[%s246 + $0x20] sm:$0xff]
      %v376 = vld [vmem:[%s246 + $0x28] sm:$0x3]
      %v377 = vld [vmem:[%s246 + $0x30] sm:$0xff]
      %v378 = vld [vmem:[%s246 + $0x38] sm:$0xff]
      %v379 = vld [vmem:[%s246 + $0x40] sm:$0x3]
      %v380 = vld [vmem:[%s246 + $0x48] sm:$0xff]
      %v381 = vld [vmem:[%s246 + $0x50] sm:$0xff]
      %v382 = vld [vmem:[%s246 + $0x58] sm:$0x3]
      %v383 = vld [vmem:[%s246 + $0x60] sm:$0xff]
      %v384 = vld [vmem:[%s246 + $0x68] sm:$0xff]
      %v385 = vld [vmem:[%s246 + $0x70] sm:$0x3]
      %v386 = vld [vmem:[%s246 + $0x78] sm:$0xff]
      %v387 = vld [vmem:[%s246 + $0x80] sm:$0xff]
      %v388 = vld [vmem:[%s246 + $0x88] sm:$0x3]
      %v389 = vld [vmem:[%s246 + $0x90] sm:$0xff]
      %v390 = vld [vmem:[%s246 + $0x98] sm:$0xff]
      %v391 = vld [vmem:[%s246 + $0xa0] sm:$0x3]
      %v392 = vld [vmem:[%s246 + $0xa8] sm:$0xff]
      %v393 = vld [vmem:[%s246 + $0xb0] sm:$0xff]
      %v394 = vld [vmem:[%s246 + $0xb8] sm:$0x3]
      %v395 = vld [vmem:[%s246 + $0xc0] sm:$0xff]
      %v396 = vld [vmem:[%s246 + $0xc8] sm:$0xff]
      %v397 = vld [vmem:[%s246 + $0xd0] sm:$0x3]
      %v398 = vld [vmem:[%s246 + $0xd8] sm:$0xff]
      %v399 = vld [vmem:[%s246 + $0xe0] sm:$0xff]
      %v400 = vld [vmem:[%s246 + $0xe8] sm:$0x3]
      %v401 = vld [vmem:[%s246 + $0xf0] sm:$0xff]
      %v402 = vld [vmem:[%s246 + $0xf8] sm:$0xff]
      %v403 = vld [vmem:[%s246 + $0x100] sm:$0x3]
      %v404 = vld [vmem:[%s246 + $0x108] sm:$0xff]
      %v405 = vld [vmem:[%s246 + $0x110] sm:$0xff]
      %v406 = vld [vmem:[%s246 + $0x118] sm:$0x3]
      %v407 = vld [vmem:[%s246 + $0x120] sm:$0xff]
      %v408 = vld [vmem:[%s246 + $0x128] sm:$0xff]
      %v409 = vld [vmem:[%s246 + $0x130] sm:$0x3]
      %v410 = vld [vmem:[%s246 + $0x138] sm:$0xff]
      %v411 = vld [vmem:[%s246 + $0x140] sm:$0xff]
      %v412 = vld [vmem:[%s246 + $0x148] sm:$0x3]
      %v413 = vld [vmem:[%s246 + $0x150] sm:$0xff]
      %v414 = vld [vmem:[%s246 + $0x158] sm:$0xff]
      %v415 = vld [vmem:[%s246 + $0x160] sm:$0x3]
      %v416 = vld [vmem:[%s246 + $0x168] sm:$0xff]
      %v417 = vld [vmem:[%s246 + $0x170] sm:$0xff]
      %v418 = vld [vmem:[%s246 + $0x178] sm:$0x3]
      %v419 = vld [vmem:[%s246 + $0x180] sm:$0xff]
      %v420 = vld [vmem:[%s246 + $0x188] sm:$0xff]
      %v421 = vld [vmem:[%s246 + $0x190] sm:$0x3]
      %v422 = vld [vmem:[%s246 + $0x198] sm:$0xff]
      %v423 = vld [vmem:[%s246 + $0x1a0] sm:$0xff]
      %v424 = vld [vmem:[%s246 + $0x1a8] sm:$0x3]
      %v425 = vld [vmem:[%s1] sm:$0x1]
      %427 = vset.pattern.permute.xlu0 0
      %428 = vperm.xlu0 %427, %v371
      %v429 = vpop.permute.xlu0 %428
      %432 = vset.pattern.permute.xlu0 0
      %433 = vperm.xlu0 %432, %v372
      %v434 = vpop.permute.xlu0 %433
      %437 = vset.pattern.permute.xlu0 0
      %438 = vperm.xlu0 %437, %v374
      %v439 = vpop.permute.xlu0 %438
      %442 = vset.pattern.permute.xlu0 0
      %443 = vperm.xlu0 %442, %v375
      %v444 = vpop.permute.xlu0 %443
      %447 = vset.pattern.permute.xlu0 0
      %448 = vperm.xlu0 %447, %v377
      %v449 = vpop.permute.xlu0 %448
      %452 = vset.pattern.permute.xlu0 0
      %453 = vperm.xlu0 %452, %v378
      %v454 = vpop.permute.xlu0 %453
      %457 = vset.pattern.permute.xlu0 0
      %458 = vperm.xlu0 %457, %v380
      %v459 = vpop.permute.xlu0 %458
      %462 = vset.pattern.permute.xlu0 0
      %463 = vperm.xlu0 %462, %v381
      %v464 = vpop.permute.xlu0 %463
      %467 = vset.pattern.permute.xlu0 0
      %468 = vperm.xlu0 %467, %v383
      %v469 = vpop.permute.xlu0 %468
      %472 = vset.pattern.permute.xlu0 0
      %473 = vperm.xlu0 %472, %v384
      %v474 = vpop.permute.xlu0 %473
      %477 = vset.pattern.permute.xlu0 0
      %478 = vperm.xlu0 %477, %v386
      %v479 = vpop.permute.xlu0 %478
      %482 = vset.pattern.permute.xlu0 0
      %483 = vperm.xlu0 %482, %v387
      %v484 = vpop.permute.xlu0 %483
      %487 = vset.pattern.permute.xlu0 0
      %488 = vperm.xlu0 %487, %v389
      %v489 = vpop.permute.xlu0 %488
      %492 = vset.pattern.permute.xlu0 0
      %493 = vperm.xlu0 %492, %v390
      %v494 = vpop.permute.xlu0 %493
      %497 = vset.pattern.permute.xlu0 0
      %498 = vperm.xlu0 %497, %v392
      %v499 = vpop.permute.xlu0 %498
      %502 = vset.pattern.permute.xlu0 0
      %503 = vperm.xlu0 %502, %v393
      %v504 = vpop.permute.xlu0 %503
      %507 = vset.pattern.permute.xlu0 0
      %508 = vperm.xlu0 %507, %v395
      %v509 = vpop.permute.xlu0 %508
      %512 = vset.pattern.permute.xlu0 0
      %513 = vperm.xlu0 %512, %v396
      %v514 = vpop.permute.xlu0 %513
      %517 = vset.pattern.permute.xlu0 0
      %518 = vperm.xlu0 %517, %v398
      %v519 = vpop.permute.xlu0 %518
      %522 = vset.pattern.permute.xlu0 0
      %523 = vperm.xlu0 %522, %v399
      %v524 = vpop.permute.xlu0 %523
      %527 = vset.pattern.permute.xlu0 0
      %528 = vperm.xlu0 %527, %v401
      %v529 = vpop.permute.xlu0 %528
      %532 = vset.pattern.permute.xlu0 0
      %533 = vperm.xlu0 %532, %v402
      %v534 = vpop.permute.xlu0 %533
      %537 = vset.pattern.permute.xlu0 0
      %538 = vperm.xlu0 %537, %v404
      %v539 = vpop.permute.xlu0 %538
      %542 = vset.pattern.permute.xlu0 0
      %543 = vperm.xlu0 %542, %v405
      %v544 = vpop.permute.xlu0 %543
      %547 = vset.pattern.permute.xlu0 0
      %548 = vperm.xlu0 %547, %v407
      %v549 = vpop.permute.xlu0 %548
      %552 = vset.pattern.permute.xlu0 0
      %553 = vperm.xlu0 %552, %v408
      %v554 = vpop.permute.xlu0 %553
      %557 = vset.pattern.permute.xlu0 0
      %558 = vperm.xlu0 %557, %v410
      %v559 = vpop.permute.xlu0 %558
      %562 = vset.pattern.permute.xlu0 0
      %563 = vperm.xlu0 %562, %v411
      %v564 = vpop.permute.xlu0 %563
      %567 = vset.pattern.permute.xlu0 0
      %568 = vperm.xlu0 %567, %v413
      %v569 = vpop.permute.xlu0 %568
      %572 = vset.pattern.permute.xlu0 0
      %573 = vperm.xlu0 %572, %v414
      %v574 = vpop.permute.xlu0 %573
      %577 = vset.pattern.permute.xlu0 0
      %578 = vperm.xlu0 %577, %v416
      %v579 = vpop.permute.xlu0 %578
      %582 = vset.pattern.permute.xlu0 0
      %583 = vperm.xlu0 %582, %v417
      %v584 = vpop.permute.xlu0 %583
      %v587 = vlaneseq
      %v588 = vshrl.u32 %v587, 7
      %v589 = vsub.s32 0, %v588
      %v590 = vrot.slane %v425, %v589
      %v592 = vmul.f32 %v429, %v590
      %v593 = vmul.f32 %v434, %v590
      %v594 = vmul.f32 %v439, %v590
      %v595 = vmul.f32 %v444, %v590
      %v596 = vmul.f32 %v449, %v590
      %v597 = vmul.f32 %v454, %v590
      %v598 = vmul.f32 %v459, %v590
      %v599 = vmul.f32 %v464, %v590
      %v600 = vmul.f32 %v469, %v590
      %v601 = vmul.f32 %v474, %v590
      %v602 = vmul.f32 %v479, %v590
      %v603 = vmul.f32 %v484, %v590
      %v604 = vmul.f32 %v489, %v590
      %v605 = vmul.f32 %v494, %v590
      %v606 = vmul.f32 %v499, %v590
      %v607 = vmul.f32 %v504, %v590
      %v608 = vmul.f32 %v509, %v590
      %v609 = vmul.f32 %v514, %v590
      %v610 = vmul.f32 %v519, %v590
      %v611 = vmul.f32 %v524, %v590
      %v612 = vmul.f32 %v529, %v590
      %v613 = vmul.f32 %v534, %v590
      %v614 = vmul.f32 %v539, %v590
      %v615 = vmul.f32 %v544, %v590
      %v616 = vmul.f32 %v549, %v590
      %v617 = vmul.f32 %v554, %v590
      %v618 = vmul.f32 %v559, %v590
      %v619 = vmul.f32 %v564, %v590
      %v620 = vmul.f32 %v569, %v590
      %v621 = vmul.f32 %v574, %v590
      %v622 = vmul.f32 %v579, %v590
      %v623 = vmul.f32 %v584, %v590
      %v624 = vadd.f32 %v592, 0.0
      %v625 = vadd.f32 %v593, 0.0
      %v626 = vadd.f32 %v594, 0.0
      %v627 = vadd.f32 %v595, 0.0
      %v628 = vadd.f32 %v596, 0.0
      %v629 = vadd.f32 %v597, 0.0
      %v630 = vadd.f32 %v598, 0.0
      %v631 = vadd.f32 %v599, 0.0
      %v632 = vadd.f32 %v600, 0.0
      %v633 = vadd.f32 %v601, 0.0
      %v634 = vadd.f32 %v602, 0.0
      %v635 = vadd.f32 %v603, 0.0
      %v636 = vadd.f32 %v604, 0.0
      %v637 = vadd.f32 %v605, 0.0
      %v638 = vadd.f32 %v606, 0.0
      %v639 = vadd.f32 %v607, 0.0
      %v640 = vadd.f32 %v608, 0.0
      %v641 = vadd.f32 %v609, 0.0
      %v642 = vadd.f32 %v610, 0.0
      %v643 = vadd.f32 %v611, 0.0
      %v644 = vadd.f32 %v612, 0.0
      %v645 = vadd.f32 %v613, 0.0
      %v646 = vadd.f32 %v614, 0.0
      %v647 = vadd.f32 %v615, 0.0
      %v648 = vadd.f32 %v616, 0.0
      %v649 = vadd.f32 %v617, 0.0
      %v650 = vadd.f32 %v618, 0.0
      %v651 = vadd.f32 %v619, 0.0
      %v652 = vadd.f32 %v620, 0.0
      %v653 = vadd.f32 %v621, 0.0
      %v654 = vadd.f32 %v622, 0.0
      %v655 = vadd.f32 %v623, 0.0
      %vm672 = vcmask 1046528
      %v673 = vrot.slane %v371, 1
      %v674 = vrot.slane %v372, 1
      %v675 = vsel %vm672, %v673, %v674
      %v676 = vrot.slane %v373, 1
      %v677 = vsel %vm672, %v674, %v676
      %v678 = vrot.slane %v374, 1
      %v679 = vrot.slane %v375, 1
      %v680 = vsel %vm672, %v678, %v679
      %v681 = vrot.slane %v376, 1
      %v682 = vsel %vm672, %v679, %v681
      %v683 = vrot.slane %v377, 1
      %v684 = vrot.slane %v378, 1
      %v685 = vsel %vm672, %v683, %v684
      %v686 = vrot.slane %v379, 1
      %v687 = vsel %vm672, %v684, %v686
      %v688 = vrot.slane %v380, 1
      %v689 = vrot.slane %v381, 1
      %v690 = vsel %vm672, %v688, %v689
      %v691 = vrot.slane %v382, 1
      %v692 = vsel %vm672, %v689, %v691
      %v693 = vrot.slane %v383, 1
      %v694 = vrot.slane %v384, 1
      %v695 = vsel %vm672, %v693, %v694
      %v696 = vrot.slane %v385, 1
      %v697 = vsel %vm672, %v694, %v696
      %v698 = vrot.slane %v386, 1
      %v699 = vrot.slane %v387, 1
      %v700 = vsel %vm672, %v698, %v699
      %v701 = vrot.slane %v388, 1
      %v702 = vsel %vm672, %v699, %v701
      %v703 = vrot.slane %v389, 1
      %v704 = vrot.slane %v390, 1
      %v705 = vsel %vm672, %v703, %v704
      %v706 = vrot.slane %v391, 1
      %v707 = vsel %vm672, %v704, %v706
      %v708 = vrot.slane %v392, 1
      %v709 = vrot.slane %v393, 1
      %v710 = vsel %vm672, %v708, %v709
      %v711 = vrot.slane %v394, 1
      %v712 = vsel %vm672, %v709, %v711
      %v713 = vrot.slane %v395, 1
      %v714 = vrot.slane %v396, 1
      %v715 = vsel %vm672, %v713, %v714
      %v716 = vrot.slane %v397, 1
      %v717 = vsel %vm672, %v714, %v716
      %v718 = vrot.slane %v398, 1
      %v719 = vrot.slane %v399, 1
      %v720 = vsel %vm672, %v718, %v719
      %v721 = vrot.slane %v400, 1
      %v722 = vsel %vm672, %v719, %v721
      %v723 = vrot.slane %v401, 1
      %v724 = vrot.slane %v402, 1
      %v725 = vsel %vm672, %v723, %v724
      %v726 = vrot.slane %v403, 1
      %v727 = vsel %vm672, %v724, %v726
      %v728 = vrot.slane %v404, 1
      %v729 = vrot.slane %v405, 1
      %v730 = vsel %vm672, %v728, %v729
      %v731 = vrot.slane %v406, 1
      %v732 = vsel %vm672, %v729, %v731
      %v733 = vrot.slane %v407, 1
      %v734 = vrot.slane %v408, 1
      %v735 = vsel %vm672, %v733, %v734
      %v736 = vrot.slane %v409, 1
      %v737 = vsel %vm672, %v734, %v736
      %v738 = vrot.slane %v410, 1
      %v739 = vrot.slane %v411, 1
      %v740 = vsel %vm672, %v738, %v739
      %v741 = vrot.slane %v412, 1
      %v742 = vsel %vm672, %v739, %v741
      %v743 = vrot.slane %v413, 1
      %v744 = vrot.slane %v414, 1
      %v745 = vsel %vm672, %v743, %v744
      %v746 = vrot.slane %v415, 1
      %v747 = vsel %vm672, %v744, %v746
      %v748 = vrot.slane %v416, 1
      %v749 = vrot.slane %v417, 1
      %v750 = vsel %vm672, %v748, %v749
      %v751 = vrot.slane %v418, 1
      %v752 = vsel %vm672, %v749, %v751
      %s753 = scalar_lea.vmem %s1, 1
      %v754 = vld [vmem:[%s753] sm:$0x1]
      %755 = vset.pattern.permute.xlu0 0
      %756 = vperm.xlu0 %755, %v675
      %v757 = vpop.permute.xlu0 %756
      %759 = vset.pattern.permute.xlu0 0
      %760 = vperm.xlu0 %759, %v677
      %v761 = vpop.permute.xlu0 %760
      %763 = vset.pattern.permute.xlu0 0
      %764 = vperm.xlu0 %763, %v680
      %v765 = vpop.permute.xlu0 %764
      %767 = vset.pattern.permute.xlu0 0
      %768 = vperm.xlu0 %767, %v682
      %v769 = vpop.permute.xlu0 %768
      %771 = vset.pattern.permute.xlu0 0
      %772 = vperm.xlu0 %771, %v685
      %v773 = vpop.permute.xlu0 %772
      %775 = vset.pattern.permute.xlu0 0
      %776 = vperm.xlu0 %775, %v687
      %v777 = vpop.permute.xlu0 %776
      %779 = vset.pattern.permute.xlu0 0
      %780 = vperm.xlu0 %779, %v690
      %v781 = vpop.permute.xlu0 %780
      %783 = vset.pattern.permute.xlu0 0
      %784 = vperm.xlu0 %783, %v692
      %v785 = vpop.permute.xlu0 %784
      %787 = vset.pattern.permute.xlu0 0
      %788 = vperm.xlu0 %787, %v695
      %v789 = vpop.permute.xlu0 %788
      %791 = vset.pattern.permute.xlu0 0
      %792 = vperm.xlu0 %791, %v697
      %v793 = vpop.permute.xlu0 %792
      %795 = vset.pattern.permute.xlu0 0
      %796 = vperm.xlu0 %795, %v700
      %v797 = vpop.permute.xlu0 %796
      %799 = vset.pattern.permute.xlu0 0
      %800 = vperm.xlu0 %799, %v702
      %v801 = vpop.permute.xlu0 %800
      %803 = vset.pattern.permute.xlu0 0
      %804 = vperm.xlu0 %803, %v705
      %v805 = vpop.permute.xlu0 %804
      %807 = vset.pattern.permute.xlu0 0
      %808 = vperm.xlu0 %807, %v707
      %v809 = vpop.permute.xlu0 %808
      %811 = vset.pattern.permute.xlu0 0
      %812 = vperm.xlu0 %811, %v710
      %v813 = vpop.permute.xlu0 %812
      %815 = vset.pattern.permute.xlu0 0
      %816 = vperm.xlu0 %815, %v712
      %v817 = vpop.permute.xlu0 %816
      %819 = vset.pattern.permute.xlu0 0
      %820 = vperm.xlu0 %819, %v715
      %v821 = vpop.permute.xlu0 %820
      %823 = vset.pattern.permute.xlu0 0
      %824 = vperm.xlu0 %823, %v717
      %v825 = vpop.permute.xlu0 %824
      %827 = vset.pattern.permute.xlu0 0
      %828 = vperm.xlu0 %827, %v720
      %v829 = vpop.permute.xlu0 %828
      %831 = vset.pattern.permute.xlu0 0
      %832 = vperm.xlu0 %831, %v722
      %v833 = vpop.permute.xlu0 %832
      %835 = vset.pattern.permute.xlu0 0
      %836 = vperm.xlu0 %835, %v725
      %v837 = vpop.permute.xlu0 %836
      %839 = vset.pattern.permute.xlu0 0
      %840 = vperm.xlu0 %839, %v727
      %v841 = vpop.permute.xlu0 %840
      %843 = vset.pattern.permute.xlu0 0
      %844 = vperm.xlu0 %843, %v730
      %v845 = vpop.permute.xlu0 %844
      %847 = vset.pattern.permute.xlu0 0
      %848 = vperm.xlu0 %847, %v732
      %v849 = vpop.permute.xlu0 %848
      %851 = vset.pattern.permute.xlu0 0
      %852 = vperm.xlu0 %851, %v735
      %v853 = vpop.permute.xlu0 %852
      %855 = vset.pattern.permute.xlu0 0
      %856 = vperm.xlu0 %855, %v737
      %v857 = vpop.permute.xlu0 %856
      %859 = vset.pattern.permute.xlu0 0
      %860 = vperm.xlu0 %859, %v740
      %v861 = vpop.permute.xlu0 %860
      %863 = vset.pattern.permute.xlu0 0
      %864 = vperm.xlu0 %863, %v742
      %v865 = vpop.permute.xlu0 %864
      %867 = vset.pattern.permute.xlu0 0
      %868 = vperm.xlu0 %867, %v745
      %v869 = vpop.permute.xlu0 %868
      %871 = vset.pattern.permute.xlu0 0
      %872 = vperm.xlu0 %871, %v747
      %v873 = vpop.permute.xlu0 %872
      %875 = vset.pattern.permute.xlu0 0
      %876 = vperm.xlu0 %875, %v750
      %v877 = vpop.permute.xlu0 %876
      %879 = vset.pattern.permute.xlu0 0
      %880 = vperm.xlu0 %879, %v752
      %v881 = vpop.permute.xlu0 %880
      %v884 = vlaneseq
      %v885 = vshrl.u32 %v884, 7
      %v886 = vsub.s32 0, %v885
      %v887 = vrot.slane %v754, %v886
      %v889 = vmul.f32 %v757, %v887
      %v890 = vmul.f32 %v761, %v887
      %v891 = vmul.f32 %v765, %v887
      %v892 = vmul.f32 %v769, %v887
      %v893 = vmul.f32 %v773, %v887
      %v894 = vmul.f32 %v777, %v887
      %v895 = vmul.f32 %v781, %v887
      %v896 = vmul.f32 %v785, %v887
      %v897 = vmul.f32 %v789, %v887
      %v898 = vmul.f32 %v793, %v887
      %v899 = vmul.f32 %v797, %v887
      %v900 = vmul.f32 %v801, %v887
      %v901 = vmul.f32 %v805, %v887
      %v902 = vmul.f32 %v809, %v887
      %v903 = vmul.f32 %v813, %v887
      %v904 = vmul.f32 %v817, %v887
      %v905 = vmul.f32 %v821, %v887
      %v906 = vmul.f32 %v825, %v887
      %v907 = vmul.f32 %v829, %v887
      %v908 = vmul.f32 %v833, %v887
      %v909 = vmul.f32 %v837, %v887
      %v910 = vmul.f32 %v841, %v887
      %v911 = vmul.f32 %v845, %v887
      %v912 = vmul.f32 %v849, %v887
      %v913 = vmul.f32 %v853, %v887
      %v914 = vmul.f32 %v857, %v887
      %v915 = vmul.f32 %v861, %v887
      %v916 = vmul.f32 %v865, %v887
      %v917 = vmul.f32 %v869, %v887
      %v918 = vmul.f32 %v873, %v887
      %v919 = vmul.f32 %v877, %v887
      %v920 = vmul.f32 %v881, %v887
      %v921 = vadd.f32 %v624, %v889
      %v922 = vadd.f32 %v625, %v890
      %v923 = vadd.f32 %v626, %v891
      %v924 = vadd.f32 %v627, %v892
      %v925 = vadd.f32 %v628, %v893
      %v926 = vadd.f32 %v629, %v894
      %v927 = vadd.f32 %v630, %v895
      %v928 = vadd.f32 %v631, %v896
      %v929 = vadd.f32 %v632, %v897
      %v930 = vadd.f32 %v633, %v898
      %v931 = vadd.f32 %v634, %v899
      %v932 = vadd.f32 %v635, %v900
      %v933 = vadd.f32 %v636, %v901
      %v934 = vadd.f32 %v637, %v902
      %v935 = vadd.f32 %v638, %v903
      %v936 = vadd.f32 %v639, %v904
      %v937 = vadd.f32 %v640, %v905
      %v938 = vadd.f32 %v641, %v906
      %v939 = vadd.f32 %v642, %v907
      %v940 = vadd.f32 %v643, %v908
      %v941 = vadd.f32 %v644, %v909
      %v942 = vadd.f32 %v645, %v910
      %v943 = vadd.f32 %v646, %v911
      %v944 = vadd.f32 %v647, %v912
      %v945 = vadd.f32 %v648, %v913
      %v946 = vadd.f32 %v649, %v914
      %v947 = vadd.f32 %v650, %v915
      %v948 = vadd.f32 %v651, %v916
      %v949 = vadd.f32 %v652, %v917
      %v950 = vadd.f32 %v653, %v918
      %v951 = vadd.f32 %v654, %v919
      %v952 = vadd.f32 %v655, %v920
      %vm953 = vcmask 1045504
      %v954 = vrot.slane %v371, 2
      %v955 = vrot.slane %v372, 2
      %v956 = vsel %vm953, %v954, %v955
      %v957 = vrot.slane %v373, 2
      %v958 = vsel %vm953, %v955, %v957
      %v959 = vrot.slane %v374, 2
      %v960 = vrot.slane %v375, 2
      %v961 = vsel %vm953, %v959, %v960
      %v962 = vrot.slane %v376, 2
      %v963 = vsel %vm953, %v960, %v962
      %v964 = vrot.slane %v377, 2
      %v965 = vrot.slane %v378, 2
      %v966 = vsel %vm953, %v964, %v965
      %v967 = vrot.slane %v379, 2
      %v968 = vsel %vm953, %v965, %v967
      %v969 = vrot.slane %v380, 2
      %v970 = vrot.slane %v381, 2
      %v971 = vsel %vm953, %v969, %v970
      %v972 = vrot.slane %v382, 2
      %v973 = vsel %vm953, %v970, %v972
      %v974 = vrot.slane %v383, 2
      %v975 = vrot.slane %v384, 2
      %v976 = vsel %vm953, %v974, %v975
      %v977 = vrot.slane %v385, 2
      %v978 = vsel %vm953, %v975, %v977
      %v979 = vrot.slane %v386, 2
      %v980 = vrot.slane %v387, 2
      %v981 = vsel %vm953, %v979, %v980
      %v982 = vrot.slane %v388, 2
      %v983 = vsel %vm953, %v980, %v982
      %v984 = vrot.slane %v389, 2
      %v985 = vrot.slane %v390, 2
      %v986 = vsel %vm953, %v984, %v985
      %v987 = vrot.slane %v391, 2
      %v988 = vsel %vm953, %v985, %v987
      %v989 = vrot.slane %v392, 2
      %v990 = vrot.slane %v393, 2
      %v991 = vsel %vm953, %v989, %v990
      %v992 = vrot.slane %v394, 2
      %v993 = vsel %vm953, %v990, %v992
      %v994 = vrot.slane %v395, 2
      %v995 = vrot.slane %v396, 2
      %v996 = vsel %vm953, %v994, %v995
      %v997 = vrot.slane %v397, 2
      %v998 = vsel %vm953, %v995, %v997
      %v999 = vrot.slane %v398, 2
      %v1000 = vrot.slane %v399, 2
      %v1001 = vsel %vm953, %v999, %v1000
      %v1002 = vrot.slane %v400, 2
      %v1003 = vsel %vm953, %v1000, %v1002
      %v1004 = vrot.slane %v401, 2
      %v1005 = vrot.slane %v402, 2
      %v1006 = vsel %vm953, %v1004, %v1005
      %v1007 = vrot.slane %v403, 2
      %v1008 = vsel %vm953, %v1005, %v1007
      %v1009 = vrot.slane %v404, 2
      %v1010 = vrot.slane %v405, 2
      %v1011 = vsel %vm953, %v1009, %v1010
      %v1012 = vrot.slane %v406, 2
      %v1013 = vsel %vm953, %v1010, %v1012
      %v1014 = vrot.slane %v407, 2
      %v1015 = vrot.slane %v408, 2
      %v1016 = vsel %vm953, %v1014, %v1015
      %v1017 = vrot.slane %v409, 2
      %v1018 = vsel %vm953, %v1015, %v1017
      %v1019 = vrot.slane %v410, 2
      %v1020 = vrot.slane %v411, 2
      %v1021 = vsel %vm953, %v1019, %v1020
      %v1022 = vrot.slane %v412, 2
      %v1023 = vsel %vm953, %v1020, %v1022
      %v1024 = vrot.slane %v413, 2
      %v1025 = vrot.slane %v414, 2
      %v1026 = vsel %vm953, %v1024, %v1025
      %v1027 = vrot.slane %v415, 2
      %v1028 = vsel %vm953, %v1025, %v1027
      %v1029 = vrot.slane %v416, 2
      %v1030 = vrot.slane %v417, 2
      %v1031 = vsel %vm953, %v1029, %v1030
      %v1032 = vrot.slane %v418, 2
      %v1033 = vsel %vm953, %v1030, %v1032
      %s1034 = scalar_lea.vmem %s1, 2
      %v1035 = vld [vmem:[%s1034] sm:$0x1]
      %1036 = vset.pattern.permute.xlu0 0
      %1037 = vperm.xlu0 %1036, %v956
      %v1038 = vpop.permute.xlu0 %1037
      %1040 = vset.pattern.permute.xlu0 0
      %1041 = vperm.xlu0 %1040, %v958
      %v1042 = vpop.permute.xlu0 %1041
      %1044 = vset.pattern.permute.xlu0 0
      %1045 = vperm.xlu0 %1044, %v961
      %v1046 = vpop.permute.xlu0 %1045
      %1048 = vset.pattern.permute.xlu0 0
      %1049 = vperm.xlu0 %1048, %v963
      %v1050 = vpop.permute.xlu0 %1049
      %1052 = vset.pattern.permute.xlu0 0
      %1053 = vperm.xlu0 %1052, %v966
      %v1054 = vpop.permute.xlu0 %1053
      %1056 = vset.pattern.permute.xlu0 0
      %1057 = vperm.xlu0 %1056, %v968
      %v1058 = vpop.permute.xlu0 %1057
      %1060 = vset.pattern.permute.xlu0 0
      %1061 = vperm.xlu0 %1060, %v971
      %v1062 = vpop.permute.xlu0 %1061
      %1064 = vset.pattern.permute.xlu0 0
      %1065 = vperm.xlu0 %1064, %v973
      %v1066 = vpop.permute.xlu0 %1065
      %1068 = vset.pattern.permute.xlu0 0
      %1069 = vperm.xlu0 %1068, %v976
      %v1070 = vpop.permute.xlu0 %1069
      %1072 = vset.pattern.permute.xlu0 0
      %1073 = vperm.xlu0 %1072, %v978
      %v1074 = vpop.permute.xlu0 %1073
      %1076 = vset.pattern.permute.xlu0 0
      %1077 = vperm.xlu0 %1076, %v981
      %v1078 = vpop.permute.xlu0 %1077
      %1080 = vset.pattern.permute.xlu0 0
      %1081 = vperm.xlu0 %1080, %v983
      %v1082 = vpop.permute.xlu0 %1081
      %1084 = vset.pattern.permute.xlu0 0
      %1085 = vperm.xlu0 %1084, %v986
      %v1086 = vpop.permute.xlu0 %1085
      %1088 = vset.pattern.permute.xlu0 0
      %1089 = vperm.xlu0 %1088, %v988
      %v1090 = vpop.permute.xlu0 %1089
      %1092 = vset.pattern.permute.xlu0 0
      %1093 = vperm.xlu0 %1092, %v991
      %v1094 = vpop.permute.xlu0 %1093
      %1096 = vset.pattern.permute.xlu0 0
      %1097 = vperm.xlu0 %1096, %v993
      %v1098 = vpop.permute.xlu0 %1097
      %1100 = vset.pattern.permute.xlu0 0
      %1101 = vperm.xlu0 %1100, %v996
      %v1102 = vpop.permute.xlu0 %1101
      %1104 = vset.pattern.permute.xlu0 0
      %1105 = vperm.xlu0 %1104, %v998
      %v1106 = vpop.permute.xlu0 %1105
      %1108 = vset.pattern.permute.xlu0 0
      %1109 = vperm.xlu0 %1108, %v1001
      %v1110 = vpop.permute.xlu0 %1109
      %1112 = vset.pattern.permute.xlu0 0
      %1113 = vperm.xlu0 %1112, %v1003
      %v1114 = vpop.permute.xlu0 %1113
      %1116 = vset.pattern.permute.xlu0 0
      %1117 = vperm.xlu0 %1116, %v1006
      %v1118 = vpop.permute.xlu0 %1117
      %1120 = vset.pattern.permute.xlu0 0
      %1121 = vperm.xlu0 %1120, %v1008
      %v1122 = vpop.permute.xlu0 %1121
      %1124 = vset.pattern.permute.xlu0 0
      %1125 = vperm.xlu0 %1124, %v1011
      %v1126 = vpop.permute.xlu0 %1125
      %1128 = vset.pattern.permute.xlu0 0
      %1129 = vperm.xlu0 %1128, %v1013
      %v1130 = vpop.permute.xlu0 %1129
      %1132 = vset.pattern.permute.xlu0 0
      %1133 = vperm.xlu0 %1132, %v1016
      %v1134 = vpop.permute.xlu0 %1133
      %1136 = vset.pattern.permute.xlu0 0
      %1137 = vperm.xlu0 %1136, %v1018
      %v1138 = vpop.permute.xlu0 %1137
      %1140 = vset.pattern.permute.xlu0 0
      %1141 = vperm.xlu0 %1140, %v1021
      %v1142 = vpop.permute.xlu0 %1141
      %1144 = vset.pattern.permute.xlu0 0
      %1145 = vperm.xlu0 %1144, %v1023
      %v1146 = vpop.permute.xlu0 %1145
      %1148 = vset.pattern.permute.xlu0 0
      %1149 = vperm.xlu0 %1148, %v1026
      %v1150 = vpop.permute.xlu0 %1149
      %1152 = vset.pattern.permute.xlu0 0
      %1153 = vperm.xlu0 %1152, %v1028
      %v1154 = vpop.permute.xlu0 %1153
      %1156 = vset.pattern.permute.xlu0 0
      %1157 = vperm.xlu0 %1156, %v1031
      %v1158 = vpop.permute.xlu0 %1157
      %1160 = vset.pattern.permute.xlu0 0
      %1161 = vperm.xlu0 %1160, %v1033
      %v1162 = vpop.permute.xlu0 %1161
      %v1165 = vlaneseq
      %v1166 = vshrl.u32 %v1165, 7
      %v1167 = vsub.s32 0, %v1166
      %v1168 = vrot.slane %v1035, %v1167
      %v1170 = vmul.f32 %v1038, %v1168
      %v1171 = vmul.f32 %v1042, %v1168
      %v1172 = vmul.f32 %v1046, %v1168
      %v1173 = vmul.f32 %v1050, %v1168
      %v1174 = vmul.f32 %v1054, %v1168
      %v1175 = vmul.f32 %v1058, %v1168
      %v1176 = vmul.f32 %v1062, %v1168
      %v1177 = vmul.f32 %v1066, %v1168
      %v1178 = vmul.f32 %v1070, %v1168
      %v1179 = vmul.f32 %v1074, %v1168
      %v1180 = vmul.f32 %v1078, %v1168
      %v1181 = vmul.f32 %v1082, %v1168
      %v1182 = vmul.f32 %v1086, %v1168
      %v1183 = vmul.f32 %v1090, %v1168
      %v1184 = vmul.f32 %v1094, %v1168
      %v1185 = vmul.f32 %v1098, %v1168
      %v1186 = vmul.f32 %v1102, %v1168
      %v1187 = vmul.f32 %v1106, %v1168
      %v1188 = vmul.f32 %v1110, %v1168
      %v1189 = vmul.f32 %v1114, %v1168
      %v1190 = vmul.f32 %v1118, %v1168
      %v1191 = vmul.f32 %v1122, %v1168
      %v1192 = vmul.f32 %v1126, %v1168
      %v1193 = vmul.f32 %v1130, %v1168
      %v1194 = vmul.f32 %v1134, %v1168
      %v1195 = vmul.f32 %v1138, %v1168
      %v1196 = vmul.f32 %v1142, %v1168
      %v1197 = vmul.f32 %v1146, %v1168
      %v1198 = vmul.f32 %v1150, %v1168
      %v1199 = vmul.f32 %v1154, %v1168
      %v1200 = vmul.f32 %v1158, %v1168
      %v1201 = vmul.f32 %v1162, %v1168
      %v1202 = vadd.f32 %v921, %v1170
      %v1203 = vadd.f32 %v922, %v1171
      %v1204 = vadd.f32 %v923, %v1172
      %v1205 = vadd.f32 %v924, %v1173
      %v1206 = vadd.f32 %v925, %v1174
      %v1207 = vadd.f32 %v926, %v1175
      %v1208 = vadd.f32 %v927, %v1176
      %v1209 = vadd.f32 %v928, %v1177
      %v1210 = vadd.f32 %v929, %v1178
      %v1211 = vadd.f32 %v930, %v1179
      %v1212 = vadd.f32 %v931, %v1180
      %v1213 = vadd.f32 %v932, %v1181
      %v1214 = vadd.f32 %v933, %v1182
      %v1215 = vadd.f32 %v934, %v1183
      %v1216 = vadd.f32 %v935, %v1184
      %v1217 = vadd.f32 %v936, %v1185
      %v1218 = vadd.f32 %v937, %v1186
      %v1219 = vadd.f32 %v938, %v1187
      %v1220 = vadd.f32 %v939, %v1188
      %v1221 = vadd.f32 %v940, %v1189
      %v1222 = vadd.f32 %v941, %v1190
      %v1223 = vadd.f32 %v942, %v1191
      %v1224 = vadd.f32 %v943, %v1192
      %v1225 = vadd.f32 %v944, %v1193
      %v1226 = vadd.f32 %v945, %v1194
      %v1227 = vadd.f32 %v946, %v1195
      %v1228 = vadd.f32 %v947, %v1196
      %v1229 = vadd.f32 %v948, %v1197
      %v1230 = vadd.f32 %v949, %v1198
      %v1231 = vadd.f32 %v950, %v1199
      %v1232 = vadd.f32 %v951, %v1200
      %v1233 = vadd.f32 %v952, %v1201
      %s1234 = scalar_lea.vmem %s1, 3
      %v1235 = vld [vmem:[%s1234] sm:$0x1]
      %1237 = vset.pattern.permute.xlu0 0
      %1238 = vperm.xlu0 %1237, %v419
      %v1239 = vpop.permute.xlu0 %1238
      %1242 = vset.pattern.permute.xlu0 0
      %1243 = vperm.xlu0 %1242, %v420
      %v1244 = vpop.permute.xlu0 %1243
      %v1247 = vlaneseq
      %v1248 = vshrl.u32 %v1247, 7
      %v1249 = vsub.s32 0, %v1248
      %v1250 = vrot.slane %v1235, %v1249
      %v1252 = vmul.f32 %v439, %v1250
      %v1253 = vmul.f32 %v444, %v1250
      %v1254 = vmul.f32 %v449, %v1250
      %v1255 = vmul.f32 %v454, %v1250
      %v1256 = vmul.f32 %v459, %v1250
      %v1257 = vmul.f32 %v464, %v1250
      %v1258 = vmul.f32 %v469, %v1250
      %v1259 = vmul.f32 %v474, %v1250
      %v1260 = vmul.f32 %v479, %v1250
      %v1261 = vmul.f32 %v484, %v1250
      %v1262 = vmul.f32 %v489, %v1250
      %v1263 = vmul.f32 %v494, %v1250
      %v1264 = vmul.f32 %v499, %v1250
      %v1265 = vmul.f32 %v504, %v1250
      %v1266 = vmul.f32 %v509, %v1250
      %v1267 = vmul.f32 %v514, %v1250
      %v1268 = vmul.f32 %v519, %v1250
      %v1269 = vmul.f32 %v524, %v1250
      %v1270 = vmul.f32 %v529, %v1250
      %v1271 = vmul.f32 %v534, %v1250
      %v1272 = vmul.f32 %v539, %v1250
      %v1273 = vmul.f32 %v544, %v1250
      %v1274 = vmul.f32 %v549, %v1250
      %v1275 = vmul.f32 %v554, %v1250
      %v1276 = vmul.f32 %v559, %v1250
      %v1277 = vmul.f32 %v564, %v1250
      %v1278 = vmul.f32 %v569, %v1250
      %v1279 = vmul.f32 %v574, %v1250
      %v1280 = vmul.f32 %v579, %v1250
      %v1281 = vmul.f32 %v584, %v1250
      %v1282 = vmul.f32 %v1239, %v1250
      %v1283 = vmul.f32 %v1244, %v1250
      %v1284 = vadd.f32 %v1202, %v1252
      %v1285 = vadd.f32 %v1203, %v1253
      %v1286 = vadd.f32 %v1204, %v1254
      %v1287 = vadd.f32 %v1205, %v1255
      %v1288 = vadd.f32 %v1206, %v1256
      %v1289 = vadd.f32 %v1207, %v1257
      %v1290 = vadd.f32 %v1208, %v1258
      %v1291 = vadd.f32 %v1209, %v1259
      %v1292 = vadd.f32 %v1210, %v1260
      %v1293 = vadd.f32 %v1211, %v1261
      %v1294 = vadd.f32 %v1212, %v1262
      %v1295 = vadd.f32 %v1213, %v1263
      %v1296 = vadd.f32 %v1214, %v1264
      %v1297 = vadd.f32 %v1215, %v1265
      %v1298 = vadd.f32 %v1216, %v1266
      %v1299 = vadd.f32 %v1217, %v1267
      %v1300 = vadd.f32 %v1218, %v1268
      %v1301 = vadd.f32 %v1219, %v1269
      %v1302 = vadd.f32 %v1220, %v1270
      %v1303 = vadd.f32 %v1221, %v1271
      %v1304 = vadd.f32 %v1222, %v1272
      %v1305 = vadd.f32 %v1223, %v1273
      %v1306 = vadd.f32 %v1224, %v1274
      %v1307 = vadd.f32 %v1225, %v1275
      %v1308 = vadd.f32 %v1226, %v1276
      %v1309 = vadd.f32 %v1227, %v1277
      %v1310 = vadd.f32 %v1228, %v1278
      %v1311 = vadd.f32 %v1229, %v1279
      %v1312 = vadd.f32 %v1230, %v1280
      %v1313 = vadd.f32 %v1231, %v1281
      %v1314 = vadd.f32 %v1232, %v1282
      %v1315 = vadd.f32 %v1233, %v1283
      %v1317 = vrot.slane %v419, 1
      %v1318 = vrot.slane %v420, 1
      %v1319 = vsel %vm672, %v1317, %v1318
      %v1320 = vrot.slane %v421, 1
      %v1321 = vsel %vm672, %v1318, %v1320
      %s1322 = scalar_lea.vmem %s1, 4
      %v1323 = vld [vmem:[%s1322] sm:$0x1]
      %1324 = vset.pattern.permute.xlu0 0
      %1325 = vperm.xlu0 %1324, %v1319
      %v1326 = vpop.permute.xlu0 %1325
      %1328 = vset.pattern.permute.xlu0 0
      %1329 = vperm.xlu0 %1328, %v1321
      %v1330 = vpop.permute.xlu0 %1329
      %v1333 = vlaneseq
      %v1334 = vshrl.u32 %v1333, 7
      %v1335 = vsub.s32 0, %v1334
      %v1336 = vrot.slane %v1323, %v1335
      %v1338 = vmul.f32 %v765, %v1336
      %v1339 = vmul.f32 %v769, %v1336
      %v1340 = vmul.f32 %v773, %v1336
      %v1341 = vmul.f32 %v777, %v1336
      %v1342 = vmul.f32 %v781, %v1336
      %v1343 = vmul.f32 %v785, %v1336
      %v1344 = vmul.f32 %v789, %v1336
      %v1345 = vmul.f32 %v793, %v1336
      %v1346 = vmul.f32 %v797, %v1336
      %v1347 = vmul.f32 %v801, %v1336
      %v1348 = vmul.f32 %v805, %v1336
      %v1349 = vmul.f32 %v809, %v1336
      %v1350 = vmul.f32 %v813, %v1336
      %v1351 = vmul.f32 %v817, %v1336
      %v1352 = vmul.f32 %v821, %v1336
      %v1353 = vmul.f32 %v825, %v1336
      %v1354 = vmul.f32 %v829, %v1336
      %v1355 = vmul.f32 %v833, %v1336
      %v1356 = vmul.f32 %v837, %v1336
      %v1357 = vmul.f32 %v841, %v1336
      %v1358 = vmul.f32 %v845, %v1336
      %v1359 = vmul.f32 %v849, %v1336
      %v1360 = vmul.f32 %v853, %v1336
      %v1361 = vmul.f32 %v857, %v1336
      %v1362 = vmul.f32 %v861, %v1336
      %v1363 = vmul.f32 %v865, %v1336
      %v1364 = vmul.f32 %v869, %v1336
      %v1365 = vmul.f32 %v873, %v1336
      %v1366 = vmul.f32 %v877, %v1336
      %v1367 = vmul.f32 %v881, %v1336
      %v1368 = vmul.f32 %v1326, %v1336
      %v1369 = vmul.f32 %v1330, %v1336
      %v1370 = vadd.f32 %v1284, %v1338
      %v1371 = vadd.f32 %v1285, %v1339
      %v1372 = vadd.f32 %v1286, %v1340
      %v1373 = vadd.f32 %v1287, %v1341
      %v1374 = vadd.f32 %v1288, %v1342
      %v1375 = vadd.f32 %v1289, %v1343
      %v1376 = vadd.f32 %v1290, %v1344
      %v1377 = vadd.f32 %v1291, %v1345
      %v1378 = vadd.f32 %v1292, %v1346
      %v1379 = vadd.f32 %v1293, %v1347
      %v1380 = vadd.f32 %v1294, %v1348
      %v1381 = vadd.f32 %v1295, %v1349
      %v1382 = vadd.f32 %v1296, %v1350
      %v1383 = vadd.f32 %v1297, %v1351
      %v1384 = vadd.f32 %v1298, %v1352
      %v1385 = vadd.f32 %v1299, %v1353
      %v1386 = vadd.f32 %v1300, %v1354
      %v1387 = vadd.f32 %v1301, %v1355
      %v1388 = vadd.f32 %v1302, %v1356
      %v1389 = vadd.f32 %v1303, %v1357
      %v1390 = vadd.f32 %v1304, %v1358
      %v1391 = vadd.f32 %v1305, %v1359
      %v1392 = vadd.f32 %v1306, %v1360
      %v1393 = vadd.f32 %v1307, %v1361
      %v1394 = vadd.f32 %v1308, %v1362
      %v1395 = vadd.f32 %v1309, %v1363
      %v1396 = vadd.f32 %v1310, %v1364
      %v1397 = vadd.f32 %v1311, %v1365
      %v1398 = vadd.f32 %v1312, %v1366
      %v1399 = vadd.f32 %v1313, %v1367
      %v1400 = vadd.f32 %v1314, %v1368
      %v1401 = vadd.f32 %v1315, %v1369
      %v1402 = vrot.slane %v419, 2
      %v1403 = vrot.slane %v420, 2
      %v1404 = vsel %vm953, %v1402, %v1403
      %v1405 = vrot.slane %v421, 2
      %v1406 = vsel %vm953, %v1403, %v1405
      %s1407 = scalar_lea.vmem %s1, 5
      %v1408 = vld [vmem:[%s1407] sm:$0x1]
      %1409 = vset.pattern.permute.xlu0 0
      %1410 = vperm.xlu0 %1409, %v1404
      %v1411 = vpop.permute.xlu0 %1410
      %1413 = vset.pattern.permute.xlu0 0
      %1414 = vperm.xlu0 %1413, %v1406
      %v1415 = vpop.permute.xlu0 %1414
      %v1418 = vlaneseq
      %v1419 = vshrl.u32 %v1418, 7
      %v1420 = vsub.s32 0, %v1419
      %v1421 = vrot.slane %v1408, %v1420
      %v1423 = vmul.f32 %v1046, %v1421
      %v1424 = vmul.f32 %v1050, %v1421
      %v1425 = vmul.f32 %v1054, %v1421
      %v1426 = vmul.f32 %v1058, %v1421
      %v1427 = vmul.f32 %v1062, %v1421
      %v1428 = vmul.f32 %v1066, %v1421
      %v1429 = vmul.f32 %v1070, %v1421
      %v1430 = vmul.f32 %v1074, %v1421
      %v1431 = vmul.f32 %v1078, %v1421
      %v1432 = vmul.f32 %v1082, %v1421
      %v1433 = vmul.f32 %v1086, %v1421
      %v1434 = vmul.f32 %v1090, %v1421
      %v1435 = vmul.f32 %v1094, %v1421
      %v1436 = vmul.f32 %v1098, %v1421
      %v1437 = vmul.f32 %v1102, %v1421
      %v1438 = vmul.f32 %v1106, %v1421
      %v1439 = vmul.f32 %v1110, %v1421
      %v1440 = vmul.f32 %v1114, %v1421
      %v1441 = vmul.f32 %v1118, %v1421
      %v1442 = vmul.f32 %v1122, %v1421
      %v1443 = vmul.f32 %v1126, %v1421
      %v1444 = vmul.f32 %v1130, %v1421
      %v1445 = vmul.f32 %v1134, %v1421
      %v1446 = vmul.f32 %v1138, %v1421
      %v1447 = vmul.f32 %v1142, %v1421
      %v1448 = vmul.f32 %v1146, %v1421
      %v1449 = vmul.f32 %v1150, %v1421
      %v1450 = vmul.f32 %v1154, %v1421
      %v1451 = vmul.f32 %v1158, %v1421
      %v1452 = vmul.f32 %v1162, %v1421
      %v1453 = vmul.f32 %v1411, %v1421
      %v1454 = vmul.f32 %v1415, %v1421
      %v1455 = vadd.f32 %v1370, %v1423
      %v1456 = vadd.f32 %v1371, %v1424
      %v1457 = vadd.f32 %v1372, %v1425
      %v1458 = vadd.f32 %v1373, %v1426
      %v1459 = vadd.f32 %v1374, %v1427
      %v1460 = vadd.f32 %v1375, %v1428
      %v1461 = vadd.f32 %v1376, %v1429
      %v1462 = vadd.f32 %v1377, %v1430
      %v1463 = vadd.f32 %v1378, %v1431
      %v1464 = vadd.f32 %v1379, %v1432
      %v1465 = vadd.f32 %v1380, %v1433
      %v1466 = vadd.f32 %v1381, %v1434
      %v1467 = vadd.f32 %v1382, %v1435
      %v1468 = vadd.f32 %v1383, %v1436
      %v1469 = vadd.f32 %v1384, %v1437
      %v1470 = vadd.f32 %v1385, %v1438
      %v1471 = vadd.f32 %v1386, %v1439
      %v1472 = vadd.f32 %v1387, %v1440
      %v1473 = vadd.f32 %v1388, %v1441
      %v1474 = vadd.f32 %v1389, %v1442
      %v1475 = vadd.f32 %v1390, %v1443
      %v1476 = vadd.f32 %v1391, %v1444
      %v1477 = vadd.f32 %v1392, %v1445
      %v1478 = vadd.f32 %v1393, %v1446
      %v1479 = vadd.f32 %v1394, %v1447
      %v1480 = vadd.f32 %v1395, %v1448
      %v1481 = vadd.f32 %v1396, %v1449
      %v1482 = vadd.f32 %v1397, %v1450
      %v1483 = vadd.f32 %v1398, %v1451
      %v1484 = vadd.f32 %v1399, %v1452
      %v1485 = vadd.f32 %v1400, %v1453
      %v1486 = vadd.f32 %v1401, %v1454
      %s1487 = scalar_lea.vmem %s1, 6
      %v1488 = vld [vmem:[%s1487] sm:$0x1]
      %1490 = vset.pattern.permute.xlu0 0
      %1491 = vperm.xlu0 %1490, %v422
      %v1492 = vpop.permute.xlu0 %1491
      %1495 = vset.pattern.permute.xlu0 0
      %1496 = vperm.xlu0 %1495, %v423
      %v1497 = vpop.permute.xlu0 %1496
      %v1500 = vlaneseq
      %v1501 = vshrl.u32 %v1500, 7
      %v1502 = vsub.s32 0, %v1501
      %v1503 = vrot.slane %v1488, %v1502
      %v1505 = vmul.f32 %v449, %v1503
      %v1506 = vmul.f32 %v454, %v1503
      %v1507 = vmul.f32 %v459, %v1503
      %v1508 = vmul.f32 %v464, %v1503
      %v1509 = vmul.f32 %v469, %v1503
      %v1510 = vmul.f32 %v474, %v1503
      %v1511 = vmul.f32 %v479, %v1503
      %v1512 = vmul.f32 %v484, %v1503
      %v1513 = vmul.f32 %v489, %v1503
      %v1514 = vmul.f32 %v494, %v1503
      %v1515 = vmul.f32 %v499, %v1503
      %v1516 = vmul.f32 %v504, %v1503
      %v1517 = vmul.f32 %v509, %v1503
      %v1518 = vmul.f32 %v514, %v1503
      %v1519 = vmul.f32 %v519, %v1503
      %v1520 = vmul.f32 %v524, %v1503
      %v1521 = vmul.f32 %v529, %v1503
      %v1522 = vmul.f32 %v534, %v1503
      %v1523 = vmul.f32 %v539, %v1503
      %v1524 = vmul.f32 %v544, %v1503
      %v1525 = vmul.f32 %v549, %v1503
      %v1526 = vmul.f32 %v554, %v1503
      %v1527 = vmul.f32 %v559, %v1503
      %v1528 = vmul.f32 %v564, %v1503
      %v1529 = vmul.f32 %v569, %v1503
      %v1530 = vmul.f32 %v574, %v1503
      %v1531 = vmul.f32 %v579, %v1503
      %v1532 = vmul.f32 %v584, %v1503
      %v1533 = vmul.f32 %v1239, %v1503
      %v1534 = vmul.f32 %v1244, %v1503
      %v1535 = vmul.f32 %v1492, %v1503
      %v1536 = vmul.f32 %v1497, %v1503
      %v1537 = vadd.f32 %v1455, %v1505
      %v1538 = vadd.f32 %v1456, %v1506
      %v1539 = vadd.f32 %v1457, %v1507
      %v1540 = vadd.f32 %v1458, %v1508
      %v1541 = vadd.f32 %v1459, %v1509
      %v1542 = vadd.f32 %v1460, %v1510
      %v1543 = vadd.f32 %v1461, %v1511
      %v1544 = vadd.f32 %v1462, %v1512
      %v1545 = vadd.f32 %v1463, %v1513
      %v1546 = vadd.f32 %v1464, %v1514
      %v1547 = vadd.f32 %v1465, %v1515
      %v1548 = vadd.f32 %v1466, %v1516
      %v1549 = vadd.f32 %v1467, %v1517
      %v1550 = vadd.f32 %v1468, %v1518
      %v1551 = vadd.f32 %v1469, %v1519
      %v1552 = vadd.f32 %v1470, %v1520
      %v1553 = vadd.f32 %v1471, %v1521
      %v1554 = vadd.f32 %v1472, %v1522
      %v1555 = vadd.f32 %v1473, %v1523
      %v1556 = vadd.f32 %v1474, %v1524
      %v1557 = vadd.f32 %v1475, %v1525
      %v1558 = vadd.f32 %v1476, %v1526
      %v1559 = vadd.f32 %v1477, %v1527
      %v1560 = vadd.f32 %v1478, %v1528
      %v1561 = vadd.f32 %v1479, %v1529
      %v1562 = vadd.f32 %v1480, %v1530
      %v1563 = vadd.f32 %v1481, %v1531
      %v1564 = vadd.f32 %v1482, %v1532
      %v1565 = vadd.f32 %v1483, %v1533
      %v1566 = vadd.f32 %v1484, %v1534
      %v1567 = vadd.f32 %v1485, %v1535
      %v1568 = vadd.f32 %v1486, %v1536
      %v1570 = vrot.slane %v422, 1
      %v1571 = vrot.slane %v423, 1
      %v1572 = vsel %vm672, %v1570, %v1571
      %v1573 = vrot.slane %v424, 1
      %v1574 = vsel %vm672, %v1571, %v1573
      %s1575 = scalar_lea.vmem %s1, 7
      %v1576 = vld [vmem:[%s1575] sm:$0x1]
      %1577 = vset.pattern.permute.xlu0 0
      %1578 = vperm.xlu0 %1577, %v1572
      %v1579 = vpop.permute.xlu0 %1578
      %1581 = vset.pattern.permute.xlu0 0
      %1582 = vperm.xlu0 %1581, %v1574
      %v1583 = vpop.permute.xlu0 %1582
      %v1586 = vlaneseq
      %v1587 = vshrl.u32 %v1586, 7
      %v1588 = vsub.s32 0, %v1587
      %v1589 = vrot.slane %v1576, %v1588
      %v1591 = vmul.f32 %v773, %v1589
      %v1592 = vmul.f32 %v777, %v1589
      %v1593 = vmul.f32 %v781, %v1589
      %v1594 = vmul.f32 %v785, %v1589
      %v1595 = vmul.f32 %v789, %v1589
      %v1596 = vmul.f32 %v793, %v1589
      %v1597 = vmul.f32 %v797, %v1589
      %v1598 = vmul.f32 %v801, %v1589
      %v1599 = vmul.f32 %v805, %v1589
      %v1600 = vmul.f32 %v809, %v1589
      %v1601 = vmul.f32 %v813, %v1589
      %v1602 = vmul.f32 %v817, %v1589
      %v1603 = vmul.f32 %v821, %v1589
      %v1604 = vmul.f32 %v825, %v1589
      %v1605 = vmul.f32 %v829, %v1589
      %v1606 = vmul.f32 %v833, %v1589
      %v1607 = vmul.f32 %v837, %v1589
      %v1608 = vmul.f32 %v841, %v1589
      %v1609 = vmul.f32 %v845, %v1589
      %v1610 = vmul.f32 %v849, %v1589
      %v1611 = vmul.f32 %v853, %v1589
      %v1612 = vmul.f32 %v857, %v1589
      %v1613 = vmul.f32 %v861, %v1589
      %v1614 = vmul.f32 %v865, %v1589
      %v1615 = vmul.f32 %v869, %v1589
      %v1616 = vmul.f32 %v873, %v1589
      %v1617 = vmul.f32 %v877, %v1589
      %v1618 = vmul.f32 %v881, %v1589
      %v1619 = vmul.f32 %v1326, %v1589
      %v1620 = vmul.f32 %v1330, %v1589
      %v1621 = vmul.f32 %v1579, %v1589
      %v1622 = vmul.f32 %v1583, %v1589
      %v1623 = vadd.f32 %v1537, %v1591
      %v1624 = vadd.f32 %v1538, %v1592
      %v1625 = vadd.f32 %v1539, %v1593
      %v1626 = vadd.f32 %v1540, %v1594
      %v1627 = vadd.f32 %v1541, %v1595
      %v1628 = vadd.f32 %v1542, %v1596
      %v1629 = vadd.f32 %v1543, %v1597
      %v1630 = vadd.f32 %v1544, %v1598
      %v1631 = vadd.f32 %v1545, %v1599
      %v1632 = vadd.f32 %v1546, %v1600
      %v1633 = vadd.f32 %v1547, %v1601
      %v1634 = vadd.f32 %v1548, %v1602
      %v1635 = vadd.f32 %v1549, %v1603
      %v1636 = vadd.f32 %v1550, %v1604
      %v1637 = vadd.f32 %v1551, %v1605
      %v1638 = vadd.f32 %v1552, %v1606
      %v1639 = vadd.f32 %v1553, %v1607
      %v1640 = vadd.f32 %v1554, %v1608
      %v1641 = vadd.f32 %v1555, %v1609
      %v1642 = vadd.f32 %v1556, %v1610
      %v1643 = vadd.f32 %v1557, %v1611
      %v1644 = vadd.f32 %v1558, %v1612
      %v1645 = vadd.f32 %v1559, %v1613
      %v1646 = vadd.f32 %v1560, %v1614
      %v1647 = vadd.f32 %v1561, %v1615
      %v1648 = vadd.f32 %v1562, %v1616
      %v1649 = vadd.f32 %v1563, %v1617
      %v1650 = vadd.f32 %v1564, %v1618
      %v1651 = vadd.f32 %v1565, %v1619
      %v1652 = vadd.f32 %v1566, %v1620
      %v1653 = vadd.f32 %v1567, %v1621
      %v1654 = vadd.f32 %v1568, %v1622
      %v1655 = vrot.slane %v422, 2
      %v1656 = vrot.slane %v423, 2
      %v1657 = vsel %vm953, %v1655, %v1656
      %v1658 = vrot.slane %v424, 2
      %v1659 = vsel %vm953, %v1656, %v1658
      %s1660 = scalar_lea.vmem %s1, 8
      %v1661 = vld [vmem:[%s1660] sm:$0x1]
      %1662 = vset.pattern.permute.xlu0 0
      %1663 = vperm.xlu0 %1662, %v1657
      %v1664 = vpop.permute.xlu0 %1663
      %1666 = vset.pattern.permute.xlu0 0
      %1667 = vperm.xlu0 %1666, %v1659
      %v1668 = vpop.permute.xlu0 %1667
      %v1671 = vlaneseq
      %v1672 = vshrl.u32 %v1671, 7
      %v1673 = vsub.s32 0, %v1672
      %v1674 = vrot.slane %v1661, %v1673
      %v1676 = vmul.f32 %v1054, %v1674
      %v1677 = vmul.f32 %v1058, %v1674
      %v1678 = vmul.f32 %v1062, %v1674
      %v1679 = vmul.f32 %v1066, %v1674
      %v1680 = vmul.f32 %v1070, %v1674
      %v1681 = vmul.f32 %v1074, %v1674
      %v1682 = vmul.f32 %v1078, %v1674
      %v1683 = vmul.f32 %v1082, %v1674
      %v1684 = vmul.f32 %v1086, %v1674
      %v1685 = vmul.f32 %v1090, %v1674
      %v1686 = vmul.f32 %v1094, %v1674
      %v1687 = vmul.f32 %v1098, %v1674
      %v1688 = vmul.f32 %v1102, %v1674
      %v1689 = vmul.f32 %v1106, %v1674
      %v1690 = vmul.f32 %v1110, %v1674
      %v1691 = vmul.f32 %v1114, %v1674
      %v1692 = vmul.f32 %v1118, %v1674
      %v1693 = vmul.f32 %v1122, %v1674
      %v1694 = vmul.f32 %v1126, %v1674
      %v1695 = vmul.f32 %v1130, %v1674
      %v1696 = vmul.f32 %v1134, %v1674
      %v1697 = vmul.f32 %v1138, %v1674
      %v1698 = vmul.f32 %v1142, %v1674
      %v1699 = vmul.f32 %v1146, %v1674
      %v1700 = vmul.f32 %v1150, %v1674
      %v1701 = vmul.f32 %v1154, %v1674
      %v1702 = vmul.f32 %v1158, %v1674
      %v1703 = vmul.f32 %v1162, %v1674
      %v1704 = vmul.f32 %v1411, %v1674
      %v1705 = vmul.f32 %v1415, %v1674
      %v1706 = vmul.f32 %v1664, %v1674
      %v1707 = vmul.f32 %v1668, %v1674
      %v1708 = vadd.f32 %v1623, %v1676
      %v1709 = vadd.f32 %v1624, %v1677
      %v1710 = vadd.f32 %v1625, %v1678
      %v1711 = vadd.f32 %v1626, %v1679
      %v1712 = vadd.f32 %v1627, %v1680
      %v1713 = vadd.f32 %v1628, %v1681
      %v1714 = vadd.f32 %v1629, %v1682
      %v1715 = vadd.f32 %v1630, %v1683
      %v1716 = vadd.f32 %v1631, %v1684
      %v1717 = vadd.f32 %v1632, %v1685
      %v1718 = vadd.f32 %v1633, %v1686
      %v1719 = vadd.f32 %v1634, %v1687
      %v1720 = vadd.f32 %v1635, %v1688
      %v1721 = vadd.f32 %v1636, %v1689
      %v1722 = vadd.f32 %v1637, %v1690
      %v1723 = vadd.f32 %v1638, %v1691
      %v1724 = vadd.f32 %v1639, %v1692
      %v1725 = vadd.f32 %v1640, %v1693
      %v1726 = vadd.f32 %v1641, %v1694
      %v1727 = vadd.f32 %v1642, %v1695
      %v1728 = vadd.f32 %v1643, %v1696
      %v1729 = vadd.f32 %v1644, %v1697
      %v1730 = vadd.f32 %v1645, %v1698
      %v1731 = vadd.f32 %v1646, %v1699
      %v1732 = vadd.f32 %v1647, %v1700
      %v1733 = vadd.f32 %v1648, %v1701
      %v1734 = vadd.f32 %v1649, %v1702
      %v1735 = vadd.f32 %v1650, %v1703
      %v1736 = vadd.f32 %v1651, %v1704
      %v1737 = vadd.f32 %v1652, %v1705
      %v1738 = vadd.f32 %v1653, %v1706
      %v1739 = vadd.f32 %v1654, %v1707
      %vm1740 = vcmp.gt.f32.partialorder %v1708, 0.0
      %vm1741 = vcmp.gt.f32.partialorder %v1709, 0.0
      %vm1742 = vcmp.gt.f32.partialorder %v1710, 0.0
      %vm1743 = vcmp.gt.f32.partialorder %v1711, 0.0
      %vm1744 = vcmp.gt.f32.partialorder %v1712, 0.0
      %vm1745 = vcmp.gt.f32.partialorder %v1713, 0.0
      %vm1746 = vcmp.gt.f32.partialorder %v1714, 0.0
      %vm1747 = vcmp.gt.f32.partialorder %v1715, 0.0
      %vm1748 = vcmp.gt.f32.partialorder %v1716, 0.0
      %vm1749 = vcmp.gt.f32.partialorder %v1717, 0.0
      %vm1750 = vcmp.gt.f32.partialorder %v1718, 0.0
      %vm1751 = vcmp.gt.f32.partialorder %v1719, 0.0
      %vm1752 = vcmp.gt.f32.partialorder %v1720, 0.0
      %vm1753 = vcmp.gt.f32.partialorder %v1721, 0.0
      %vm1754 = vcmp.gt.f32.partialorder %v1722, 0.0
      %vm1755 = vcmp.gt.f32.partialorder %v1723, 0.0
      %vm1756 = vcmp.gt.f32.partialorder %v1724, 0.0
      %vm1757 = vcmp.gt.f32.partialorder %v1725, 0.0
      %vm1758 = vcmp.gt.f32.partialorder %v1726, 0.0
      %vm1759 = vcmp.gt.f32.partialorder %v1727, 0.0
      %vm1760 = vcmp.gt.f32.partialorder %v1728, 0.0
      %vm1761 = vcmp.gt.f32.partialorder %v1729, 0.0
      %vm1762 = vcmp.gt.f32.partialorder %v1730, 0.0
      %vm1763 = vcmp.gt.f32.partialorder %v1731, 0.0
      %vm1764 = vcmp.gt.f32.partialorder %v1732, 0.0
      %vm1765 = vcmp.gt.f32.partialorder %v1733, 0.0
      %vm1766 = vcmp.gt.f32.partialorder %v1734, 0.0
      %vm1767 = vcmp.gt.f32.partialorder %v1735, 0.0
      %vm1768 = vcmp.gt.f32.partialorder %v1736, 0.0
      %vm1769 = vcmp.gt.f32.partialorder %v1737, 0.0
      %vm1770 = vcmp.gt.f32.partialorder %v1738, 0.0
      %vm1771 = vcmp.gt.f32.partialorder %v1739, 0.0
      %v1772 = vmul.f32 %v1708, 0.1
      %v1773 = vmul.f32 %v1709, 0.1
      %v1774 = vmul.f32 %v1710, 0.1
      %v1775 = vmul.f32 %v1711, 0.1
      %v1776 = vmul.f32 %v1712, 0.1
      %v1777 = vmul.f32 %v1713, 0.1
      %v1778 = vmul.f32 %v1714, 0.1
      %v1779 = vmul.f32 %v1715, 0.1
      %v1780 = vmul.f32 %v1716, 0.1
      %v1781 = vmul.f32 %v1717, 0.1
      %v1782 = vmul.f32 %v1718, 0.1
      %v1783 = vmul.f32 %v1719, 0.1
      %v1784 = vmul.f32 %v1720, 0.1
      %v1785 = vmul.f32 %v1721, 0.1
      %v1786 = vmul.f32 %v1722, 0.1
      %v1787 = vmul.f32 %v1723, 0.1
      %v1788 = vmul.f32 %v1724, 0.1
      %v1789 = vmul.f32 %v1725, 0.1
      %v1790 = vmul.f32 %v1726, 0.1
      %v1791 = vmul.f32 %v1727, 0.1
      %v1792 = vmul.f32 %v1728, 0.1
      %v1793 = vmul.f32 %v1729, 0.1
      %v1794 = vmul.f32 %v1730, 0.1
      %v1795 = vmul.f32 %v1731, 0.1
      %v1796 = vmul.f32 %v1732, 0.1
      %v1797 = vmul.f32 %v1733, 0.1
      %v1798 = vmul.f32 %v1734, 0.1
      %v1799 = vmul.f32 %v1735, 0.1
      %v1800 = vmul.f32 %v1736, 0.1
      %v1801 = vmul.f32 %v1737, 0.1
      %v1802 = vmul.f32 %v1738, 0.1
      %v1803 = vmul.f32 %v1739, 0.1
      %v1804 = vsel %vm1740, %v1708, %v1772
      %v1805 = vsel %vm1741, %v1709, %v1773
      %v1806 = vsel %vm1742, %v1710, %v1774
      %v1807 = vsel %vm1743, %v1711, %v1775
      %v1808 = vsel %vm1744, %v1712, %v1776
      %v1809 = vsel %vm1745, %v1713, %v1777
      %v1810 = vsel %vm1746, %v1714, %v1778
      %v1811 = vsel %vm1747, %v1715, %v1779
      %v1812 = vsel %vm1748, %v1716, %v1780
      %v1813 = vsel %vm1749, %v1717, %v1781
      %v1814 = vsel %vm1750, %v1718, %v1782
      %v1815 = vsel %vm1751, %v1719, %v1783
      %v1816 = vsel %vm1752, %v1720, %v1784
      %v1817 = vsel %vm1753, %v1721, %v1785
      %v1818 = vsel %vm1754, %v1722, %v1786
      %v1819 = vsel %vm1755, %v1723, %v1787
      %v1820 = vsel %vm1756, %v1724, %v1788
      %v1821 = vsel %vm1757, %v1725, %v1789
      %v1822 = vsel %vm1758, %v1726, %v1790
      %v1823 = vsel %vm1759, %v1727, %v1791
      %v1824 = vsel %vm1760, %v1728, %v1792
      %v1825 = vsel %vm1761, %v1729, %v1793
      %v1826 = vsel %vm1762, %v1730, %v1794
      %v1827 = vsel %vm1763, %v1731, %v1795
      %v1828 = vsel %vm1764, %v1732, %v1796
      %v1829 = vsel %vm1765, %v1733, %v1797
      %v1830 = vsel %vm1766, %v1734, %v1798
      %v1831 = vsel %vm1767, %v1735, %v1799
      %v1832 = vsel %vm1768, %v1736, %v1800
      %v1833 = vsel %vm1769, %v1737, %v1801
      %v1834 = vsel %vm1770, %v1738, %v1802
      %v1835 = vsel %vm1771, %v1739, %v1803
      %1836 = vst.msk [vmem:[#allocation2] sm:$0xff] %vm315, %v1804
      %1837 = vst.msk [vmem:[#allocation2 + $0x8] sm:$0xff] %vm315, %v1805
      %1838 = vst.msk [vmem:[#allocation2 + $0x10] sm:$0xff] %vm315, %v1806
      %1839 = vst.msk [vmem:[#allocation2 + $0x18] sm:$0xff] %vm315, %v1807
      %1840 = vst.msk [vmem:[#allocation2 + $0x20] sm:$0xff] %vm315, %v1808
      %1841 = vst.msk [vmem:[#allocation2 + $0x28] sm:$0xff] %vm315, %v1809
      %1842 = vst.msk [vmem:[#allocation2 + $0x30] sm:$0xff] %vm315, %v1810
      %1843 = vst.msk [vmem:[#allocation2 + $0x38] sm:$0xff] %vm315, %v1811
      %1844 = vst.msk [vmem:[#allocation2 + $0x40] sm:$0xff] %vm315, %v1812
      %1845 = vst.msk [vmem:[#allocation2 + $0x48] sm:$0xff] %vm315, %v1813
      %1846 = vst.msk [vmem:[#allocation2 + $0x50] sm:$0xff] %vm315, %v1814
      %1847 = vst.msk [vmem:[#allocation2 + $0x58] sm:$0xff] %vm315, %v1815
      %1848 = vst.msk [vmem:[#allocation2 + $0x60] sm:$0xff] %vm315, %v1816
      %1849 = vst.msk [vmem:[#allocation2 + $0x68] sm:$0xff] %vm315, %v1817
      %1850 = vst.msk [vmem:[#allocation2 + $0x70] sm:$0xff] %vm315, %v1818
      %1851 = vst.msk [vmem:[#allocation2 + $0x78] sm:$0xff] %vm315, %v1819
      %1852 = vst.msk [vmem:[#allocation2 + $0x80] sm:$0xff] %vm315, %v1820
      %1853 = vst.msk [vmem:[#allocation2 + $0x88] sm:$0xff] %vm315, %v1821
      %1854 = vst.msk [vmem:[#allocation2 + $0x90] sm:$0xff] %vm315, %v1822
      %1855 = vst.msk [vmem:[#allocation2 + $0x98] sm:$0xff] %vm315, %v1823
      %1856 = vst.msk [vmem:[#allocation2 + $0xa0] sm:$0xff] %vm315, %v1824
      %1857 = vst.msk [vmem:[#allocation2 + $0xa8] sm:$0xff] %vm315, %v1825
      %1858 = vst.msk [vmem:[#allocation2 + $0xb0] sm:$0xff] %vm315, %v1826
      %1859 = vst.msk [vmem:[#allocation2 + $0xb8] sm:$0xff] %vm315, %v1827
      %1860 = vst.msk [vmem:[#allocation2 + $0xc0] sm:$0xff] %vm315, %v1828
      %1861 = vst.msk [vmem:[#allocation2 + $0xc8] sm:$0xff] %vm315, %v1829
      %1862 = vst.msk [vmem:[#allocation2 + $0xd0] sm:$0xff] %vm315, %v1830
      %1863 = vst.msk [vmem:[#allocation2 + $0xd8] sm:$0xff] %vm315, %v1831
      %1864 = vst.msk [vmem:[#allocation2 + $0xe0] sm:$0xff] %vm315, %v1832
      %1865 = vst.msk [vmem:[#allocation2 + $0xe8] sm:$0xff] %vm315, %v1833
      %1866 = vst.msk [vmem:[#allocation2 + $0xf0] sm:$0xff] %vm315, %v1834
      %1867 = vst.msk [vmem:[#allocation2 + $0xf8] sm:$0xff] %vm315, %v1835
      %1868 = vst.msk [vmem:[#allocation3] sm:$0xff] %vm315, %v1804
      %1869 = vst.msk [vmem:[#allocation3 + $0x8] sm:$0xff] %vm315, %v1805
      %1870 = vst.msk [vmem:[#allocation3 + $0x10] sm:$0xff] %vm315, %v1806
      %1871 = vst.msk [vmem:[#allocation3 + $0x18] sm:$0xff] %vm315, %v1807
      %1872 = vst.msk [vmem:[#allocation3 + $0x20] sm:$0xff] %vm315, %v1808
      %1873 = vst.msk [vmem:[#allocation3 + $0x28] sm:$0xff] %vm315, %v1809
      %1874 = vst.msk [vmem:[#allocation3 + $0x30] sm:$0xff] %vm315, %v1810
      %1875 = vst.msk [vmem:[#allocation3 + $0x38] sm:$0xff] %vm315, %v1811
      %1876 = vst.msk [vmem:[#allocation3 + $0x40] sm:$0xff] %vm315, %v1812
      %1877 = vst.msk [vmem:[#allocation3 + $0x48] sm:$0xff] %vm315, %v1813
      %1878 = vst.msk [vmem:[#allocation3 + $0x50] sm:$0xff] %vm315, %v1814
      %1879 = vst.msk [vmem:[#allocation3 + $0x58] sm:$0xff] %vm315, %v1815
      %1880 = vst.msk [vmem:[#allocation3 + $0x60] sm:$0xff] %vm315, %v1816
      %1881 = vst.msk [vmem:[#allocation3 + $0x68] sm:$0xff] %vm315, %v1817
      %1882 = vst.msk [vmem:[#allocation3 + $0x70] sm:$0xff] %vm315, %v1818
      %1883 = vst.msk [vmem:[#allocation3 + $0x78] sm:$0xff] %vm315, %v1819
      %1884 = vst.msk [vmem:[#allocation3 + $0x80] sm:$0xff] %vm315, %v1820
      %1885 = vst.msk [vmem:[#allocation3 + $0x88] sm:$0xff] %vm315, %v1821
      %1886 = vst.msk [vmem:[#allocation3 + $0x90] sm:$0xff] %vm315, %v1822
      %1887 = vst.msk [vmem:[#allocation3 + $0x98] sm:$0xff] %vm315, %v1823
      %1888 = vst.msk [vmem:[#allocation3 + $0xa0] sm:$0xff] %vm315, %v1824
      %1889 = vst.msk [vmem:[#allocation3 + $0xa8] sm:$0xff] %vm315, %v1825
      %1890 = vst.msk [vmem:[#allocation3 + $0xb0] sm:$0xff] %vm315, %v1826
      %1891 = vst.msk [vmem:[#allocation3 + $0xb8] sm:$0xff] %vm315, %v1827
      %1892 = vst.msk [vmem:[#allocation3 + $0xc0] sm:$0xff] %vm315, %v1828
      %1893 = vst.msk [vmem:[#allocation3 + $0xc8] sm:$0xff] %vm315, %v1829
      %1894 = vst.msk [vmem:[#allocation3 + $0xd0] sm:$0xff] %vm315, %v1830
      %1895 = vst.msk [vmem:[#allocation3 + $0xd8] sm:$0xff] %vm315, %v1831
      %1896 = vst.msk [vmem:[#allocation3 + $0xe0] sm:$0xff] %vm315, %v1832
      %1897 = vst.msk [vmem:[#allocation3 + $0xe8] sm:$0xff] %vm315, %v1833
      %1898 = vst.msk [vmem:[#allocation3 + $0xf0] sm:$0xff] %vm315, %v1834
      %1899 = vst.msk [vmem:[#allocation3 + $0xf8] sm:$0xff] %vm315, %v1835
      loop: start=0, step=1, limit=4
      $region45: #{predictor_forward.1} parent=43 // loop_pre_header
        _
      $region46: #{predictor_forward.1} parent=43 // loop_header
        %s1901 = sphi 0, %s1905
        %p1902 = scmp.ge.s32.totalorder %s1901, 4
      $region47: #{predictor_forward.1} parent=43 // loop_header_branch
        %1904 = sbr.rel (%p1902) target = $region51
      $region48: #{predictor_forward.1} parent=43 // loop_body
        %v1906 = vld [vmem:[%s3] sm:$0xf]
        %v1907 = vld [vmem:[%s5] sm:$0xf]
        %v1908 = vld [vmem:[%s5 + $0x4] sm:$0xf]
        %v1909 = vld [vmem:[%s5 + $0x8] sm:$0xf]
        %v1910 = vld [vmem:[%s5 + $0xc] sm:$0xf]
        %v1911 = vld [vmem:[%s5 + $0x10] sm:$0xf]
        %v1912 = vld [vmem:[%s5 + $0x14] sm:$0xf]
        %v1913 = vld [vmem:[%s4] sm:$0x1]
        %v1914 = vld [vmem:[%s4 + $0x1] sm:$0x1]
        %v1915 = vld [vmem:[%s4 + $0x2] sm:$0x1]
        %v1916 = vld [vmem:[%s4 + $0x3] sm:$0x1]
        %v1917 = vld [vmem:[%s4 + $0x4] sm:$0x1]
        %v1918 = vld [vmem:[%s4 + $0x5] sm:$0x1]
        %v1919 = vld [vmem:[%s4 + $0x6] sm:$0x1]
        %v1920 = vld [vmem:[%s4 + $0x7] sm:$0x1]
        %v1921 = vld [vmem:[%s4 + $0x8] sm:$0x1]
        %v1922 = vld [vmem:[%s4 + $0x9] sm:$0x1]
        %v1923 = vld [vmem:[%s4 + $0xa] sm:$0x1]
        %v1924 = vld [vmem:[%s4 + $0xb] sm:$0x1]
        %v1925 = vld [vmem:[%s4 + $0xc] sm:$0x1]
        %v1926 = vld [vmem:[%s4 + $0xd] sm:$0x1]
        %v1927 = vld [vmem:[%s4 + $0xe] sm:$0x1]
        %v1928 = vld [vmem:[%s4 + $0xf] sm:$0x1]
        %v1929 = vld [vmem:[%s4 + $0x10] sm:$0x1]
        %v1930 = vld [vmem:[%s4 + $0x11] sm:$0x1]
        %v1931 = vld [vmem:[%s4 + $0x12] sm:$0x1]
        %v1932 = vld [vmem:[%s4 + $0x13] sm:$0x1]
        %v1933 = vld [vmem:[%s4 + $0x14] sm:$0x1]
        %v1934 = vld [vmem:[%s4 + $0x15] sm:$0x1]
        %v1935 = vld [vmem:[%s4 + $0x16] sm:$0x1]
        %v1936 = vld [vmem:[%s4 + $0x17] sm:$0x1]
        %v1937 = vld [vmem:[%s4 + $0x18] sm:$0x1]
        loop: start=0, step=1, limit=2
        $region52: #{predictor_forward.1} parent=48 // loop_pre_header
          _
        $region53: #{predictor_forward.1} parent=48 // loop_header
          %s1939 = sphi 0, %s1943
          %p1940 = scmp.ge.s32.totalorder %s1939, 2
        $region54: #{predictor_forward.1} parent=48 // loop_header_branch
          %1942 = sbr.rel (%p1940) target = $region58
        $region55: #{predictor_forward.1} parent=48 // loop_body
          %s1944 = smul.u32 %s1939, 8
          %s1945 = smul.u32 %s1944, 16
          %s1946 = scalar_lea.vmem [#allocation3], %s1945
          %v1947 = vld [vmem:[%s1946] sm:$0xff]
          %v1948 = vld [vmem:[%s1946 + $0x8] sm:$0xff]
          %v1949 = vld [vmem:[%s1946 + $0x10] sm:$0xff]
          %v1950 = vld [vmem:[%s1946 + $0x18] sm:$0xff]
          %v1951 = vld [vmem:[%s1946 + $0x20] sm:$0xff]
          %v1952 = vld [vmem:[%s1946 + $0x28] sm:$0xff]
          %v1953 = vld [vmem:[%s1946 + $0x30] sm:$0xff]
          %v1954 = vld [vmem:[%s1946 + $0x38] sm:$0xff]
          %v1955 = vld [vmem:[%s1946 + $0x40] sm:$0xff]
          %v1956 = vld [vmem:[%s1946 + $0x48] sm:$0xff]
          %v1957 = vld [vmem:[%s1946 + $0x50] sm:$0xff]
          %v1958 = vld [vmem:[%s1946 + $0x58] sm:$0xff]
          %v1959 = vld [vmem:[%s1946 + $0x60] sm:$0xff]
          %v1960 = vld [vmem:[%s1946 + $0x68] sm:$0xff]
          %v1961 = vld [vmem:[%s1946 + $0x70] sm:$0xff]
          %v1962 = vld [vmem:[%s1946 + $0x78] sm:$0xff]
          %v1963 = vpack.c.bf16 %v1948, %v1947
          %v1964 = vpack.c.bf16 %v1950, %v1949
          %v1965 = vpack.c.bf16 %v1952, %v1951
          %v1966 = vpack.c.bf16 %v1954, %v1953
          %v1967 = vpack.c.bf16 %v1956, %v1955
          %v1968 = vpack.c.bf16 %v1958, %v1957
          %v1969 = vpack.c.bf16 %v1960, %v1959
          %v1970 = vpack.c.bf16 %v1962, %v1961
          %v1972 = vsel %vm315, %v1963, 0
          %v1975 = vsel %vm315, %v1964, 0
          %v1978 = vsel %vm315, %v1965, 0
          %v1981 = vsel %vm315, %v1966, 0
          %v1984 = vsel %vm315, %v1967, 0
          %v1987 = vsel %vm315, %v1968, 0
          %v1990 = vsel %vm315, %v1969, 0
          %v1993 = vsel %vm315, %v1970, 0
          %vm1995 = vcmask 1043456
          %v1997 = vsel %vm1995, %v1906, 0
          %1999 = vmatprep.subr.bf16.mxu0 0
          %2000 = vmatpush1.bf16.msra.mxu0 %v1997
          %2001 = vmatprep.subr.bf16.mxu0 0
          %2002 = vmatpush1.bf16.msra.mxu0 0
          %2003 = vmatprep.subr.bf16.mxu0 0
          %2004 = vmatpush1.bf16.msra.mxu0 0
          %2005 = vmatprep.subr.bf16.mxu0 0
          %2006 = vmatpush1.bf16.msra.mxu0 0
          %2007 = vmatprep.subr.bf16.mxu0 0
          %2008 = vmatpush1.bf16.msra.mxu0 0
          %2009 = vmatprep.subr.bf16.mxu0 0
          %2010 = vmatpush1.bf16.msra.mxu0 0
          %2011 = vmatprep.subr.bf16.mxu0 0
          %2012 = vmatpush1.bf16.msra.mxu0 0
          %2013 = vmatprep.subr.bf16.mxu0 0
          %2014 = vmatpush1.bf16.msra.mxu0 0
          %2015 = vmatprep.subr.bf16.mxu0 0
          %2016 = vmatpush1.bf16.msra.mxu0 0
          %2017 = vmatprep.subr.bf16.mxu0 0
          %2018 = vmatpush1.bf16.msra.mxu0 0
          %2019 = vmatprep.subr.bf16.mxu0 0
          %2020 = vmatpush1.bf16.msra.mxu0 0
          %2021 = vmatprep.subr.bf16.mxu0 0
          %2022 = vmatpush1.bf16.msra.mxu0 0
          %2023 = vmatprep.subr.bf16.mxu0 0
          %2024 = vmatpush1.bf16.msra.mxu0 0
          %2025 = vmatprep.subr.bf16.mxu0 0
          %2026 = vmatpush1.bf16.msra.mxu0 0
          %2027 = vmatprep.subr.bf16.mxu0 0
          %2028 = vmatpush1.bf16.msra.mxu0 0
          %2029 = vmatprep.subr.bf16.mxu0 0
          %2030 = vmatpush1.bf16.msra.mxu0 0
          %2031 = vmatprep.mubr.bf16.mxu0 0
          %2032 = vmatmul.mubr.bf16.gmra.mrb[0].mxu0 %v1972
          %v2033 = vpop.f32.mrb[0].mxu0
          %v2034 = vadd.f32 0.0, %v2033
          %v2035 = vpop.f32.mrb[0].mxu0
          %v2036 = vpop.f32.mrb[0].mxu0
          %v2037 = vadd.f32 0.0, %v2036
          %v2038 = vpop.f32.mrb[0].mxu0
          %2039 = vmatprep.mubr.bf16.mxu0 0
          %2040 = vmatmul.mubr.bf16.gmra.mrb[0].mxu0 %v1975
          %v2041 = vpop.f32.mrb[0].mxu0
          %v2042 = vadd.f32 0.0, %v2041
          %v2043 = vpop.f32.mrb[0].mxu0
          %v2044 = vpop.f32.mrb[0].mxu0
          %v2045 = vadd.f32 0.0, %v2044
          %v2046 = vpop.f32.mrb[0].mxu0
          %2047 = vmatprep.mubr.bf16.mxu0 0
          %2048 = vmatmul.mubr.bf16.gmra.mrb[0].mxu0 %v1978
          %v2049 = vpop.f32.mrb[0].mxu0
          %v2050 = vadd.f32 0.0, %v2049
          %v2051 = vpop.f32.mrb[0].mxu0
          %v2052 = vpop.f32.mrb[0].mxu0
          %v2053 = vadd.f32 0.0, %v2052
          %v2054 = vpop.f32.mrb[0].mxu0
          %2055 = vmatprep.mubr.bf16.mxu0 0
          %2056 = vmatmul.mubr.bf16.gmra.mrb[0].mxu0 %v1981
          %v2057 = vpop.f32.mrb[0].mxu0
          %v2058 = vadd.f32 0.0, %v2057
          %v2059 = vpop.f32.mrb[0].mxu0
          %v2060 = vpop.f32.mrb[0].mxu0
          %v2061 = vadd.f32 0.0, %v2060
          %v2062 = vpop.f32.mrb[0].mxu0
          %2063 = vmatprep.mubr.bf16.mxu0 0
          %2064 = vmatmul.mubr.bf16.gmra.mrb[0].mxu0 %v1984
          %v2065 = vpop.f32.mrb[0].mxu0
          %v2066 = vadd.f32 0.0, %v2065
          %v2067 = vpop.f32.mrb[0].mxu0
          %v2068 = vpop.f32.mrb[0].mxu0
          %v2069 = vadd.f32 0.0, %v2068
          %v2070 = vpop.f32.mrb[0].mxu0
          %2071 = vmatprep.mubr.bf16.mxu0 0
          %2072 = vmatmul.mubr.bf16.gmra.mrb[0].mxu0 %v1987
          %v2073 = vpop.f32.mrb[0].mxu0
          %v2074 = vadd.f32 0.0, %v2073
          %v2075 = vpop.f32.mrb[0].mxu0
          %v2076 = vpop.f32.mrb[0].mxu0
          %v2077 = vadd.f32 0.0, %v2076
          %v2078 = vpop.f32.mrb[0].mxu0
          %2079 = vmatprep.mubr.bf16.mxu0 0
          %2080 = vmatmul.mubr.bf16.gmra.mrb[0].mxu0 %v1990
          %v2081 = vpop.f32.mrb[0].mxu0
          %v2082 = vadd.f32 0.0, %v2081
          %v2083 = vpop.f32.mrb[0].mxu0
          %v2084 = vpop.f32.mrb[0].mxu0
          %v2085 = vadd.f32 0.0, %v2084
          %v2086 = vpop.f32.mrb[0].mxu0
          %2087 = vmatprep.mubr.bf16.mxu0 0
          %2088 = vmatmul.mubr.bf16.gmra.mrb[0].mxu0 %v1993
          %v2089 = vpop.f32.mrb[0].mxu0
          %v2090 = vadd.f32 0.0, %v2089
          %v2091 = vpop.f32.mrb[0].mxu0
          %v2092 = vpop.f32.mrb[0].mxu0
          %v2093 = vadd.f32 0.0, %v2092
          %v2094 = vpop.f32.mrb[0].mxu0
          %2095 = vdwg.mxu0
          %vm2096 = vcmp.gt.f32.partialorder %v2034, 0.0
          %vm2097 = vcmp.gt.f32.partialorder %v2037, 0.0
          %vm2098 = vcmp.gt.f32.partialorder %v2042, 0.0
          %vm2099 = vcmp.gt.f32.partialorder %v2045, 0.0
          %vm2100 = vcmp.gt.f32.partialorder %v2050, 0.0
          %vm2101 = vcmp.gt.f32.partialorder %v2053, 0.0
          %vm2102 = vcmp.gt.f32.partialorder %v2058, 0.0
          %vm2103 = vcmp.gt.f32.partialorder %v2061, 0.0
          %vm2104 = vcmp.gt.f32.partialorder %v2066, 0.0
          %vm2105 = vcmp.gt.f32.partialorder %v2069, 0.0
          %vm2106 = vcmp.gt.f32.partialorder %v2074, 0.0
          %vm2107 = vcmp.gt.f32.partialorder %v2077, 0.0
          %vm2108 = vcmp.gt.f32.partialorder %v2082, 0.0
          %vm2109 = vcmp.gt.f32.partialorder %v2085, 0.0
          %vm2110 = vcmp.gt.f32.partialorder %v2090, 0.0
          %vm2111 = vcmp.gt.f32.partialorder %v2093, 0.0
          %v2112 = vmul.f32 %v2034, 0.1
          %v2113 = vmul.f32 %v2037, 0.1
          %v2114 = vmul.f32 %v2042, 0.1
          %v2115 = vmul.f32 %v2045, 0.1
          %v2116 = vmul.f32 %v2050, 0.1
          %v2117 = vmul.f32 %v2053, 0.1
          %v2118 = vmul.f32 %v2058, 0.1
          %v2119 = vmul.f32 %v2061, 0.1
          %v2120 = vmul.f32 %v2066, 0.1
          %v2121 = vmul.f32 %v2069, 0.1
          %v2122 = vmul.f32 %v2074, 0.1
          %v2123 = vmul.f32 %v2077, 0.1
          %v2124 = vmul.f32 %v2082, 0.1
          %v2125 = vmul.f32 %v2085, 0.1
          %v2126 = vmul.f32 %v2090, 0.1
          %v2127 = vmul.f32 %v2093, 0.1
          %v2128 = vsel %vm2096, %v2034, %v2112
          %v2129 = vsel %vm2097, %v2037, %v2113
          %v2130 = vsel %vm2098, %v2042, %v2114
          %v2131 = vsel %vm2099, %v2045, %v2115
          %v2132 = vsel %vm2100, %v2050, %v2116
          %v2133 = vsel %vm2101, %v2053, %v2117
          %v2134 = vsel %vm2102, %v2058, %v2118
          %v2135 = vsel %vm2103, %v2061, %v2119
          %v2136 = vsel %vm2104, %v2066, %v2120
          %v2137 = vsel %vm2105, %v2069, %v2121
          %v2138 = vsel %vm2106, %v2074, %v2122
          %v2139 = vsel %vm2107, %v2077, %v2123
          %v2140 = vsel %vm2108, %v2082, %v2124
          %v2141 = vsel %vm2109, %v2085, %v2125
          %v2142 = vsel %vm2110, %v2090, %v2126
          %v2143 = vsel %vm2111, %v2093, %v2127
          %s2144 = sadd.s32 %s1944, 2
          %s2145 = smul.u32 %s2144, 24
          %s2146 = scalar_lea.vmem [#allocation4], %s2145
          %2147 = vst.msk [vmem:[%s2146 + $0x2] sm:$0xff] %vm253, %v2128
          %2148 = vst.msk [vmem:[%s2146 + $0xa] sm:$0xff] %vm253, %v2129
          %2149 = vst.msk [vmem:[%s2146 + $0x1a] sm:$0xff] %vm253, %v2130
          %2150 = vst.msk [vmem:[%s2146 + $0x22] sm:$0xff] %vm253, %v2131
          %2151 = vst.msk [vmem:[%s2146 + $0x32] sm:$0xff] %vm253, %v2132
          %2152 = vst.msk [vmem:[%s2146 + $0x3a] sm:$0xff] %vm253, %v2133
          %2153 = vst.msk [vmem:[%s2146 + $0x4a] sm:$0xff] %vm253, %v2134
          %2154 = vst.msk [vmem:[%s2146 + $0x52] sm:$0xff] %vm253, %v2135
          %2155 = vst.msk [vmem:[%s2146 + $0x62] sm:$0xff] %vm253, %v2136
          %2156 = vst.msk [vmem:[%s2146 + $0x6a] sm:$0xff] %vm253, %v2137
          %2157 = vst.msk [vmem:[%s2146 + $0x7a] sm:$0xff] %vm253, %v2138
          %2158 = vst.msk [vmem:[%s2146 + $0x82] sm:$0xff] %vm253, %v2139
          %2159 = vst.msk [vmem:[%s2146 + $0x92] sm:$0xff] %vm253, %v2140
          %2160 = vst.msk [vmem:[%s2146 + $0x9a] sm:$0xff] %vm253, %v2141
          %2161 = vst.msk [vmem:[%s2146 + $0xaa] sm:$0xff] %vm253, %v2142
          %2162 = vst.msk [vmem:[%s2146 + $0xb2] sm:$0xff] %vm253, %v2143
        $region56: #{predictor_forward.1} parent=48 // loop_footer
          %s1943 = sadd.s32 1, %s1939
        $region57: #{predictor_forward.1} parent=48 // loop_footer_branch
          %1938 = sbr.rel target = $region53
        $region58: #{predictor_forward.1} parent=48 // loop_exit
          _
        loop: start=0, step=1, limit=2
        $region59: #{predictor_forward.1} parent=48 // loop_pre_header
          _
        $region60: #{predictor_forward.1} parent=48 // loop_header
          %s2164 = sphi 0, %s2168
          %p2165 = scmp.ge.s32.totalorder %s2164, 2
        $region61: #{predictor_forward.1} parent=48 // loop_header_branch
          %2167 = sbr.rel (%p2165) target = $region65
        $region62: #{predictor_forward.1} parent=48 // loop_body
          %s2169 = smul.u32 %s2164, 8
          %s2170 = smul.u32 %s2169, 24
          %s2171 = scalar_lea.vmem [#allocation4], %s2170
          %v2172 = vld [vmem:[%s2171] sm:$0xff]
          %v2173 = vld [vmem:[%s2171 + $0x8] sm:$0xff]
          %v2174 = vld [vmem:[%s2171 + $0x18] sm:$0xff]
          %v2175 = vld [vmem:[%s2171 + $0x20] sm:$0xff]
          %v2176 = vld [vmem:[%s2171 + $0x30] sm:$0xff]
          %v2177 = vld [vmem:[%s2171 + $0x38] sm:$0xff]
          %v2178 = vld [vmem:[%s2171 + $0x48] sm:$0xff]
          %v2179 = vld [vmem:[%s2171 + $0x50] sm:$0xff]
          %v2180 = vld [vmem:[%s2171 + $0x60] sm:$0xff]
          %v2181 = vld [vmem:[%s2171 + $0x68] sm:$0xff]
          %v2182 = vld [vmem:[%s2171 + $0x78] sm:$0xff]
          %v2183 = vld [vmem:[%s2171 + $0x80] sm:$0xff]
          %v2184 = vld [vmem:[%s2171 + $0x90] sm:$0xff]
          %v2185 = vld [vmem:[%s2171 + $0x98] sm:$0xff]
          %v2186 = vld [vmem:[%s2171 + $0xa8] sm:$0xff]
          %v2187 = vld [vmem:[%s2171 + $0xb0] sm:$0xff]
          %v2189 = vlaneseq
          %v2190 = vshrl.u32 %v2189, 7
          %v2191 = vsub.s32 0, %v2190
          %v2192 = vrot.slane %v1913, %v2191
          %v2194 = vmul.f32 %v2172, %v2192
          %v2195 = vmul.f32 %v2173, %v2192
          %v2196 = vmul.f32 %v2174, %v2192
          %v2197 = vmul.f32 %v2175, %v2192
          %v2198 = vmul.f32 %v2176, %v2192
          %v2199 = vmul.f32 %v2177, %v2192
          %v2200 = vmul.f32 %v2178, %v2192
          %v2201 = vmul.f32 %v2179, %v2192
          %v2202 = vmul.f32 %v2180, %v2192
          %v2203 = vmul.f32 %v2181, %v2192
          %v2204 = vmul.f32 %v2182, %v2192
          %v2205 = vmul.f32 %v2183, %v2192
          %v2206 = vmul.f32 %v2184, %v2192
          %v2207 = vmul.f32 %v2185, %v2192
          %v2208 = vmul.f32 %v2186, %v2192
          %v2209 = vmul.f32 %v2187, %v2192
          %v2210 = vadd.f32 %v2194, 0.0
          %v2211 = vadd.f32 %v2195, 0.0
          %v2212 = vadd.f32 %v2196, 0.0
          %v2213 = vadd.f32 %v2197, 0.0
          %v2214 = vadd.f32 %v2198, 0.0
          %v2215 = vadd.f32 %v2199, 0.0
          %v2216 = vadd.f32 %v2200, 0.0
          %v2217 = vadd.f32 %v2201, 0.0
          %v2218 = vadd.f32 %v2202, 0.0
          %v2219 = vadd.f32 %v2203, 0.0
          %v2220 = vadd.f32 %v2204, 0.0
          %v2221 = vadd.f32 %v2205, 0.0
          %v2222 = vadd.f32 %v2206, 0.0
          %v2223 = vadd.f32 %v2207, 0.0
          %v2224 = vadd.f32 %v2208, 0.0
          %v2225 = vadd.f32 %v2209, 0.0
          %v2226 = vld [vmem:[%s2171 + $0x1] sm:$0xff]
          %v2227 = vld [vmem:[%s2171 + $0x9] sm:$0xff]
          %v2228 = vld [vmem:[%s2171 + $0x19] sm:$0xff]
          %v2229 = vld [vmem:[%s2171 + $0x21] sm:$0xff]
          %v2230 = vld [vmem:[%s2171 + $0x31] sm:$0xff]
          %v2231 = vld [vmem:[%s2171 + $0x39] sm:$0xff]
          %v2232 = vld [vmem:[%s2171 + $0x49] sm:$0xff]
          %v2233 = vld [vmem:[%s2171 + $0x51] sm:$0xff]
          %v2234 = vld [vmem:[%s2171 + $0x61] sm:$0xff]
          %v2235 = vld [vmem:[%s2171 + $0x69] sm:$0xff]
          %v2236 = vld [vmem:[%s2171 + $0x79] sm:$0xff]
          %v2237 = vld [vmem:[%s2171 + $0x81] sm:$0xff]
          %v2238 = vld [vmem:[%s2171 + $0x91] sm:$0xff]
          %v2239 = vld [vmem:[%s2171 + $0x99] sm:$0xff]
          %v2240 = vld [vmem:[%s2171 + $0xa9] sm:$0xff]
          %v2241 = vld [vmem:[%s2171 + $0xb1] sm:$0xff]
          %v2243 = vlaneseq
          %v2244 = vshrl.u32 %v2243, 7
          %v2245 = vsub.s32 0, %v2244
          %v2246 = vrot.slane %v1914, %v2245
          %v2248 = vmul.f32 %v2226, %v2246
          %v2249 = vmul.f32 %v2227, %v2246
          %v2250 = vmul.f32 %v2228, %v2246
          %v2251 = vmul.f32 %v2229, %v2246
          %v2252 = vmul.f32 %v2230, %v2246
          %v2253 = vmul.f32 %v2231, %v2246
          %v2254 = vmul.f32 %v2232, %v2246
          %v2255 = vmul.f32 %v2233, %v2246
          %v2256 = vmul.f32 %v2234, %v2246
          %v2257 = vmul.f32 %v2235, %v2246
          %v2258 = vmul.f32 %v2236, %v2246
          %v2259 = vmul.f32 %v2237, %v2246
          %v2260 = vmul.f32 %v2238, %v2246
          %v2261 = vmul.f32 %v2239, %v2246
          %v2262 = vmul.f32 %v2240, %v2246
          %v2263 = vmul.f32 %v2241, %v2246
          %v2264 = vadd.f32 %v2210, %v2248
          %v2265 = vadd.f32 %v2211, %v2249
          %v2266 = vadd.f32 %v2212, %v2250
          %v2267 = vadd.f32 %v2213, %v2251
          %v2268 = vadd.f32 %v2214, %v2252
          %v2269 = vadd.f32 %v2215, %v2253
          %v2270 = vadd.f32 %v2216, %v2254
          %v2271 = vadd.f32 %v2217, %v2255
          %v2272 = vadd.f32 %v2218, %v2256
          %v2273 = vadd.f32 %v2219, %v2257
          %v2274 = vadd.f32 %v2220, %v2258
          %v2275 = vadd.f32 %v2221, %v2259
          %v2276 = vadd.f32 %v2222, %v2260
          %v2277 = vadd.f32 %v2223, %v2261
          %v2278 = vadd.f32 %v2224, %v2262
          %v2279 = vadd.f32 %v2225, %v2263
          %v2280 = vld [vmem:[%s2171 + $0x2] sm:$0xff]
          %v2281 = vld [vmem:[%s2171 + $0xa] sm:$0xff]
          %v2282 = vld [vmem:[%s2171 + $0x1a] sm:$0xff]
          %v2283 = vld [vmem:[%s2171 + $0x22] sm:$0xff]
          %v2284 = vld [vmem:[%s2171 + $0x32] sm:$0xff]
          %v2285 = vld [vmem:[%s2171 + $0x3a] sm:$0xff]
          %v2286 = vld [vmem:[%s2171 + $0x4a] sm:$0xff]
          %v2287 = vld [vmem:[%s2171 + $0x52] sm:$0xff]
          %v2288 = vld [vmem:[%s2171 + $0x62] sm:$0xff]
          %v2289 = vld [vmem:[%s2171 + $0x6a] sm:$0xff]
          %v2290 = vld [vmem:[%s2171 + $0x7a] sm:$0xff]
          %v2291 = vld [vmem:[%s2171 + $0x82] sm:$0xff]
          %v2292 = vld [vmem:[%s2171 + $0x92] sm:$0xff]
          %v2293 = vld [vmem:[%s2171 + $0x9a] sm:$0xff]
          %v2294 = vld [vmem:[%s2171 + $0xaa] sm:$0xff]
          %v2295 = vld [vmem:[%s2171 + $0xb2] sm:$0xff]
          %v2297 = vlaneseq
          %v2298 = vshrl.u32 %v2297, 7
          %v2299 = vsub.s32 0, %v2298
          %v2300 = vrot.slane %v1915, %v2299
          %v2302 = vmul.f32 %v2280, %v2300
          %v2303 = vmul.f32 %v2281, %v2300
          %v2304 = vmul.f32 %v2282, %v2300
          %v2305 = vmul.f32 %v2283, %v2300
          %v2306 = vmul.f32 %v2284, %v2300
          %v2307 = vmul.f32 %v2285, %v2300
          %v2308 = vmul.f32 %v2286, %v2300
          %v2309 = vmul.f32 %v2287, %v2300
          %v2310 = vmul.f32 %v2288, %v2300
          %v2311 = vmul.f32 %v2289, %v2300
          %v2312 = vmul.f32 %v2290, %v2300
          %v2313 = vmul.f32 %v2291, %v2300
          %v2314 = vmul.f32 %v2292, %v2300
          %v2315 = vmul.f32 %v2293, %v2300
          %v2316 = vmul.f32 %v2294, %v2300
          %v2317 = vmul.f32 %v2295, %v2300
          %v2318 = vadd.f32 %v2264, %v2302
          %v2319 = vadd.f32 %v2265, %v2303
          %v2320 = vadd.f32 %v2266, %v2304
          %v2321 = vadd.f32 %v2267, %v2305
          %v2322 = vadd.f32 %v2268, %v2306
          %v2323 = vadd.f32 %v2269, %v2307
          %v2324 = vadd.f32 %v2270, %v2308
          %v2325 = vadd.f32 %v2271, %v2309
          %v2326 = vadd.f32 %v2272, %v2310
          %v2327 = vadd.f32 %v2273, %v2311
          %v2328 = vadd.f32 %v2274, %v2312
          %v2329 = vadd.f32 %v2275, %v2313
          %v2330 = vadd.f32 %v2276, %v2314
          %v2331 = vadd.f32 %v2277, %v2315
          %v2332 = vadd.f32 %v2278, %v2316
          %v2333 = vadd.f32 %v2279, %v2317
          %v2334 = vld [vmem:[%s2171 + $0x3] sm:$0xff]
          %v2335 = vld [vmem:[%s2171 + $0xb] sm:$0xff]
          %v2336 = vld [vmem:[%s2171 + $0x1b] sm:$0xff]
          %v2337 = vld [vmem:[%s2171 + $0x23] sm:$0xff]
          %v2338 = vld [vmem:[%s2171 + $0x33] sm:$0xff]
          %v2339 = vld [vmem:[%s2171 + $0x3b] sm:$0xff]
          %v2340 = vld [vmem:[%s2171 + $0x4b] sm:$0xff]
          %v2341 = vld [vmem:[%s2171 + $0x53] sm:$0xff]
          %v2342 = vld [vmem:[%s2171 + $0x63] sm:$0xff]
          %v2343 = vld [vmem:[%s2171 + $0x6b] sm:$0xff]
          %v2344 = vld [vmem:[%s2171 + $0x7b] sm:$0xff]
          %v2345 = vld [vmem:[%s2171 + $0x83] sm:$0xff]
          %v2346 = vld [vmem:[%s2171 + $0x93] sm:$0xff]
          %v2347 = vld [vmem:[%s2171 + $0x9b] sm:$0xff]
          %v2348 = vld [vmem:[%s2171 + $0xab] sm:$0xff]
          %v2349 = vld [vmem:[%s2171 + $0xb3] sm:$0xff]
          %v2351 = vlaneseq
          %v2352 = vshrl.u32 %v2351, 7
          %v2353 = vsub.s32 0, %v2352
          %v2354 = vrot.slane %v1916, %v2353
          %v2356 = vmul.f32 %v2334, %v2354
          %v2357 = vmul.f32 %v2335, %v2354
          %v2358 = vmul.f32 %v2336, %v2354
          %v2359 = vmul.f32 %v2337, %v2354
          %v2360 = vmul.f32 %v2338, %v2354
          %v2361 = vmul.f32 %v2339, %v2354
          %v2362 = vmul.f32 %v2340, %v2354
          %v2363 = vmul.f32 %v2341, %v2354
          %v2364 = vmul.f32 %v2342, %v2354
          %v2365 = vmul.f32 %v2343, %v2354
          %v2366 = vmul.f32 %v2344, %v2354
          %v2367 = vmul.f32 %v2345, %v2354
          %v2368 = vmul.f32 %v2346, %v2354
          %v2369 = vmul.f32 %v2347, %v2354
          %v2370 = vmul.f32 %v2348, %v2354
          %v2371 = vmul.f32 %v2349, %v2354
          %v2372 = vadd.f32 %v2318, %v2356
          %v2373 = vadd.f32 %v2319, %v2357
          %v2374 = vadd.f32 %v2320, %v2358
          %v2375 = vadd.f32 %v2321, %v2359
          %v2376 = vadd.f32 %v2322, %v2360
          %v2377 = vadd.f32 %v2323, %v2361
          %v2378 = vadd.f32 %v2324, %v2362
          %v2379 = vadd.f32 %v2325, %v2363
          %v2380 = vadd.f32 %v2326, %v2364
          %v2381 = vadd.f32 %v2327, %v2365
          %v2382 = vadd.f32 %v2328, %v2366
          %v2383 = vadd.f32 %v2329, %v2367
          %v2384 = vadd.f32 %v2330, %v2368
          %v2385 = vadd.f32 %v2331, %v2369
          %v2386 = vadd.f32 %v2332, %v2370
          %v2387 = vadd.f32 %v2333, %v2371
          %v2388 = vld [vmem:[%s2171 + $0x4] sm:$0xff]
          %v2389 = vld [vmem:[%s2171 + $0xc] sm:$0xff]
          %v2390 = vld [vmem:[%s2171 + $0x1c] sm:$0xff]
          %v2391 = vld [vmem:[%s2171 + $0x24] sm:$0xff]
          %v2392 = vld [vmem:[%s2171 + $0x34] sm:$0xff]
          %v2393 = vld [vmem:[%s2171 + $0x3c] sm:$0xff]
          %v2394 = vld [vmem:[%s2171 + $0x4c] sm:$0xff]
          %v2395 = vld [vmem:[%s2171 + $0x54] sm:$0xff]
          %v2396 = vld [vmem:[%s2171 + $0x64] sm:$0xff]
          %v2397 = vld [vmem:[%s2171 + $0x6c] sm:$0xff]
          %v2398 = vld [vmem:[%s2171 + $0x7c] sm:$0xff]
          %v2399 = vld [vmem:[%s2171 + $0x84] sm:$0xff]
          %v2400 = vld [vmem:[%s2171 + $0x94] sm:$0xff]
          %v2401 = vld [vmem:[%s2171 + $0x9c] sm:$0xff]
          %v2402 = vld [vmem:[%s2171 + $0xac] sm:$0xff]
          %v2403 = vld [vmem:[%s2171 + $0xb4] sm:$0xff]
          %v2405 = vlaneseq
          %v2406 = vshrl.u32 %v2405, 7
          %v2407 = vsub.s32 0, %v2406
          %v2408 = vrot.slane %v1917, %v2407
          %v2410 = vmul.f32 %v2388, %v2408
          %v2411 = vmul.f32 %v2389, %v2408
          %v2412 = vmul.f32 %v2390, %v2408
          %v2413 = vmul.f32 %v2391, %v2408
          %v2414 = vmul.f32 %v2392, %v2408
          %v2415 = vmul.f32 %v2393, %v2408
          %v2416 = vmul.f32 %v2394, %v2408
          %v2417 = vmul.f32 %v2395, %v2408
          %v2418 = vmul.f32 %v2396, %v2408
          %v2419 = vmul.f32 %v2397, %v2408
          %v2420 = vmul.f32 %v2398, %v2408
          %v2421 = vmul.f32 %v2399, %v2408
          %v2422 = vmul.f32 %v2400, %v2408
          %v2423 = vmul.f32 %v2401, %v2408
          %v2424 = vmul.f32 %v2402, %v2408
          %v2425 = vmul.f32 %v2403, %v2408
          %v2426 = vadd.f32 %v2372, %v2410
          %v2427 = vadd.f32 %v2373, %v2411
          %v2428 = vadd.f32 %v2374, %v2412
          %v2429 = vadd.f32 %v2375, %v2413
          %v2430 = vadd.f32 %v2376, %v2414
          %v2431 = vadd.f32 %v2377, %v2415
          %v2432 = vadd.f32 %v2378, %v2416
          %v2433 = vadd.f32 %v2379, %v2417
          %v2434 = vadd.f32 %v2380, %v2418
          %v2435 = vadd.f32 %v2381, %v2419
          %v2436 = vadd.f32 %v2382, %v2420
          %v2437 = vadd.f32 %v2383, %v2421
          %v2438 = vadd.f32 %v2384, %v2422
          %v2439 = vadd.f32 %v2385, %v2423
          %v2440 = vadd.f32 %v2386, %v2424
          %v2441 = vadd.f32 %v2387, %v2425
          %s2442 = sadd.s32 %s2169, 1
          %s2443 = smul.u32 %s2442, 24
          %s2444 = scalar_lea.vmem [#allocation4], %s2443
          %v2445 = vld [vmem:[%s2444] sm:$0xff]
          %v2446 = vld [vmem:[%s2444 + $0x8] sm:$0xff]
          %v2447 = vld [vmem:[%s2444 + $0x18] sm:$0xff]
          %v2448 = vld [vmem:[%s2444 + $0x20] sm:$0xff]
          %v2449 = vld [vmem:[%s2444 + $0x30] sm:$0xff]
          %v2450 = vld [vmem:[%s2444 + $0x38] sm:$0xff]
          %v2451 = vld [vmem:[%s2444 + $0x48] sm:$0xff]
          %v2452 = vld [vmem:[%s2444 + $0x50] sm:$0xff]
          %v2453 = vld [vmem:[%s2444 + $0x60] sm:$0xff]
          %v2454 = vld [vmem:[%s2444 + $0x68] sm:$0xff]
          %v2455 = vld [vmem:[%s2444 + $0x78] sm:$0xff]
          %v2456 = vld [vmem:[%s2444 + $0x80] sm:$0xff]
          %v2457 = vld [vmem:[%s2444 + $0x90] sm:$0xff]
          %v2458 = vld [vmem:[%s2444 + $0x98] sm:$0xff]
          %v2459 = vld [vmem:[%s2444 + $0xa8] sm:$0xff]
          %v2460 = vld [vmem:[%s2444 + $0xb0] sm:$0xff]
          %v2462 = vlaneseq
          %v2463 = vshrl.u32 %v2462, 7
          %v2464 = vsub.s32 0, %v2463
          %v2465 = vrot.slane %v1918, %v2464
          %v2467 = vmul.f32 %v2445, %v2465
          %v2468 = vmul.f32 %v2446, %v2465
          %v2469 = vmul.f32 %v2447, %v2465
          %v2470 = vmul.f32 %v2448, %v2465
          %v2471 = vmul.f32 %v2449, %v2465
          %v2472 = vmul.f32 %v2450, %v2465
          %v2473 = vmul.f32 %v2451, %v2465
          %v2474 = vmul.f32 %v2452, %v2465
          %v2475 = vmul.f32 %v2453, %v2465
          %v2476 = vmul.f32 %v2454, %v2465
          %v2477 = vmul.f32 %v2455, %v2465
          %v2478 = vmul.f32 %v2456, %v2465
          %v2479 = vmul.f32 %v2457, %v2465
          %v2480 = vmul.f32 %v2458, %v2465
          %v2481 = vmul.f32 %v2459, %v2465
          %v2482 = vmul.f32 %v2460, %v2465
          %v2483 = vadd.f32 %v2426, %v2467
          %v2484 = vadd.f32 %v2427, %v2468
          %v2485 = vadd.f32 %v2428, %v2469
          %v2486 = vadd.f32 %v2429, %v2470
          %v2487 = vadd.f32 %v2430, %v2471
          %v2488 = vadd.f32 %v2431, %v2472
          %v2489 = vadd.f32 %v2432, %v2473
          %v2490 = vadd.f32 %v2433, %v2474
          %v2491 = vadd.f32 %v2434, %v2475
          %v2492 = vadd.f32 %v2435, %v2476
          %v2493 = vadd.f32 %v2436, %v2477
          %v2494 = vadd.f32 %v2437, %v2478
          %v2495 = vadd.f32 %v2438, %v2479
          %v2496 = vadd.f32 %v2439, %v2480
          %v2497 = vadd.f32 %v2440, %v2481
          %v2498 = vadd.f32 %v2441, %v2482
          %v2499 = vld [vmem:[%s2444 + $0x1] sm:$0xff]
          %v2500 = vld [vmem:[%s2444 + $0x9] sm:$0xff]
          %v2501 = vld [vmem:[%s2444 + $0x19] sm:$0xff]
          %v2502 = vld [vmem:[%s2444 + $0x21] sm:$0xff]
          %v2503 = vld [vmem:[%s2444 + $0x31] sm:$0xff]
          %v2504 = vld [vmem:[%s2444 + $0x39] sm:$0xff]
          %v2505 = vld [vmem:[%s2444 + $0x49] sm:$0xff]
          %v2506 = vld [vmem:[%s2444 + $0x51] sm:$0xff]
          %v2507 = vld [vmem:[%s2444 + $0x61] sm:$0xff]
          %v2508 = vld [vmem:[%s2444 + $0x69] sm:$0xff]
          %v2509 = vld [vmem:[%s2444 + $0x79] sm:$0xff]
          %v2510 = vld [vmem:[%s2444 + $0x81] sm:$0xff]
          %v2511 = vld [vmem:[%s2444 + $0x91] sm:$0xff]
          %v2512 = vld [vmem:[%s2444 + $0x99] sm:$0xff]
          %v2513 = vld [vmem:[%s2444 + $0xa9] sm:$0xff]
          %v2514 = vld [vmem:[%s2444 + $0xb1] sm:$0xff]
          %v2516 = vlaneseq
          %v2517 = vshrl.u32 %v2516, 7
          %v2518 = vsub.s32 0, %v2517
          %v2519 = vrot.slane %v1919, %v2518
          %v2521 = vmul.f32 %v2499, %v2519
          %v2522 = vmul.f32 %v2500, %v2519
          %v2523 = vmul.f32 %v2501, %v2519
          %v2524 = vmul.f32 %v2502, %v2519
          %v2525 = vmul.f32 %v2503, %v2519
          %v2526 = vmul.f32 %v2504, %v2519
          %v2527 = vmul.f32 %v2505, %v2519
          %v2528 = vmul.f32 %v2506, %v2519
          %v2529 = vmul.f32 %v2507, %v2519
          %v2530 = vmul.f32 %v2508, %v2519
          %v2531 = vmul.f32 %v2509, %v2519
          %v2532 = vmul.f32 %v2510, %v2519
          %v2533 = vmul.f32 %v2511, %v2519
          %v2534 = vmul.f32 %v2512, %v2519
          %v2535 = vmul.f32 %v2513, %v2519
          %v2536 = vmul.f32 %v2514, %v2519
          %v2537 = vadd.f32 %v2483, %v2521
          %v2538 = vadd.f32 %v2484, %v2522
          %v2539 = vadd.f32 %v2485, %v2523
          %v2540 = vadd.f32 %v2486, %v2524
          %v2541 = vadd.f32 %v2487, %v2525
          %v2542 = vadd.f32 %v2488, %v2526
          %v2543 = vadd.f32 %v2489, %v2527
          %v2544 = vadd.f32 %v2490, %v2528
          %v2545 = vadd.f32 %v2491, %v2529
          %v2546 = vadd.f32 %v2492, %v2530
          %v2547 = vadd.f32 %v2493, %v2531
          %v2548 = vadd.f32 %v2494, %v2532
          %v2549 = vadd.f32 %v2495, %v2533
          %v2550 = vadd.f32 %v2496, %v2534
          %v2551 = vadd.f32 %v2497, %v2535
          %v2552 = vadd.f32 %v2498, %v2536
          %v2553 = vld [vmem:[%s2444 + $0x2] sm:$0xff]
          %v2554 = vld [vmem:[%s2444 + $0xa] sm:$0xff]
          %v2555 = vld [vmem:[%s2444 + $0x1a] sm:$0xff]
          %v2556 = vld [vmem:[%s2444 + $0x22] sm:$0xff]
          %v2557 = vld [vmem:[%s2444 + $0x32] sm:$0xff]
          %v2558 = vld [vmem:[%s2444 + $0x3a] sm:$0xff]
          %v2559 = vld [vmem:[%s2444 + $0x4a] sm:$0xff]
          %v2560 = vld [vmem:[%s2444 + $0x52] sm:$0xff]
          %v2561 = vld [vmem:[%s2444 + $0x62] sm:$0xff]
          %v2562 = vld [vmem:[%s2444 + $0x6a] sm:$0xff]
          %v2563 = vld [vmem:[%s2444 + $0x7a] sm:$0xff]
          %v2564 = vld [vmem:[%s2444 + $0x82] sm:$0xff]
          %v2565 = vld [vmem:[%s2444 + $0x92] sm:$0xff]
          %v2566 = vld [vmem:[%s2444 + $0x9a] sm:$0xff]
          %v2567 = vld [vmem:[%s2444 + $0xaa] sm:$0xff]
          %v2568 = vld [vmem:[%s2444 + $0xb2] sm:$0xff]
          %v2570 = vlaneseq
          %v2571 = vshrl.u32 %v2570, 7
          %v2572 = vsub.s32 0, %v2571
          %v2573 = vrot.slane %v1920, %v2572
          %v2575 = vmul.f32 %v2553, %v2573
          %v2576 = vmul.f32 %v2554, %v2573
          %v2577 = vmul.f32 %v2555, %v2573
          %v2578 = vmul.f32 %v2556, %v2573
          %v2579 = vmul.f32 %v2557, %v2573
          %v2580 = vmul.f32 %v2558, %v2573
          %v2581 = vmul.f32 %v2559, %v2573
          %v2582 = vmul.f32 %v2560, %v2573
          %v2583 = vmul.f32 %v2561, %v2573
          %v2584 = vmul.f32 %v2562, %v2573
          %v2585 = vmul.f32 %v2563, %v2573
          %v2586 = vmul.f32 %v2564, %v2573
          %v2587 = vmul.f32 %v2565, %v2573
          %v2588 = vmul.f32 %v2566, %v2573
          %v2589 = vmul.f32 %v2567, %v2573
          %v2590 = vmul.f32 %v2568, %v2573
          %v2591 = vadd.f32 %v2537, %v2575
          %v2592 = vadd.f32 %v2538, %v2576
          %v2593 = vadd.f32 %v2539, %v2577
          %v2594 = vadd.f32 %v2540, %v2578
          %v2595 = vadd.f32 %v2541, %v2579
          %v2596 = vadd.f32 %v2542, %v2580
          %v2597 = vadd.f32 %v2543, %v2581
          %v2598 = vadd.f32 %v2544, %v2582
          %v2599 = vadd.f32 %v2545, %v2583
          %v2600 = vadd.f32 %v2546, %v2584
          %v2601 = vadd.f32 %v2547, %v2585
          %v2602 = vadd.f32 %v2548, %v2586
          %v2603 = vadd.f32 %v2549, %v2587
          %v2604 = vadd.f32 %v2550, %v2588
          %v2605 = vadd.f32 %v2551, %v2589
          %v2606 = vadd.f32 %v2552, %v2590
          %v2607 = vld [vmem:[%s2444 + $0x3] sm:$0xff]
          %v2608 = vld [vmem:[%s2444 + $0xb] sm:$0xff]
          %v2609 = vld [vmem:[%s2444 + $0x1b] sm:$0xff]
          %v2610 = vld [vmem:[%s2444 + $0x23] sm:$0xff]
          %v2611 = vld [vmem:[%s2444 + $0x33] sm:$0xff]
          %v2612 = vld [vmem:[%s2444 + $0x3b] sm:$0xff]
          %v2613 = vld [vmem:[%s2444 + $0x4b] sm:$0xff]
          %v2614 = vld [vmem:[%s2444 + $0x53] sm:$0xff]
          %v2615 = vld [vmem:[%s2444 + $0x63] sm:$0xff]
          %v2616 = vld [vmem:[%s2444 + $0x6b] sm:$0xff]
          %v2617 = vld [vmem:[%s2444 + $0x7b] sm:$0xff]
          %v2618 = vld [vmem:[%s2444 + $0x83] sm:$0xff]
          %v2619 = vld [vmem:[%s2444 + $0x93] sm:$0xff]
          %v2620 = vld [vmem:[%s2444 + $0x9b] sm:$0xff]
          %v2621 = vld [vmem:[%s2444 + $0xab] sm:$0xff]
          %v2622 = vld [vmem:[%s2444 + $0xb3] sm:$0xff]
          %v2624 = vlaneseq
          %v2625 = vshrl.u32 %v2624, 7
          %v2626 = vsub.s32 0, %v2625
          %v2627 = vrot.slane %v1921, %v2626
          %v2629 = vmul.f32 %v2607, %v2627
          %v2630 = vmul.f32 %v2608, %v2627
          %v2631 = vmul.f32 %v2609, %v2627
          %v2632 = vmul.f32 %v2610, %v2627
          %v2633 = vmul.f32 %v2611, %v2627
          %v2634 = vmul.f32 %v2612, %v2627
          %v2635 = vmul.f32 %v2613, %v2627
          %v2636 = vmul.f32 %v2614, %v2627
          %v2637 = vmul.f32 %v2615, %v2627
          %v2638 = vmul.f32 %v2616, %v2627
          %v2639 = vmul.f32 %v2617, %v2627
          %v2640 = vmul.f32 %v2618, %v2627
          %v2641 = vmul.f32 %v2619, %v2627
          %v2642 = vmul.f32 %v2620, %v2627
          %v2643 = vmul.f32 %v2621, %v2627
          %v2644 = vmul.f32 %v2622, %v2627
          %v2645 = vadd.f32 %v2591, %v2629
          %v2646 = vadd.f32 %v2592, %v2630
          %v2647 = vadd.f32 %v2593, %v2631
          %v2648 = vadd.f32 %v2594, %v2632
          %v2649 = vadd.f32 %v2595, %v2633
          %v2650 = vadd.f32 %v2596, %v2634
          %v2651 = vadd.f32 %v2597, %v2635
          %v2652 = vadd.f32 %v2598, %v2636
          %v2653 = vadd.f32 %v2599, %v2637
          %v2654 = vadd.f32 %v2600, %v2638
          %v2655 = vadd.f32 %v2601, %v2639
          %v2656 = vadd.f32 %v2602, %v2640
          %v2657 = vadd.f32 %v2603, %v2641
          %v2658 = vadd.f32 %v2604, %v2642
          %v2659 = vadd.f32 %v2605, %v2643
          %v2660 = vadd.f32 %v2606, %v2644
          %v2661 = vld [vmem:[%s2444 + $0x4] sm:$0xff]
          %v2662 = vld [vmem:[%s2444 + $0xc] sm:$0xff]
          %v2663 = vld [vmem:[%s2444 + $0x1c] sm:$0xff]
          %v2664 = vld [vmem:[%s2444 + $0x24] sm:$0xff]
          %v2665 = vld [vmem:[%s2444 + $0x34] sm:$0xff]
          %v2666 = vld [vmem:[%s2444 + $0x3c] sm:$0xff]
          %v2667 = vld [vmem:[%s2444 + $0x4c] sm:$0xff]
          %v2668 = vld [vmem:[%s2444 + $0x54] sm:$0xff]
          %v2669 = vld [vmem:[%s2444 + $0x64] sm:$0xff]
          %v2670 = vld [vmem:[%s2444 + $0x6c] sm:$0xff]
          %v2671 = vld [vmem:[%s2444 + $0x7c] sm:$0xff]
          %v2672 = vld [vmem:[%s2444 + $0x84] sm:$0xff]
          %v2673 = vld [vmem:[%s2444 + $0x94] sm:$0xff]
          %v2674 = vld [vmem:[%s2444 + $0x9c] sm:$0xff]
          %v2675 = vld [vmem:[%s2444 + $0xac] sm:$0xff]
          %v2676 = vld [vmem:[%s2444 + $0xb4] sm:$0xff]
          %v2678 = vlaneseq
          %v2679 = vshrl.u32 %v2678, 7
          %v2680 = vsub.s32 0, %v2679
          %v2681 = vrot.slane %v1922, %v2680
          %v2683 = vmul.f32 %v2661, %v2681
          %v2684 = vmul.f32 %v2662, %v2681
          %v2685 = vmul.f32 %v2663, %v2681
          %v2686 = vmul.f32 %v2664, %v2681
          %v2687 = vmul.f32 %v2665, %v2681
          %v2688 = vmul.f32 %v2666, %v2681
          %v2689 = vmul.f32 %v2667, %v2681
          %v2690 = vmul.f32 %v2668, %v2681
          %v2691 = vmul.f32 %v2669, %v2681
          %v2692 = vmul.f32 %v2670, %v2681
          %v2693 = vmul.f32 %v2671, %v2681
          %v2694 = vmul.f32 %v2672, %v2681
          %v2695 = vmul.f32 %v2673, %v2681
          %v2696 = vmul.f32 %v2674, %v2681
          %v2697 = vmul.f32 %v2675, %v2681
          %v2698 = vmul.f32 %v2676, %v2681
          %v2699 = vadd.f32 %v2645, %v2683
          %v2700 = vadd.f32 %v2646, %v2684
          %v2701 = vadd.f32 %v2647, %v2685
          %v2702 = vadd.f32 %v2648, %v2686
          %v2703 = vadd.f32 %v2649, %v2687
          %v2704 = vadd.f32 %v2650, %v2688
          %v2705 = vadd.f32 %v2651, %v2689
          %v2706 = vadd.f32 %v2652, %v2690
          %v2707 = vadd.f32 %v2653, %v2691
          %v2708 = vadd.f32 %v2654, %v2692
          %v2709 = vadd.f32 %v2655, %v2693
          %v2710 = vadd.f32 %v2656, %v2694
          %v2711 = vadd.f32 %v2657, %v2695
          %v2712 = vadd.f32 %v2658, %v2696
          %v2713 = vadd.f32 %v2659, %v2697
          %v2714 = vadd.f32 %v2660, %v2698
          %s2715 = sadd.s32 %s2169, 2
          %s2716 = smul.u32 %s2715, 24
          %s2717 = scalar_lea.vmem [#allocation4], %s2716
          %v2718 = vld [vmem:[%s2717] sm:$0xff]
          %v2719 = vld [vmem:[%s2717 + $0x8] sm:$0xff]
          %v2720 = vld [vmem:[%s2717 + $0x18] sm:$0xff]
          %v2721 = vld [vmem:[%s2717 + $0x20] sm:$0xff]
          %v2722 = vld [vmem:[%s2717 + $0x30] sm:$0xff]
          %v2723 = vld [vmem:[%s2717 + $0x38] sm:$0xff]
          %v2724 = vld [vmem:[%s2717 + $0x48] sm:$0xff]
          %v2725 = vld [vmem:[%s2717 + $0x50] sm:$0xff]
          %v2726 = vld [vmem:[%s2717 + $0x60] sm:$0xff]
          %v2727 = vld [vmem:[%s2717 + $0x68] sm:$0xff]
          %v2728 = vld [vmem:[%s2717 + $0x78] sm:$0xff]
          %v2729 = vld [vmem:[%s2717 + $0x80] sm:$0xff]
          %v2730 = vld [vmem:[%s2717 + $0x90] sm:$0xff]
          %v2731 = vld [vmem:[%s2717 + $0x98] sm:$0xff]
          %v2732 = vld [vmem:[%s2717 + $0xa8] sm:$0xff]
          %v2733 = vld [vmem:[%s2717 + $0xb0] sm:$0xff]
          %v2735 = vlaneseq
          %v2736 = vshrl.u32 %v2735, 7
          %v2737 = vsub.s32 0, %v2736
          %v2738 = vrot.slane %v1923, %v2737
          %v2740 = vmul.f32 %v2718, %v2738
          %v2741 = vmul.f32 %v2719, %v2738
          %v2742 = vmul.f32 %v2720, %v2738
          %v2743 = vmul.f32 %v2721, %v2738
          %v2744 = vmul.f32 %v2722, %v2738
          %v2745 = vmul.f32 %v2723, %v2738
          %v2746 = vmul.f32 %v2724, %v2738
          %v2747 = vmul.f32 %v2725, %v2738
          %v2748 = vmul.f32 %v2726, %v2738
          %v2749 = vmul.f32 %v2727, %v2738
          %v2750 = vmul.f32 %v2728, %v2738
          %v2751 = vmul.f32 %v2729, %v2738
          %v2752 = vmul.f32 %v2730, %v2738
          %v2753 = vmul.f32 %v2731, %v2738
          %v2754 = vmul.f32 %v2732, %v2738
          %v2755 = vmul.f32 %v2733, %v2738
          %v2756 = vadd.f32 %v2699, %v2740
          %v2757 = vadd.f32 %v2700, %v2741
          %v2758 = vadd.f32 %v2701, %v2742
          %v2759 = vadd.f32 %v2702, %v2743
          %v2760 = vadd.f32 %v2703, %v2744
          %v2761 = vadd.f32 %v2704, %v2745
          %v2762 = vadd.f32 %v2705, %v2746
          %v2763 = vadd.f32 %v2706, %v2747
          %v2764 = vadd.f32 %v2707, %v2748
          %v2765 = vadd.f32 %v2708, %v2749
          %v2766 = vadd.f32 %v2709, %v2750
          %v2767 = vadd.f32 %v2710, %v2751
          %v2768 = vadd.f32 %v2711, %v2752
          %v2769 = vadd.f32 %v2712, %v2753
          %v2770 = vadd.f32 %v2713, %v2754
          %v2771 = vadd.f32 %v2714, %v2755
          %v2772 = vld [vmem:[%s2717 + $0x1] sm:$0xff]
          %v2773 = vld [vmem:[%s2717 + $0x9] sm:$0xff]
          %v2774 = vld [vmem:[%s2717 + $0x19] sm:$0xff]
          %v2775 = vld [vmem:[%s2717 + $0x21] sm:$0xff]
          %v2776 = vld [vmem:[%s2717 + $0x31] sm:$0xff]
          %v2777 = vld [vmem:[%s2717 + $0x39] sm:$0xff]
          %v2778 = vld [vmem:[%s2717 + $0x49] sm:$0xff]
          %v2779 = vld [vmem:[%s2717 + $0x51] sm:$0xff]
          %v2780 = vld [vmem:[%s2717 + $0x61] sm:$0xff]
          %v2781 = vld [vmem:[%s2717 + $0x69] sm:$0xff]
          %v2782 = vld [vmem:[%s2717 + $0x79] sm:$0xff]
          %v2783 = vld [vmem:[%s2717 + $0x81] sm:$0xff]
          %v2784 = vld [vmem:[%s2717 + $0x91] sm:$0xff]
          %v2785 = vld [vmem:[%s2717 + $0x99] sm:$0xff]
          %v2786 = vld [vmem:[%s2717 + $0xa9] sm:$0xff]
          %v2787 = vld [vmem:[%s2717 + $0xb1] sm:$0xff]
          %v2789 = vlaneseq
          %v2790 = vshrl.u32 %v2789, 7
          %v2791 = vsub.s32 0, %v2790
          %v2792 = vrot.slane %v1924, %v2791
          %v2794 = vmul.f32 %v2772, %v2792
          %v2795 = vmul.f32 %v2773, %v2792
          %v2796 = vmul.f32 %v2774, %v2792
          %v2797 = vmul.f32 %v2775, %v2792
          %v2798 = vmul.f32 %v2776, %v2792
          %v2799 = vmul.f32 %v2777, %v2792
          %v2800 = vmul.f32 %v2778, %v2792
          %v2801 = vmul.f32 %v2779, %v2792
          %v2802 = vmul.f32 %v2780, %v2792
          %v2803 = vmul.f32 %v2781, %v2792
          %v2804 = vmul.f32 %v2782, %v2792
          %v2805 = vmul.f32 %v2783, %v2792
          %v2806 = vmul.f32 %v2784, %v2792
          %v2807 = vmul.f32 %v2785, %v2792
          %v2808 = vmul.f32 %v2786, %v2792
          %v2809 = vmul.f32 %v2787, %v2792
          %v2810 = vadd.f32 %v2756, %v2794
          %v2811 = vadd.f32 %v2757, %v2795
          %v2812 = vadd.f32 %v2758, %v2796
          %v2813 = vadd.f32 %v2759, %v2797
          %v2814 = vadd.f32 %v2760, %v2798
          %v2815 = vadd.f32 %v2761, %v2799
          %v2816 = vadd.f32 %v2762, %v2800
          %v2817 = vadd.f32 %v2763, %v2801
          %v2818 = vadd.f32 %v2764, %v2802
          %v2819 = vadd.f32 %v2765, %v2803
          %v2820 = vadd.f32 %v2766, %v2804
          %v2821 = vadd.f32 %v2767, %v2805
          %v2822 = vadd.f32 %v2768, %v2806
          %v2823 = vadd.f32 %v2769, %v2807
          %v2824 = vadd.f32 %v2770, %v2808
          %v2825 = vadd.f32 %v2771, %v2809
          %v2826 = vld [vmem:[%s2717 + $0x2] sm:$0xff]
          %v2827 = vld [vmem:[%s2717 + $0xa] sm:$0xff]
          %v2828 = vld [vmem:[%s2717 + $0x1a] sm:$0xff]
          %v2829 = vld [vmem:[%s2717 + $0x22] sm:$0xff]
          %v2830 = vld [vmem:[%s2717 + $0x32] sm:$0xff]
          %v2831 = vld [vmem:[%s2717 + $0x3a] sm:$0xff]
          %v2832 = vld [vmem:[%s2717 + $0x4a] sm:$0xff]
          %v2833 = vld [vmem:[%s2717 + $0x52] sm:$0xff]
          %v2834 = vld [vmem:[%s2717 + $0x62] sm:$0xff]
          %v2835 = vld [vmem:[%s2717 + $0x6a] sm:$0xff]
          %v2836 = vld [vmem:[%s2717 + $0x7a] sm:$0xff]
          %v2837 = vld [vmem:[%s2717 + $0x82] sm:$0xff]
          %v2838 = vld [vmem:[%s2717 + $0x92] sm:$0xff]
          %v2839 = vld [vmem:[%s2717 + $0x9a] sm:$0xff]
          %v2840 = vld [vmem:[%s2717 + $0xaa] sm:$0xff]
          %v2841 = vld [vmem:[%s2717 + $0xb2] sm:$0xff]
          %v2843 = vlaneseq
          %v2844 = vshrl.u32 %v2843, 7
          %v2845 = vsub.s32 0, %v2844
          %v2846 = vrot.slane %v1925, %v2845
          %v2848 = vmul.f32 %v2826, %v2846
          %v2849 = vmul.f32 %v2827, %v2846
          %v2850 = vmul.f32 %v2828, %v2846
          %v2851 = vmul.f32 %v2829, %v2846
          %v2852 = vmul.f32 %v2830, %v2846
          %v2853 = vmul.f32 %v2831, %v2846
          %v2854 = vmul.f32 %v2832, %v2846
          %v2855 = vmul.f32 %v2833, %v2846
          %v2856 = vmul.f32 %v2834, %v2846
          %v2857 = vmul.f32 %v2835, %v2846
          %v2858 = vmul.f32 %v2836, %v2846
          %v2859 = vmul.f32 %v2837, %v2846
          %v2860 = vmul.f32 %v2838, %v2846
          %v2861 = vmul.f32 %v2839, %v2846
          %v2862 = vmul.f32 %v2840, %v2846
          %v2863 = vmul.f32 %v2841, %v2846
          %v2864 = vadd.f32 %v2810, %v2848
          %v2865 = vadd.f32 %v2811, %v2849
          %v2866 = vadd.f32 %v2812, %v2850
          %v2867 = vadd.f32 %v2813, %v2851
          %v2868 = vadd.f32 %v2814, %v2852
          %v2869 = vadd.f32 %v2815, %v2853
          %v2870 = vadd.f32 %v2816, %v2854
          %v2871 = vadd.f32 %v2817, %v2855
          %v2872 = vadd.f32 %v2818, %v2856
          %v2873 = vadd.f32 %v2819, %v2857
          %v2874 = vadd.f32 %v2820, %v2858
          %v2875 = vadd.f32 %v2821, %v2859
          %v2876 = vadd.f32 %v2822, %v2860
          %v2877 = vadd.f32 %v2823, %v2861
          %v2878 = vadd.f32 %v2824, %v2862
          %v2879 = vadd.f32 %v2825, %v2863
          %v2880 = vld [vmem:[%s2717 + $0x3] sm:$0xff]
          %v2881 = vld [vmem:[%s2717 + $0xb] sm:$0xff]
          %v2882 = vld [vmem:[%s2717 + $0x1b] sm:$0xff]
          %v2883 = vld [vmem:[%s2717 + $0x23] sm:$0xff]
          %v2884 = vld [vmem:[%s2717 + $0x33] sm:$0xff]
          %v2885 = vld [vmem:[%s2717 + $0x3b] sm:$0xff]
          %v2886 = vld [vmem:[%s2717 + $0x4b] sm:$0xff]
          %v2887 = vld [vmem:[%s2717 + $0x53] sm:$0xff]
          %v2888 = vld [vmem:[%s2717 + $0x63] sm:$0xff]
          %v2889 = vld [vmem:[%s2717 + $0x6b] sm:$0xff]
          %v2890 = vld [vmem:[%s2717 + $0x7b] sm:$0xff]
          %v2891 = vld [vmem:[%s2717 + $0x83] sm:$0xff]
          %v2892 = vld [vmem:[%s2717 + $0x93] sm:$0xff]
          %v2893 = vld [vmem:[%s2717 + $0x9b] sm:$0xff]
          %v2894 = vld [vmem:[%s2717 + $0xab] sm:$0xff]
          %v2895 = vld [vmem:[%s2717 + $0xb3] sm:$0xff]
          %v2897 = vlaneseq
          %v2898 = vshrl.u32 %v2897, 7
          %v2899 = vsub.s32 0, %v2898
          %v2900 = vrot.slane %v1926, %v2899
          %v2902 = vmul.f32 %v2880, %v2900
          %v2903 = vmul.f32 %v2881, %v2900
          %v2904 = vmul.f32 %v2882, %v2900
          %v2905 = vmul.f32 %v2883, %v2900
          %v2906 = vmul.f32 %v2884, %v2900
          %v2907 = vmul.f32 %v2885, %v2900
          %v2908 = vmul.f32 %v2886, %v2900
          %v2909 = vmul.f32 %v2887, %v2900
          %v2910 = vmul.f32 %v2888, %v2900
          %v2911 = vmul.f32 %v2889, %v2900
          %v2912 = vmul.f32 %v2890, %v2900
          %v2913 = vmul.f32 %v2891, %v2900
          %v2914 = vmul.f32 %v2892, %v2900
          %v2915 = vmul.f32 %v2893, %v2900
          %v2916 = vmul.f32 %v2894, %v2900
          %v2917 = vmul.f32 %v2895, %v2900
          %v2918 = vadd.f32 %v2864, %v2902
          %v2919 = vadd.f32 %v2865, %v2903
          %v2920 = vadd.f32 %v2866, %v2904
          %v2921 = vadd.f32 %v2867, %v2905
          %v2922 = vadd.f32 %v2868, %v2906
          %v2923 = vadd.f32 %v2869, %v2907
          %v2924 = vadd.f32 %v2870, %v2908
          %v2925 = vadd.f32 %v2871, %v2909
          %v2926 = vadd.f32 %v2872, %v2910
          %v2927 = vadd.f32 %v2873, %v2911
          %v2928 = vadd.f32 %v2874, %v2912
          %v2929 = vadd.f32 %v2875, %v2913
          %v2930 = vadd.f32 %v2876, %v2914
          %v2931 = vadd.f32 %v2877, %v2915
          %v2932 = vadd.f32 %v2878, %v2916
          %v2933 = vadd.f32 %v2879, %v2917
          %v2934 = vld [vmem:[%s2717 + $0x4] sm:$0xff]
          %v2935 = vld [vmem:[%s2717 + $0xc] sm:$0xff]
          %v2936 = vld [vmem:[%s2717 + $0x1c] sm:$0xff]
          %v2937 = vld [vmem:[%s2717 + $0x24] sm:$0xff]
          %v2938 = vld [vmem:[%s2717 + $0x34] sm:$0xff]
          %v2939 = vld [vmem:[%s2717 + $0x3c] sm:$0xff]
          %v2940 = vld [vmem:[%s2717 + $0x4c] sm:$0xff]
          %v2941 = vld [vmem:[%s2717 + $0x54] sm:$0xff]
          %v2942 = vld [vmem:[%s2717 + $0x64] sm:$0xff]
          %v2943 = vld [vmem:[%s2717 + $0x6c] sm:$0xff]
          %v2944 = vld [vmem:[%s2717 + $0x7c] sm:$0xff]
          %v2945 = vld [vmem:[%s2717 + $0x84] sm:$0xff]
          %v2946 = vld [vmem:[%s2717 + $0x94] sm:$0xff]
          %v2947 = vld [vmem:[%s2717 + $0x9c] sm:$0xff]
          %v2948 = vld [vmem:[%s2717 + $0xac] sm:$0xff]
          %v2949 = vld [vmem:[%s2717 + $0xb4] sm:$0xff]
          %v2951 = vlaneseq
          %v2952 = vshrl.u32 %v2951, 7
          %v2953 = vsub.s32 0, %v2952
          %v2954 = vrot.slane %v1927, %v2953
          %v2956 = vmul.f32 %v2934, %v2954
          %v2957 = vmul.f32 %v2935, %v2954
          %v2958 = vmul.f32 %v2936, %v2954
          %v2959 = vmul.f32 %v2937, %v2954
          %v2960 = vmul.f32 %v2938, %v2954
          %v2961 = vmul.f32 %v2939, %v2954
          %v2962 = vmul.f32 %v2940, %v2954
          %v2963 = vmul.f32 %v2941, %v2954
          %v2964 = vmul.f32 %v2942, %v2954
          %v2965 = vmul.f32 %v2943, %v2954
          %v2966 = vmul.f32 %v2944, %v2954
          %v2967 = vmul.f32 %v2945, %v2954
          %v2968 = vmul.f32 %v2946, %v2954
          %v2969 = vmul.f32 %v2947, %v2954
          %v2970 = vmul.f32 %v2948, %v2954
          %v2971 = vmul.f32 %v2949, %v2954
          %v2972 = vadd.f32 %v2918, %v2956
          %v2973 = vadd.f32 %v2919, %v2957
          %v2974 = vadd.f32 %v2920, %v2958
          %v2975 = vadd.f32 %v2921, %v2959
          %v2976 = vadd.f32 %v2922, %v2960
          %v2977 = vadd.f32 %v2923, %v2961
          %v2978 = vadd.f32 %v2924, %v2962
          %v2979 = vadd.f32 %v2925, %v2963
          %v2980 = vadd.f32 %v2926, %v2964
          %v2981 = vadd.f32 %v2927, %v2965
          %v2982 = vadd.f32 %v2928, %v2966
          %v2983 = vadd.f32 %v2929, %v2967
          %v2984 = vadd.f32 %v2930, %v2968
          %v2985 = vadd.f32 %v2931, %v2969
          %v2986 = vadd.f32 %v2932, %v2970
          %v2987 = vadd.f32 %v2933, %v2971
          %s2988 = sadd.s32 %s2169, 3
          %s2989 = smul.u32 %s2988, 24
          %s2990 = scalar_lea.vmem [#allocation4], %s2989
          %v2991 = vld [vmem:[%s2990] sm:$0xff]
          %v2992 = vld [vmem:[%s2990 + $0x8] sm:$0xff]
          %v2993 = vld [vmem:[%s2990 + $0x18] sm:$0xff]
          %v2994 = vld [vmem:[%s2990 + $0x20] sm:$0xff]
          %v2995 = vld [vmem:[%s2990 + $0x30] sm:$0xff]
          %v2996 = vld [vmem:[%s2990 + $0x38] sm:$0xff]
          %v2997 = vld [vmem:[%s2990 + $0x48] sm:$0xff]
          %v2998 = vld [vmem:[%s2990 + $0x50] sm:$0xff]
          %v2999 = vld [vmem:[%s2990 + $0x60] sm:$0xff]
          %v3000 = vld [vmem:[%s2990 + $0x68] sm:$0xff]
          %v3001 = vld [vmem:[%s2990 + $0x78] sm:$0xff]
          %v3002 = vld [vmem:[%s2990 + $0x80] sm:$0xff]
          %v3003 = vld [vmem:[%s2990 + $0x90] sm:$0xff]
          %v3004 = vld [vmem:[%s2990 + $0x98] sm:$0xff]
          %v3005 = vld [vmem:[%s2990 + $0xa8] sm:$0xff]
          %v3006 = vld [vmem:[%s2990 + $0xb0] sm:$0xff]
          %v3008 = vlaneseq
          %v3009 = vshrl.u32 %v3008, 7
          %v3010 = vsub.s32 0, %v3009
          %v3011 = vrot.slane %v1928, %v3010
          %v3013 = vmul.f32 %v2991, %v3011
          %v3014 = vmul.f32 %v2992, %v3011
          %v3015 = vmul.f32 %v2993, %v3011
          %v3016 = vmul.f32 %v2994, %v3011
          %v3017 = vmul.f32 %v2995, %v3011
          %v3018 = vmul.f32 %v2996, %v3011
          %v3019 = vmul.f32 %v2997, %v3011
          %v3020 = vmul.f32 %v2998, %v3011
          %v3021 = vmul.f32 %v2999, %v3011
          %v3022 = vmul.f32 %v3000, %v3011
          %v3023 = vmul.f32 %v3001, %v3011
          %v3024 = vmul.f32 %v3002, %v3011
          %v3025 = vmul.f32 %v3003, %v3011
          %v3026 = vmul.f32 %v3004, %v3011
          %v3027 = vmul.f32 %v3005, %v3011
          %v3028 = vmul.f32 %v3006, %v3011
          %v3029 = vadd.f32 %v2972, %v3013
          %v3030 = vadd.f32 %v2973, %v3014
          %v3031 = vadd.f32 %v2974, %v3015
          %v3032 = vadd.f32 %v2975, %v3016
          %v3033 = vadd.f32 %v2976, %v3017
          %v3034 = vadd.f32 %v2977, %v3018
          %v3035 = vadd.f32 %v2978, %v3019
          %v3036 = vadd.f32 %v2979, %v3020
          %v3037 = vadd.f32 %v2980, %v3021
          %v3038 = vadd.f32 %v2981, %v3022
          %v3039 = vadd.f32 %v2982, %v3023
          %v3040 = vadd.f32 %v2983, %v3024
          %v3041 = vadd.f32 %v2984, %v3025
          %v3042 = vadd.f32 %v2985, %v3026
          %v3043 = vadd.f32 %v2986, %v3027
          %v3044 = vadd.f32 %v2987, %v3028
          %v3045 = vld [vmem:[%s2990 + $0x1] sm:$0xff]
          %v3046 = vld [vmem:[%s2990 + $0x9] sm:$0xff]
          %v3047 = vld [vmem:[%s2990 + $0x19] sm:$0xff]
          %v3048 = vld [vmem:[%s2990 + $0x21] sm:$0xff]
          %v3049 = vld [vmem:[%s2990 + $0x31] sm:$0xff]
          %v3050 = vld [vmem:[%s2990 + $0x39] sm:$0xff]
          %v3051 = vld [vmem:[%s2990 + $0x49] sm:$0xff]
          %v3052 = vld [vmem:[%s2990 + $0x51] sm:$0xff]
          %v3053 = vld [vmem:[%s2990 + $0x61] sm:$0xff]
          %v3054 = vld [vmem:[%s2990 + $0x69] sm:$0xff]
          %v3055 = vld [vmem:[%s2990 + $0x79] sm:$0xff]
          %v3056 = vld [vmem:[%s2990 + $0x81] sm:$0xff]
          %v3057 = vld [vmem:[%s2990 + $0x91] sm:$0xff]
          %v3058 = vld [vmem:[%s2990 + $0x99] sm:$0xff]
          %v3059 = vld [vmem:[%s2990 + $0xa9] sm:$0xff]
          %v3060 = vld [vmem:[%s2990 + $0xb1] sm:$0xff]
          %v3062 = vlaneseq
          %v3063 = vshrl.u32 %v3062, 7
          %v3064 = vsub.s32 0, %v3063
          %v3065 = vrot.slane %v1929, %v3064
          %v3067 = vmul.f32 %v3045, %v3065
          %v3068 = vmul.f32 %v3046, %v3065
          %v3069 = vmul.f32 %v3047, %v3065
          %v3070 = vmul.f32 %v3048, %v3065
          %v3071 = vmul.f32 %v3049, %v3065
          %v3072 = vmul.f32 %v3050, %v3065
          %v3073 = vmul.f32 %v3051, %v3065
          %v3074 = vmul.f32 %v3052, %v3065
          %v3075 = vmul.f32 %v3053, %v3065
          %v3076 = vmul.f32 %v3054, %v3065
          %v3077 = vmul.f32 %v3055, %v3065
          %v3078 = vmul.f32 %v3056, %v3065
          %v3079 = vmul.f32 %v3057, %v3065
          %v3080 = vmul.f32 %v3058, %v3065
          %v3081 = vmul.f32 %v3059, %v3065
          %v3082 = vmul.f32 %v3060, %v3065
          %v3083 = vadd.f32 %v3029, %v3067
          %v3084 = vadd.f32 %v3030, %v3068
          %v3085 = vadd.f32 %v3031, %v3069
          %v3086 = vadd.f32 %v3032, %v3070
          %v3087 = vadd.f32 %v3033, %v3071
          %v3088 = vadd.f32 %v3034, %v3072
          %v3089 = vadd.f32 %v3035, %v3073
          %v3090 = vadd.f32 %v3036, %v3074
          %v3091 = vadd.f32 %v3037, %v3075
          %v3092 = vadd.f32 %v3038, %v3076
          %v3093 = vadd.f32 %v3039, %v3077
          %v3094 = vadd.f32 %v3040, %v3078
          %v3095 = vadd.f32 %v3041, %v3079
          %v3096 = vadd.f32 %v3042, %v3080
          %v3097 = vadd.f32 %v3043, %v3081
          %v3098 = vadd.f32 %v3044, %v3082
          %v3099 = vld [vmem:[%s2990 + $0x2] sm:$0xff]
          %v3100 = vld [vmem:[%s2990 + $0xa] sm:$0xff]
          %v3101 = vld [vmem:[%s2990 + $0x1a] sm:$0xff]
          %v3102 = vld [vmem:[%s2990 + $0x22] sm:$0xff]
          %v3103 = vld [vmem:[%s2990 + $0x32] sm:$0xff]
          %v3104 = vld [vmem:[%s2990 + $0x3a] sm:$0xff]
          %v3105 = vld [vmem:[%s2990 + $0x4a] sm:$0xff]
          %v3106 = vld [vmem:[%s2990 + $0x52] sm:$0xff]
          %v3107 = vld [vmem:[%s2990 + $0x62] sm:$0xff]
          %v3108 = vld [vmem:[%s2990 + $0x6a] sm:$0xff]
          %v3109 = vld [vmem:[%s2990 + $0x7a] sm:$0xff]
          %v3110 = vld [vmem:[%s2990 + $0x82] sm:$0xff]
          %v3111 = vld [vmem:[%s2990 + $0x92] sm:$0xff]
          %v3112 = vld [vmem:[%s2990 + $0x9a] sm:$0xff]
          %v3113 = vld [vmem:[%s2990 + $0xaa] sm:$0xff]
          %v3114 = vld [vmem:[%s2990 + $0xb2] sm:$0xff]
          %v3116 = vlaneseq
          %v3117 = vshrl.u32 %v3116, 7
          %v3118 = vsub.s32 0, %v3117
          %v3119 = vrot.slane %v1930, %v3118
          %v3121 = vmul.f32 %v3099, %v3119
          %v3122 = vmul.f32 %v3100, %v3119
          %v3123 = vmul.f32 %v3101, %v3119
          %v3124 = vmul.f32 %v3102, %v3119
          %v3125 = vmul.f32 %v3103, %v3119
          %v3126 = vmul.f32 %v3104, %v3119
          %v3127 = vmul.f32 %v3105, %v3119
          %v3128 = vmul.f32 %v3106, %v3119
          %v3129 = vmul.f32 %v3107, %v3119
          %v3130 = vmul.f32 %v3108, %v3119
          %v3131 = vmul.f32 %v3109, %v3119
          %v3132 = vmul.f32 %v3110, %v3119
          %v3133 = vmul.f32 %v3111, %v3119
          %v3134 = vmul.f32 %v3112, %v3119
          %v3135 = vmul.f32 %v3113, %v3119
          %v3136 = vmul.f32 %v3114, %v3119
          %v3137 = vadd.f32 %v3083, %v3121
          %v3138 = vadd.f32 %v3084, %v3122
          %v3139 = vadd.f32 %v3085, %v3123
          %v3140 = vadd.f32 %v3086, %v3124
          %v3141 = vadd.f32 %v3087, %v3125
          %v3142 = vadd.f32 %v3088, %v3126
          %v3143 = vadd.f32 %v3089, %v3127
          %v3144 = vadd.f32 %v3090, %v3128
          %v3145 = vadd.f32 %v3091, %v3129
          %v3146 = vadd.f32 %v3092, %v3130
          %v3147 = vadd.f32 %v3093, %v3131
          %v3148 = vadd.f32 %v3094, %v3132
          %v3149 = vadd.f32 %v3095, %v3133
          %v3150 = vadd.f32 %v3096, %v3134
          %v3151 = vadd.f32 %v3097, %v3135
          %v3152 = vadd.f32 %v3098, %v3136
          %v3153 = vld [vmem:[%s2990 + $0x3] sm:$0xff]
          %v3154 = vld [vmem:[%s2990 + $0xb] sm:$0xff]
          %v3155 = vld [vmem:[%s2990 + $0x1b] sm:$0xff]
          %v3156 = vld [vmem:[%s2990 + $0x23] sm:$0xff]
          %v3157 = vld [vmem:[%s2990 + $0x33] sm:$0xff]
          %v3158 = vld [vmem:[%s2990 + $0x3b] sm:$0xff]
          %v3159 = vld [vmem:[%s2990 + $0x4b] sm:$0xff]
          %v3160 = vld [vmem:[%s2990 + $0x53] sm:$0xff]
          %v3161 = vld [vmem:[%s2990 + $0x63] sm:$0xff]
          %v3162 = vld [vmem:[%s2990 + $0x6b] sm:$0xff]
          %v3163 = vld [vmem:[%s2990 + $0x7b] sm:$0xff]
          %v3164 = vld [vmem:[%s2990 + $0x83] sm:$0xff]
          %v3165 = vld [vmem:[%s2990 + $0x93] sm:$0xff]
          %v3166 = vld [vmem:[%s2990 + $0x9b] sm:$0xff]
          %v3167 = vld [vmem:[%s2990 + $0xab] sm:$0xff]
          %v3168 = vld [vmem:[%s2990 + $0xb3] sm:$0xff]
          %v3170 = vlaneseq
          %v3171 = vshrl.u32 %v3170, 7
          %v3172 = vsub.s32 0, %v3171
          %v3173 = vrot.slane %v1931, %v3172
          %v3175 = vmul.f32 %v3153, %v3173
          %v3176 = vmul.f32 %v3154, %v3173
          %v3177 = vmul.f32 %v3155, %v3173
          %v3178 = vmul.f32 %v3156, %v3173
          %v3179 = vmul.f32 %v3157, %v3173
          %v3180 = vmul.f32 %v3158, %v3173
          %v3181 = vmul.f32 %v3159, %v3173
          %v3182 = vmul.f32 %v3160, %v3173
          %v3183 = vmul.f32 %v3161, %v3173
          %v3184 = vmul.f32 %v3162, %v3173
          %v3185 = vmul.f32 %v3163, %v3173
          %v3186 = vmul.f32 %v3164, %v3173
          %v3187 = vmul.f32 %v3165, %v3173
          %v3188 = vmul.f32 %v3166, %v3173
          %v3189 = vmul.f32 %v3167, %v3173
          %v3190 = vmul.f32 %v3168, %v3173
          %v3191 = vadd.f32 %v3137, %v3175
          %v3192 = vadd.f32 %v3138, %v3176
          %v3193 = vadd.f32 %v3139, %v3177
          %v3194 = vadd.f32 %v3140, %v3178
          %v3195 = vadd.f32 %v3141, %v3179
          %v3196 = vadd.f32 %v3142, %v3180
          %v3197 = vadd.f32 %v3143, %v3181
          %v3198 = vadd.f32 %v3144, %v3182
          %v3199 = vadd.f32 %v3145, %v3183
          %v3200 = vadd.f32 %v3146, %v3184
          %v3201 = vadd.f32 %v3147, %v3185
          %v3202 = vadd.f32 %v3148, %v3186
          %v3203 = vadd.f32 %v3149, %v3187
          %v3204 = vadd.f32 %v3150, %v3188
          %v3205 = vadd.f32 %v3151, %v3189
          %v3206 = vadd.f32 %v3152, %v3190
          %v3207 = vld [vmem:[%s2990 + $0x4] sm:$0xff]
          %v3208 = vld [vmem:[%s2990 + $0xc] sm:$0xff]
          %v3209 = vld [vmem:[%s2990 + $0x1c] sm:$0xff]
          %v3210 = vld [vmem:[%s2990 + $0x24] sm:$0xff]
          %v3211 = vld [vmem:[%s2990 + $0x34] sm:$0xff]
          %v3212 = vld [vmem:[%s2990 + $0x3c] sm:$0xff]
          %v3213 = vld [vmem:[%s2990 + $0x4c] sm:$0xff]
          %v3214 = vld [vmem:[%s2990 + $0x54] sm:$0xff]
          %v3215 = vld [vmem:[%s2990 + $0x64] sm:$0xff]
          %v3216 = vld [vmem:[%s2990 + $0x6c] sm:$0xff]
          %v3217 = vld [vmem:[%s2990 + $0x7c] sm:$0xff]
          %v3218 = vld [vmem:[%s2990 + $0x84] sm:$0xff]
          %v3219 = vld [vmem:[%s2990 + $0x94] sm:$0xff]
          %v3220 = vld [vmem:[%s2990 + $0x9c] sm:$0xff]
          %v3221 = vld [vmem:[%s2990 + $0xac] sm:$0xff]
          %v3222 = vld [vmem:[%s2990 + $0xb4] sm:$0xff]
          %v3224 = vlaneseq
          %v3225 = vshrl.u32 %v3224, 7
          %v3226 = vsub.s32 0, %v3225
          %v3227 = vrot.slane %v1932, %v3226
          %v3229 = vmul.f32 %v3207, %v3227
          %v3230 = vmul.f32 %v3208, %v3227
          %v3231 = vmul.f32 %v3209, %v3227
          %v3232 = vmul.f32 %v3210, %v3227
          %v3233 = vmul.f32 %v3211, %v3227
          %v3234 = vmul.f32 %v3212, %v3227
          %v3235 = vmul.f32 %v3213, %v3227
          %v3236 = vmul.f32 %v3214, %v3227
          %v3237 = vmul.f32 %v3215, %v3227
          %v3238 = vmul.f32 %v3216, %v3227
          %v3239 = vmul.f32 %v3217, %v3227
          %v3240 = vmul.f32 %v3218, %v3227
          %v3241 = vmul.f32 %v3219, %v3227
          %v3242 = vmul.f32 %v3220, %v3227
          %v3243 = vmul.f32 %v3221, %v3227
          %v3244 = vmul.f32 %v3222, %v3227
          %v3245 = vadd.f32 %v3191, %v3229
          %v3246 = vadd.f32 %v3192, %v3230
          %v3247 = vadd.f32 %v3193, %v3231
          %v3248 = vadd.f32 %v3194, %v3232
          %v3249 = vadd.f32 %v3195, %v3233
          %v3250 = vadd.f32 %v3196, %v3234
          %v3251 = vadd.f32 %v3197, %v3235
          %v3252 = vadd.f32 %v3198, %v3236
          %v3253 = vadd.f32 %v3199, %v3237
          %v3254 = vadd.f32 %v3200, %v3238
          %v3255 = vadd.f32 %v3201, %v3239
          %v3256 = vadd.f32 %v3202, %v3240
          %v3257 = vadd.f32 %v3203, %v3241
          %v3258 = vadd.f32 %v3204, %v3242
          %v3259 = vadd.f32 %v3205, %v3243
          %v3260 = vadd.f32 %v3206, %v3244
          %s3261 = sadd.s32 %s2169, 4
          %s3262 = smul.u32 %s3261, 24
          %s3263 = scalar_lea.vmem [#allocation4], %s3262
          %v3264 = vld [vmem:[%s3263] sm:$0xff]
          %v3265 = vld [vmem:[%s3263 + $0x8] sm:$0xff]
          %v3266 = vld [vmem:[%s3263 + $0x18] sm:$0xff]
          %v3267 = vld [vmem:[%s3263 + $0x20] sm:$0xff]
          %v3268 = vld [vmem:[%s3263 + $0x30] sm:$0xff]
          %v3269 = vld [vmem:[%s3263 + $0x38] sm:$0xff]
          %v3270 = vld [vmem:[%s3263 + $0x48] sm:$0xff]
          %v3271 = vld [vmem:[%s3263 + $0x50] sm:$0xff]
          %v3272 = vld [vmem:[%s3263 + $0x60] sm:$0xff]
          %v3273 = vld [vmem:[%s3263 + $0x68] sm:$0xff]
          %v3274 = vld [vmem:[%s3263 + $0x78] sm:$0xff]
          %v3275 = vld [vmem:[%s3263 + $0x80] sm:$0xff]
          %v3276 = vld [vmem:[%s3263 + $0x90] sm:$0xff]
          %v3277 = vld [vmem:[%s3263 + $0x98] sm:$0xff]
          %v3278 = vld [vmem:[%s3263 + $0xa8] sm:$0xff]
          %v3279 = vld [vmem:[%s3263 + $0xb0] sm:$0xff]
          %v3281 = vlaneseq
          %v3282 = vshrl.u32 %v3281, 7
          %v3283 = vsub.s32 0, %v3282
          %v3284 = vrot.slane %v1933, %v3283
          %v3286 = vmul.f32 %v3264, %v3284
          %v3287 = vmul.f32 %v3265, %v3284
          %v3288 = vmul.f32 %v3266, %v3284
          %v3289 = vmul.f32 %v3267, %v3284
          %v3290 = vmul.f32 %v3268, %v3284
          %v3291 = vmul.f32 %v3269, %v3284
          %v3292 = vmul.f32 %v3270, %v3284
          %v3293 = vmul.f32 %v3271, %v3284
          %v3294 = vmul.f32 %v3272, %v3284
          %v3295 = vmul.f32 %v3273, %v3284
          %v3296 = vmul.f32 %v3274, %v3284
          %v3297 = vmul.f32 %v3275, %v3284
          %v3298 = vmul.f32 %v3276, %v3284
          %v3299 = vmul.f32 %v3277, %v3284
          %v3300 = vmul.f32 %v3278, %v3284
          %v3301 = vmul.f32 %v3279, %v3284
          %v3302 = vadd.f32 %v3245, %v3286
          %v3303 = vadd.f32 %v3246, %v3287
          %v3304 = vadd.f32 %v3247, %v3288
          %v3305 = vadd.f32 %v3248, %v3289
          %v3306 = vadd.f32 %v3249, %v3290
          %v3307 = vadd.f32 %v3250, %v3291
          %v3308 = vadd.f32 %v3251, %v3292
          %v3309 = vadd.f32 %v3252, %v3293
          %v3310 = vadd.f32 %v3253, %v3294
          %v3311 = vadd.f32 %v3254, %v3295
          %v3312 = vadd.f32 %v3255, %v3296
          %v3313 = vadd.f32 %v3256, %v3297
          %v3314 = vadd.f32 %v3257, %v3298
          %v3315 = vadd.f32 %v3258, %v3299
          %v3316 = vadd.f32 %v3259, %v3300
          %v3317 = vadd.f32 %v3260, %v3301
          %v3318 = vld [vmem:[%s3263 + $0x1] sm:$0xff]
          %v3319 = vld [vmem:[%s3263 + $0x9] sm:$0xff]
          %v3320 = vld [vmem:[%s3263 + $0x19] sm:$0xff]
          %v3321 = vld [vmem:[%s3263 + $0x21] sm:$0xff]
          %v3322 = vld [vmem:[%s3263 + $0x31] sm:$0xff]
          %v3323 = vld [vmem:[%s3263 + $0x39] sm:$0xff]
          %v3324 = vld [vmem:[%s3263 + $0x49] sm:$0xff]
          %v3325 = vld [vmem:[%s3263 + $0x51] sm:$0xff]
          %v3326 = vld [vmem:[%s3263 + $0x61] sm:$0xff]
          %v3327 = vld [vmem:[%s3263 + $0x69] sm:$0xff]
          %v3328 = vld [vmem:[%s3263 + $0x79] sm:$0xff]
          %v3329 = vld [vmem:[%s3263 + $0x81] sm:$0xff]
          %v3330 = vld [vmem:[%s3263 + $0x91] sm:$0xff]
          %v3331 = vld [vmem:[%s3263 + $0x99] sm:$0xff]
          %v3332 = vld [vmem:[%s3263 + $0xa9] sm:$0xff]
          %v3333 = vld [vmem:[%s3263 + $0xb1] sm:$0xff]
          %v3335 = vlaneseq
          %v3336 = vshrl.u32 %v3335, 7
          %v3337 = vsub.s32 0, %v3336
          %v3338 = vrot.slane %v1934, %v3337
          %v3340 = vmul.f32 %v3318, %v3338
          %v3341 = vmul.f32 %v3319, %v3338
          %v3342 = vmul.f32 %v3320, %v3338
          %v3343 = vmul.f32 %v3321, %v3338
          %v3344 = vmul.f32 %v3322, %v3338
          %v3345 = vmul.f32 %v3323, %v3338
          %v3346 = vmul.f32 %v3324, %v3338
          %v3347 = vmul.f32 %v3325, %v3338
          %v3348 = vmul.f32 %v3326, %v3338
          %v3349 = vmul.f32 %v3327, %v3338
          %v3350 = vmul.f32 %v3328, %v3338
          %v3351 = vmul.f32 %v3329, %v3338
          %v3352 = vmul.f32 %v3330, %v3338
          %v3353 = vmul.f32 %v3331, %v3338
          %v3354 = vmul.f32 %v3332, %v3338
          %v3355 = vmul.f32 %v3333, %v3338
          %v3356 = vadd.f32 %v3302, %v3340
          %v3357 = vadd.f32 %v3303, %v3341
          %v3358 = vadd.f32 %v3304, %v3342
          %v3359 = vadd.f32 %v3305, %v3343
          %v3360 = vadd.f32 %v3306, %v3344
          %v3361 = vadd.f32 %v3307, %v3345
          %v3362 = vadd.f32 %v3308, %v3346
          %v3363 = vadd.f32 %v3309, %v3347
          %v3364 = vadd.f32 %v3310, %v3348
          %v3365 = vadd.f32 %v3311, %v3349
          %v3366 = vadd.f32 %v3312, %v3350
          %v3367 = vadd.f32 %v3313, %v3351
          %v3368 = vadd.f32 %v3314, %v3352
          %v3369 = vadd.f32 %v3315, %v3353
          %v3370 = vadd.f32 %v3316, %v3354
          %v3371 = vadd.f32 %v3317, %v3355
          %v3372 = vld [vmem:[%s3263 + $0x2] sm:$0xff]
          %v3373 = vld [vmem:[%s3263 + $0xa] sm:$0xff]
          %v3374 = vld [vmem:[%s3263 + $0x1a] sm:$0xff]
          %v3375 = vld [vmem:[%s3263 + $0x22] sm:$0xff]
          %v3376 = vld [vmem:[%s3263 + $0x32] sm:$0xff]
          %v3377 = vld [vmem:[%s3263 + $0x3a] sm:$0xff]
          %v3378 = vld [vmem:[%s3263 + $0x4a] sm:$0xff]
          %v3379 = vld [vmem:[%s3263 + $0x52] sm:$0xff]
          %v3380 = vld [vmem:[%s3263 + $0x62] sm:$0xff]
          %v3381 = vld [vmem:[%s3263 + $0x6a] sm:$0xff]
          %v3382 = vld [vmem:[%s3263 + $0x7a] sm:$0xff]
          %v3383 = vld [vmem:[%s3263 + $0x82] sm:$0xff]
          %v3384 = vld [vmem:[%s3263 + $0x92] sm:$0xff]
          %v3385 = vld [vmem:[%s3263 + $0x9a] sm:$0xff]
          %v3386 = vld [vmem:[%s3263 + $0xaa] sm:$0xff]
          %v3387 = vld [vmem:[%s3263 + $0xb2] sm:$0xff]
          %v3389 = vlaneseq
          %v3390 = vshrl.u32 %v3389, 7
          %v3391 = vsub.s32 0, %v3390
          %v3392 = vrot.slane %v1935, %v3391
          %v3394 = vmul.f32 %v3372, %v3392
          %v3395 = vmul.f32 %v3373, %v3392
          %v3396 = vmul.f32 %v3374, %v3392
          %v3397 = vmul.f32 %v3375, %v3392
          %v3398 = vmul.f32 %v3376, %v3392
          %v3399 = vmul.f32 %v3377, %v3392
          %v3400 = vmul.f32 %v3378, %v3392
          %v3401 = vmul.f32 %v3379, %v3392
          %v3402 = vmul.f32 %v3380, %v3392
          %v3403 = vmul.f32 %v3381, %v3392
          %v3404 = vmul.f32 %v3382, %v3392
          %v3405 = vmul.f32 %v3383, %v3392
          %v3406 = vmul.f32 %v3384, %v3392
          %v3407 = vmul.f32 %v3385, %v3392
          %v3408 = vmul.f32 %v3386, %v3392
          %v3409 = vmul.f32 %v3387, %v3392
          %v3410 = vadd.f32 %v3356, %v3394
          %v3411 = vadd.f32 %v3357, %v3395
          %v3412 = vadd.f32 %v3358, %v3396
          %v3413 = vadd.f32 %v3359, %v3397
          %v3414 = vadd.f32 %v3360, %v3398
          %v3415 = vadd.f32 %v3361, %v3399
          %v3416 = vadd.f32 %v3362, %v3400
          %v3417 = vadd.f32 %v3363, %v3401
          %v3418 = vadd.f32 %v3364, %v3402
          %v3419 = vadd.f32 %v3365, %v3403
          %v3420 = vadd.f32 %v3366, %v3404
          %v3421 = vadd.f32 %v3367, %v3405
          %v3422 = vadd.f32 %v3368, %v3406
          %v3423 = vadd.f32 %v3369, %v3407
          %v3424 = vadd.f32 %v3370, %v3408
          %v3425 = vadd.f32 %v3371, %v3409
          %v3426 = vld [vmem:[%s3263 + $0x3] sm:$0xff]
          %v3427 = vld [vmem:[%s3263 + $0xb] sm:$0xff]
          %v3428 = vld [vmem:[%s3263 + $0x1b] sm:$0xff]
          %v3429 = vld [vmem:[%s3263 + $0x23] sm:$0xff]
          %v3430 = vld [vmem:[%s3263 + $0x33] sm:$0xff]
          %v3431 = vld [vmem:[%s3263 + $0x3b] sm:$0xff]
          %v3432 = vld [vmem:[%s3263 + $0x4b] sm:$0xff]
          %v3433 = vld [vmem:[%s3263 + $0x53] sm:$0xff]
          %v3434 = vld [vmem:[%s3263 + $0x63] sm:$0xff]
          %v3435 = vld [vmem:[%s3263 + $0x6b] sm:$0xff]
          %v3436 = vld [vmem:[%s3263 + $0x7b] sm:$0xff]
          %v3437 = vld [vmem:[%s3263 + $0x83] sm:$0xff]
          %v3438 = vld [vmem:[%s3263 + $0x93] sm:$0xff]
          %v3439 = vld [vmem:[%s3263 + $0x9b] sm:$0xff]
          %v3440 = vld [vmem:[%s3263 + $0xab] sm:$0xff]
          %v3441 = vld [vmem:[%s3263 + $0xb3] sm:$0xff]
          %v3443 = vlaneseq
          %v3444 = vshrl.u32 %v3443, 7
          %v3445 = vsub.s32 0, %v3444
          %v3446 = vrot.slane %v1936, %v3445
          %v3448 = vmul.f32 %v3426, %v3446
          %v3449 = vmul.f32 %v3427, %v3446
          %v3450 = vmul.f32 %v3428, %v3446
          %v3451 = vmul.f32 %v3429, %v3446
          %v3452 = vmul.f32 %v3430, %v3446
          %v3453 = vmul.f32 %v3431, %v3446
          %v3454 = vmul.f32 %v3432, %v3446
          %v3455 = vmul.f32 %v3433, %v3446
          %v3456 = vmul.f32 %v3434, %v3446
          %v3457 = vmul.f32 %v3435, %v3446
          %v3458 = vmul.f32 %v3436, %v3446
          %v3459 = vmul.f32 %v3437, %v3446
          %v3460 = vmul.f32 %v3438, %v3446
          %v3461 = vmul.f32 %v3439, %v3446
          %v3462 = vmul.f32 %v3440, %v3446
          %v3463 = vmul.f32 %v3441, %v3446
          %v3464 = vadd.f32 %v3410, %v3448
          %v3465 = vadd.f32 %v3411, %v3449
          %v3466 = vadd.f32 %v3412, %v3450
          %v3467 = vadd.f32 %v3413, %v3451
          %v3468 = vadd.f32 %v3414, %v3452
          %v3469 = vadd.f32 %v3415, %v3453
          %v3470 = vadd.f32 %v3416, %v3454
          %v3471 = vadd.f32 %v3417, %v3455
          %v3472 = vadd.f32 %v3418, %v3456
          %v3473 = vadd.f32 %v3419, %v3457
          %v3474 = vadd.f32 %v3420, %v3458
          %v3475 = vadd.f32 %v3421, %v3459
          %v3476 = vadd.f32 %v3422, %v3460
          %v3477 = vadd.f32 %v3423, %v3461
          %v3478 = vadd.f32 %v3424, %v3462
          %v3479 = vadd.f32 %v3425, %v3463
          %v3480 = vld [vmem:[%s3263 + $0x4] sm:$0xff]
          %v3481 = vld [vmem:[%s3263 + $0xc] sm:$0xff]
          %v3482 = vld [vmem:[%s3263 + $0x1c] sm:$0xff]
          %v3483 = vld [vmem:[%s3263 + $0x24] sm:$0xff]
          %v3484 = vld [vmem:[%s3263 + $0x34] sm:$0xff]
          %v3485 = vld [vmem:[%s3263 + $0x3c] sm:$0xff]
          %v3486 = vld [vmem:[%s3263 + $0x4c] sm:$0xff]
          %v3487 = vld [vmem:[%s3263 + $0x54] sm:$0xff]
          %v3488 = vld [vmem:[%s3263 + $0x64] sm:$0xff]
          %v3489 = vld [vmem:[%s3263 + $0x6c] sm:$0xff]
          %v3490 = vld [vmem:[%s3263 + $0x7c] sm:$0xff]
          %v3491 = vld [vmem:[%s3263 + $0x84] sm:$0xff]
          %v3492 = vld [vmem:[%s3263 + $0x94] sm:$0xff]
          %v3493 = vld [vmem:[%s3263 + $0x9c] sm:$0xff]
          %v3494 = vld [vmem:[%s3263 + $0xac] sm:$0xff]
          %v3495 = vld [vmem:[%s3263 + $0xb4] sm:$0xff]
          %v3497 = vlaneseq
          %v3498 = vshrl.u32 %v3497, 7
          %v3499 = vsub.s32 0, %v3498
          %v3500 = vrot.slane %v1937, %v3499
          %v3502 = vmul.f32 %v3480, %v3500
          %v3503 = vmul.f32 %v3481, %v3500
          %v3504 = vmul.f32 %v3482, %v3500
          %v3505 = vmul.f32 %v3483, %v3500
          %v3506 = vmul.f32 %v3484, %v3500
          %v3507 = vmul.f32 %v3485, %v3500
          %v3508 = vmul.f32 %v3486, %v3500
          %v3509 = vmul.f32 %v3487, %v3500
          %v3510 = vmul.f32 %v3488, %v3500
          %v3511 = vmul.f32 %v3489, %v3500
          %v3512 = vmul.f32 %v3490, %v3500
          %v3513 = vmul.f32 %v3491, %v3500
          %v3514 = vmul.f32 %v3492, %v3500
          %v3515 = vmul.f32 %v3493, %v3500
          %v3516 = vmul.f32 %v3494, %v3500
          %v3517 = vmul.f32 %v3495, %v3500
          %v3518 = vadd.f32 %v3464, %v3502
          %v3519 = vadd.f32 %v3465, %v3503
          %v3520 = vadd.f32 %v3466, %v3504
          %v3521 = vadd.f32 %v3467, %v3505
          %v3522 = vadd.f32 %v3468, %v3506
          %v3523 = vadd.f32 %v3469, %v3507
          %v3524 = vadd.f32 %v3470, %v3508
          %v3525 = vadd.f32 %v3471, %v3509
          %v3526 = vadd.f32 %v3472, %v3510
          %v3527 = vadd.f32 %v3473, %v3511
          %v3528 = vadd.f32 %v3474, %v3512
          %v3529 = vadd.f32 %v3475, %v3513
          %v3530 = vadd.f32 %v3476, %v3514
          %v3531 = vadd.f32 %v3477, %v3515
          %v3532 = vadd.f32 %v3478, %v3516
          %v3533 = vadd.f32 %v3479, %v3517
          %vm3534 = vcmp.gt.f32.partialorder %v3518, 0.0
          %vm3535 = vcmp.gt.f32.partialorder %v3519, 0.0
          %vm3536 = vcmp.gt.f32.partialorder %v3520, 0.0
          %vm3537 = vcmp.gt.f32.partialorder %v3521, 0.0
          %vm3538 = vcmp.gt.f32.partialorder %v3522, 0.0
          %vm3539 = vcmp.gt.f32.partialorder %v3523, 0.0
          %vm3540 = vcmp.gt.f32.partialorder %v3524, 0.0
          %vm3541 = vcmp.gt.f32.partialorder %v3525, 0.0
          %vm3542 = vcmp.gt.f32.partialorder %v3526, 0.0
          %vm3543 = vcmp.gt.f32.partialorder %v3527, 0.0
          %vm3544 = vcmp.gt.f32.partialorder %v3528, 0.0
          %vm3545 = vcmp.gt.f32.partialorder %v3529, 0.0
          %vm3546 = vcmp.gt.f32.partialorder %v3530, 0.0
          %vm3547 = vcmp.gt.f32.partialorder %v3531, 0.0
          %vm3548 = vcmp.gt.f32.partialorder %v3532, 0.0
          %vm3549 = vcmp.gt.f32.partialorder %v3533, 0.0
          %v3550 = vmul.f32 %v3518, 0.1
          %v3551 = vmul.f32 %v3519, 0.1
          %v3552 = vmul.f32 %v3520, 0.1
          %v3553 = vmul.f32 %v3521, 0.1
          %v3554 = vmul.f32 %v3522, 0.1
          %v3555 = vmul.f32 %v3523, 0.1
          %v3556 = vmul.f32 %v3524, 0.1
          %v3557 = vmul.f32 %v3525, 0.1
          %v3558 = vmul.f32 %v3526, 0.1
          %v3559 = vmul.f32 %v3527, 0.1
          %v3560 = vmul.f32 %v3528, 0.1
          %v3561 = vmul.f32 %v3529, 0.1
          %v3562 = vmul.f32 %v3530, 0.1
          %v3563 = vmul.f32 %v3531, 0.1
          %v3564 = vmul.f32 %v3532, 0.1
          %v3565 = vmul.f32 %v3533, 0.1
          %v3566 = vsel %vm3534, %v3518, %v3550
          %v3567 = vsel %vm3535, %v3519, %v3551
          %v3568 = vsel %vm3536, %v3520, %v3552
          %v3569 = vsel %vm3537, %v3521, %v3553
          %v3570 = vsel %vm3538, %v3522, %v3554
          %v3571 = vsel %vm3539, %v3523, %v3555
          %v3572 = vsel %vm3540, %v3524, %v3556
          %v3573 = vsel %vm3541, %v3525, %v3557
          %v3574 = vsel %vm3542, %v3526, %v3558
          %v3575 = vsel %vm3543, %v3527, %v3559
          %v3576 = vsel %vm3544, %v3528, %v3560
          %v3577 = vsel %vm3545, %v3529, %v3561
          %v3578 = vsel %vm3546, %v3530, %v3562
          %v3579 = vsel %vm3547, %v3531, %v3563
          %v3580 = vsel %vm3548, %v3532, %v3564
          %v3581 = vsel %vm3549, %v3533, %v3565
          %v3582 = vpack.c.bf16 %v3567, %v3566
          %v3583 = vpack.c.bf16 %v3569, %v3568
          %v3584 = vpack.c.bf16 %v3571, %v3570
          %v3585 = vpack.c.bf16 %v3573, %v3572
          %v3586 = vpack.c.bf16 %v3575, %v3574
          %v3587 = vpack.c.bf16 %v3577, %v3576
          %v3588 = vpack.c.bf16 %v3579, %v3578
          %v3589 = vpack.c.bf16 %v3581, %v3580
          %v3596 = vunpack.c.l.b16 %v1907
          %v3597 = vunpack.c.l.b16 %v1908
          %v3598 = vunpack.c.l.b16 %v1909
          %v3599 = vunpack.c.l.b16 %v1910
          %v3600 = vunpack.c.l.b16 %v1911
          %v3601 = vunpack.c.l.b16 %v1912
          %v3602 = vpack.c.b16 %v3597, %v3596
          %v3603 = vpack.c.b16 %v3599, %v3598
          %v3604 = vpack.c.b16 %v3601, %v3600
          %v3609 = vsel %vm253, %v3582, 0
          %v3612 = vsel %vm253, %v3583, 0
          %v3615 = vsel %vm253, %v3584, 0
          %v3618 = vsel %vm253, %v3585, 0
          %v3621 = vsel %vm253, %v3586, 0
          %v3624 = vsel %vm253, %v3587, 0
          %v3627 = vsel %vm253, %v3588, 0
          %v3630 = vsel %vm253, %v3589, 0
          %3632 = vmatprep.subr.bf16.mxu0 0
          %3633 = vmatpush1.bf16.msra.mxu0 %v3602
          %3634 = vmatprep.subr.bf16.mxu0 0
          %3635 = vmatpush1.bf16.msra.mxu0 %v3603
          %3636 = vmatprep.subr.bf16.mxu0 0
          %3637 = vmatpush1.bf16.msra.mxu0 %v3604
          %3638 = vmatprep.subr.bf16.mxu0 0
          %3639 = vmatpush1.bf16.msra.mxu0 0
          %3640 = vmatprep.subr.bf16.mxu0 0
          %3641 = vmatpush1.bf16.msra.mxu0 0
          %3642 = vmatprep.subr.bf16.mxu0 0
          %3643 = vmatpush1.bf16.msra.mxu0 0
          %3644 = vmatprep.subr.bf16.mxu0 0
          %3645 = vmatpush1.bf16.msra.mxu0 0
          %3646 = vmatprep.subr.bf16.mxu0 0
          %3647 = vmatpush1.bf16.msra.mxu0 0
          %3648 = vmatprep.subr.bf16.mxu0 0
          %3649 = vmatpush1.bf16.msra.mxu0 0
          %3650 = vmatprep.subr.bf16.mxu0 0
          %3651 = vmatpush1.bf16.msra.mxu0 0
          %3652 = vmatprep.subr.bf16.mxu0 0
          %3653 = vmatpush1.bf16.msra.mxu0 0
          %3654 = vmatprep.subr.bf16.mxu0 0
          %3655 = vmatpush1.bf16.msra.mxu0 0
          %3656 = vmatprep.subr.bf16.mxu0 0
          %3657 = vmatpush1.bf16.msra.mxu0 0
          %3658 = vmatprep.subr.bf16.mxu0 0
          %3659 = vmatpush1.bf16.msra.mxu0 0
          %3660 = vmatprep.subr.bf16.mxu0 0
          %3661 = vmatpush1.bf16.msra.mxu0 0
          %3662 = vmatprep.subr.bf16.mxu0 0
          %3663 = vmatpush1.bf16.msra.mxu0 0
          %3664 = vmatprep.mubr.bf16.mxu0 0
          %3665 = vmatmul.mubr.bf16.gmra.mrb[0].mxu0 %v3609
          %v3666 = vpop.f32.mrb[0].mxu0
          %v3667 = vadd.f32 0.0, %v3666
          %v3668 = vpop.f32.mrb[0].mxu0
          %v3669 = vpop.f32.mrb[0].mxu0
          %v3670 = vadd.f32 0.0, %v3669
          %v3671 = vpop.f32.mrb[0].mxu0
          %3672 = vmatprep.mubr.bf16.mxu0 0
          %3673 = vmatmul.mubr.bf16.gmra.mrb[0].mxu0 %v3612
          %v3674 = vpop.f32.mrb[0].mxu0
          %v3675 = vadd.f32 0.0, %v3674
          %v3676 = vpop.f32.mrb[0].mxu0
          %v3677 = vpop.f32.mrb[0].mxu0
          %v3678 = vadd.f32 0.0, %v3677
          %v3679 = vpop.f32.mrb[0].mxu0
          %3680 = vmatprep.mubr.bf16.mxu0 0
          %3681 = vmatmul.mubr.bf16.gmra.mrb[0].mxu0 %v3615
          %v3682 = vpop.f32.mrb[0].mxu0
          %v3683 = vadd.f32 0.0, %v3682
          %v3684 = vpop.f32.mrb[0].mxu0
          %v3685 = vpop.f32.mrb[0].mxu0
          %v3686 = vadd.f32 0.0, %v3685
          %v3687 = vpop.f32.mrb[0].mxu0
          %3688 = vmatprep.mubr.bf16.mxu0 0
          %3689 = vmatmul.mubr.bf16.gmra.mrb[0].mxu0 %v3618
          %v3690 = vpop.f32.mrb[0].mxu0
          %v3691 = vadd.f32 0.0, %v3690
          %v3692 = vpop.f32.mrb[0].mxu0
          %v3693 = vpop.f32.mrb[0].mxu0
          %v3694 = vadd.f32 0.0, %v3693
          %v3695 = vpop.f32.mrb[0].mxu0
          %3696 = vmatprep.mubr.bf16.mxu0 0
          %3697 = vmatmul.mubr.bf16.gmra.mrb[0].mxu0 %v3621
          %v3698 = vpop.f32.mrb[0].mxu0
          %v3699 = vadd.f32 0.0, %v3698
          %v3700 = vpop.f32.mrb[0].mxu0
          %v3701 = vpop.f32.mrb[0].mxu0
          %v3702 = vadd.f32 0.0, %v3701
          %v3703 = vpop.f32.mrb[0].mxu0
          %3704 = vmatprep.mubr.bf16.mxu0 0
          %3705 = vmatmul.mubr.bf16.gmra.mrb[0].mxu0 %v3624
          %v3706 = vpop.f32.mrb[0].mxu0
          %v3707 = vadd.f32 0.0, %v3706
          %v3708 = vpop.f32.mrb[0].mxu0
          %v3709 = vpop.f32.mrb[0].mxu0
          %v3710 = vadd.f32 0.0, %v3709
          %v3711 = vpop.f32.mrb[0].mxu0
          %3712 = vmatprep.mubr.bf16.mxu0 0
          %3713 = vmatmul.mubr.bf16.gmra.mrb[0].mxu0 %v3627
          %v3714 = vpop.f32.mrb[0].mxu0
          %v3715 = vadd.f32 0.0, %v3714
          %v3716 = vpop.f32.mrb[0].mxu0
          %v3717 = vpop.f32.mrb[0].mxu0
          %v3718 = vadd.f32 0.0, %v3717
          %v3719 = vpop.f32.mrb[0].mxu0
          %3720 = vmatprep.mubr.bf16.mxu0 0
          %3721 = vmatmul.mubr.bf16.gmra.mrb[0].mxu0 %v3630
          %v3722 = vpop.f32.mrb[0].mxu0
          %v3723 = vadd.f32 0.0, %v3722
          %v3724 = vpop.f32.mrb[0].mxu0
          %v3725 = vpop.f32.mrb[0].mxu0
          %v3726 = vadd.f32 0.0, %v3725
          %v3727 = vpop.f32.mrb[0].mxu0
          %3728 = vdwg.mxu0
          %s3729 = smul.u32 %s2169, 16
          %s3730 = scalar_lea.vmem [#allocation3], %s3729
          %v3731 = vld [vmem:[%s3730] sm:$0xff]
          %v3732 = vld [vmem:[%s3730 + $0x8] sm:$0xff]
          %v3733 = vld [vmem:[%s3730 + $0x10] sm:$0xff]
          %v3734 = vld [vmem:[%s3730 + $0x18] sm:$0xff]
          %v3735 = vld [vmem:[%s3730 + $0x20] sm:$0xff]
          %v3736 = vld [vmem:[%s3730 + $0x28] sm:$0xff]
          %v3737 = vld [vmem:[%s3730 + $0x30] sm:$0xff]
          %v3738 = vld [vmem:[%s3730 + $0x38] sm:$0xff]
          %v3739 = vld [vmem:[%s3730 + $0x40] sm:$0xff]
          %v3740 = vld [vmem:[%s3730 + $0x48] sm:$0xff]
          %v3741 = vld [vmem:[%s3730 + $0x50] sm:$0xff]
          %v3742 = vld [vmem:[%s3730 + $0x58] sm:$0xff]
          %v3743 = vld [vmem:[%s3730 + $0x60] sm:$0xff]
          %v3744 = vld [vmem:[%s3730 + $0x68] sm:$0xff]
          %v3745 = vld [vmem:[%s3730 + $0x70] sm:$0xff]
          %v3746 = vld [vmem:[%s3730 + $0x78] sm:$0xff]
          %v3747 = vadd.f32 %v3731, %v3667
          %v3748 = vadd.f32 %v3732, %v3670
          %v3749 = vadd.f32 %v3733, %v3675
          %v3750 = vadd.f32 %v3734, %v3678
          %v3751 = vadd.f32 %v3735, %v3683
          %v3752 = vadd.f32 %v3736, %v3686
          %v3753 = vadd.f32 %v3737, %v3691
          %v3754 = vadd.f32 %v3738, %v3694
          %v3755 = vadd.f32 %v3739, %v3699
          %v3756 = vadd.f32 %v3740, %v3702
          %v3757 = vadd.f32 %v3741, %v3707
          %v3758 = vadd.f32 %v3742, %v3710
          %v3759 = vadd.f32 %v3743, %v3715
          %v3760 = vadd.f32 %v3744, %v3718
          %v3761 = vadd.f32 %v3745, %v3723
          %v3762 = vadd.f32 %v3746, %v3726
          %vm3763 = vcmp.gt.f32.partialorder %v3747, 0.0
          %vm3764 = vcmp.gt.f32.partialorder %v3748, 0.0
          %vm3765 = vcmp.gt.f32.partialorder %v3749, 0.0
          %vm3766 = vcmp.gt.f32.partialorder %v3750, 0.0
          %vm3767 = vcmp.gt.f32.partialorder %v3751, 0.0
          %vm3768 = vcmp.gt.f32.partialorder %v3752, 0.0
          %vm3769 = vcmp.gt.f32.partialorder %v3753, 0.0
          %vm3770 = vcmp.gt.f32.partialorder %v3754, 0.0
          %vm3771 = vcmp.gt.f32.partialorder %v3755, 0.0
          %vm3772 = vcmp.gt.f32.partialorder %v3756, 0.0
          %vm3773 = vcmp.gt.f32.partialorder %v3757, 0.0
          %vm3774 = vcmp.gt.f32.partialorder %v3758, 0.0
          %vm3775 = vcmp.gt.f32.partialorder %v3759, 0.0
          %vm3776 = vcmp.gt.f32.partialorder %v3760, 0.0
          %vm3777 = vcmp.gt.f32.partialorder %v3761, 0.0
          %vm3778 = vcmp.gt.f32.partialorder %v3762, 0.0
          %v3779 = vmul.f32 %v3747, 0.1
          %v3780 = vmul.f32 %v3748, 0.1
          %v3781 = vmul.f32 %v3749, 0.1
          %v3782 = vmul.f32 %v3750, 0.1
          %v3783 = vmul.f32 %v3751, 0.1
          %v3784 = vmul.f32 %v3752, 0.1
          %v3785 = vmul.f32 %v3753, 0.1
          %v3786 = vmul.f32 %v3754, 0.1
          %v3787 = vmul.f32 %v3755, 0.1
          %v3788 = vmul.f32 %v3756, 0.1
          %v3789 = vmul.f32 %v3757, 0.1
          %v3790 = vmul.f32 %v3758, 0.1
          %v3791 = vmul.f32 %v3759, 0.1
          %v3792 = vmul.f32 %v3760, 0.1
          %v3793 = vmul.f32 %v3761, 0.1
          %v3794 = vmul.f32 %v3762, 0.1
          %v3795 = vsel %vm3763, %v3747, %v3779
          %v3796 = vsel %vm3764, %v3748, %v3780
          %v3797 = vsel %vm3765, %v3749, %v3781
          %v3798 = vsel %vm3766, %v3750, %v3782
          %v3799 = vsel %vm3767, %v3751, %v3783
          %v3800 = vsel %vm3768, %v3752, %v3784
          %v3801 = vsel %vm3769, %v3753, %v3785
          %v3802 = vsel %vm3770, %v3754, %v3786
          %v3803 = vsel %vm3771, %v3755, %v3787
          %v3804 = vsel %vm3772, %v3756, %v3788
          %v3805 = vsel %vm3773, %v3757, %v3789
          %v3806 = vsel %vm3774, %v3758, %v3790
          %v3807 = vsel %vm3775, %v3759, %v3791
          %v3808 = vsel %vm3776, %v3760, %v3792
          %v3809 = vsel %vm3777, %v3761, %v3793
          %v3810 = vsel %vm3778, %v3762, %v3794
          %3811 = vst.msk [vmem:[%s3730] sm:$0xff] %vm315, %v3795
          %3812 = vst.msk [vmem:[%s3730 + $0x8] sm:$0xff] %vm315, %v3796
          %3813 = vst.msk [vmem:[%s3730 + $0x10] sm:$0xff] %vm315, %v3797
          %3814 = vst.msk [vmem:[%s3730 + $0x18] sm:$0xff] %vm315, %v3798
          %3815 = vst.msk [vmem:[%s3730 + $0x20] sm:$0xff] %vm315, %v3799
          %3816 = vst.msk [vmem:[%s3730 + $0x28] sm:$0xff] %vm315, %v3800
          %3817 = vst.msk [vmem:[%s3730 + $0x30] sm:$0xff] %vm315, %v3801
          %3818 = vst.msk [vmem:[%s3730 + $0x38] sm:$0xff] %vm315, %v3802
          %3819 = vst.msk [vmem:[%s3730 + $0x40] sm:$0xff] %vm315, %v3803
          %3820 = vst.msk [vmem:[%s3730 + $0x48] sm:$0xff] %vm315, %v3804
          %3821 = vst.msk [vmem:[%s3730 + $0x50] sm:$0xff] %vm315, %v3805
          %3822 = vst.msk [vmem:[%s3730 + $0x58] sm:$0xff] %vm315, %v3806
          %3823 = vst.msk [vmem:[%s3730 + $0x60] sm:$0xff] %vm315, %v3807
          %3824 = vst.msk [vmem:[%s3730 + $0x68] sm:$0xff] %vm315, %v3808
          %3825 = vst.msk [vmem:[%s3730 + $0x70] sm:$0xff] %vm315, %v3809
          %3826 = vst.msk [vmem:[%s3730 + $0x78] sm:$0xff] %vm315, %v3810
        $region63: #{predictor_forward.1} parent=48 // loop_footer
          %s2168 = sadd.s32 1, %s2164
        $region64: #{predictor_forward.1} parent=48 // loop_footer_branch
          %2163 = sbr.rel target = $region60
        $region65: #{predictor_forward.1} parent=48 // loop_exit
          _
        %s3827 = scalar_lea.vmem %s3, 4
        %v3828 = vld [vmem:[%s3827] sm:$0xf]
        %s3829 = scalar_lea.vmem %s5, 24
        %v3830 = vld [vmem:[%s3829] sm:$0xf]
        %v3831 = vld [vmem:[%s3829 + $0x4] sm:$0xf]
        %v3832 = vld [vmem:[%s3829 + $0x8] sm:$0xf]
        %v3833 = vld [vmem:[%s3829 + $0xc] sm:$0xf]
        %v3834 = vld [vmem:[%s3829 + $0x10] sm:$0xf]
        %v3835 = vld [vmem:[%s3829 + $0x14] sm:$0xf]
        %s3836 = scalar_lea.vmem %s4, 25
        %v3837 = vld [vmem:[%s3836] sm:$0x1]
        %v3838 = vld [vmem:[%s3836 + $0x1] sm:$0x1]
        %v3839 = vld [vmem:[%s3836 + $0x2] sm:$0x1]
        %v3840 = vld [vmem:[%s3836 + $0x3] sm:$0x1]
        %v3841 = vld [vmem:[%s3836 + $0x4] sm:$0x1]
        %v3842 = vld [vmem:[%s3836 + $0x5] sm:$0x1]
        %v3843 = vld [vmem:[%s3836 + $0x6] sm:$0x1]
        %v3844 = vld [vmem:[%s3836 + $0x7] sm:$0x1]
        %v3845 = vld [vmem:[%s3836 + $0x8] sm:$0x1]
        %v3846 = vld [vmem:[%s3836 + $0x9] sm:$0x1]
        %v3847 = vld [vmem:[%s3836 + $0xa] sm:$0x1]
        %v3848 = vld [vmem:[%s3836 + $0xb] sm:$0x1]
        %v3849 = vld [vmem:[%s3836 + $0xc] sm:$0x1]
        %v3850 = vld [vmem:[%s3836 + $0xd] sm:$0x1]
        %v3851 = vld [vmem:[%s3836 + $0xe] sm:$0x1]
        %v3852 = vld [vmem:[%s3836 + $0xf] sm:$0x1]
        %v3853 = vld [vmem:[%s3836 + $0x10] sm:$0x1]
        %v3854 = vld [vmem:[%s3836 + $0x11] sm:$0x1]
        %v3855 = vld [vmem:[%s3836 + $0x12] sm:$0x1]
        %v3856 = vld [vmem:[%s3836 + $0x13] sm:$0x1]
        %v3857 = vld [vmem:[%s3836 + $0x14] sm:$0x1]
        %v3858 = vld [vmem:[%s3836 + $0x15] sm:$0x1]
        %v3859 = vld [vmem:[%s3836 + $0x16] sm:$0x1]
        %v3860 = vld [vmem:[%s3836 + $0x17] sm:$0x1]
        %v3861 = vld [vmem:[%s3836 + $0x18] sm:$0x1]
        loop: start=0, step=1, limit=2
        $region66: #{predictor_forward.1} parent=48 // loop_pre_header
          _
        $region67: #{predictor_forward.1} parent=48 // loop_header
          %s3863 = sphi 0, %s3867
          %p3864 = scmp.ge.s32.totalorder %s3863, 2
        $region68: #{predictor_forward.1} parent=48 // loop_header_branch
          %3866 = sbr.rel (%p3864) target = $region72
        $region69: #{predictor_forward.1} parent=48 // loop_body
          %s3868 = smul.u32 %s3863, 8
          %s3869 = smul.u32 %s3868, 16
          %s3870 = scalar_lea.vmem [#allocation3], %s3869
          %v3871 = vld [vmem:[%s3870] sm:$0xff]
          %v3872 = vld [vmem:[%s3870 + $0x8] sm:$0xff]
          %v3873 = vld [vmem:[%s3870 + $0x10] sm:$0xff]
          %v3874 = vld [vmem:[%s3870 + $0x18] sm:$0xff]
          %v3875 = vld [vmem:[%s3870 + $0x20] sm:$0xff]
          %v3876 = vld [vmem:[%s3870 + $0x28] sm:$0xff]
          %v3877 = vld [vmem:[%s3870 + $0x30] sm:$0xff]
          %v3878 = vld [vmem:[%s3870 + $0x38] sm:$0xff]
          %v3879 = vld [vmem:[%s3870 + $0x40] sm:$0xff]
          %v3880 = vld [vmem:[%s3870 + $0x48] sm:$0xff]
          %v3881 = vld [vmem:[%s3870 + $0x50] sm:$0xff]
          %v3882 = vld [vmem:[%s3870 + $0x58] sm:$0xff]
          %v3883 = vld [vmem:[%s3870 + $0x60] sm:$0xff]
          %v3884 = vld [vmem:[%s3870 + $0x68] sm:$0xff]
          %v3885 = vld [vmem:[%s3870 + $0x70] sm:$0xff]
          %v3886 = vld [vmem:[%s3870 + $0x78] sm:$0xff]
          %v3887 = vpack.c.bf16 %v3872, %v3871
          %v3888 = vpack.c.bf16 %v3874, %v3873
          %v3889 = vpack.c.bf16 %v3876, %v3875
          %v3890 = vpack.c.bf16 %v3878, %v3877
          %v3891 = vpack.c.bf16 %v3880, %v3879
          %v3892 = vpack.c.bf16 %v3882, %v3881
          %v3893 = vpack.c.bf16 %v3884, %v3883
          %v3894 = vpack.c.bf16 %v3886, %v3885
          %v3896 = vsel %vm315, %v3887, 0
          %v3899 = vsel %vm315, %v3888, 0
          %v3902 = vsel %vm315, %v3889, 0
          %v3905 = vsel %vm315, %v3890, 0
          %v3908 = vsel %vm315, %v3891, 0
          %v3911 = vsel %vm315, %v3892, 0
          %v3914 = vsel %vm315, %v3893, 0
          %v3917 = vsel %vm315, %v3894, 0
          %vm3919 = vcmask 1043456
          %v3921 = vsel %vm3919, %v3828, 0
          %3923 = vmatprep.subr.bf16.mxu0 0
          %3924 = vmatpush1.bf16.msra.mxu0 %v3921
          %3925 = vmatprep.subr.bf16.mxu0 0
          %3926 = vmatpush1.bf16.msra.mxu0 0
          %3927 = vmatprep.subr.bf16.mxu0 0
          %3928 = vmatpush1.bf16.msra.mxu0 0
          %3929 = vmatprep.subr.bf16.mxu0 0
          %3930 = vmatpush1.bf16.msra.mxu0 0
          %3931 = vmatprep.subr.bf16.mxu0 0
          %3932 = vmatpush1.bf16.msra.mxu0 0
          %3933 = vmatprep.subr.bf16.mxu0 0
          %3934 = vmatpush1.bf16.msra.mxu0 0
          %3935 = vmatprep.subr.bf16.mxu0 0
          %3936 = vmatpush1.bf16.msra.mxu0 0
          %3937 = vmatprep.subr.bf16.mxu0 0
          %3938 = vmatpush1.bf16.msra.mxu0 0
          %3939 = vmatprep.subr.bf16.mxu0 0
          %3940 = vmatpush1.bf16.msra.mxu0 0
          %3941 = vmatprep.subr.bf16.mxu0 0
          %3942 = vmatpush1.bf16.msra.mxu0 0
          %3943 = vmatprep.subr.bf16.mxu0 0
          %3944 = vmatpush1.bf16.msra.mxu0 0
          %3945 = vmatprep.subr.bf16.mxu0 0
          %3946 = vmatpush1.bf16.msra.mxu0 0
          %3947 = vmatprep.subr.bf16.mxu0 0
          %3948 = vmatpush1.bf16.msra.mxu0 0
          %3949 = vmatprep.subr.bf16.mxu0 0
          %3950 = vmatpush1.bf16.msra.mxu0 0
          %3951 = vmatprep.subr.bf16.mxu0 0
          %3952 = vmatpush1.bf16.msra.mxu0 0
          %3953 = vmatprep.subr.bf16.mxu0 0
          %3954 = vmatpush1.bf16.msra.mxu0 0
          %3955 = vmatprep.mubr.bf16.mxu0 0
          %3956 = vmatmul.mubr.bf16.gmra.mrb[0].mxu0 %v3896
          %v3957 = vpop.f32.mrb[0].mxu0
          %v3958 = vadd.f32 0.0, %v3957
          %v3959 = vpop.f32.mrb[0].mxu0
          %v3960 = vpop.f32.mrb[0].mxu0
          %v3961 = vadd.f32 0.0, %v3960
          %v3962 = vpop.f32.mrb[0].mxu0
          %3963 = vmatprep.mubr.bf16.mxu0 0
          %3964 = vmatmul.mubr.bf16.gmra.mrb[0].mxu0 %v3899
          %v3965 = vpop.f32.mrb[0].mxu0
          %v3966 = vadd.f32 0.0, %v3965
          %v3967 = vpop.f32.mrb[0].mxu0
          %v3968 = vpop.f32.mrb[0].mxu0
          %v3969 = vadd.f32 0.0, %v3968
          %v3970 = vpop.f32.mrb[0].mxu0
          %3971 = vmatprep.mubr.bf16.mxu0 0
          %3972 = vmatmul.mubr.bf16.gmra.mrb[0].mxu0 %v3902
          %v3973 = vpop.f32.mrb[0].mxu0
          %v3974 = vadd.f32 0.0, %v3973
          %v3975 = vpop.f32.mrb[0].mxu0
          %v3976 = vpop.f32.mrb[0].mxu0
          %v3977 = vadd.f32 0.0, %v3976
          %v3978 = vpop.f32.mrb[0].mxu0
          %3979 = vmatprep.mubr.bf16.mxu0 0
          %3980 = vmatmul.mubr.bf16.gmra.mrb[0].mxu0 %v3905
          %v3981 = vpop.f32.mrb[0].mxu0
          %v3982 = vadd.f32 0.0, %v3981
          %v3983 = vpop.f32.mrb[0].mxu0
          %v3984 = vpop.f32.mrb[0].mxu0
          %v3985 = vadd.f32 0.0, %v3984
          %v3986 = vpop.f32.mrb[0].mxu0
          %3987 = vmatprep.mubr.bf16.mxu0 0
          %3988 = vmatmul.mubr.bf16.gmra.mrb[0].mxu0 %v3908
          %v3989 = vpop.f32.mrb[0].mxu0
          %v3990 = vadd.f32 0.0, %v3989
          %v3991 = vpop.f32.mrb[0].mxu0
          %v3992 = vpop.f32.mrb[0].mxu0
          %v3993 = vadd.f32 0.0, %v3992
          %v3994 = vpop.f32.mrb[0].mxu0
          %3995 = vmatprep.mubr.bf16.mxu0 0
          %3996 = vmatmul.mubr.bf16.gmra.mrb[0].mxu0 %v3911
          %v3997 = vpop.f32.mrb[0].mxu0
          %v3998 = vadd.f32 0.0, %v3997
          %v3999 = vpop.f32.mrb[0].mxu0
          %v4000 = vpop.f32.mrb[0].mxu0
          %v4001 = vadd.f32 0.0, %v4000
          %v4002 = vpop.f32.mrb[0].mxu0
          %4003 = vmatprep.mubr.bf16.mxu0 0
          %4004 = vmatmul.mubr.bf16.gmra.mrb[0].mxu0 %v3914
          %v4005 = vpop.f32.mrb[0].mxu0
          %v4006 = vadd.f32 0.0, %v4005
          %v4007 = vpop.f32.mrb[0].mxu0
          %v4008 = vpop.f32.mrb[0].mxu0
          %v4009 = vadd.f32 0.0, %v4008
          %v4010 = vpop.f32.mrb[0].mxu0
          %4011 = vmatprep.mubr.bf16.mxu0 0
          %4012 = vmatmul.mubr.bf16.gmra.mrb[0].mxu0 %v3917
          %v4013 = vpop.f32.mrb[0].mxu0
          %v4014 = vadd.f32 0.0, %v4013
          %v4015 = vpop.f32.mrb[0].mxu0
          %v4016 = vpop.f32.mrb[0].mxu0
          %v4017 = vadd.f32 0.0, %v4016
          %v4018 = vpop.f32.mrb[0].mxu0
          %4019 = vdwg.mxu0
          %vm4020 = vcmp.gt.f32.partialorder %v3958, 0.0
          %vm4021 = vcmp.gt.f32.partialorder %v3961, 0.0
          %vm4022 = vcmp.gt.f32.partialorder %v3966, 0.0
          %vm4023 = vcmp.gt.f32.partialorder %v3969, 0.0
          %vm4024 = vcmp.gt.f32.partialorder %v3974, 0.0
          %vm4025 = vcmp.gt.f32.partialorder %v3977, 0.0
          %vm4026 = vcmp.gt.f32.partialorder %v3982, 0.0
          %vm4027 = vcmp.gt.f32.partialorder %v3985, 0.0
          %vm4028 = vcmp.gt.f32.partialorder %v3990, 0.0
          %vm4029 = vcmp.gt.f32.partialorder %v3993, 0.0
          %vm4030 = vcmp.gt.f32.partialorder %v3998, 0.0
          %vm4031 = vcmp.gt.f32.partialorder %v4001, 0.0
          %vm4032 = vcmp.gt.f32.partialorder %v4006, 0.0
          %vm4033 = vcmp.gt.f32.partialorder %v4009, 0.0
          %vm4034 = vcmp.gt.f32.partialorder %v4014, 0.0
          %vm4035 = vcmp.gt.f32.partialorder %v4017, 0.0
          %v4036 = vmul.f32 %v3958, 0.1
          %v4037 = vmul.f32 %v3961, 0.1
          %v4038 = vmul.f32 %v3966, 0.1
          %v4039 = vmul.f32 %v3969, 0.1
          %v4040 = vmul.f32 %v3974, 0.1
          %v4041 = vmul.f32 %v3977, 0.1
          %v4042 = vmul.f32 %v3982, 0.1
          %v4043 = vmul.f32 %v3985, 0.1
          %v4044 = vmul.f32 %v3990, 0.1
          %v4045 = vmul.f32 %v3993, 0.1
          %v4046 = vmul.f32 %v3998, 0.1
          %v4047 = vmul.f32 %v4001, 0.1
          %v4048 = vmul.f32 %v4006, 0.1
          %v4049 = vmul.f32 %v4009, 0.1
          %v4050 = vmul.f32 %v4014, 0.1
          %v4051 = vmul.f32 %v4017, 0.1
          %v4052 = vsel %vm4020, %v3958, %v4036
          %v4053 = vsel %vm4021, %v3961, %v4037
          %v4054 = vsel %vm4022, %v3966, %v4038
          %v4055 = vsel %vm4023, %v3969, %v4039
          %v4056 = vsel %vm4024, %v3974, %v4040
          %v4057 = vsel %vm4025, %v3977, %v4041
          %v4058 = vsel %vm4026, %v3982, %v4042
          %v4059 = vsel %vm4027, %v3985, %v4043
          %v4060 = vsel %vm4028, %v3990, %v4044
          %v4061 = vsel %vm4029, %v3993, %v4045
          %v4062 = vsel %vm4030, %v3998, %v4046
          %v4063 = vsel %vm4031, %v4001, %v4047
          %v4064 = vsel %vm4032, %v4006, %v4048
          %v4065 = vsel %vm4033, %v4009, %v4049
          %v4066 = vsel %vm4034, %v4014, %v4050
          %v4067 = vsel %vm4035, %v4017, %v4051
          %s4068 = sadd.s32 %s3868, 2
          %s4069 = smul.u32 %s4068, 24
          %s4070 = scalar_lea.vmem [#allocation4], %s4069
          %4071 = vst.msk [vmem:[%s4070 + $0x2] sm:$0xff] %vm253, %v4052
          %4072 = vst.msk [vmem:[%s4070 + $0xa] sm:$0xff] %vm253, %v4053
          %4073 = vst.msk [vmem:[%s4070 + $0x1a] sm:$0xff] %vm253, %v4054
          %4074 = vst.msk [vmem:[%s4070 + $0x22] sm:$0xff] %vm253, %v4055
          %4075 = vst.msk [vmem:[%s4070 + $0x32] sm:$0xff] %vm253, %v4056
          %4076 = vst.msk [vmem:[%s4070 + $0x3a] sm:$0xff] %vm253, %v4057
          %4077 = vst.msk [vmem:[%s4070 + $0x4a] sm:$0xff] %vm253, %v4058
          %4078 = vst.msk [vmem:[%s4070 + $0x52] sm:$0xff] %vm253, %v4059
          %4079 = vst.msk [vmem:[%s4070 + $0x62] sm:$0xff] %vm253, %v4060
          %4080 = vst.msk [vmem:[%s4070 + $0x6a] sm:$0xff] %vm253, %v4061
          %4081 = vst.msk [vmem:[%s4070 + $0x7a] sm:$0xff] %vm253, %v4062
          %4082 = vst.msk [vmem:[%s4070 + $0x82] sm:$0xff] %vm253, %v4063
          %4083 = vst.msk [vmem:[%s4070 + $0x92] sm:$0xff] %vm253, %v4064
          %4084 = vst.msk [vmem:[%s4070 + $0x9a] sm:$0xff] %vm253, %v4065
          %4085 = vst.msk [vmem:[%s4070 + $0xaa] sm:$0xff] %vm253, %v4066
          %4086 = vst.msk [vmem:[%s4070 + $0xb2] sm:$0xff] %vm253, %v4067
        $region70: #{predictor_forward.1} parent=48 // loop_footer
          %s3867 = sadd.s32 1, %s3863
        $region71: #{predictor_forward.1} parent=48 // loop_footer_branch
          %3862 = sbr.rel target = $region67
        $region72: #{predictor_forward.1} parent=48 // loop_exit
          _
        loop: start=0, step=1, limit=2
        $region73: #{predictor_forward.1} parent=48 // loop_pre_header
          _
        $region74: #{predictor_forward.1} parent=48 // loop_header
          %s4088 = sphi 0, %s4092
          %p4089 = scmp.ge.s32.totalorder %s4088, 2
        $region75: #{predictor_forward.1} parent=48 // loop_header_branch
          %4091 = sbr.rel (%p4089) target = $region79
        $region76: #{predictor_forward.1} parent=48 // loop_body
          %s4093 = smul.u32 %s4088, 8
          %s4094 = smul.u32 %s4093, 24
          %s4095 = scalar_lea.vmem [#allocation4], %s4094
          %v4096 = vld [vmem:[%s4095] sm:$0xff]
          %v4097 = vld [vmem:[%s4095 + $0x8] sm:$0xff]
          %v4098 = vld [vmem:[%s4095 + $0x18] sm:$0xff]
          %v4099 = vld [vmem:[%s4095 + $0x20] sm:$0xff]
          %v4100 = vld [vmem:[%s4095 + $0x30] sm:$0xff]
          %v4101 = vld [vmem:[%s4095 + $0x38] sm:$0xff]
          %v4102 = vld [vmem:[%s4095 + $0x48] sm:$0xff]
          %v4103 = vld [vmem:[%s4095 + $0x50] sm:$0xff]
          %v4104 = vld [vmem:[%s4095 + $0x60] sm:$0xff]
          %v4105 = vld [vmem:[%s4095 + $0x68] sm:$0xff]
          %v4106 = vld [vmem:[%s4095 + $0x78] sm:$0xff]
          %v4107 = vld [vmem:[%s4095 + $0x80] sm:$0xff]
          %v4108 = vld [vmem:[%s4095 + $0x90] sm:$0xff]
          %v4109 = vld [vmem:[%s4095 + $0x98] sm:$0xff]
          %v4110 = vld [vmem:[%s4095 + $0xa8] sm:$0xff]
          %v4111 = vld [vmem:[%s4095 + $0xb0] sm:$0xff]
          %v4113 = vlaneseq
          %v4114 = vshrl.u32 %v4113, 7
          %v4115 = vsub.s32 0, %v4114
          %v4116 = vrot.slane %v3837, %v4115
          %v4118 = vmul.f32 %v4096, %v4116
          %v4119 = vmul.f32 %v4097, %v4116
          %v4120 = vmul.f32 %v4098, %v4116
          %v4121 = vmul.f32 %v4099, %v4116
          %v4122 = vmul.f32 %v4100, %v4116
          %v4123 = vmul.f32 %v4101, %v4116
          %v4124 = vmul.f32 %v4102, %v4116
          %v4125 = vmul.f32 %v4103, %v4116
          %v4126 = vmul.f32 %v4104, %v4116
          %v4127 = vmul.f32 %v4105, %v4116
          %v4128 = vmul.f32 %v4106, %v4116
          %v4129 = vmul.f32 %v4107, %v4116
          %v4130 = vmul.f32 %v4108, %v4116
          %v4131 = vmul.f32 %v4109, %v4116
          %v4132 = vmul.f32 %v4110, %v4116
          %v4133 = vmul.f32 %v4111, %v4116
          %v4134 = vadd.f32 %v4118, 0.0
          %v4135 = vadd.f32 %v4119, 0.0
          %v4136 = vadd.f32 %v4120, 0.0
          %v4137 = vadd.f32 %v4121, 0.0
          %v4138 = vadd.f32 %v4122, 0.0
          %v4139 = vadd.f32 %v4123, 0.0
          %v4140 = vadd.f32 %v4124, 0.0
          %v4141 = vadd.f32 %v4125, 0.0
          %v4142 = vadd.f32 %v4126, 0.0
          %v4143 = vadd.f32 %v4127, 0.0
          %v4144 = vadd.f32 %v4128, 0.0
          %v4145 = vadd.f32 %v4129, 0.0
          %v4146 = vadd.f32 %v4130, 0.0
          %v4147 = vadd.f32 %v4131, 0.0
          %v4148 = vadd.f32 %v4132, 0.0
          %v4149 = vadd.f32 %v4133, 0.0
          %v4150 = vld [vmem:[%s4095 + $0x1] sm:$0xff]
          %v4151 = vld [vmem:[%s4095 + $0x9] sm:$0xff]
          %v4152 = vld [vmem:[%s4095 + $0x19] sm:$0xff]
          %v4153 = vld [vmem:[%s4095 + $0x21] sm:$0xff]
          %v4154 = vld [vmem:[%s4095 + $0x31] sm:$0xff]
          %v4155 = vld [vmem:[%s4095 + $0x39] sm:$0xff]
          %v4156 = vld [vmem:[%s4095 + $0x49] sm:$0xff]
          %v4157 = vld [vmem:[%s4095 + $0x51] sm:$0xff]
          %v4158 = vld [vmem:[%s4095 + $0x61] sm:$0xff]
          %v4159 = vld [vmem:[%s4095 + $0x69] sm:$0xff]
          %v4160 = vld [vmem:[%s4095 + $0x79] sm:$0xff]
          %v4161 = vld [vmem:[%s4095 + $0x81] sm:$0xff]
          %v4162 = vld [vmem:[%s4095 + $0x91] sm:$0xff]
          %v4163 = vld [vmem:[%s4095 + $0x99] sm:$0xff]
          %v4164 = vld [vmem:[%s4095 + $0xa9] sm:$0xff]
          %v4165 = vld [vmem:[%s4095 + $0xb1] sm:$0xff]
          %v4167 = vlaneseq
          %v4168 = vshrl.u32 %v4167, 7
          %v4169 = vsub.s32 0, %v4168
          %v4170 = vrot.slane %v3838, %v4169
          %v4172 = vmul.f32 %v4150, %v4170
          %v4173 = vmul.f32 %v4151, %v4170
          %v4174 = vmul.f32 %v4152, %v4170
          %v4175 = vmul.f32 %v4153, %v4170
          %v4176 = vmul.f32 %v4154, %v4170
          %v4177 = vmul.f32 %v4155, %v4170
          %v4178 = vmul.f32 %v4156, %v4170
          %v4179 = vmul.f32 %v4157, %v4170
          %v4180 = vmul.f32 %v4158, %v4170
          %v4181 = vmul.f32 %v4159, %v4170
          %v4182 = vmul.f32 %v4160, %v4170
          %v4183 = vmul.f32 %v4161, %v4170
          %v4184 = vmul.f32 %v4162, %v4170
          %v4185 = vmul.f32 %v4163, %v4170
          %v4186 = vmul.f32 %v4164, %v4170
          %v4187 = vmul.f32 %v4165, %v4170
          %v4188 = vadd.f32 %v4134, %v4172
          %v4189 = vadd.f32 %v4135, %v4173
          %v4190 = vadd.f32 %v4136, %v4174
          %v4191 = vadd.f32 %v4137, %v4175
          %v4192 = vadd.f32 %v4138, %v4176
          %v4193 = vadd.f32 %v4139, %v4177
          %v4194 = vadd.f32 %v4140, %v4178
          %v4195 = vadd.f32 %v4141, %v4179
          %v4196 = vadd.f32 %v4142, %v4180
          %v4197 = vadd.f32 %v4143, %v4181
          %v4198 = vadd.f32 %v4144, %v4182
          %v4199 = vadd.f32 %v4145, %v4183
          %v4200 = vadd.f32 %v4146, %v4184
          %v4201 = vadd.f32 %v4147, %v4185
          %v4202 = vadd.f32 %v4148, %v4186
          %v4203 = vadd.f32 %v4149, %v4187
          %v4204 = vld [vmem:[%s4095 + $0x2] sm:$0xff]
          %v4205 = vld [vmem:[%s4095 + $0xa] sm:$0xff]
          %v4206 = vld [vmem:[%s4095 + $0x1a] sm:$0xff]
          %v4207 = vld [vmem:[%s4095 + $0x22] sm:$0xff]
          %v4208 = vld [vmem:[%s4095 + $0x32] sm:$0xff]
          %v4209 = vld [vmem:[%s4095 + $0x3a] sm:$0xff]
          %v4210 = vld [vmem:[%s4095 + $0x4a] sm:$0xff]
          %v4211 = vld [vmem:[%s4095 + $0x52] sm:$0xff]
          %v4212 = vld [vmem:[%s4095 + $0x62] sm:$0xff]
          %v4213 = vld [vmem:[%s4095 + $0x6a] sm:$0xff]
          %v4214 = vld [vmem:[%s4095 + $0x7a] sm:$0xff]
          %v4215 = vld [vmem:[%s4095 + $0x82] sm:$0xff]
          %v4216 = vld [vmem:[%s4095 + $0x92] sm:$0xff]
          %v4217 = vld [vmem:[%s4095 + $0x9a] sm:$0xff]
          %v4218 = vld [vmem:[%s4095 + $0xaa] sm:$0xff]
          %v4219 = vld [vmem:[%s4095 + $0xb2] sm:$0xff]
          %v4221 = vlaneseq
          %v4222 = vshrl.u32 %v4221, 7
          %v4223 = vsub.s32 0, %v4222
          %v4224 = vrot.slane %v3839, %v4223
          %v4226 = vmul.f32 %v4204, %v4224
          %v4227 = vmul.f32 %v4205, %v4224
          %v4228 = vmul.f32 %v4206, %v4224
          %v4229 = vmul.f32 %v4207, %v4224
          %v4230 = vmul.f32 %v4208, %v4224
          %v4231 = vmul.f32 %v4209, %v4224
          %v4232 = vmul.f32 %v4210, %v4224
          %v4233 = vmul.f32 %v4211, %v4224
          %v4234 = vmul.f32 %v4212, %v4224
          %v4235 = vmul.f32 %v4213, %v4224
          %v4236 = vmul.f32 %v4214, %v4224
          %v4237 = vmul.f32 %v4215, %v4224
          %v4238 = vmul.f32 %v4216, %v4224
          %v4239 = vmul.f32 %v4217, %v4224
          %v4240 = vmul.f32 %v4218, %v4224
          %v4241 = vmul.f32 %v4219, %v4224
          %v4242 = vadd.f32 %v4188, %v4226
          %v4243 = vadd.f32 %v4189, %v4227
          %v4244 = vadd.f32 %v4190, %v4228
          %v4245 = vadd.f32 %v4191, %v4229
          %v4246 = vadd.f32 %v4192, %v4230
          %v4247 = vadd.f32 %v4193, %v4231
          %v4248 = vadd.f32 %v4194, %v4232
          %v4249 = vadd.f32 %v4195, %v4233
          %v4250 = vadd.f32 %v4196, %v4234
          %v4251 = vadd.f32 %v4197, %v4235
          %v4252 = vadd.f32 %v4198, %v4236
          %v4253 = vadd.f32 %v4199, %v4237
          %v4254 = vadd.f32 %v4200, %v4238
          %v4255 = vadd.f32 %v4201, %v4239
          %v4256 = vadd.f32 %v4202, %v4240
          %v4257 = vadd.f32 %v4203, %v4241
          %v4258 = vld [vmem:[%s4095 + $0x3] sm:$0xff]
          %v4259 = vld [vmem:[%s4095 + $0xb] sm:$0xff]
          %v4260 = vld [vmem:[%s4095 + $0x1b] sm:$0xff]
          %v4261 = vld [vmem:[%s4095 + $0x23] sm:$0xff]
          %v4262 = vld [vmem:[%s4095 + $0x33] sm:$0xff]
          %v4263 = vld [vmem:[%s4095 + $0x3b] sm:$0xff]
          %v4264 = vld [vmem:[%s4095 + $0x4b] sm:$0xff]
          %v4265 = vld [vmem:[%s4095 + $0x53] sm:$0xff]
          %v4266 = vld [vmem:[%s4095 + $0x63] sm:$0xff]
          %v4267 = vld [vmem:[%s4095 + $0x6b] sm:$0xff]
          %v4268 = vld [vmem:[%s4095 + $0x7b] sm:$0xff]
          %v4269 = vld [vmem:[%s4095 + $0x83] sm:$0xff]
          %v4270 = vld [vmem:[%s4095 + $0x93] sm:$0xff]
          %v4271 = vld [vmem:[%s4095 + $0x9b] sm:$0xff]
          %v4272 = vld [vmem:[%s4095 + $0xab] sm:$0xff]
          %v4273 = vld [vmem:[%s4095 + $0xb3] sm:$0xff]
          %v4275 = vlaneseq
          %v4276 = vshrl.u32 %v4275, 7
          %v4277 = vsub.s32 0, %v4276
          %v4278 = vrot.slane %v3840, %v4277
          %v4280 = vmul.f32 %v4258, %v4278
          %v4281 = vmul.f32 %v4259, %v4278
          %v4282 = vmul.f32 %v4260, %v4278
          %v4283 = vmul.f32 %v4261, %v4278
          %v4284 = vmul.f32 %v4262, %v4278
          %v4285 = vmul.f32 %v4263, %v4278
          %v4286 = vmul.f32 %v4264, %v4278
          %v4287 = vmul.f32 %v4265, %v4278
          %v4288 = vmul.f32 %v4266, %v4278
          %v4289 = vmul.f32 %v4267, %v4278
          %v4290 = vmul.f32 %v4268, %v4278
          %v4291 = vmul.f32 %v4269, %v4278
          %v4292 = vmul.f32 %v4270, %v4278
          %v4293 = vmul.f32 %v4271, %v4278
          %v4294 = vmul.f32 %v4272, %v4278
          %v4295 = vmul.f32 %v4273, %v4278
          %v4296 = vadd.f32 %v4242, %v4280
          %v4297 = vadd.f32 %v4243, %v4281
          %v4298 = vadd.f32 %v4244, %v4282
          %v4299 = vadd.f32 %v4245, %v4283
          %v4300 = vadd.f32 %v4246, %v4284
          %v4301 = vadd.f32 %v4247, %v4285
          %v4302 = vadd.f32 %v4248, %v4286
          %v4303 = vadd.f32 %v4249, %v4287
          %v4304 = vadd.f32 %v4250, %v4288
          %v4305 = vadd.f32 %v4251, %v4289
          %v4306 = vadd.f32 %v4252, %v4290
          %v4307 = vadd.f32 %v4253, %v4291
          %v4308 = vadd.f32 %v4254, %v4292
          %v4309 = vadd.f32 %v4255, %v4293
          %v4310 = vadd.f32 %v4256, %v4294
          %v4311 = vadd.f32 %v4257, %v4295
          %v4312 = vld [vmem:[%s4095 + $0x4] sm:$0xff]
          %v4313 = vld [vmem:[%s4095 + $0xc] sm:$0xff]
          %v4314 = vld [vmem:[%s4095 + $0x1c] sm:$0xff]
          %v4315 = vld [vmem:[%s4095 + $0x24] sm:$0xff]
          %v4316 = vld [vmem:[%s4095 + $0x34] sm:$0xff]
          %v4317 = vld [vmem:[%s4095 + $0x3c] sm:$0xff]
          %v4318 = vld [vmem:[%s4095 + $0x4c] sm:$0xff]
          %v4319 = vld [vmem:[%s4095 + $0x54] sm:$0xff]
          %v4320 = vld [vmem:[%s4095 + $0x64] sm:$0xff]
          %v4321 = vld [vmem:[%s4095 + $0x6c] sm:$0xff]
          %v4322 = vld [vmem:[%s4095 + $0x7c] sm:$0xff]
          %v4323 = vld [vmem:[%s4095 + $0x84] sm:$0xff]
          %v4324 = vld [vmem:[%s4095 + $0x94] sm:$0xff]
          %v4325 = vld [vmem:[%s4095 + $0x9c] sm:$0xff]
          %v4326 = vld [vmem:[%s4095 + $0xac] sm:$0xff]
          %v4327 = vld [vmem:[%s4095 + $0xb4] sm:$0xff]
          %v4329 = vlaneseq
          %v4330 = vshrl.u32 %v4329, 7
          %v4331 = vsub.s32 0, %v4330
          %v4332 = vrot.slane %v3841, %v4331
          %v4334 = vmul.f32 %v4312, %v4332
          %v4335 = vmul.f32 %v4313, %v4332
          %v4336 = vmul.f32 %v4314, %v4332
          %v4337 = vmul.f32 %v4315, %v4332
          %v4338 = vmul.f32 %v4316, %v4332
          %v4339 = vmul.f32 %v4317, %v4332
          %v4340 = vmul.f32 %v4318, %v4332
          %v4341 = vmul.f32 %v4319, %v4332
          %v4342 = vmul.f32 %v4320, %v4332
          %v4343 = vmul.f32 %v4321, %v4332
          %v4344 = vmul.f32 %v4322, %v4332
          %v4345 = vmul.f32 %v4323, %v4332
          %v4346 = vmul.f32 %v4324, %v4332
          %v4347 = vmul.f32 %v4325, %v4332
          %v4348 = vmul.f32 %v4326, %v4332
          %v4349 = vmul.f32 %v4327, %v4332
          %v4350 = vadd.f32 %v4296, %v4334
          %v4351 = vadd.f32 %v4297, %v4335
          %v4352 = vadd.f32 %v4298, %v4336
          %v4353 = vadd.f32 %v4299, %v4337
          %v4354 = vadd.f32 %v4300, %v4338
          %v4355 = vadd.f32 %v4301, %v4339
          %v4356 = vadd.f32 %v4302, %v4340
          %v4357 = vadd.f32 %v4303, %v4341
          %v4358 = vadd.f32 %v4304, %v4342
          %v4359 = vadd.f32 %v4305, %v4343
          %v4360 = vadd.f32 %v4306, %v4344
          %v4361 = vadd.f32 %v4307, %v4345
          %v4362 = vadd.f32 %v4308, %v4346
          %v4363 = vadd.f32 %v4309, %v4347
          %v4364 = vadd.f32 %v4310, %v4348
          %v4365 = vadd.f32 %v4311, %v4349
          %s4366 = sadd.s32 %s4093, 1
          %s4367 = smul.u32 %s4366, 24
          %s4368 = scalar_lea.vmem [#allocation4], %s4367
          %v4369 = vld [vmem:[%s4368] sm:$0xff]
          %v4370 = vld [vmem:[%s4368 + $0x8] sm:$0xff]
          %v4371 = vld [vmem:[%s4368 + $0x18] sm:$0xff]
          %v4372 = vld [vmem:[%s4368 + $0x20] sm:$0xff]
          %v4373 = vld [vmem:[%s4368 + $0x30] sm:$0xff]
          %v4374 = vld [vmem:[%s4368 + $0x38] sm:$0xff]
          %v4375 = vld [vmem:[%s4368 + $0x48] sm:$0xff]
          %v4376 = vld [vmem:[%s4368 + $0x50] sm:$0xff]
          %v4377 = vld [vmem:[%s4368 + $0x60] sm:$0xff]
          %v4378 = vld [vmem:[%s4368 + $0x68] sm:$0xff]
          %v4379 = vld [vmem:[%s4368 + $0x78] sm:$0xff]
          %v4380 = vld [vmem:[%s4368 + $0x80] sm:$0xff]
          %v4381 = vld [vmem:[%s4368 + $0x90] sm:$0xff]
          %v4382 = vld [vmem:[%s4368 + $0x98] sm:$0xff]
          %v4383 = vld [vmem:[%s4368 + $0xa8] sm:$0xff]
          %v4384 = vld [vmem:[%s4368 + $0xb0] sm:$0xff]
          %v4386 = vlaneseq
          %v4387 = vshrl.u32 %v4386, 7
          %v4388 = vsub.s32 0, %v4387
          %v4389 = vrot.slane %v3842, %v4388
          %v4391 = vmul.f32 %v4369, %v4389
          %v4392 = vmul.f32 %v4370, %v4389
          %v4393 = vmul.f32 %v4371, %v4389
          %v4394 = vmul.f32 %v4372, %v4389
          %v4395 = vmul.f32 %v4373, %v4389
          %v4396 = vmul.f32 %v4374, %v4389
          %v4397 = vmul.f32 %v4375, %v4389
          %v4398 = vmul.f32 %v4376, %v4389
          %v4399 = vmul.f32 %v4377, %v4389
          %v4400 = vmul.f32 %v4378, %v4389
          %v4401 = vmul.f32 %v4379, %v4389
          %v4402 = vmul.f32 %v4380, %v4389
          %v4403 = vmul.f32 %v4381, %v4389
          %v4404 = vmul.f32 %v4382, %v4389
          %v4405 = vmul.f32 %v4383, %v4389
          %v4406 = vmul.f32 %v4384, %v4389
          %v4407 = vadd.f32 %v4350, %v4391
          %v4408 = vadd.f32 %v4351, %v4392
          %v4409 = vadd.f32 %v4352, %v4393
          %v4410 = vadd.f32 %v4353, %v4394
          %v4411 = vadd.f32 %v4354, %v4395
          %v4412 = vadd.f32 %v4355, %v4396
          %v4413 = vadd.f32 %v4356, %v4397
          %v4414 = vadd.f32 %v4357, %v4398
          %v4415 = vadd.f32 %v4358, %v4399
          %v4416 = vadd.f32 %v4359, %v4400
          %v4417 = vadd.f32 %v4360, %v4401
          %v4418 = vadd.f32 %v4361, %v4402
          %v4419 = vadd.f32 %v4362, %v4403
          %v4420 = vadd.f32 %v4363, %v4404
          %v4421 = vadd.f32 %v4364, %v4405
          %v4422 = vadd.f32 %v4365, %v4406
          %v4423 = vld [vmem:[%s4368 + $0x1] sm:$0xff]
          %v4424 = vld [vmem:[%s4368 + $0x9] sm:$0xff]
          %v4425 = vld [vmem:[%s4368 + $0x19] sm:$0xff]
          %v4426 = vld [vmem:[%s4368 + $0x21] sm:$0xff]
          %v4427 = vld [vmem:[%s4368 + $0x31] sm:$0xff]
          %v4428 = vld [vmem:[%s4368 + $0x39] sm:$0xff]
          %v4429 = vld [vmem:[%s4368 + $0x49] sm:$0xff]
          %v4430 = vld [vmem:[%s4368 + $0x51] sm:$0xff]
          %v4431 = vld [vmem:[%s4368 + $0x61] sm:$0xff]
          %v4432 = vld [vmem:[%s4368 + $0x69] sm:$0xff]
          %v4433 = vld [vmem:[%s4368 + $0x79] sm:$0xff]
          %v4434 = vld [vmem:[%s4368 + $0x81] sm:$0xff]
          %v4435 = vld [vmem:[%s4368 + $0x91] sm:$0xff]
          %v4436 = vld [vmem:[%s4368 + $0x99] sm:$0xff]
          %v4437 = vld [vmem:[%s4368 + $0xa9] sm:$0xff]
          %v4438 = vld [vmem:[%s4368 + $0xb1] sm:$0xff]
          %v4440 = vlaneseq
          %v4441 = vshrl.u32 %v4440, 7
          %v4442 = vsub.s32 0, %v4441
          %v4443 = vrot.slane %v3843, %v4442
          %v4445 = vmul.f32 %v4423, %v4443
          %v4446 = vmul.f32 %v4424, %v4443
          %v4447 = vmul.f32 %v4425, %v4443
          %v4448 = vmul.f32 %v4426, %v4443
          %v4449 = vmul.f32 %v4427, %v4443
          %v4450 = vmul.f32 %v4428, %v4443
          %v4451 = vmul.f32 %v4429, %v4443
          %v4452 = vmul.f32 %v4430, %v4443
          %v4453 = vmul.f32 %v4431, %v4443
          %v4454 = vmul.f32 %v4432, %v4443
          %v4455 = vmul.f32 %v4433, %v4443
          %v4456 = vmul.f32 %v4434, %v4443
          %v4457 = vmul.f32 %v4435, %v4443
          %v4458 = vmul.f32 %v4436, %v4443
          %v4459 = vmul.f32 %v4437, %v4443
          %v4460 = vmul.f32 %v4438, %v4443
          %v4461 = vadd.f32 %v4407, %v4445
          %v4462 = vadd.f32 %v4408, %v4446
          %v4463 = vadd.f32 %v4409, %v4447
          %v4464 = vadd.f32 %v4410, %v4448
          %v4465 = vadd.f32 %v4411, %v4449
          %v4466 = vadd.f32 %v4412, %v4450
          %v4467 = vadd.f32 %v4413, %v4451
          %v4468 = vadd.f32 %v4414, %v4452
          %v4469 = vadd.f32 %v4415, %v4453
          %v4470 = vadd.f32 %v4416, %v4454
          %v4471 = vadd.f32 %v4417, %v4455
          %v4472 = vadd.f32 %v4418, %v4456
          %v4473 = vadd.f32 %v4419, %v4457
          %v4474 = vadd.f32 %v4420, %v4458
          %v4475 = vadd.f32 %v4421, %v4459
          %v4476 = vadd.f32 %v4422, %v4460
          %v4477 = vld [vmem:[%s4368 + $0x2] sm:$0xff]
          %v4478 = vld [vmem:[%s4368 + $0xa] sm:$0xff]
          %v4479 = vld [vmem:[%s4368 + $0x1a] sm:$0xff]
          %v4480 = vld [vmem:[%s4368 + $0x22] sm:$0xff]
          %v4481 = vld [vmem:[%s4368 + $0x32] sm:$0xff]
          %v4482 = vld [vmem:[%s4368 + $0x3a] sm:$0xff]
          %v4483 = vld [vmem:[%s4368 + $0x4a] sm:$0xff]
          %v4484 = vld [vmem:[%s4368 + $0x52] sm:$0xff]
          %v4485 = vld [vmem:[%s4368 + $0x62] sm:$0xff]
          %v4486 = vld [vmem:[%s4368 + $0x6a] sm:$0xff]
          %v4487 = vld [vmem:[%s4368 + $0x7a] sm:$0xff]
          %v4488 = vld [vmem:[%s4368 + $0x82] sm:$0xff]
          %v4489 = vld [vmem:[%s4368 + $0x92] sm:$0xff]
          %v4490 = vld [vmem:[%s4368 + $0x9a] sm:$0xff]
          %v4491 = vld [vmem:[%s4368 + $0xaa] sm:$0xff]
          %v4492 = vld [vmem:[%s4368 + $0xb2] sm:$0xff]
          %v4494 = vlaneseq
          %v4495 = vshrl.u32 %v4494, 7
          %v4496 = vsub.s32 0, %v4495
          %v4497 = vrot.slane %v3844, %v4496
          %v4499 = vmul.f32 %v4477, %v4497
          %v4500 = vmul.f32 %v4478, %v4497
          %v4501 = vmul.f32 %v4479, %v4497
          %v4502 = vmul.f32 %v4480, %v4497
          %v4503 = vmul.f32 %v4481, %v4497
          %v4504 = vmul.f32 %v4482, %v4497
          %v4505 = vmul.f32 %v4483, %v4497
          %v4506 = vmul.f32 %v4484, %v4497
          %v4507 = vmul.f32 %v4485, %v4497
          %v4508 = vmul.f32 %v4486, %v4497
          %v4509 = vmul.f32 %v4487, %v4497
          %v4510 = vmul.f32 %v4488, %v4497
          %v4511 = vmul.f32 %v4489, %v4497
          %v4512 = vmul.f32 %v4490, %v4497
          %v4513 = vmul.f32 %v4491, %v4497
          %v4514 = vmul.f32 %v4492, %v4497
          %v4515 = vadd.f32 %v4461, %v4499
          %v4516 = vadd.f32 %v4462, %v4500
          %v4517 = vadd.f32 %v4463, %v4501
          %v4518 = vadd.f32 %v4464, %v4502
          %v4519 = vadd.f32 %v4465, %v4503
          %v4520 = vadd.f32 %v4466, %v4504
          %v4521 = vadd.f32 %v4467, %v4505
          %v4522 = vadd.f32 %v4468, %v4506
          %v4523 = vadd.f32 %v4469, %v4507
          %v4524 = vadd.f32 %v4470, %v4508
          %v4525 = vadd.f32 %v4471, %v4509
          %v4526 = vadd.f32 %v4472, %v4510
          %v4527 = vadd.f32 %v4473, %v4511
          %v4528 = vadd.f32 %v4474, %v4512
          %v4529 = vadd.f32 %v4475, %v4513
          %v4530 = vadd.f32 %v4476, %v4514
          %v4531 = vld [vmem:[%s4368 + $0x3] sm:$0xff]
          %v4532 = vld [vmem:[%s4368 + $0xb] sm:$0xff]
          %v4533 = vld [vmem:[%s4368 + $0x1b] sm:$0xff]
          %v4534 = vld [vmem:[%s4368 + $0x23] sm:$0xff]
          %v4535 = vld [vmem:[%s4368 + $0x33] sm:$0xff]
          %v4536 = vld [vmem:[%s4368 + $0x3b] sm:$0xff]
          %v4537 = vld [vmem:[%s4368 + $0x4b] sm:$0xff]
          %v4538 = vld [vmem:[%s4368 + $0x53] sm:$0xff]
          %v4539 = vld [vmem:[%s4368 + $0x63] sm:$0xff]
          %v4540 = vld [vmem:[%s4368 + $0x6b] sm:$0xff]
          %v4541 = vld [vmem:[%s4368 + $0x7b] sm:$0xff]
          %v4542 = vld [vmem:[%s4368 + $0x83] sm:$0xff]
          %v4543 = vld [vmem:[%s4368 + $0x93] sm:$0xff]
          %v4544 = vld [vmem:[%s4368 + $0x9b] sm:$0xff]
          %v4545 = vld [vmem:[%s4368 + $0xab] sm:$0xff]
          %v4546 = vld [vmem:[%s4368 + $0xb3] sm:$0xff]
          %v4548 = vlaneseq
          %v4549 = vshrl.u32 %v4548, 7
          %v4550 = vsub.s32 0, %v4549
          %v4551 = vrot.slane %v3845, %v4550
          %v4553 = vmul.f32 %v4531, %v4551
          %v4554 = vmul.f32 %v4532, %v4551
          %v4555 = vmul.f32 %v4533, %v4551
          %v4556 = vmul.f32 %v4534, %v4551
          %v4557 = vmul.f32 %v4535, %v4551
          %v4558 = vmul.f32 %v4536, %v4551
          %v4559 = vmul.f32 %v4537, %v4551
          %v4560 = vmul.f32 %v4538, %v4551
          %v4561 = vmul.f32 %v4539, %v4551
          %v4562 = vmul.f32 %v4540, %v4551
          %v4563 = vmul.f32 %v4541, %v4551
          %v4564 = vmul.f32 %v4542, %v4551
          %v4565 = vmul.f32 %v4543, %v4551
          %v4566 = vmul.f32 %v4544, %v4551
          %v4567 = vmul.f32 %v4545, %v4551
          %v4568 = vmul.f32 %v4546, %v4551
          %v4569 = vadd.f32 %v4515, %v4553
          %v4570 = vadd.f32 %v4516, %v4554
          %v4571 = vadd.f32 %v4517, %v4555
          %v4572 = vadd.f32 %v4518, %v4556
          %v4573 = vadd.f32 %v4519, %v4557
          %v4574 = vadd.f32 %v4520, %v4558
          %v4575 = vadd.f32 %v4521, %v4559
          %v4576 = vadd.f32 %v4522, %v4560
          %v4577 = vadd.f32 %v4523, %v4561
          %v4578 = vadd.f32 %v4524, %v4562
          %v4579 = vadd.f32 %v4525, %v4563
          %v4580 = vadd.f32 %v4526, %v4564
          %v4581 = vadd.f32 %v4527, %v4565
          %v4582 = vadd.f32 %v4528, %v4566
          %v4583 = vadd.f32 %v4529, %v4567
          %v4584 = vadd.f32 %v4530, %v4568
          %v4585 = vld [vmem:[%s4368 + $0x4] sm:$0xff]
          %v4586 = vld [vmem:[%s4368 + $0xc] sm:$0xff]
          %v4587 = vld [vmem:[%s4368 + $0x1c] sm:$0xff]
          %v4588 = vld [vmem:[%s4368 + $0x24] sm:$0xff]
          %v4589 = vld [vmem:[%s4368 + $0x34] sm:$0xff]
          %v4590 = vld [vmem:[%s4368 + $0x3c] sm:$0xff]
          %v4591 = vld [vmem:[%s4368 + $0x4c] sm:$0xff]
          %v4592 = vld [vmem:[%s4368 + $0x54] sm:$0xff]
          %v4593 = vld [vmem:[%s4368 + $0x64] sm:$0xff]
          %v4594 = vld [vmem:[%s4368 + $0x6c] sm:$0xff]
          %v4595 = vld [vmem:[%s4368 + $0x7c] sm:$0xff]
          %v4596 = vld [vmem:[%s4368 + $0x84] sm:$0xff]
          %v4597 = vld [vmem:[%s4368 + $0x94] sm:$0xff]
          %v4598 = vld [vmem:[%s4368 + $0x9c] sm:$0xff]
          %v4599 = vld [vmem:[%s4368 + $0xac] sm:$0xff]
          %v4600 = vld [vmem:[%s4368 + $0xb4] sm:$0xff]
          %v4602 = vlaneseq
          %v4603 = vshrl.u32 %v4602, 7
          %v4604 = vsub.s32 0, %v4603
          %v4605 = vrot.slane %v3846, %v4604
          %v4607 = vmul.f32 %v4585, %v4605
          %v4608 = vmul.f32 %v4586, %v4605
          %v4609 = vmul.f32 %v4587, %v4605
          %v4610 = vmul.f32 %v4588, %v4605
          %v4611 = vmul.f32 %v4589, %v4605
          %v4612 = vmul.f32 %v4590, %v4605
          %v4613 = vmul.f32 %v4591, %v4605
          %v4614 = vmul.f32 %v4592, %v4605
          %v4615 = vmul.f32 %v4593, %v4605
          %v4616 = vmul.f32 %v4594, %v4605
          %v4617 = vmul.f32 %v4595, %v4605
          %v4618 = vmul.f32 %v4596, %v4605
          %v4619 = vmul.f32 %v4597, %v4605
          %v4620 = vmul.f32 %v4598, %v4605
          %v4621 = vmul.f32 %v4599, %v4605
          %v4622 = vmul.f32 %v4600, %v4605
          %v4623 = vadd.f32 %v4569, %v4607
          %v4624 = vadd.f32 %v4570, %v4608
          %v4625 = vadd.f32 %v4571, %v4609
          %v4626 = vadd.f32 %v4572, %v4610
          %v4627 = vadd.f32 %v4573, %v4611
          %v4628 = vadd.f32 %v4574, %v4612
          %v4629 = vadd.f32 %v4575, %v4613
          %v4630 = vadd.f32 %v4576, %v4614
          %v4631 = vadd.f32 %v4577, %v4615
          %v4632 = vadd.f32 %v4578, %v4616
          %v4633 = vadd.f32 %v4579, %v4617
          %v4634 = vadd.f32 %v4580, %v4618
          %v4635 = vadd.f32 %v4581, %v4619
          %v4636 = vadd.f32 %v4582, %v4620
          %v4637 = vadd.f32 %v4583, %v4621
          %v4638 = vadd.f32 %v4584, %v4622
          %s4639 = sadd.s32 %s4093, 2
          %s4640 = smul.u32 %s4639, 24
          %s4641 = scalar_lea.vmem [#allocation4], %s4640
          %v4642 = vld [vmem:[%s4641] sm:$0xff]
          %v4643 = vld [vmem:[%s4641 + $0x8] sm:$0xff]
          %v4644 = vld [vmem:[%s4641 + $0x18] sm:$0xff]
          %v4645 = vld [vmem:[%s4641 + $0x20] sm:$0xff]
          %v4646 = vld [vmem:[%s4641 + $0x30] sm:$0xff]
          %v4647 = vld [vmem:[%s4641 + $0x38] sm:$0xff]
          %v4648 = vld [vmem:[%s4641 + $0x48] sm:$0xff]
          %v4649 = vld [vmem:[%s4641 + $0x50] sm:$0xff]
          %v4650 = vld [vmem:[%s4641 + $0x60] sm:$0xff]
          %v4651 = vld [vmem:[%s4641 + $0x68] sm:$0xff]
          %v4652 = vld [vmem:[%s4641 + $0x78] sm:$0xff]
          %v4653 = vld [vmem:[%s4641 + $0x80] sm:$0xff]
          %v4654 = vld [vmem:[%s4641 + $0x90] sm:$0xff]
          %v4655 = vld [vmem:[%s4641 + $0x98] sm:$0xff]
          %v4656 = vld [vmem:[%s4641 + $0xa8] sm:$0xff]
          %v4657 = vld [vmem:[%s4641 + $0xb0] sm:$0xff]
          %v4659 = vlaneseq
          %v4660 = vshrl.u32 %v4659, 7
          %v4661 = vsub.s32 0, %v4660
          %v4662 = vrot.slane %v3847, %v4661
          %v4664 = vmul.f32 %v4642, %v4662
          %v4665 = vmul.f32 %v4643, %v4662
          %v4666 = vmul.f32 %v4644, %v4662
          %v4667 = vmul.f32 %v4645, %v4662
          %v4668 = vmul.f32 %v4646, %v4662
          %v4669 = vmul.f32 %v4647, %v4662
          %v4670 = vmul.f32 %v4648, %v4662
          %v4671 = vmul.f32 %v4649, %v4662
          %v4672 = vmul.f32 %v4650, %v4662
          %v4673 = vmul.f32 %v4651, %v4662
          %v4674 = vmul.f32 %v4652, %v4662
          %v4675 = vmul.f32 %v4653, %v4662
          %v4676 = vmul.f32 %v4654, %v4662
          %v4677 = vmul.f32 %v4655, %v4662
          %v4678 = vmul.f32 %v4656, %v4662
          %v4679 = vmul.f32 %v4657, %v4662
          %v4680 = vadd.f32 %v4623, %v4664
          %v4681 = vadd.f32 %v4624, %v4665
          %v4682 = vadd.f32 %v4625, %v4666
          %v4683 = vadd.f32 %v4626, %v4667
          %v4684 = vadd.f32 %v4627, %v4668
          %v4685 = vadd.f32 %v4628, %v4669
          %v4686 = vadd.f32 %v4629, %v4670
          %v4687 = vadd.f32 %v4630, %v4671
          %v4688 = vadd.f32 %v4631, %v4672
          %v4689 = vadd.f32 %v4632, %v4673
          %v4690 = vadd.f32 %v4633, %v4674
          %v4691 = vadd.f32 %v4634, %v4675
          %v4692 = vadd.f32 %v4635, %v4676
          %v4693 = vadd.f32 %v4636, %v4677
          %v4694 = vadd.f32 %v4637, %v4678
          %v4695 = vadd.f32 %v4638, %v4679
          %v4696 = vld [vmem:[%s4641 + $0x1] sm:$0xff]
          %v4697 = vld [vmem:[%s4641 + $0x9] sm:$0xff]
          %v4698 = vld [vmem:[%s4641 + $0x19] sm:$0xff]
          %v4699 = vld [vmem:[%s4641 + $0x21] sm:$0xff]
          %v4700 = vld [vmem:[%s4641 + $0x31] sm:$0xff]
          %v4701 = vld [vmem:[%s4641 + $0x39] sm:$0xff]
          %v4702 = vld [vmem:[%s4641 + $0x49] sm:$0xff]
          %v4703 = vld [vmem:[%s4641 + $0x51] sm:$0xff]
          %v4704 = vld [vmem:[%s4641 + $0x61] sm:$0xff]
          %v4705 = vld [vmem:[%s4641 + $0x69] sm:$0xff]
          %v4706 = vld [vmem:[%s4641 + $0x79] sm:$0xff]
          %v4707 = vld [vmem:[%s4641 + $0x81] sm:$0xff]
          %v4708 = vld [vmem:[%s4641 + $0x91] sm:$0xff]
          %v4709 = vld [vmem:[%s4641 + $0x99] sm:$0xff]
          %v4710 = vld [vmem:[%s4641 + $0xa9] sm:$0xff]
          %v4711 = vld [vmem:[%s4641 + $0xb1] sm:$0xff]
          %v4713 = vlaneseq
          %v4714 = vshrl.u32 %v4713, 7
          %v4715 = vsub.s32 0, %v4714
          %v4716 = vrot.slane %v3848, %v4715
          %v4718 = vmul.f32 %v4696, %v4716
          %v4719 = vmul.f32 %v4697, %v4716
          %v4720 = vmul.f32 %v4698, %v4716
          %v4721 = vmul.f32 %v4699, %v4716
          %v4722 = vmul.f32 %v4700, %v4716
          %v4723 = vmul.f32 %v4701, %v4716
          %v4724 = vmul.f32 %v4702, %v4716
          %v4725 = vmul.f32 %v4703, %v4716
          %v4726 = vmul.f32 %v4704, %v4716
          %v4727 = vmul.f32 %v4705, %v4716
          %v4728 = vmul.f32 %v4706, %v4716
          %v4729 = vmul.f32 %v4707, %v4716
          %v4730 = vmul.f32 %v4708, %v4716
          %v4731 = vmul.f32 %v4709, %v4716
          %v4732 = vmul.f32 %v4710, %v4716
          %v4733 = vmul.f32 %v4711, %v4716
          %v4734 = vadd.f32 %v4680, %v4718
          %v4735 = vadd.f32 %v4681, %v4719
          %v4736 = vadd.f32 %v4682, %v4720
          %v4737 = vadd.f32 %v4683, %v4721
          %v4738 = vadd.f32 %v4684, %v4722
          %v4739 = vadd.f32 %v4685, %v4723
          %v4740 = vadd.f32 %v4686, %v4724
          %v4741 = vadd.f32 %v4687, %v4725
          %v4742 = vadd.f32 %v4688, %v4726
          %v4743 = vadd.f32 %v4689, %v4727
          %v4744 = vadd.f32 %v4690, %v4728
          %v4745 = vadd.f32 %v4691, %v4729
          %v4746 = vadd.f32 %v4692, %v4730
          %v4747 = vadd.f32 %v4693, %v4731
          %v4748 = vadd.f32 %v4694, %v4732
          %v4749 = vadd.f32 %v4695, %v4733
          %v4750 = vld [vmem:[%s4641 + $0x2] sm:$0xff]
          %v4751 = vld [vmem:[%s4641 + $0xa] sm:$0xff]
          %v4752 = vld [vmem:[%s4641 + $0x1a] sm:$0xff]
          %v4753 = vld [vmem:[%s4641 + $0x22] sm:$0xff]
          %v4754 = vld [vmem:[%s4641 + $0x32] sm:$0xff]
          %v4755 = vld [vmem:[%s4641 + $0x3a] sm:$0xff]
          %v4756 = vld [vmem:[%s4641 + $0x4a] sm:$0xff]
          %v4757 = vld [vmem:[%s4641 + $0x52] sm:$0xff]
          %v4758 = vld [vmem:[%s4641 + $0x62] sm:$0xff]
          %v4759 = vld [vmem:[%s4641 + $0x6a] sm:$0xff]
          %v4760 = vld [vmem:[%s4641 + $0x7a] sm:$0xff]
          %v4761 = vld [vmem:[%s4641 + $0x82] sm:$0xff]
          %v4762 = vld [vmem:[%s4641 + $0x92] sm:$0xff]
          %v4763 = vld [vmem:[%s4641 + $0x9a] sm:$0xff]
          %v4764 = vld [vmem:[%s4641 + $0xaa] sm:$0xff]
          %v4765 = vld [vmem:[%s4641 + $0xb2] sm:$0xff]
          %v4767 = vlaneseq
          %v4768 = vshrl.u32 %v4767, 7
          %v4769 = vsub.s32 0, %v4768
          %v4770 = vrot.slane %v3849, %v4769
          %v4772 = vmul.f32 %v4750, %v4770
          %v4773 = vmul.f32 %v4751, %v4770
          %v4774 = vmul.f32 %v4752, %v4770
          %v4775 = vmul.f32 %v4753, %v4770
          %v4776 = vmul.f32 %v4754, %v4770
          %v4777 = vmul.f32 %v4755, %v4770
          %v4778 = vmul.f32 %v4756, %v4770
          %v4779 = vmul.f32 %v4757, %v4770
          %v4780 = vmul.f32 %v4758, %v4770
          %v4781 = vmul.f32 %v4759, %v4770
          %v4782 = vmul.f32 %v4760, %v4770
          %v4783 = vmul.f32 %v4761, %v4770
          %v4784 = vmul.f32 %v4762, %v4770
          %v4785 = vmul.f32 %v4763, %v4770
          %v4786 = vmul.f32 %v4764, %v4770
          %v4787 = vmul.f32 %v4765, %v4770
          %v4788 = vadd.f32 %v4734, %v4772
          %v4789 = vadd.f32 %v4735, %v4773
          %v4790 = vadd.f32 %v4736, %v4774
          %v4791 = vadd.f32 %v4737, %v4775
          %v4792 = vadd.f32 %v4738, %v4776
          %v4793 = vadd.f32 %v4739, %v4777
          %v4794 = vadd.f32 %v4740, %v4778
          %v4795 = vadd.f32 %v4741, %v4779
          %v4796 = vadd.f32 %v4742, %v4780
          %v4797 = vadd.f32 %v4743, %v4781
          %v4798 = vadd.f32 %v4744, %v4782
          %v4799 = vadd.f32 %v4745, %v4783
          %v4800 = vadd.f32 %v4746, %v4784
          %v4801 = vadd.f32 %v4747, %v4785
          %v4802 = vadd.f32 %v4748, %v4786
          %v4803 = vadd.f32 %v4749, %v4787
          %v4804 = vld [vmem:[%s4641 + $0x3] sm:$0xff]
          %v4805 = vld [vmem:[%s4641 + $0xb] sm:$0xff]
          %v4806 = vld [vmem:[%s4641 + $0x1b] sm:$0xff]
          %v4807 = vld [vmem:[%s4641 + $0x23] sm:$0xff]
          %v4808 = vld [vmem:[%s4641 + $0x33] sm:$0xff]
          %v4809 = vld [vmem:[%s4641 + $0x3b] sm:$0xff]
          %v4810 = vld [vmem:[%s4641 + $0x4b] sm:$0xff]
          %v4811 = vld [vmem:[%s4641 + $0x53] sm:$0xff]
          %v4812 = vld [vmem:[%s4641 + $0x63] sm:$0xff]
          %v4813 = vld [vmem:[%s4641 + $0x6b] sm:$0xff]
          %v4814 = vld [vmem:[%s4641 + $0x7b] sm:$0xff]
          %v4815 = vld [vmem:[%s4641 + $0x83] sm:$0xff]
          %v4816 = vld [vmem:[%s4641 + $0x93] sm:$0xff]
          %v4817 = vld [vmem:[%s4641 + $0x9b] sm:$0xff]
          %v4818 = vld [vmem:[%s4641 + $0xab] sm:$0xff]
          %v4819 = vld [vmem:[%s4641 + $0xb3] sm:$0xff]
          %v4821 = vlaneseq
          %v4822 = vshrl.u32 %v4821, 7
          %v4823 = vsub.s32 0, %v4822
          %v4824 = vrot.slane %v3850, %v4823
          %v4826 = vmul.f32 %v4804, %v4824
          %v4827 = vmul.f32 %v4805, %v4824
          %v4828 = vmul.f32 %v4806, %v4824
          %v4829 = vmul.f32 %v4807, %v4824
          %v4830 = vmul.f32 %v4808, %v4824
          %v4831 = vmul.f32 %v4809, %v4824
          %v4832 = vmul.f32 %v4810, %v4824
          %v4833 = vmul.f32 %v4811, %v4824
          %v4834 = vmul.f32 %v4812, %v4824
          %v4835 = vmul.f32 %v4813, %v4824
          %v4836 = vmul.f32 %v4814, %v4824
          %v4837 = vmul.f32 %v4815, %v4824
          %v4838 = vmul.f32 %v4816, %v4824
          %v4839 = vmul.f32 %v4817, %v4824
          %v4840 = vmul.f32 %v4818, %v4824
          %v4841 = vmul.f32 %v4819, %v4824
          %v4842 = vadd.f32 %v4788, %v4826
          %v4843 = vadd.f32 %v4789, %v4827
          %v4844 = vadd.f32 %v4790, %v4828
          %v4845 = vadd.f32 %v4791, %v4829
          %v4846 = vadd.f32 %v4792, %v4830
          %v4847 = vadd.f32 %v4793, %v4831
          %v4848 = vadd.f32 %v4794, %v4832
          %v4849 = vadd.f32 %v4795, %v4833
          %v4850 = vadd.f32 %v4796, %v4834
          %v4851 = vadd.f32 %v4797, %v4835
          %v4852 = vadd.f32 %v4798, %v4836
          %v4853 = vadd.f32 %v4799, %v4837
          %v4854 = vadd.f32 %v4800, %v4838
          %v4855 = vadd.f32 %v4801, %v4839
          %v4856 = vadd.f32 %v4802, %v4840
          %v4857 = vadd.f32 %v4803, %v4841
          %v4858 = vld [vmem:[%s4641 + $0x4] sm:$0xff]
          %v4859 = vld [vmem:[%s4641 + $0xc] sm:$0xff]
          %v4860 = vld [vmem:[%s4641 + $0x1c] sm:$0xff]
          %v4861 = vld [vmem:[%s4641 + $0x24] sm:$0xff]
          %v4862 = vld [vmem:[%s4641 + $0x34] sm:$0xff]
          %v4863 = vld [vmem:[%s4641 + $0x3c] sm:$0xff]
          %v4864 = vld [vmem:[%s4641 + $0x4c] sm:$0xff]
          %v4865 = vld [vmem:[%s4641 + $0x54] sm:$0xff]
          %v4866 = vld [vmem:[%s4641 + $0x64] sm:$0xff]
          %v4867 = vld [vmem:[%s4641 + $0x6c] sm:$0xff]
          %v4868 = vld [vmem:[%s4641 + $0x7c] sm:$0xff]
          %v4869 = vld [vmem:[%s4641 + $0x84] sm:$0xff]
          %v4870 = vld [vmem:[%s4641 + $0x94] sm:$0xff]
          %v4871 = vld [vmem:[%s4641 + $0x9c] sm:$0xff]
          %v4872 = vld [vmem:[%s4641 + $0xac] sm:$0xff]
          %v4873 = vld [vmem:[%s4641 + $0xb4] sm:$0xff]
          %v4875 = vlaneseq
          %v4876 = vshrl.u32 %v4875, 7
          %v4877 = vsub.s32 0, %v4876
          %v4878 = vrot.slane %v3851, %v4877
          %v4880 = vmul.f32 %v4858, %v4878
          %v4881 = vmul.f32 %v4859, %v4878
          %v4882 = vmul.f32 %v4860, %v4878
          %v4883 = vmul.f32 %v4861, %v4878
          %v4884 = vmul.f32 %v4862, %v4878
          %v4885 = vmul.f32 %v4863, %v4878
          %v4886 = vmul.f32 %v4864, %v4878
          %v4887 = vmul.f32 %v4865, %v4878
          %v4888 = vmul.f32 %v4866, %v4878
          %v4889 = vmul.f32 %v4867, %v4878
          %v4890 = vmul.f32 %v4868, %v4878
          %v4891 = vmul.f32 %v4869, %v4878
          %v4892 = vmul.f32 %v4870, %v4878
          %v4893 = vmul.f32 %v4871, %v4878
          %v4894 = vmul.f32 %v4872, %v4878
          %v4895 = vmul.f32 %v4873, %v4878
          %v4896 = vadd.f32 %v4842, %v4880
          %v4897 = vadd.f32 %v4843, %v4881
          %v4898 = vadd.f32 %v4844, %v4882
          %v4899 = vadd.f32 %v4845, %v4883
          %v4900 = vadd.f32 %v4846, %v4884
          %v4901 = vadd.f32 %v4847, %v4885
          %v4902 = vadd.f32 %v4848, %v4886
          %v4903 = vadd.f32 %v4849, %v4887
          %v4904 = vadd.f32 %v4850, %v4888
          %v4905 = vadd.f32 %v4851, %v4889
          %v4906 = vadd.f32 %v4852, %v4890
          %v4907 = vadd.f32 %v4853, %v4891
          %v4908 = vadd.f32 %v4854, %v4892
          %v4909 = vadd.f32 %v4855, %v4893
          %v4910 = vadd.f32 %v4856, %v4894
          %v4911 = vadd.f32 %v4857, %v4895
          %s4912 = sadd.s32 %s4093, 3
          %s4913 = smul.u32 %s4912, 24
          %s4914 = scalar_lea.vmem [#allocation4], %s4913
          %v4915 = vld [vmem:[%s4914] sm:$0xff]
          %v4916 = vld [vmem:[%s4914 + $0x8] sm:$0xff]
          %v4917 = vld [vmem:[%s4914 + $0x18] sm:$0xff]
          %v4918 = vld [vmem:[%s4914 + $0x20] sm:$0xff]
          %v4919 = vld [vmem:[%s4914 + $0x30] sm:$0xff]
          %v4920 = vld [vmem:[%s4914 + $0x38] sm:$0xff]
          %v4921 = vld [vmem:[%s4914 + $0x48] sm:$0xff]
          %v4922 = vld [vmem:[%s4914 + $0x50] sm:$0xff]
          %v4923 = vld [vmem:[%s4914 + $0x60] sm:$0xff]
          %v4924 = vld [vmem:[%s4914 + $0x68] sm:$0xff]
          %v4925 = vld [vmem:[%s4914 + $0x78] sm:$0xff]
          %v4926 = vld [vmem:[%s4914 + $0x80] sm:$0xff]
          %v4927 = vld [vmem:[%s4914 + $0x90] sm:$0xff]
          %v4928 = vld [vmem:[%s4914 + $0x98] sm:$0xff]
          %v4929 = vld [vmem:[%s4914 + $0xa8] sm:$0xff]
          %v4930 = vld [vmem:[%s4914 + $0xb0] sm:$0xff]
          %v4932 = vlaneseq
          %v4933 = vshrl.u32 %v4932, 7
          %v4934 = vsub.s32 0, %v4933
          %v4935 = vrot.slane %v3852, %v4934
          %v4937 = vmul.f32 %v4915, %v4935
          %v4938 = vmul.f32 %v4916, %v4935
          %v4939 = vmul.f32 %v4917, %v4935
          %v4940 = vmul.f32 %v4918, %v4935
          %v4941 = vmul.f32 %v4919, %v4935
          %v4942 = vmul.f32 %v4920, %v4935
          %v4943 = vmul.f32 %v4921, %v4935
          %v4944 = vmul.f32 %v4922, %v4935
          %v4945 = vmul.f32 %v4923, %v4935
          %v4946 = vmul.f32 %v4924, %v4935
          %v4947 = vmul.f32 %v4925, %v4935
          %v4948 = vmul.f32 %v4926, %v4935
          %v4949 = vmul.f32 %v4927, %v4935
          %v4950 = vmul.f32 %v4928, %v4935
          %v4951 = vmul.f32 %v4929, %v4935
          %v4952 = vmul.f32 %v4930, %v4935
          %v4953 = vadd.f32 %v4896, %v4937
          %v4954 = vadd.f32 %v4897, %v4938
          %v4955 = vadd.f32 %v4898, %v4939
          %v4956 = vadd.f32 %v4899, %v4940
          %v4957 = vadd.f32 %v4900, %v4941
          %v4958 = vadd.f32 %v4901, %v4942
          %v4959 = vadd.f32 %v4902, %v4943
          %v4960 = vadd.f32 %v4903, %v4944
          %v4961 = vadd.f32 %v4904, %v4945
          %v4962 = vadd.f32 %v4905, %v4946
          %v4963 = vadd.f32 %v4906, %v4947
          %v4964 = vadd.f32 %v4907, %v4948
          %v4965 = vadd.f32 %v4908, %v4949
          %v4966 = vadd.f32 %v4909, %v4950
          %v4967 = vadd.f32 %v4910, %v4951
          %v4968 = vadd.f32 %v4911, %v4952
          %v4969 = vld [vmem:[%s4914 + $0x1] sm:$0xff]
          %v4970 = vld [vmem:[%s4914 + $0x9] sm:$0xff]
          %v4971 = vld [vmem:[%s4914 + $0x19] sm:$0xff]
          %v4972 = vld [vmem:[%s4914 + $0x21] sm:$0xff]
          %v4973 = vld [vmem:[%s4914 + $0x31] sm:$0xff]
          %v4974 = vld [vmem:[%s4914 + $0x39] sm:$0xff]
          %v4975 = vld [vmem:[%s4914 + $0x49] sm:$0xff]
          %v4976 = vld [vmem:[%s4914 + $0x51] sm:$0xff]
          %v4977 = vld [vmem:[%s4914 + $0x61] sm:$0xff]
          %v4978 = vld [vmem:[%s4914 + $0x69] sm:$0xff]
          %v4979 = vld [vmem:[%s4914 + $0x79] sm:$0xff]
          %v4980 = vld [vmem:[%s4914 + $0x81] sm:$0xff]
          %v4981 = vld [vmem:[%s4914 + $0x91] sm:$0xff]
          %v4982 = vld [vmem:[%s4914 + $0x99] sm:$0xff]
          %v4983 = vld [vmem:[%s4914 + $0xa9] sm:$0xff]
          %v4984 = vld [vmem:[%s4914 + $0xb1] sm:$0xff]
          %v4986 = vlaneseq
          %v4987 = vshrl.u32 %v4986, 7
          %v4988 = vsub.s32 0, %v4987
          %v4989 = vrot.slane %v3853, %v4988
          %v4991 = vmul.f32 %v4969, %v4989
          %v4992 = vmul.f32 %v4970, %v4989
          %v4993 = vmul.f32 %v4971, %v4989
          %v4994 = vmul.f32 %v4972, %v4989
          %v4995 = vmul.f32 %v4973, %v4989
          %v4996 = vmul.f32 %v4974, %v4989
          %v4997 = vmul.f32 %v4975, %v4989
          %v4998 = vmul.f32 %v4976, %v4989
          %v4999 = vmul.f32 %v4977, %v4989
          %v5000 = vmul.f32 %v4978, %v4989
          %v5001 = vmul.f32 %v4979, %v4989
          %v5002 = vmul.f32 %v4980, %v4989
          %v5003 = vmul.f32 %v4981, %v4989
          %v5004 = vmul.f32 %v4982, %v4989
          %v5005 = vmul.f32 %v4983, %v4989
          %v5006 = vmul.f32 %v4984, %v4989
          %v5007 = vadd.f32 %v4953, %v4991
          %v5008 = vadd.f32 %v4954, %v4992
          %v5009 = vadd.f32 %v4955, %v4993
          %v5010 = vadd.f32 %v4956, %v4994
          %v5011 = vadd.f32 %v4957, %v4995
          %v5012 = vadd.f32 %v4958, %v4996
          %v5013 = vadd.f32 %v4959, %v4997
          %v5014 = vadd.f32 %v4960, %v4998
          %v5015 = vadd.f32 %v4961, %v4999
          %v5016 = vadd.f32 %v4962, %v5000
          %v5017 = vadd.f32 %v4963, %v5001
          %v5018 = vadd.f32 %v4964, %v5002
          %v5019 = vadd.f32 %v4965, %v5003
          %v5020 = vadd.f32 %v4966, %v5004
          %v5021 = vadd.f32 %v4967, %v5005
          %v5022 = vadd.f32 %v4968, %v5006
          %v5023 = vld [vmem:[%s4914 + $0x2] sm:$0xff]
          %v5024 = vld [vmem:[%s4914 + $0xa] sm:$0xff]
          %v5025 = vld [vmem:[%s4914 + $0x1a] sm:$0xff]
          %v5026 = vld [vmem:[%s4914 + $0x22] sm:$0xff]
          %v5027 = vld [vmem:[%s4914 + $0x32] sm:$0xff]
          %v5028 = vld [vmem:[%s4914 + $0x3a] sm:$0xff]
          %v5029 = vld [vmem:[%s4914 + $0x4a] sm:$0xff]
          %v5030 = vld [vmem:[%s4914 + $0x52] sm:$0xff]
          %v5031 = vld [vmem:[%s4914 + $0x62] sm:$0xff]
          %v5032 = vld [vmem:[%s4914 + $0x6a] sm:$0xff]
          %v5033 = vld [vmem:[%s4914 + $0x7a] sm:$0xff]
          %v5034 = vld [vmem:[%s4914 + $0x82] sm:$0xff]
          %v5035 = vld [vmem:[%s4914 + $0x92] sm:$0xff]
          %v5036 = vld [vmem:[%s4914 + $0x9a] sm:$0xff]
          %v5037 = vld [vmem:[%s4914 + $0xaa] sm:$0xff]
          %v5038 = vld [vmem:[%s4914 + $0xb2] sm:$0xff]
          %v5040 = vlaneseq
          %v5041 = vshrl.u32 %v5040, 7
          %v5042 = vsub.s32 0, %v5041
          %v5043 = vrot.slane %v3854, %v5042
          %v5045 = vmul.f32 %v5023, %v5043
          %v5046 = vmul.f32 %v5024, %v5043
          %v5047 = vmul.f32 %v5025, %v5043
          %v5048 = vmul.f32 %v5026, %v5043
          %v5049 = vmul.f32 %v5027, %v5043
          %v5050 = vmul.f32 %v5028, %v5043
          %v5051 = vmul.f32 %v5029, %v5043
          %v5052 = vmul.f32 %v5030, %v5043
          %v5053 = vmul.f32 %v5031, %v5043
          %v5054 = vmul.f32 %v5032, %v5043
          %v5055 = vmul.f32 %v5033, %v5043
          %v5056 = vmul.f32 %v5034, %v5043
          %v5057 = vmul.f32 %v5035, %v5043
          %v5058 = vmul.f32 %v5036, %v5043
          %v5059 = vmul.f32 %v5037, %v5043
          %v5060 = vmul.f32 %v5038, %v5043
          %v5061 = vadd.f32 %v5007, %v5045
          %v5062 = vadd.f32 %v5008, %v5046
          %v5063 = vadd.f32 %v5009, %v5047
          %v5064 = vadd.f32 %v5010, %v5048
          %v5065 = vadd.f32 %v5011, %v5049
          %v5066 = vadd.f32 %v5012, %v5050
          %v5067 = vadd.f32 %v5013, %v5051
          %v5068 = vadd.f32 %v5014, %v5052
          %v5069 = vadd.f32 %v5015, %v5053
          %v5070 = vadd.f32 %v5016, %v5054
          %v5071 = vadd.f32 %v5017, %v5055
          %v5072 = vadd.f32 %v5018, %v5056
          %v5073 = vadd.f32 %v5019, %v5057
          %v5074 = vadd.f32 %v5020, %v5058
          %v5075 = vadd.f32 %v5021, %v5059
          %v5076 = vadd.f32 %v5022, %v5060
          %v5077 = vld [vmem:[%s4914 + $0x3] sm:$0xff]
          %v5078 = vld [vmem:[%s4914 + $0xb] sm:$0xff]
          %v5079 = vld [vmem:[%s4914 + $0x1b] sm:$0xff]
          %v5080 = vld [vmem:[%s4914 + $0x23] sm:$0xff]
          %v5081 = vld [vmem:[%s4914 + $0x33] sm:$0xff]
          %v5082 = vld [vmem:[%s4914 + $0x3b] sm:$0xff]
          %v5083 = vld [vmem:[%s4914 + $0x4b] sm:$0xff]
          %v5084 = vld [vmem:[%s4914 + $0x53] sm:$0xff]
          %v5085 = vld [vmem:[%s4914 + $0x63] sm:$0xff]
          %v5086 = vld [vmem:[%s4914 + $0x6b] sm:$0xff]
          %v5087 = vld [vmem:[%s4914 + $0x7b] sm:$0xff]
          %v5088 = vld [vmem:[%s4914 + $0x83] sm:$0xff]
          %v5089 = vld [vmem:[%s4914 + $0x93] sm:$0xff]
          %v5090 = vld [vmem:[%s4914 + $0x9b] sm:$0xff]
          %v5091 = vld [vmem:[%s4914 + $0xab] sm:$0xff]
          %v5092 = vld [vmem:[%s4914 + $0xb3] sm:$0xff]
          %v5094 = vlaneseq
          %v5095 = vshrl.u32 %v5094, 7
          %v5096 = vsub.s32 0, %v5095
          %v5097 = vrot.slane %v3855, %v5096
          %v5099 = vmul.f32 %v5077, %v5097
          %v5100 = vmul.f32 %v5078, %v5097
          %v5101 = vmul.f32 %v5079, %v5097
          %v5102 = vmul.f32 %v5080, %v5097
          %v5103 = vmul.f32 %v5081, %v5097
          %v5104 = vmul.f32 %v5082, %v5097
          %v5105 = vmul.f32 %v5083, %v5097
          %v5106 = vmul.f32 %v5084, %v5097
          %v5107 = vmul.f32 %v5085, %v5097
          %v5108 = vmul.f32 %v5086, %v5097
          %v5109 = vmul.f32 %v5087, %v5097
          %v5110 = vmul.f32 %v5088, %v5097
          %v5111 = vmul.f32 %v5089, %v5097
          %v5112 = vmul.f32 %v5090, %v5097
          %v5113 = vmul.f32 %v5091, %v5097
          %v5114 = vmul.f32 %v5092, %v5097
          %v5115 = vadd.f32 %v5061, %v5099
          %v5116 = vadd.f32 %v5062, %v5100
          %v5117 = vadd.f32 %v5063, %v5101
          %v5118 = vadd.f32 %v5064, %v5102
          %v5119 = vadd.f32 %v5065, %v5103
          %v5120 = vadd.f32 %v5066, %v5104
          %v5121 = vadd.f32 %v5067, %v5105
          %v5122 = vadd.f32 %v5068, %v5106
          %v5123 = vadd.f32 %v5069, %v5107
          %v5124 = vadd.f32 %v5070, %v5108
          %v5125 = vadd.f32 %v5071, %v5109
          %v5126 = vadd.f32 %v5072, %v5110
          %v5127 = vadd.f32 %v5073, %v5111
          %v5128 = vadd.f32 %v5074, %v5112
          %v5129 = vadd.f32 %v5075, %v5113
          %v5130 = vadd.f32 %v5076, %v5114
          %v5131 = vld [vmem:[%s4914 + $0x4] sm:$0xff]
          %v5132 = vld [vmem:[%s4914 + $0xc] sm:$0xff]
          %v5133 = vld [vmem:[%s4914 + $0x1c] sm:$0xff]
          %v5134 = vld [vmem:[%s4914 + $0x24] sm:$0xff]
          %v5135 = vld [vmem:[%s4914 + $0x34] sm:$0xff]
          %v5136 = vld [vmem:[%s4914 + $0x3c] sm:$0xff]
          %v5137 = vld [vmem:[%s4914 + $0x4c] sm:$0xff]
          %v5138 = vld [vmem:[%s4914 + $0x54] sm:$0xff]
          %v5139 = vld [vmem:[%s4914 + $0x64] sm:$0xff]
          %v5140 = vld [vmem:[%s4914 + $0x6c] sm:$0xff]
          %v5141 = vld [vmem:[%s4914 + $0x7c] sm:$0xff]
          %v5142 = vld [vmem:[%s4914 + $0x84] sm:$0xff]
          %v5143 = vld [vmem:[%s4914 + $0x94] sm:$0xff]
          %v5144 = vld [vmem:[%s4914 + $0x9c] sm:$0xff]
          %v5145 = vld [vmem:[%s4914 + $0xac] sm:$0xff]
          %v5146 = vld [vmem:[%s4914 + $0xb4] sm:$0xff]
          %v5148 = vlaneseq
          %v5149 = vshrl.u32 %v5148, 7
          %v5150 = vsub.s32 0, %v5149
          %v5151 = vrot.slane %v3856, %v5150
          %v5153 = vmul.f32 %v5131, %v5151
          %v5154 = vmul.f32 %v5132, %v5151
          %v5155 = vmul.f32 %v5133, %v5151
          %v5156 = vmul.f32 %v5134, %v5151
          %v5157 = vmul.f32 %v5135, %v5151
          %v5158 = vmul.f32 %v5136, %v5151
          %v5159 = vmul.f32 %v5137, %v5151
          %v5160 = vmul.f32 %v5138, %v5151
          %v5161 = vmul.f32 %v5139, %v5151
          %v5162 = vmul.f32 %v5140, %v5151
          %v5163 = vmul.f32 %v5141, %v5151
          %v5164 = vmul.f32 %v5142, %v5151
          %v5165 = vmul.f32 %v5143, %v5151
          %v5166 = vmul.f32 %v5144, %v5151
          %v5167 = vmul.f32 %v5145, %v5151
          %v5168 = vmul.f32 %v5146, %v5151
          %v5169 = vadd.f32 %v5115, %v5153
          %v5170 = vadd.f32 %v5116, %v5154
          %v5171 = vadd.f32 %v5117, %v5155
          %v5172 = vadd.f32 %v5118, %v5156
          %v5173 = vadd.f32 %v5119, %v5157
          %v5174 = vadd.f32 %v5120, %v5158
          %v5175 = vadd.f32 %v5121, %v5159
          %v5176 = vadd.f32 %v5122, %v5160
          %v5177 = vadd.f32 %v5123, %v5161
          %v5178 = vadd.f32 %v5124, %v5162
          %v5179 = vadd.f32 %v5125, %v5163
          %v5180 = vadd.f32 %v5126, %v5164
          %v5181 = vadd.f32 %v5127, %v5165
          %v5182 = vadd.f32 %v5128, %v5166
          %v5183 = vadd.f32 %v5129, %v5167
          %v5184 = vadd.f32 %v5130, %v5168
          %s5185 = sadd.s32 %s4093, 4
          %s5186 = smul.u32 %s5185, 24
          %s5187 = scalar_lea.vmem [#allocation4], %s5186
          %v5188 = vld [vmem:[%s5187] sm:$0xff]
          %v5189 = vld [vmem:[%s5187 + $0x8] sm:$0xff]
          %v5190 = vld [vmem:[%s5187 + $0x18] sm:$0xff]
          %v5191 = vld [vmem:[%s5187 + $0x20] sm:$0xff]
          %v5192 = vld [vmem:[%s5187 + $0x30] sm:$0xff]
          %v5193 = vld [vmem:[%s5187 + $0x38] sm:$0xff]
          %v5194 = vld [vmem:[%s5187 + $0x48] sm:$0xff]
          %v5195 = vld [vmem:[%s5187 + $0x50] sm:$0xff]
          %v5196 = vld [vmem:[%s5187 + $0x60] sm:$0xff]
          %v5197 = vld [vmem:[%s5187 + $0x68] sm:$0xff]
          %v5198 = vld [vmem:[%s5187 + $0x78] sm:$0xff]
          %v5199 = vld [vmem:[%s5187 + $0x80] sm:$0xff]
          %v5200 = vld [vmem:[%s5187 + $0x90] sm:$0xff]
          %v5201 = vld [vmem:[%s5187 + $0x98] sm:$0xff]
          %v5202 = vld [vmem:[%s5187 + $0xa8] sm:$0xff]
          %v5203 = vld [vmem:[%s5187 + $0xb0] sm:$0xff]
          %v5205 = vlaneseq
          %v5206 = vshrl.u32 %v5205, 7
          %v5207 = vsub.s32 0, %v5206
          %v5208 = vrot.slane %v3857, %v5207
          %v5210 = vmul.f32 %v5188, %v5208
          %v5211 = vmul.f32 %v5189, %v5208
          %v5212 = vmul.f32 %v5190, %v5208
          %v5213 = vmul.f32 %v5191, %v5208
          %v5214 = vmul.f32 %v5192, %v5208
          %v5215 = vmul.f32 %v5193, %v5208
          %v5216 = vmul.f32 %v5194, %v5208
          %v5217 = vmul.f32 %v5195, %v5208
          %v5218 = vmul.f32 %v5196, %v5208
          %v5219 = vmul.f32 %v5197, %v5208
          %v5220 = vmul.f32 %v5198, %v5208
          %v5221 = vmul.f32 %v5199, %v5208
          %v5222 = vmul.f32 %v5200, %v5208
          %v5223 = vmul.f32 %v5201, %v5208
          %v5224 = vmul.f32 %v5202, %v5208
          %v5225 = vmul.f32 %v5203, %v5208
          %v5226 = vadd.f32 %v5169, %v5210
          %v5227 = vadd.f32 %v5170, %v5211
          %v5228 = vadd.f32 %v5171, %v5212
          %v5229 = vadd.f32 %v5172, %v5213
          %v5230 = vadd.f32 %v5173, %v5214
          %v5231 = vadd.f32 %v5174, %v5215
          %v5232 = vadd.f32 %v5175, %v5216
          %v5233 = vadd.f32 %v5176, %v5217
          %v5234 = vadd.f32 %v5177, %v5218
          %v5235 = vadd.f32 %v5178, %v5219
          %v5236 = vadd.f32 %v5179, %v5220
          %v5237 = vadd.f32 %v5180, %v5221
          %v5238 = vadd.f32 %v5181, %v5222
          %v5239 = vadd.f32 %v5182, %v5223
          %v5240 = vadd.f32 %v5183, %v5224
          %v5241 = vadd.f32 %v5184, %v5225
          %v5242 = vld [vmem:[%s5187 + $0x1] sm:$0xff]
          %v5243 = vld [vmem:[%s5187 + $0x9] sm:$0xff]
          %v5244 = vld [vmem:[%s5187 + $0x19] sm:$0xff]
          %v5245 = vld [vmem:[%s5187 + $0x21] sm:$0xff]
          %v5246 = vld [vmem:[%s5187 + $0x31] sm:$0xff]
          %v5247 = vld [vmem:[%s5187 + $0x39] sm:$0xff]
          %v5248 = vld [vmem:[%s5187 + $0x49] sm:$0xff]
          %v5249 = vld [vmem:[%s5187 + $0x51] sm:$0xff]
          %v5250 = vld [vmem:[%s5187 + $0x61] sm:$0xff]
          %v5251 = vld [vmem:[%s5187 + $0x69] sm:$0xff]
          %v5252 = vld [vmem:[%s5187 + $0x79] sm:$0xff]
          %v5253 = vld [vmem:[%s5187 + $0x81] sm:$0xff]
          %v5254 = vld [vmem:[%s5187 + $0x91] sm:$0xff]
          %v5255 = vld [vmem:[%s5187 + $0x99] sm:$0xff]
          %v5256 = vld [vmem:[%s5187 + $0xa9] sm:$0xff]
          %v5257 = vld [vmem:[%s5187 + $0xb1] sm:$0xff]
          %v5259 = vlaneseq
          %v5260 = vshrl.u32 %v5259, 7
          %v5261 = vsub.s32 0, %v5260
          %v5262 = vrot.slane %v3858, %v5261
          %v5264 = vmul.f32 %v5242, %v5262
          %v5265 = vmul.f32 %v5243, %v5262
          %v5266 = vmul.f32 %v5244, %v5262
          %v5267 = vmul.f32 %v5245, %v5262
          %v5268 = vmul.f32 %v5246, %v5262
          %v5269 = vmul.f32 %v5247, %v5262
          %v5270 = vmul.f32 %v5248, %v5262
          %v5271 = vmul.f32 %v5249, %v5262
          %v5272 = vmul.f32 %v5250, %v5262
          %v5273 = vmul.f32 %v5251, %v5262
          %v5274 = vmul.f32 %v5252, %v5262
          %v5275 = vmul.f32 %v5253, %v5262
          %v5276 = vmul.f32 %v5254, %v5262
          %v5277 = vmul.f32 %v5255, %v5262
          %v5278 = vmul.f32 %v5256, %v5262
          %v5279 = vmul.f32 %v5257, %v5262
          %v5280 = vadd.f32 %v5226, %v5264
          %v5281 = vadd.f32 %v5227, %v5265
          %v5282 = vadd.f32 %v5228, %v5266
          %v5283 = vadd.f32 %v5229, %v5267
          %v5284 = vadd.f32 %v5230, %v5268
          %v5285 = vadd.f32 %v5231, %v5269
          %v5286 = vadd.f32 %v5232, %v5270
          %v5287 = vadd.f32 %v5233, %v5271
          %v5288 = vadd.f32 %v5234, %v5272
          %v5289 = vadd.f32 %v5235, %v5273
          %v5290 = vadd.f32 %v5236, %v5274
          %v5291 = vadd.f32 %v5237, %v5275
          %v5292 = vadd.f32 %v5238, %v5276
          %v5293 = vadd.f32 %v5239, %v5277
          %v5294 = vadd.f32 %v5240, %v5278
          %v5295 = vadd.f32 %v5241, %v5279
          %v5296 = vld [vmem:[%s5187 + $0x2] sm:$0xff]
          %v5297 = vld [vmem:[%s5187 + $0xa] sm:$0xff]
          %v5298 = vld [vmem:[%s5187 + $0x1a] sm:$0xff]
          %v5299 = vld [vmem:[%s5187 + $0x22] sm:$0xff]
          %v5300 = vld [vmem:[%s5187 + $0x32] sm:$0xff]
          %v5301 = vld [vmem:[%s5187 + $0x3a] sm:$0xff]
          %v5302 = vld [vmem:[%s5187 + $0x4a] sm:$0xff]
          %v5303 = vld [vmem:[%s5187 + $0x52] sm:$0xff]
          %v5304 = vld [vmem:[%s5187 + $0x62] sm:$0xff]
          %v5305 = vld [vmem:[%s5187 + $0x6a] sm:$0xff]
          %v5306 = vld [vmem:[%s5187 + $0x7a] sm:$0xff]
          %v5307 = vld [vmem:[%s5187 + $0x82] sm:$0xff]
          %v5308 = vld [vmem:[%s5187 + $0x92] sm:$0xff]
          %v5309 = vld [vmem:[%s5187 + $0x9a] sm:$0xff]
          %v5310 = vld [vmem:[%s5187 + $0xaa] sm:$0xff]
          %v5311 = vld [vmem:[%s5187 + $0xb2] sm:$0xff]
          %v5313 = vlaneseq
          %v5314 = vshrl.u32 %v5313, 7
          %v5315 = vsub.s32 0, %v5314
          %v5316 = vrot.slane %v3859, %v5315
          %v5318 = vmul.f32 %v5296, %v5316
          %v5319 = vmul.f32 %v5297, %v5316
          %v5320 = vmul.f32 %v5298, %v5316
          %v5321 = vmul.f32 %v5299, %v5316
          %v5322 = vmul.f32 %v5300, %v5316
          %v5323 = vmul.f32 %v5301, %v5316
          %v5324 = vmul.f32 %v5302, %v5316
          %v5325 = vmul.f32 %v5303, %v5316
          %v5326 = vmul.f32 %v5304, %v5316
          %v5327 = vmul.f32 %v5305, %v5316
          %v5328 = vmul.f32 %v5306, %v5316
          %v5329 = vmul.f32 %v5307, %v5316
          %v5330 = vmul.f32 %v5308, %v5316
          %v5331 = vmul.f32 %v5309, %v5316
          %v5332 = vmul.f32 %v5310, %v5316
          %v5333 = vmul.f32 %v5311, %v5316
          %v5334 = vadd.f32 %v5280, %v5318
          %v5335 = vadd.f32 %v5281, %v5319
          %v5336 = vadd.f32 %v5282, %v5320
          %v5337 = vadd.f32 %v5283, %v5321
          %v5338 = vadd.f32 %v5284, %v5322
          %v5339 = vadd.f32 %v5285, %v5323
          %v5340 = vadd.f32 %v5286, %v5324
          %v5341 = vadd.f32 %v5287, %v5325
          %v5342 = vadd.f32 %v5288, %v5326
          %v5343 = vadd.f32 %v5289, %v5327
          %v5344 = vadd.f32 %v5290, %v5328
          %v5345 = vadd.f32 %v5291, %v5329
          %v5346 = vadd.f32 %v5292, %v5330
          %v5347 = vadd.f32 %v5293, %v5331
          %v5348 = vadd.f32 %v5294, %v5332
          %v5349 = vadd.f32 %v5295, %v5333
          %v5350 = vld [vmem:[%s5187 + $0x3] sm:$0xff]
          %v5351 = vld [vmem:[%s5187 + $0xb] sm:$0xff]
          %v5352 = vld [vmem:[%s5187 + $0x1b] sm:$0xff]
          %v5353 = vld [vmem:[%s5187 + $0x23] sm:$0xff]
          %v5354 = vld [vmem:[%s5187 + $0x33] sm:$0xff]
          %v5355 = vld [vmem:[%s5187 + $0x3b] sm:$0xff]
          %v5356 = vld [vmem:[%s5187 + $0x4b] sm:$0xff]
          %v5357 = vld [vmem:[%s5187 + $0x53] sm:$0xff]
          %v5358 = vld [vmem:[%s5187 + $0x63] sm:$0xff]
          %v5359 = vld [vmem:[%s5187 + $0x6b] sm:$0xff]
          %v5360 = vld [vmem:[%s5187 + $0x7b] sm:$0xff]
          %v5361 = vld [vmem:[%s5187 + $0x83] sm:$0xff]
          %v5362 = vld [vmem:[%s5187 + $0x93] sm:$0xff]
          %v5363 = vld [vmem:[%s5187 + $0x9b] sm:$0xff]
          %v5364 = vld [vmem:[%s5187 + $0xab] sm:$0xff]
          %v5365 = vld [vmem:[%s5187 + $0xb3] sm:$0xff]
          %v5367 = vlaneseq
          %v5368 = vshrl.u32 %v5367, 7
          %v5369 = vsub.s32 0, %v5368
          %v5370 = vrot.slane %v3860, %v5369
          %v5372 = vmul.f32 %v5350, %v5370
          %v5373 = vmul.f32 %v5351, %v5370
          %v5374 = vmul.f32 %v5352, %v5370
          %v5375 = vmul.f32 %v5353, %v5370
          %v5376 = vmul.f32 %v5354, %v5370
          %v5377 = vmul.f32 %v5355, %v5370
          %v5378 = vmul.f32 %v5356, %v5370
          %v5379 = vmul.f32 %v5357, %v5370
          %v5380 = vmul.f32 %v5358, %v5370
          %v5381 = vmul.f32 %v5359, %v5370
          %v5382 = vmul.f32 %v5360, %v5370
          %v5383 = vmul.f32 %v5361, %v5370
          %v5384 = vmul.f32 %v5362, %v5370
          %v5385 = vmul.f32 %v5363, %v5370
          %v5386 = vmul.f32 %v5364, %v5370
          %v5387 = vmul.f32 %v5365, %v5370
          %v5388 = vadd.f32 %v5334, %v5372
          %v5389 = vadd.f32 %v5335, %v5373
          %v5390 = vadd.f32 %v5336, %v5374
          %v5391 = vadd.f32 %v5337, %v5375
          %v5392 = vadd.f32 %v5338, %v5376
          %v5393 = vadd.f32 %v5339, %v5377
          %v5394 = vadd.f32 %v5340, %v5378
          %v5395 = vadd.f32 %v5341, %v5379
          %v5396 = vadd.f32 %v5342, %v5380
          %v5397 = vadd.f32 %v5343, %v5381
          %v5398 = vadd.f32 %v5344, %v5382
          %v5399 = vadd.f32 %v5345, %v5383
          %v5400 = vadd.f32 %v5346, %v5384
          %v5401 = vadd.f32 %v5347, %v5385
          %v5402 = vadd.f32 %v5348, %v5386
          %v5403 = vadd.f32 %v5349, %v5387
          %v5404 = vld [vmem:[%s5187 + $0x4] sm:$0xff]
          %v5405 = vld [vmem:[%s5187 + $0xc] sm:$0xff]
          %v5406 = vld [vmem:[%s5187 + $0x1c] sm:$0xff]
          %v5407 = vld [vmem:[%s5187 + $0x24] sm:$0xff]
          %v5408 = vld [vmem:[%s5187 + $0x34] sm:$0xff]
          %v5409 = vld [vmem:[%s5187 + $0x3c] sm:$0xff]
          %v5410 = vld [vmem:[%s5187 + $0x4c] sm:$0xff]
          %v5411 = vld [vmem:[%s5187 + $0x54] sm:$0xff]
          %v5412 = vld [vmem:[%s5187 + $0x64] sm:$0xff]
          %v5413 = vld [vmem:[%s5187 + $0x6c] sm:$0xff]
          %v5414 = vld [vmem:[%s5187 + $0x7c] sm:$0xff]
          %v5415 = vld [vmem:[%s5187 + $0x84] sm:$0xff]
          %v5416 = vld [vmem:[%s5187 + $0x94] sm:$0xff]
          %v5417 = vld [vmem:[%s5187 + $0x9c] sm:$0xff]
          %v5418 = vld [vmem:[%s5187 + $0xac] sm:$0xff]
          %v5419 = vld [vmem:[%s5187 + $0xb4] sm:$0xff]
          %v5421 = vlaneseq
          %v5422 = vshrl.u32 %v5421, 7
          %v5423 = vsub.s32 0, %v5422
          %v5424 = vrot.slane %v3861, %v5423
          %v5426 = vmul.f32 %v5404, %v5424
          %v5427 = vmul.f32 %v5405, %v5424
          %v5428 = vmul.f32 %v5406, %v5424
          %v5429 = vmul.f32 %v5407, %v5424
          %v5430 = vmul.f32 %v5408, %v5424
          %v5431 = vmul.f32 %v5409, %v5424
          %v5432 = vmul.f32 %v5410, %v5424
          %v5433 = vmul.f32 %v5411, %v5424
          %v5434 = vmul.f32 %v5412, %v5424
          %v5435 = vmul.f32 %v5413, %v5424
          %v5436 = vmul.f32 %v5414, %v5424
          %v5437 = vmul.f32 %v5415, %v5424
          %v5438 = vmul.f32 %v5416, %v5424
          %v5439 = vmul.f32 %v5417, %v5424
          %v5440 = vmul.f32 %v5418, %v5424
          %v5441 = vmul.f32 %v5419, %v5424
          %v5442 = vadd.f32 %v5388, %v5426
          %v5443 = vadd.f32 %v5389, %v5427
          %v5444 = vadd.f32 %v5390, %v5428
          %v5445 = vadd.f32 %v5391, %v5429
          %v5446 = vadd.f32 %v5392, %v5430
          %v5447 = vadd.f32 %v5393, %v5431
          %v5448 = vadd.f32 %v5394, %v5432
          %v5449 = vadd.f32 %v5395, %v5433
          %v5450 = vadd.f32 %v5396, %v5434
          %v5451 = vadd.f32 %v5397, %v5435
          %v5452 = vadd.f32 %v5398, %v5436
          %v5453 = vadd.f32 %v5399, %v5437
          %v5454 = vadd.f32 %v5400, %v5438
          %v5455 = vadd.f32 %v5401, %v5439
          %v5456 = vadd.f32 %v5402, %v5440
          %v5457 = vadd.f32 %v5403, %v5441
          %vm5458 = vcmp.gt.f32.partialorder %v5442, 0.0
          %vm5459 = vcmp.gt.f32.partialorder %v5443, 0.0
          %vm5460 = vcmp.gt.f32.partialorder %v5444, 0.0
          %vm5461 = vcmp.gt.f32.partialorder %v5445, 0.0
          %vm5462 = vcmp.gt.f32.partialorder %v5446, 0.0
          %vm5463 = vcmp.gt.f32.partialorder %v5447, 0.0
          %vm5464 = vcmp.gt.f32.partialorder %v5448, 0.0
          %vm5465 = vcmp.gt.f32.partialorder %v5449, 0.0
          %vm5466 = vcmp.gt.f32.partialorder %v5450, 0.0
          %vm5467 = vcmp.gt.f32.partialorder %v5451, 0.0
          %vm5468 = vcmp.gt.f32.partialorder %v5452, 0.0
          %vm5469 = vcmp.gt.f32.partialorder %v5453, 0.0
          %vm5470 = vcmp.gt.f32.partialorder %v5454, 0.0
          %vm5471 = vcmp.gt.f32.partialorder %v5455, 0.0
          %vm5472 = vcmp.gt.f32.partialorder %v5456, 0.0
          %vm5473 = vcmp.gt.f32.partialorder %v5457, 0.0
          %v5474 = vmul.f32 %v5442, 0.1
          %v5475 = vmul.f32 %v5443, 0.1
          %v5476 = vmul.f32 %v5444, 0.1
          %v5477 = vmul.f32 %v5445, 0.1
          %v5478 = vmul.f32 %v5446, 0.1
          %v5479 = vmul.f32 %v5447, 0.1
          %v5480 = vmul.f32 %v5448, 0.1
          %v5481 = vmul.f32 %v5449, 0.1
          %v5482 = vmul.f32 %v5450, 0.1
          %v5483 = vmul.f32 %v5451, 0.1
          %v5484 = vmul.f32 %v5452, 0.1
          %v5485 = vmul.f32 %v5453, 0.1
          %v5486 = vmul.f32 %v5454, 0.1
          %v5487 = vmul.f32 %v5455, 0.1
          %v5488 = vmul.f32 %v5456, 0.1
          %v5489 = vmul.f32 %v5457, 0.1
          %v5490 = vsel %vm5458, %v5442, %v5474
          %v5491 = vsel %vm5459, %v5443, %v5475
          %v5492 = vsel %vm5460, %v5444, %v5476
          %v5493 = vsel %vm5461, %v5445, %v5477
          %v5494 = vsel %vm5462, %v5446, %v5478
          %v5495 = vsel %vm5463, %v5447, %v5479
          %v5496 = vsel %vm5464, %v5448, %v5480
          %v5497 = vsel %vm5465, %v5449, %v5481
          %v5498 = vsel %vm5466, %v5450, %v5482
          %v5499 = vsel %vm5467, %v5451, %v5483
          %v5500 = vsel %vm5468, %v5452, %v5484
          %v5501 = vsel %vm5469, %v5453, %v5485
          %v5502 = vsel %vm5470, %v5454, %v5486
          %v5503 = vsel %vm5471, %v5455, %v5487
          %v5504 = vsel %vm5472, %v5456, %v5488
          %v5505 = vsel %vm5473, %v5457, %v5489
          %v5506 = vpack.c.bf16 %v5491, %v5490
          %v5507 = vpack.c.bf16 %v5493, %v5492
          %v5508 = vpack.c.bf16 %v5495, %v5494
          %v5509 = vpack.c.bf16 %v5497, %v5496
          %v5510 = vpack.c.bf16 %v5499, %v5498
          %v5511 = vpack.c.bf16 %v5501, %v5500
          %v5512 = vpack.c.bf16 %v5503, %v5502
          %v5513 = vpack.c.bf16 %v5505, %v5504
          %v5520 = vunpack.c.l.b16 %v3830
          %v5521 = vunpack.c.l.b16 %v3831
          %v5522 = vunpack.c.l.b16 %v3832
          %v5523 = vunpack.c.l.b16 %v3833
          %v5524 = vunpack.c.l.b16 %v3834
          %v5525 = vunpack.c.l.b16 %v3835
          %v5526 = vpack.c.b16 %v5521, %v5520
          %v5527 = vpack.c.b16 %v5523, %v5522
          %v5528 = vpack.c.b16 %v5525, %v5524
          %v5533 = vsel %vm253, %v5506, 0
          %v5536 = vsel %vm253, %v5507, 0
          %v5539 = vsel %vm253, %v5508, 0
          %v5542 = vsel %vm253, %v5509, 0
          %v5545 = vsel %vm253, %v5510, 0
          %v5548 = vsel %vm253, %v5511, 0
          %v5551 = vsel %vm253, %v5512, 0
          %v5554 = vsel %vm253, %v5513, 0
          %5556 = vmatprep.subr.bf16.mxu0 0
          %5557 = vmatpush1.bf16.msra.mxu0 %v5526
          %5558 = vmatprep.subr.bf16.mxu0 0
          %5559 = vmatpush1.bf16.msra.mxu0 %v5527
          %5560 = vmatprep.subr.bf16.mxu0 0
          %5561 = vmatpush1.bf16.msra.mxu0 %v5528
          %5562 = vmatprep.subr.bf16.mxu0 0
          %5563 = vmatpush1.bf16.msra.mxu0 0
          %5564 = vmatprep.subr.bf16.mxu0 0
          %5565 = vmatpush1.bf16.msra.mxu0 0
          %5566 = vmatprep.subr.bf16.mxu0 0
          %5567 = vmatpush1.bf16.msra.mxu0 0
          %5568 = vmatprep.subr.bf16.mxu0 0
          %5569 = vmatpush1.bf16.msra.mxu0 0
          %5570 = vmatprep.subr.bf16.mxu0 0
          %5571 = vmatpush1.bf16.msra.mxu0 0
          %5572 = vmatprep.subr.bf16.mxu0 0
          %5573 = vmatpush1.bf16.msra.mxu0 0
          %5574 = vmatprep.subr.bf16.mxu0 0
          %5575 = vmatpush1.bf16.msra.mxu0 0
          %5576 = vmatprep.subr.bf16.mxu0 0
          %5577 = vmatpush1.bf16.msra.mxu0 0
          %5578 = vmatprep.subr.bf16.mxu0 0
          %5579 = vmatpush1.bf16.msra.mxu0 0
          %5580 = vmatprep.subr.bf16.mxu0 0
          %5581 = vmatpush1.bf16.msra.mxu0 0
          %5582 = vmatprep.subr.bf16.mxu0 0
          %5583 = vmatpush1.bf16.msra.mxu0 0
          %5584 = vmatprep.subr.bf16.mxu0 0
          %5585 = vmatpush1.bf16.msra.mxu0 0
          %5586 = vmatprep.subr.bf16.mxu0 0
          %5587 = vmatpush1.bf16.msra.mxu0 0
          %5588 = vmatprep.mubr.bf16.mxu0 0
          %5589 = vmatmul.mubr.bf16.gmra.mrb[0].mxu0 %v5533
          %v5590 = vpop.f32.mrb[0].mxu0
          %v5591 = vadd.f32 0.0, %v5590
          %v5592 = vpop.f32.mrb[0].mxu0
          %v5593 = vpop.f32.mrb[0].mxu0
          %v5594 = vadd.f32 0.0, %v5593
          %v5595 = vpop.f32.mrb[0].mxu0
          %5596 = vmatprep.mubr.bf16.mxu0 0
          %5597 = vmatmul.mubr.bf16.gmra.mrb[0].mxu0 %v5536
          %v5598 = vpop.f32.mrb[0].mxu0
          %v5599 = vadd.f32 0.0, %v5598
          %v5600 = vpop.f32.mrb[0].mxu0
          %v5601 = vpop.f32.mrb[0].mxu0
          %v5602 = vadd.f32 0.0, %v5601
          %v5603 = vpop.f32.mrb[0].mxu0
          %5604 = vmatprep.mubr.bf16.mxu0 0
          %5605 = vmatmul.mubr.bf16.gmra.mrb[0].mxu0 %v5539
          %v5606 = vpop.f32.mrb[0].mxu0
          %v5607 = vadd.f32 0.0, %v5606
          %v5608 = vpop.f32.mrb[0].mxu0
          %v5609 = vpop.f32.mrb[0].mxu0
          %v5610 = vadd.f32 0.0, %v5609
          %v5611 = vpop.f32.mrb[0].mxu0
          %5612 = vmatprep.mubr.bf16.mxu0 0
          %5613 = vmatmul.mubr.bf16.gmra.mrb[0].mxu0 %v5542
          %v5614 = vpop.f32.mrb[0].mxu0
          %v5615 = vadd.f32 0.0, %v5614
          %v5616 = vpop.f32.mrb[0].mxu0
          %v5617 = vpop.f32.mrb[0].mxu0
          %v5618 = vadd.f32 0.0, %v5617
          %v5619 = vpop.f32.mrb[0].mxu0
          %5620 = vmatprep.mubr.bf16.mxu0 0
          %5621 = vmatmul.mubr.bf16.gmra.mrb[0].mxu0 %v5545
          %v5622 = vpop.f32.mrb[0].mxu0
          %v5623 = vadd.f32 0.0, %v5622
          %v5624 = vpop.f32.mrb[0].mxu0
          %v5625 = vpop.f32.mrb[0].mxu0
          %v5626 = vadd.f32 0.0, %v5625
          %v5627 = vpop.f32.mrb[0].mxu0
          %5628 = vmatprep.mubr.bf16.mxu0 0
          %5629 = vmatmul.mubr.bf16.gmra.mrb[0].mxu0 %v5548
          %v5630 = vpop.f32.mrb[0].mxu0
          %v5631 = vadd.f32 0.0, %v5630
          %v5632 = vpop.f32.mrb[0].mxu0
          %v5633 = vpop.f32.mrb[0].mxu0
          %v5634 = vadd.f32 0.0, %v5633
          %v5635 = vpop.f32.mrb[0].mxu0
          %5636 = vmatprep.mubr.bf16.mxu0 0
          %5637 = vmatmul.mubr.bf16.gmra.mrb[0].mxu0 %v5551
          %v5638 = vpop.f32.mrb[0].mxu0
          %v5639 = vadd.f32 0.0, %v5638
          %v5640 = vpop.f32.mrb[0].mxu0
          %v5641 = vpop.f32.mrb[0].mxu0
          %v5642 = vadd.f32 0.0, %v5641
          %v5643 = vpop.f32.mrb[0].mxu0
          %5644 = vmatprep.mubr.bf16.mxu0 0
          %5645 = vmatmul.mubr.bf16.gmra.mrb[0].mxu0 %v5554
          %v5646 = vpop.f32.mrb[0].mxu0
          %v5647 = vadd.f32 0.0, %v5646
          %v5648 = vpop.f32.mrb[0].mxu0
          %v5649 = vpop.f32.mrb[0].mxu0
          %v5650 = vadd.f32 0.0, %v5649
          %v5651 = vpop.f32.mrb[0].mxu0
          %5652 = vdwg.mxu0
          %s5653 = smul.u32 %s4093, 16
          %s5654 = scalar_lea.vmem [#allocation3], %s5653
          %v5655 = vld [vmem:[%s5654] sm:$0xff]
          %v5656 = vld [vmem:[%s5654 + $0x8] sm:$0xff]
          %v5657 = vld [vmem:[%s5654 + $0x10] sm:$0xff]
          %v5658 = vld [vmem:[%s5654 + $0x18] sm:$0xff]
          %v5659 = vld [vmem:[%s5654 + $0x20] sm:$0xff]
          %v5660 = vld [vmem:[%s5654 + $0x28] sm:$0xff]
          %v5661 = vld [vmem:[%s5654 + $0x30] sm:$0xff]
          %v5662 = vld [vmem:[%s5654 + $0x38] sm:$0xff]
          %v5663 = vld [vmem:[%s5654 + $0x40] sm:$0xff]
          %v5664 = vld [vmem:[%s5654 + $0x48] sm:$0xff]
          %v5665 = vld [vmem:[%s5654 + $0x50] sm:$0xff]
          %v5666 = vld [vmem:[%s5654 + $0x58] sm:$0xff]
          %v5667 = vld [vmem:[%s5654 + $0x60] sm:$0xff]
          %v5668 = vld [vmem:[%s5654 + $0x68] sm:$0xff]
          %v5669 = vld [vmem:[%s5654 + $0x70] sm:$0xff]
          %v5670 = vld [vmem:[%s5654 + $0x78] sm:$0xff]
          %v5671 = vadd.f32 %v5655, %v5591
          %v5672 = vadd.f32 %v5656, %v5594
          %v5673 = vadd.f32 %v5657, %v5599
          %v5674 = vadd.f32 %v5658, %v5602
          %v5675 = vadd.f32 %v5659, %v5607
          %v5676 = vadd.f32 %v5660, %v5610
          %v5677 = vadd.f32 %v5661, %v5615
          %v5678 = vadd.f32 %v5662, %v5618
          %v5679 = vadd.f32 %v5663, %v5623
          %v5680 = vadd.f32 %v5664, %v5626
          %v5681 = vadd.f32 %v5665, %v5631
          %v5682 = vadd.f32 %v5666, %v5634
          %v5683 = vadd.f32 %v5667, %v5639
          %v5684 = vadd.f32 %v5668, %v5642
          %v5685 = vadd.f32 %v5669, %v5647
          %v5686 = vadd.f32 %v5670, %v5650
          %vm5687 = vcmp.gt.f32.partialorder %v5671, 0.0
          %vm5688 = vcmp.gt.f32.partialorder %v5672, 0.0
          %vm5689 = vcmp.gt.f32.partialorder %v5673, 0.0
          %vm5690 = vcmp.gt.f32.partialorder %v5674, 0.0
          %vm5691 = vcmp.gt.f32.partialorder %v5675, 0.0
          %vm5692 = vcmp.gt.f32.partialorder %v5676, 0.0
          %vm5693 = vcmp.gt.f32.partialorder %v5677, 0.0
          %vm5694 = vcmp.gt.f32.partialorder %v5678, 0.0
          %vm5695 = vcmp.gt.f32.partialorder %v5679, 0.0
          %vm5696 = vcmp.gt.f32.partialorder %v5680, 0.0
          %vm5697 = vcmp.gt.f32.partialorder %v5681, 0.0
          %vm5698 = vcmp.gt.f32.partialorder %v5682, 0.0
          %vm5699 = vcmp.gt.f32.partialorder %v5683, 0.0
          %vm5700 = vcmp.gt.f32.partialorder %v5684, 0.0
          %vm5701 = vcmp.gt.f32.partialorder %v5685, 0.0
          %vm5702 = vcmp.gt.f32.partialorder %v5686, 0.0
          %v5703 = vmul.f32 %v5671, 0.1
          %v5704 = vmul.f32 %v5672, 0.1
          %v5705 = vmul.f32 %v5673, 0.1
          %v5706 = vmul.f32 %v5674, 0.1
          %v5707 = vmul.f32 %v5675, 0.1
          %v5708 = vmul.f32 %v5676, 0.1
          %v5709 = vmul.f32 %v5677, 0.1
          %v5710 = vmul.f32 %v5678, 0.1
          %v5711 = vmul.f32 %v5679, 0.1
          %v5712 = vmul.f32 %v5680, 0.1
          %v5713 = vmul.f32 %v5681, 0.1
          %v5714 = vmul.f32 %v5682, 0.1
          %v5715 = vmul.f32 %v5683, 0.1
          %v5716 = vmul.f32 %v5684, 0.1
          %v5717 = vmul.f32 %v5685, 0.1
          %v5718 = vmul.f32 %v5686, 0.1
          %v5719 = vsel %vm5687, %v5671, %v5703
          %v5720 = vsel %vm5688, %v5672, %v5704
          %v5721 = vsel %vm5689, %v5673, %v5705
          %v5722 = vsel %vm5690, %v5674, %v5706
          %v5723 = vsel %vm5691, %v5675, %v5707
          %v5724 = vsel %vm5692, %v5676, %v5708
          %v5725 = vsel %vm5693, %v5677, %v5709
          %v5726 = vsel %vm5694, %v5678, %v5710
          %v5727 = vsel %vm5695, %v5679, %v5711
          %v5728 = vsel %vm5696, %v5680, %v5712
          %v5729 = vsel %vm5697, %v5681, %v5713
          %v5730 = vsel %vm5698, %v5682, %v5714
          %v5731 = vsel %vm5699, %v5683, %v5715
          %v5732 = vsel %vm5700, %v5684, %v5716
          %v5733 = vsel %vm5701, %v5685, %v5717
          %v5734 = vsel %vm5702, %v5686, %v5718
          %5735 = vst.msk [vmem:[%s5654] sm:$0xff] %vm315, %v5719
          %5736 = vst.msk [vmem:[%s5654 + $0x8] sm:$0xff] %vm315, %v5720
          %5737 = vst.msk [vmem:[%s5654 + $0x10] sm:$0xff] %vm315, %v5721
          %5738 = vst.msk [vmem:[%s5654 + $0x18] sm:$0xff] %vm315, %v5722
          %5739 = vst.msk [vmem:[%s5654 + $0x20] sm:$0xff] %vm315, %v5723
          %5740 = vst.msk [vmem:[%s5654 + $0x28] sm:$0xff] %vm315, %v5724
          %5741 = vst.msk [vmem:[%s5654 + $0x30] sm:$0xff] %vm315, %v5725
          %5742 = vst.msk [vmem:[%s5654 + $0x38] sm:$0xff] %vm315, %v5726
          %5743 = vst.msk [vmem:[%s5654 + $0x40] sm:$0xff] %vm315, %v5727
          %5744 = vst.msk [vmem:[%s5654 + $0x48] sm:$0xff] %vm315, %v5728
          %5745 = vst.msk [vmem:[%s5654 + $0x50] sm:$0xff] %vm315, %v5729
          %5746 = vst.msk [vmem:[%s5654 + $0x58] sm:$0xff] %vm315, %v5730
          %5747 = vst.msk [vmem:[%s5654 + $0x60] sm:$0xff] %vm315, %v5731
          %5748 = vst.msk [vmem:[%s5654 + $0x68] sm:$0xff] %vm315, %v5732
          %5749 = vst.msk [vmem:[%s5654 + $0x70] sm:$0xff] %vm315, %v5733
          %5750 = vst.msk [vmem:[%s5654 + $0x78] sm:$0xff] %vm315, %v5734
        $region77: #{predictor_forward.1} parent=48 // loop_footer
          %s4092 = sadd.s32 1, %s4088
        $region78: #{predictor_forward.1} parent=48 // loop_footer_branch
          %4087 = sbr.rel target = $region74
        $region79: #{predictor_forward.1} parent=48 // loop_exit
          _
        %v5751 = vld [vmem:[#allocation3] sm:$0xff]
        %v5752 = vld [vmem:[#allocation3 + $0x8] sm:$0xff]
        %v5753 = vld [vmem:[#allocation3 + $0x10] sm:$0xff]
        %v5754 = vld [vmem:[#allocation3 + $0x18] sm:$0xff]
        %v5755 = vld [vmem:[#allocation3 + $0x20] sm:$0xff]
        %v5756 = vld [vmem:[#allocation3 + $0x28] sm:$0xff]
        %v5757 = vld [vmem:[#allocation3 + $0x30] sm:$0xff]
        %v5758 = vld [vmem:[#allocation3 + $0x38] sm:$0xff]
        %v5759 = vld [vmem:[#allocation3 + $0x40] sm:$0xff]
        %v5760 = vld [vmem:[#allocation3 + $0x48] sm:$0xff]
        %v5761 = vld [vmem:[#allocation3 + $0x50] sm:$0xff]
        %v5762 = vld [vmem:[#allocation3 + $0x58] sm:$0xff]
        %v5763 = vld [vmem:[#allocation3 + $0x60] sm:$0xff]
        %v5764 = vld [vmem:[#allocation3 + $0x68] sm:$0xff]
        %v5765 = vld [vmem:[#allocation3 + $0x70] sm:$0xff]
        %v5766 = vld [vmem:[#allocation3 + $0x78] sm:$0xff]
        %v5767 = vld [vmem:[#allocation3 + $0x80] sm:$0xff]
        %v5768 = vld [vmem:[#allocation3 + $0x88] sm:$0xff]
        %v5769 = vld [vmem:[#allocation3 + $0x90] sm:$0xff]
        %v5770 = vld [vmem:[#allocation3 + $0x98] sm:$0xff]
        %v5771 = vld [vmem:[#allocation3 + $0xa0] sm:$0xff]
        %v5772 = vld [vmem:[#allocation3 + $0xa8] sm:$0xff]
        %v5773 = vld [vmem:[#allocation3 + $0xb0] sm:$0xff]
        %v5774 = vld [vmem:[#allocation3 + $0xb8] sm:$0xff]
        %v5775 = vld [vmem:[#allocation3 + $0xc0] sm:$0xff]
        %v5776 = vld [vmem:[#allocation3 + $0xc8] sm:$0xff]
        %v5777 = vld [vmem:[#allocation3 + $0xd0] sm:$0xff]
        %v5778 = vld [vmem:[#allocation3 + $0xd8] sm:$0xff]
        %v5779 = vld [vmem:[#allocation3 + $0xe0] sm:$0xff]
        %v5780 = vld [vmem:[#allocation3 + $0xe8] sm:$0xff]
        %v5781 = vld [vmem:[#allocation3 + $0xf0] sm:$0xff]
        %v5782 = vld [vmem:[#allocation3 + $0xf8] sm:$0xff]
        %v5783 = vld [vmem:[#allocation2] sm:$0xff]
        %v5784 = vld [vmem:[#allocation2 + $0x8] sm:$0xff]
        %v5785 = vld [vmem:[#allocation2 + $0x10] sm:$0xff]
        %v5786 = vld [vmem:[#allocation2 + $0x18] sm:$0xff]
        %v5787 = vld [vmem:[#allocation2 + $0x20] sm:$0xff]
        %v5788 = vld [vmem:[#allocation2 + $0x28] sm:$0xff]
        %v5789 = vld [vmem:[#allocation2 + $0x30] sm:$0xff]
        %v5790 = vld [vmem:[#allocation2 + $0x38] sm:$0xff]
        %v5791 = vld [vmem:[#allocation2 + $0x40] sm:$0xff]
        %v5792 = vld [vmem:[#allocation2 + $0x48] sm:$0xff]
        %v5793 = vld [vmem:[#allocation2 + $0x50] sm:$0xff]
        %v5794 = vld [vmem:[#allocation2 + $0x58] sm:$0xff]
        %v5795 = vld [vmem:[#allocation2 + $0x60] sm:$0xff]
        %v5796 = vld [vmem:[#allocation2 + $0x68] sm:$0xff]
        %v5797 = vld [vmem:[#allocation2 + $0x70] sm:$0xff]
        %v5798 = vld [vmem:[#allocation2 + $0x78] sm:$0xff]
        %v5799 = vld [vmem:[#allocation2 + $0x80] sm:$0xff]
        %v5800 = vld [vmem:[#allocation2 + $0x88] sm:$0xff]
        %v5801 = vld [vmem:[#allocation2 + $0x90] sm:$0xff]
        %v5802 = vld [vmem:[#allocation2 + $0x98] sm:$0xff]
        %v5803 = vld [vmem:[#allocation2 + $0xa0] sm:$0xff]
        %v5804 = vld [vmem:[#allocation2 + $0xa8] sm:$0xff]
        %v5805 = vld [vmem:[#allocation2 + $0xb0] sm:$0xff]
        %v5806 = vld [vmem:[#allocation2 + $0xb8] sm:$0xff]
        %v5807 = vld [vmem:[#allocation2 + $0xc0] sm:$0xff]
        %v5808 = vld [vmem:[#allocation2 + $0xc8] sm:$0xff]
        %v5809 = vld [vmem:[#allocation2 + $0xd0] sm:$0xff]
        %v5810 = vld [vmem:[#allocation2 + $0xd8] sm:$0xff]
        %v5811 = vld [vmem:[#allocation2 + $0xe0] sm:$0xff]
        %v5812 = vld [vmem:[#allocation2 + $0xe8] sm:$0xff]
        %v5813 = vld [vmem:[#allocation2 + $0xf0] sm:$0xff]
        %v5814 = vld [vmem:[#allocation2 + $0xf8] sm:$0xff]
        %v5815 = vadd.f32 %v5751, %v5783
        %v5816 = vadd.f32 %v5752, %v5784
        %v5817 = vadd.f32 %v5753, %v5785
        %v5818 = vadd.f32 %v5754, %v5786
        %v5819 = vadd.f32 %v5755, %v5787
        %v5820 = vadd.f32 %v5756, %v5788
        %v5821 = vadd.f32 %v5757, %v5789
        %v5822 = vadd.f32 %v5758, %v5790
        %v5823 = vadd.f32 %v5759, %v5791
        %v5824 = vadd.f32 %v5760, %v5792
        %v5825 = vadd.f32 %v5761, %v5793
        %v5826 = vadd.f32 %v5762, %v5794
        %v5827 = vadd.f32 %v5763, %v5795
        %v5828 = vadd.f32 %v5764, %v5796
        %v5829 = vadd.f32 %v5765, %v5797
        %v5830 = vadd.f32 %v5766, %v5798
        %v5831 = vadd.f32 %v5767, %v5799
        %v5832 = vadd.f32 %v5768, %v5800
        %v5833 = vadd.f32 %v5769, %v5801
        %v5834 = vadd.f32 %v5770, %v5802
        %v5835 = vadd.f32 %v5771, %v5803
        %v5836 = vadd.f32 %v5772, %v5804
        %v5837 = vadd.f32 %v5773, %v5805
        %v5838 = vadd.f32 %v5774, %v5806
        %v5839 = vadd.f32 %v5775, %v5807
        %v5840 = vadd.f32 %v5776, %v5808
        %v5841 = vadd.f32 %v5777, %v5809
        %v5842 = vadd.f32 %v5778, %v5810
        %v5843 = vadd.f32 %v5779, %v5811
        %v5844 = vadd.f32 %v5780, %v5812
        %v5845 = vadd.f32 %v5781, %v5813
        %v5846 = vadd.f32 %v5782, %v5814
        %5847 = vst.msk [vmem:[#allocation3] sm:$0xff] %vm315, %v5815
        %5848 = vst.msk [vmem:[#allocation3 + $0x8] sm:$0xff] %vm315, %v5816
        %5849 = vst.msk [vmem:[#allocation3 + $0x10] sm:$0xff] %vm315, %v5817
        %5850 = vst.msk [vmem:[#allocation3 + $0x18] sm:$0xff] %vm315, %v5818
        %5851 = vst.msk [vmem:[#allocation3 + $0x20] sm:$0xff] %vm315, %v5819
        %5852 = vst.msk [vmem:[#allocation3 + $0x28] sm:$0xff] %vm315, %v5820
        %5853 = vst.msk [vmem:[#allocation3 + $0x30] sm:$0xff] %vm315, %v5821
        %5854 = vst.msk [vmem:[#allocation3 + $0x38] sm:$0xff] %vm315, %v5822
        %5855 = vst.msk [vmem:[#allocation3 + $0x40] sm:$0xff] %vm315, %v5823
        %5856 = vst.msk [vmem:[#allocation3 + $0x48] sm:$0xff] %vm315, %v5824
        %5857 = vst.msk [vmem:[#allocation3 + $0x50] sm:$0xff] %vm315, %v5825
        %5858 = vst.msk [vmem:[#allocation3 + $0x58] sm:$0xff] %vm315, %v5826
        %5859 = vst.msk [vmem:[#allocation3 + $0x60] sm:$0xff] %vm315, %v5827
        %5860 = vst.msk [vmem:[#allocation3 + $0x68] sm:$0xff] %vm315, %v5828
        %5861 = vst.msk [vmem:[#allocation3 + $0x70] sm:$0xff] %vm315, %v5829
        %5862 = vst.msk [vmem:[#allocation3 + $0x78] sm:$0xff] %vm315, %v5830
        %5863 = vst.msk [vmem:[#allocation3 + $0x80] sm:$0xff] %vm315, %v5831
        %5864 = vst.msk [vmem:[#allocation3 + $0x88] sm:$0xff] %vm315, %v5832
        %5865 = vst.msk [vmem:[#allocation3 + $0x90] sm:$0xff] %vm315, %v5833
        %5866 = vst.msk [vmem:[#allocation3 + $0x98] sm:$0xff] %vm315, %v5834
        %5867 = vst.msk [vmem:[#allocation3 + $0xa0] sm:$0xff] %vm315, %v5835
        %5868 = vst.msk [vmem:[#allocation3 + $0xa8] sm:$0xff] %vm315, %v5836
        %5869 = vst.msk [vmem:[#allocation3 + $0xb0] sm:$0xff] %vm315, %v5837
        %5870 = vst.msk [vmem:[#allocation3 + $0xb8] sm:$0xff] %vm315, %v5838
        %5871 = vst.msk [vmem:[#allocation3 + $0xc0] sm:$0xff] %vm315, %v5839
        %5872 = vst.msk [vmem:[#allocation3 + $0xc8] sm:$0xff] %vm315, %v5840
        %5873 = vst.msk [vmem:[#allocation3 + $0xd0] sm:$0xff] %vm315, %v5841
        %5874 = vst.msk [vmem:[#allocation3 + $0xd8] sm:$0xff] %vm315, %v5842
        %5875 = vst.msk [vmem:[#allocation3 + $0xe0] sm:$0xff] %vm315, %v5843
        %5876 = vst.msk [vmem:[#allocation3 + $0xe8] sm:$0xff] %vm315, %v5844
        %5877 = vst.msk [vmem:[#allocation3 + $0xf0] sm:$0xff] %vm315, %v5845
        %5878 = vst.msk [vmem:[#allocation3 + $0xf8] sm:$0xff] %vm315, %v5846
      $region49: #{predictor_forward.1} parent=43 // loop_footer
        %s1905 = sadd.s32 1, %s1901
      $region50: #{predictor_forward.1} parent=43 // loop_footer_branch
        %1900 = sbr.rel target = $region46
      $region51: #{predictor_forward.1} parent=43 // loop_exit
        _
      %v5879 = vld [vmem:[#allocation3] sm:$0xff]
      %v5880 = vld [vmem:[#allocation3 + $0x8] sm:$0xff]
      %v5881 = vld [vmem:[#allocation3 + $0x10] sm:$0xff]
      %v5882 = vld [vmem:[#allocation3 + $0x18] sm:$0xff]
      %v5883 = vld [vmem:[#allocation3 + $0x20] sm:$0xff]
      %v5884 = vld [vmem:[#allocation3 + $0x28] sm:$0xff]
      %v5885 = vld [vmem:[#allocation3 + $0x30] sm:$0xff]
      %v5886 = vld [vmem:[#allocation3 + $0x38] sm:$0xff]
      %v5887 = vld [vmem:[#allocation3 + $0x40] sm:$0xff]
      %v5888 = vld [vmem:[#allocation3 + $0x48] sm:$0xff]
      %v5889 = vld [vmem:[#allocation3 + $0x50] sm:$0xff]
      %v5890 = vld [vmem:[#allocation3 + $0x58] sm:$0xff]
      %v5891 = vld [vmem:[#allocation3 + $0x60] sm:$0xff]
      %v5892 = vld [vmem:[#allocation3 + $0x68] sm:$0xff]
      %v5893 = vld [vmem:[#allocation3 + $0x70] sm:$0xff]
      %v5894 = vld [vmem:[#allocation3 + $0x78] sm:$0xff]
      %v5895 = vld [vmem:[#allocation3 + $0x80] sm:$0xff]
      %v5896 = vld [vmem:[#allocation3 + $0x88] sm:$0xff]
      %v5897 = vld [vmem:[#allocation3 + $0x90] sm:$0xff]
      %v5898 = vld [vmem:[#allocation3 + $0x98] sm:$0xff]
      %v5899 = vld [vmem:[#allocation3 + $0xa0] sm:$0xff]
      %v5900 = vld [vmem:[#allocation3 + $0xa8] sm:$0xff]
      %v5901 = vld [vmem:[#allocation3 + $0xb0] sm:$0xff]
      %v5902 = vld [vmem:[#allocation3 + $0xb8] sm:$0xff]
      %v5903 = vld [vmem:[#allocation3 + $0xc0] sm:$0xff]
      %v5904 = vld [vmem:[#allocation3 + $0xc8] sm:$0xff]
      %v5905 = vld [vmem:[#allocation3 + $0xd0] sm:$0xff]
      %v5906 = vld [vmem:[#allocation3 + $0xd8] sm:$0xff]
      %v5907 = vld [vmem:[#allocation3 + $0xe0] sm:$0xff]
      %v5908 = vld [vmem:[#allocation3 + $0xe8] sm:$0xff]
      %v5909 = vld [vmem:[#allocation3 + $0xf0] sm:$0xff]
      %v5910 = vld [vmem:[#allocation3 + $0xf8] sm:$0xff]
      %s5911 = scalar_lea.vmem [#allocation5], 24
      %5912 = vst.msk [vmem:[%s5911 + $0x1] sm:$0xff] %vm315, %v5879
      %5913 = vst.msk [vmem:[%s5911 + $0x9] sm:$0xff] %vm315, %v5880
      %5914 = vst.msk [vmem:[%s5911 + $0x19] sm:$0xff] %vm315, %v5881
      %5915 = vst.msk [vmem:[%s5911 + $0x21] sm:$0xff] %vm315, %v5882
      %5916 = vst.msk [vmem:[%s5911 + $0x31] sm:$0xff] %vm315, %v5883
      %5917 = vst.msk [vmem:[%s5911 + $0x39] sm:$0xff] %vm315, %v5884
      %5918 = vst.msk [vmem:[%s5911 + $0x49] sm:$0xff] %vm315, %v5885
      %5919 = vst.msk [vmem:[%s5911 + $0x51] sm:$0xff] %vm315, %v5886
      %5920 = vst.msk [vmem:[%s5911 + $0x61] sm:$0xff] %vm315, %v5887
      %5921 = vst.msk [vmem:[%s5911 + $0x69] sm:$0xff] %vm315, %v5888
      %5922 = vst.msk [vmem:[%s5911 + $0x79] sm:$0xff] %vm315, %v5889
      %5923 = vst.msk [vmem:[%s5911 + $0x81] sm:$0xff] %vm315, %v5890
      %5924 = vst.msk [vmem:[%s5911 + $0x91] sm:$0xff] %vm315, %v5891
      %5925 = vst.msk [vmem:[%s5911 + $0x99] sm:$0xff] %vm315, %v5892
      %5926 = vst.msk [vmem:[%s5911 + $0xa9] sm:$0xff] %vm315, %v5893
      %5927 = vst.msk [vmem:[%s5911 + $0xb1] sm:$0xff] %vm315, %v5894
      %5928 = vst.msk [vmem:[%s5911 + $0xc1] sm:$0xff] %vm315, %v5895
      %5929 = vst.msk [vmem:[%s5911 + $0xc9] sm:$0xff] %vm315, %v5896
      %5930 = vst.msk [vmem:[%s5911 + $0xd9] sm:$0xff] %vm315, %v5897
      %5931 = vst.msk [vmem:[%s5911 + $0xe1] sm:$0xff] %vm315, %v5898
      %5932 = vst.msk [vmem:[%s5911 + $0xf1] sm:$0xff] %vm315, %v5899
      %5933 = vst.msk [vmem:[%s5911 + $0xf9] sm:$0xff] %vm315, %v5900
      %5934 = vst.msk [vmem:[%s5911 + $0x109] sm:$0xff] %vm315, %v5901
      %5935 = vst.msk [vmem:[%s5911 + $0x111] sm:$0xff] %vm315, %v5902
      %5936 = vst.msk [vmem:[%s5911 + $0x121] sm:$0xff] %vm315, %v5903
      %5937 = vst.msk [vmem:[%s5911 + $0x129] sm:$0xff] %vm315, %v5904
      %5938 = vst.msk [vmem:[%s5911 + $0x139] sm:$0xff] %vm315, %v5905
      %5939 = vst.msk [vmem:[%s5911 + $0x141] sm:$0xff] %vm315, %v5906
      %5940 = vst.msk [vmem:[%s5911 + $0x151] sm:$0xff] %vm315, %v5907
      %5941 = vst.msk [vmem:[%s5911 + $0x159] sm:$0xff] %vm315, %v5908
      %5942 = vst.msk [vmem:[%s5911 + $0x169] sm:$0xff] %vm315, %v5909
      %5943 = vst.msk [vmem:[%s5911 + $0x171] sm:$0xff] %vm315, %v5910
      %v5944 = vld [vmem:[#allocation5] sm:$0xff]
      %v5945 = vld [vmem:[#allocation5 + $0x8] sm:$0xff]
      %v5946 = vld [vmem:[#allocation5 + $0x18] sm:$0xff]
      %v5947 = vld [vmem:[#allocation5 + $0x20] sm:$0xff]
      %v5948 = vld [vmem:[#allocation5 + $0x30] sm:$0xff]
      %v5949 = vld [vmem:[#allocation5 + $0x38] sm:$0xff]
      %v5950 = vld [vmem:[#allocation5 + $0x48] sm:$0xff]
      %v5951 = vld [vmem:[#allocation5 + $0x50] sm:$0xff]
      %v5952 = vld [vmem:[#allocation5 + $0x60] sm:$0xff]
      %v5953 = vld [vmem:[#allocation5 + $0x68] sm:$0xff]
      %v5954 = vld [vmem:[#allocation5 + $0x78] sm:$0xff]
      %v5955 = vld [vmem:[#allocation5 + $0x80] sm:$0xff]
      %v5956 = vld [vmem:[#allocation5 + $0x90] sm:$0xff]
      %v5957 = vld [vmem:[#allocation5 + $0x98] sm:$0xff]
      %v5958 = vld [vmem:[#allocation5 + $0xa8] sm:$0xff]
      %v5959 = vld [vmem:[#allocation5 + $0xb0] sm:$0xff]
      %v5960 = vld [vmem:[#allocation5 + $0xc0] sm:$0xff]
      %v5961 = vld [vmem:[#allocation5 + $0xc8] sm:$0xff]
      %v5962 = vld [vmem:[#allocation5 + $0xd8] sm:$0xff]
      %v5963 = vld [vmem:[#allocation5 + $0xe0] sm:$0xff]
      %v5964 = vld [vmem:[#allocation5 + $0xf0] sm:$0xff]
      %v5965 = vld [vmem:[#allocation5 + $0xf8] sm:$0xff]
      %v5966 = vld [vmem:[#allocation5 + $0x108] sm:$0xff]
      %v5967 = vld [vmem:[#allocation5 + $0x110] sm:$0xff]
      %v5968 = vld [vmem:[#allocation5 + $0x120] sm:$0xff]
      %v5969 = vld [vmem:[#allocation5 + $0x128] sm:$0xff]
      %v5970 = vld [vmem:[#allocation5 + $0x138] sm:$0xff]
      %v5971 = vld [vmem:[#allocation5 + $0x140] sm:$0xff]
      %v5972 = vld [vmem:[#allocation5 + $0x150] sm:$0xff]
      %v5973 = vld [vmem:[#allocation5 + $0x158] sm:$0xff]
      %v5974 = vld [vmem:[#allocation5 + $0x168] sm:$0xff]
      %v5975 = vld [vmem:[#allocation5 + $0x170] sm:$0xff]
      %v5976 = vld [vmem:[%s2] sm:$0x1]
      %v5978 = vlaneseq
      %v5979 = vshrl.u32 %v5978, 7
      %v5980 = vsub.s32 0, %v5979
      %v5981 = vrot.slane %v5976, %v5980
      %v5983 = vmul.f32 %v5944, %v5981
      %v5984 = vmul.f32 %v5945, %v5981
      %v5985 = vmul.f32 %v5946, %v5981
      %v5986 = vmul.f32 %v5947, %v5981
      %v5987 = vmul.f32 %v5948, %v5981
      %v5988 = vmul.f32 %v5949, %v5981
      %v5989 = vmul.f32 %v5950, %v5981
      %v5990 = vmul.f32 %v5951, %v5981
      %v5991 = vmul.f32 %v5952, %v5981
      %v5992 = vmul.f32 %v5953, %v5981
      %v5993 = vmul.f32 %v5954, %v5981
      %v5994 = vmul.f32 %v5955, %v5981
      %v5995 = vmul.f32 %v5956, %v5981
      %v5996 = vmul.f32 %v5957, %v5981
      %v5997 = vmul.f32 %v5958, %v5981
      %v5998 = vmul.f32 %v5959, %v5981
      %v5999 = vmul.f32 %v5960, %v5981
      %v6000 = vmul.f32 %v5961, %v5981
      %v6001 = vmul.f32 %v5962, %v5981
      %v6002 = vmul.f32 %v5963, %v5981
      %v6003 = vmul.f32 %v5964, %v5981
      %v6004 = vmul.f32 %v5965, %v5981
      %v6005 = vmul.f32 %v5966, %v5981
      %v6006 = vmul.f32 %v5967, %v5981
      %v6007 = vmul.f32 %v5968, %v5981
      %v6008 = vmul.f32 %v5969, %v5981
      %v6009 = vmul.f32 %v5970, %v5981
      %v6010 = vmul.f32 %v5971, %v5981
      %v6011 = vmul.f32 %v5972, %v5981
      %v6012 = vmul.f32 %v5973, %v5981
      %v6013 = vmul.f32 %v5974, %v5981
      %v6014 = vmul.f32 %v5975, %v5981
      %v6015 = vsel %vm315, %v5983, 0.0
      %6016 = vadd.xlane.f32.xlu0 %v6015
      %v6017 = vpop.xlane.xlu0 %6016
      %v6018 = vsel %vm315, %v5984, 0.0
      %6019 = vadd.xlane.f32.xlu0 %v6018
      %v6020 = vpop.xlane.xlu0 %6019
      %v6021 = vsel %vm315, %v5985, 0.0
      %6022 = vadd.xlane.f32.xlu0 %v6021
      %v6023 = vpop.xlane.xlu0 %6022
      %v6024 = vsel %vm315, %v5986, 0.0
      %6025 = vadd.xlane.f32.xlu0 %v6024
      %v6026 = vpop.xlane.xlu0 %6025
      %v6027 = vsel %vm315, %v5987, 0.0
      %6028 = vadd.xlane.f32.xlu0 %v6027
      %v6029 = vpop.xlane.xlu0 %6028
      %v6030 = vsel %vm315, %v5988, 0.0
      %6031 = vadd.xlane.f32.xlu0 %v6030
      %v6032 = vpop.xlane.xlu0 %6031
      %v6033 = vsel %vm315, %v5989, 0.0
      %6034 = vadd.xlane.f32.xlu0 %v6033
      %v6035 = vpop.xlane.xlu0 %6034
      %v6036 = vsel %vm315, %v5990, 0.0
      %6037 = vadd.xlane.f32.xlu0 %v6036
      %v6038 = vpop.xlane.xlu0 %6037
      %v6039 = vsel %vm315, %v5991, 0.0
      %6040 = vadd.xlane.f32.xlu0 %v6039
      %v6041 = vpop.xlane.xlu0 %6040
      %v6042 = vsel %vm315, %v5992, 0.0
      %6043 = vadd.xlane.f32.xlu0 %v6042
      %v6044 = vpop.xlane.xlu0 %6043
      %v6045 = vsel %vm315, %v5993, 0.0
      %6046 = vadd.xlane.f32.xlu0 %v6045
      %v6047 = vpop.xlane.xlu0 %6046
      %v6048 = vsel %vm315, %v5994, 0.0
      %6049 = vadd.xlane.f32.xlu0 %v6048
      %v6050 = vpop.xlane.xlu0 %6049
      %v6051 = vsel %vm315, %v5995, 0.0
      %6052 = vadd.xlane.f32.xlu0 %v6051
      %v6053 = vpop.xlane.xlu0 %6052
      %v6054 = vsel %vm315, %v5996, 0.0
      %6055 = vadd.xlane.f32.xlu0 %v6054
      %v6056 = vpop.xlane.xlu0 %6055
      %v6057 = vsel %vm315, %v5997, 0.0
      %6058 = vadd.xlane.f32.xlu0 %v6057
      %v6059 = vpop.xlane.xlu0 %6058
      %v6060 = vsel %vm315, %v5998, 0.0
      %6061 = vadd.xlane.f32.xlu0 %v6060
      %v6062 = vpop.xlane.xlu0 %6061
      %v6063 = vsel %vm315, %v5999, 0.0
      %6064 = vadd.xlane.f32.xlu0 %v6063
      %v6065 = vpop.xlane.xlu0 %6064
      %v6066 = vsel %vm315, %v6000, 0.0
      %6067 = vadd.xlane.f32.xlu0 %v6066
      %v6068 = vpop.xlane.xlu0 %6067
      %v6069 = vsel %vm315, %v6001, 0.0
      %6070 = vadd.xlane.f32.xlu0 %v6069
      %v6071 = vpop.xlane.xlu0 %6070
      %v6072 = vsel %vm315, %v6002, 0.0
      %6073 = vadd.xlane.f32.xlu0 %v6072
      %v6074 = vpop.xlane.xlu0 %6073
      %v6075 = vsel %vm315, %v6003, 0.0
      %6076 = vadd.xlane.f32.xlu0 %v6075
      %v6077 = vpop.xlane.xlu0 %6076
      %v6078 = vsel %vm315, %v6004, 0.0
      %6079 = vadd.xlane.f32.xlu0 %v6078
      %v6080 = vpop.xlane.xlu0 %6079
      %v6081 = vsel %vm315, %v6005, 0.0
      %6082 = vadd.xlane.f32.xlu0 %v6081
      %v6083 = vpop.xlane.xlu0 %6082
      %v6084 = vsel %vm315, %v6006, 0.0
      %6085 = vadd.xlane.f32.xlu0 %v6084
      %v6086 = vpop.xlane.xlu0 %6085
      %v6087 = vsel %vm315, %v6007, 0.0
      %6088 = vadd.xlane.f32.xlu0 %v6087
      %v6089 = vpop.xlane.xlu0 %6088
      %v6090 = vsel %vm315, %v6008, 0.0
      %6091 = vadd.xlane.f32.xlu0 %v6090
      %v6092 = vpop.xlane.xlu0 %6091
      %v6093 = vsel %vm315, %v6009, 0.0
      %6094 = vadd.xlane.f32.xlu0 %v6093
      %v6095 = vpop.xlane.xlu0 %6094
      %v6096 = vsel %vm315, %v6010, 0.0
      %6097 = vadd.xlane.f32.xlu0 %v6096
      %v6098 = vpop.xlane.xlu0 %6097
      %v6099 = vsel %vm315, %v6011, 0.0
      %6100 = vadd.xlane.f32.xlu0 %v6099
      %v6101 = vpop.xlane.xlu0 %6100
      %v6102 = vsel %vm315, %v6012, 0.0
      %6103 = vadd.xlane.f32.xlu0 %v6102
      %v6104 = vpop.xlane.xlu0 %6103
      %v6105 = vsel %vm315, %v6013, 0.0
      %6106 = vadd.xlane.f32.xlu0 %v6105
      %v6107 = vpop.xlane.xlu0 %6106
      %v6108 = vsel %vm315, %v6014, 0.0
      %6109 = vadd.xlane.f32.xlu0 %v6108
      %v6110 = vpop.xlane.xlu0 %6109
      %v6111 = vadd.f32 %v6017, 0.0
      %v6112 = vadd.f32 %v6020, 0.0
      %v6113 = vadd.f32 %v6023, 0.0
      %v6114 = vadd.f32 %v6026, 0.0
      %v6115 = vadd.f32 %v6029, 0.0
      %v6116 = vadd.f32 %v6032, 0.0
      %v6117 = vadd.f32 %v6035, 0.0
      %v6118 = vadd.f32 %v6038, 0.0
      %v6119 = vadd.f32 %v6041, 0.0
      %v6120 = vadd.f32 %v6044, 0.0
      %v6121 = vadd.f32 %v6047, 0.0
      %v6122 = vadd.f32 %v6050, 0.0
      %v6123 = vadd.f32 %v6053, 0.0
      %v6124 = vadd.f32 %v6056, 0.0
      %v6125 = vadd.f32 %v6059, 0.0
      %v6126 = vadd.f32 %v6062, 0.0
      %v6127 = vadd.f32 %v6065, 0.0
      %v6128 = vadd.f32 %v6068, 0.0
      %v6129 = vadd.f32 %v6071, 0.0
      %v6130 = vadd.f32 %v6074, 0.0
      %v6131 = vadd.f32 %v6077, 0.0
      %v6132 = vadd.f32 %v6080, 0.0
      %v6133 = vadd.f32 %v6083, 0.0
      %v6134 = vadd.f32 %v6086, 0.0
      %v6135 = vadd.f32 %v6089, 0.0
      %v6136 = vadd.f32 %v6092, 0.0
      %v6137 = vadd.f32 %v6095, 0.0
      %v6138 = vadd.f32 %v6098, 0.0
      %v6139 = vadd.f32 %v6101, 0.0
      %v6140 = vadd.f32 %v6104, 0.0
      %v6141 = vadd.f32 %v6107, 0.0
      %v6142 = vadd.f32 %v6110, 0.0
      %v6143 = vld [vmem:[#allocation5 + $0x1] sm:$0xff]
      %v6144 = vld [vmem:[#allocation5 + $0x9] sm:$0xff]
      %v6145 = vld [vmem:[#allocation5 + $0x19] sm:$0xff]
      %v6146 = vld [vmem:[#allocation5 + $0x21] sm:$0xff]
      %v6147 = vld [vmem:[#allocation5 + $0x31] sm:$0xff]
      %v6148 = vld [vmem:[#allocation5 + $0x39] sm:$0xff]
      %v6149 = vld [vmem:[#allocation5 + $0x49] sm:$0xff]
      %v6150 = vld [vmem:[#allocation5 + $0x51] sm:$0xff]
      %v6151 = vld [vmem:[#allocation5 + $0x61] sm:$0xff]
      %v6152 = vld [vmem:[#allocation5 + $0x69] sm:$0xff]
      %v6153 = vld [vmem:[#allocation5 + $0x79] sm:$0xff]
      %v6154 = vld [vmem:[#allocation5 + $0x81] sm:$0xff]
      %v6155 = vld [vmem:[#allocation5 + $0x91] sm:$0xff]
      %v6156 = vld [vmem:[#allocation5 + $0x99] sm:$0xff]
      %v6157 = vld [vmem:[#allocation5 + $0xa9] sm:$0xff]
      %v6158 = vld [vmem:[#allocation5 + $0xb1] sm:$0xff]
      %v6159 = vld [vmem:[#allocation5 + $0xc1] sm:$0xff]
      %v6160 = vld [vmem:[#allocation5 + $0xc9] sm:$0xff]
      %v6161 = vld [vmem:[#allocation5 + $0xd9] sm:$0xff]
      %v6162 = vld [vmem:[#allocation5 + $0xe1] sm:$0xff]
      %v6163 = vld [vmem:[#allocation5 + $0xf1] sm:$0xff]
      %v6164 = vld [vmem:[#allocation5 + $0xf9] sm:$0xff]
      %v6165 = vld [vmem:[#allocation5 + $0x109] sm:$0xff]
      %v6166 = vld [vmem:[#allocation5 + $0x111] sm:$0xff]
      %v6167 = vld [vmem:[#allocation5 + $0x121] sm:$0xff]
      %v6168 = vld [vmem:[#allocation5 + $0x129] sm:$0xff]
      %v6169 = vld [vmem:[#allocation5 + $0x139] sm:$0xff]
      %v6170 = vld [vmem:[#allocation5 + $0x141] sm:$0xff]
      %v6171 = vld [vmem:[#allocation5 + $0x151] sm:$0xff]
      %v6172 = vld [vmem:[#allocation5 + $0x159] sm:$0xff]
      %v6173 = vld [vmem:[#allocation5 + $0x169] sm:$0xff]
      %v6174 = vld [vmem:[#allocation5 + $0x171] sm:$0xff]
      %s6175 = scalar_lea.vmem %s2, 1
      %v6176 = vld [vmem:[%s6175] sm:$0x1]
      %v6178 = vlaneseq
      %v6179 = vshrl.u32 %v6178, 7
      %v6180 = vsub.s32 0, %v6179
      %v6181 = vrot.slane %v6176, %v6180
      %v6183 = vmul.f32 %v6143, %v6181
      %v6184 = vmul.f32 %v6144, %v6181
      %v6185 = vmul.f32 %v6145, %v6181
      %v6186 = vmul.f32 %v6146, %v6181
      %v6187 = vmul.f32 %v6147, %v6181
      %v6188 = vmul.f32 %v6148, %v6181
      %v6189 = vmul.f32 %v6149, %v6181
      %v6190 = vmul.f32 %v6150, %v6181
      %v6191 = vmul.f32 %v6151, %v6181
      %v6192 = vmul.f32 %v6152, %v6181
      %v6193 = vmul.f32 %v6153, %v6181
      %v6194 = vmul.f32 %v6154, %v6181
      %v6195 = vmul.f32 %v6155, %v6181
      %v6196 = vmul.f32 %v6156, %v6181
      %v6197 = vmul.f32 %v6157, %v6181
      %v6198 = vmul.f32 %v6158, %v6181
      %v6199 = vmul.f32 %v6159, %v6181
      %v6200 = vmul.f32 %v6160, %v6181
      %v6201 = vmul.f32 %v6161, %v6181
      %v6202 = vmul.f32 %v6162, %v6181
      %v6203 = vmul.f32 %v6163, %v6181
      %v6204 = vmul.f32 %v6164, %v6181
      %v6205 = vmul.f32 %v6165, %v6181
      %v6206 = vmul.f32 %v6166, %v6181
      %v6207 = vmul.f32 %v6167, %v6181
      %v6208 = vmul.f32 %v6168, %v6181
      %v6209 = vmul.f32 %v6169, %v6181
      %v6210 = vmul.f32 %v6170, %v6181
      %v6211 = vmul.f32 %v6171, %v6181
      %v6212 = vmul.f32 %v6172, %v6181
      %v6213 = vmul.f32 %v6173, %v6181
      %v6214 = vmul.f32 %v6174, %v6181
      %v6215 = vsel %vm315, %v6183, 0.0
      %6216 = vadd.xlane.f32.xlu0 %v6215
      %v6217 = vpop.xlane.xlu0 %6216
      %v6218 = vsel %vm315, %v6184, 0.0
      %6219 = vadd.xlane.f32.xlu0 %v6218
      %v6220 = vpop.xlane.xlu0 %6219
      %v6221 = vsel %vm315, %v6185, 0.0
      %6222 = vadd.xlane.f32.xlu0 %v6221
      %v6223 = vpop.xlane.xlu0 %6222
      %v6224 = vsel %vm315, %v6186, 0.0
      %6225 = vadd.xlane.f32.xlu0 %v6224
      %v6226 = vpop.xlane.xlu0 %6225
      %v6227 = vsel %vm315, %v6187, 0.0
      %6228 = vadd.xlane.f32.xlu0 %v6227
      %v6229 = vpop.xlane.xlu0 %6228
      %v6230 = vsel %vm315, %v6188, 0.0
      %6231 = vadd.xlane.f32.xlu0 %v6230
      %v6232 = vpop.xlane.xlu0 %6231
      %v6233 = vsel %vm315, %v6189, 0.0
      %6234 = vadd.xlane.f32.xlu0 %v6233
      %v6235 = vpop.xlane.xlu0 %6234
      %v6236 = vsel %vm315, %v6190, 0.0
      %6237 = vadd.xlane.f32.xlu0 %v6236
      %v6238 = vpop.xlane.xlu0 %6237
      %v6239 = vsel %vm315, %v6191, 0.0
      %6240 = vadd.xlane.f32.xlu0 %v6239
      %v6241 = vpop.xlane.xlu0 %6240
      %v6242 = vsel %vm315, %v6192, 0.0
      %6243 = vadd.xlane.f32.xlu0 %v6242
      %v6244 = vpop.xlane.xlu0 %6243
      %v6245 = vsel %vm315, %v6193, 0.0
      %6246 = vadd.xlane.f32.xlu0 %v6245
      %v6247 = vpop.xlane.xlu0 %6246
      %v6248 = vsel %vm315, %v6194, 0.0
      %6249 = vadd.xlane.f32.xlu0 %v6248
      %v6250 = vpop.xlane.xlu0 %6249
      %v6251 = vsel %vm315, %v6195, 0.0
      %6252 = vadd.xlane.f32.xlu0 %v6251
      %v6253 = vpop.xlane.xlu0 %6252
      %v6254 = vsel %vm315, %v6196, 0.0
      %6255 = vadd.xlane.f32.xlu0 %v6254
      %v6256 = vpop.xlane.xlu0 %6255
      %v6257 = vsel %vm315, %v6197, 0.0
      %6258 = vadd.xlane.f32.xlu0 %v6257
      %v6259 = vpop.xlane.xlu0 %6258
      %v6260 = vsel %vm315, %v6198, 0.0
      %6261 = vadd.xlane.f32.xlu0 %v6260
      %v6262 = vpop.xlane.xlu0 %6261
      %v6263 = vsel %vm315, %v6199, 0.0
      %6264 = vadd.xlane.f32.xlu0 %v6263
      %v6265 = vpop.xlane.xlu0 %6264
      %v6266 = vsel %vm315, %v6200, 0.0
      %6267 = vadd.xlane.f32.xlu0 %v6266
      %v6268 = vpop.xlane.xlu0 %6267
      %v6269 = vsel %vm315, %v6201, 0.0
      %6270 = vadd.xlane.f32.xlu0 %v6269
      %v6271 = vpop.xlane.xlu0 %6270
      %v6272 = vsel %vm315, %v6202, 0.0
      %6273 = vadd.xlane.f32.xlu0 %v6272
      %v6274 = vpop.xlane.xlu0 %6273
      %v6275 = vsel %vm315, %v6203, 0.0
      %6276 = vadd.xlane.f32.xlu0 %v6275
      %v6277 = vpop.xlane.xlu0 %6276
      %v6278 = vsel %vm315, %v6204, 0.0
      %6279 = vadd.xlane.f32.xlu0 %v6278
      %v6280 = vpop.xlane.xlu0 %6279
      %v6281 = vsel %vm315, %v6205, 0.0
      %6282 = vadd.xlane.f32.xlu0 %v6281
      %v6283 = vpop.xlane.xlu0 %6282
      %v6284 = vsel %vm315, %v6206, 0.0
      %6285 = vadd.xlane.f32.xlu0 %v6284
      %v6286 = vpop.xlane.xlu0 %6285
      %v6287 = vsel %vm315, %v6207, 0.0
      %6288 = vadd.xlane.f32.xlu0 %v6287
      %v6289 = vpop.xlane.xlu0 %6288
      %v6290 = vsel %vm315, %v6208, 0.0
      %6291 = vadd.xlane.f32.xlu0 %v6290
      %v6292 = vpop.xlane.xlu0 %6291
      %v6293 = vsel %vm315, %v6209, 0.0
      %6294 = vadd.xlane.f32.xlu0 %v6293
      %v6295 = vpop.xlane.xlu0 %6294
      %v6296 = vsel %vm315, %v6210, 0.0
      %6297 = vadd.xlane.f32.xlu0 %v6296
      %v6298 = vpop.xlane.xlu0 %6297
      %v6299 = vsel %vm315, %v6211, 0.0
      %6300 = vadd.xlane.f32.xlu0 %v6299
      %v6301 = vpop.xlane.xlu0 %6300
      %v6302 = vsel %vm315, %v6212, 0.0
      %6303 = vadd.xlane.f32.xlu0 %v6302
      %v6304 = vpop.xlane.xlu0 %6303
      %v6305 = vsel %vm315, %v6213, 0.0
      %6306 = vadd.xlane.f32.xlu0 %v6305
      %v6307 = vpop.xlane.xlu0 %6306
      %v6308 = vsel %vm315, %v6214, 0.0
      %6309 = vadd.xlane.f32.xlu0 %v6308
      %v6310 = vpop.xlane.xlu0 %6309
      %v6311 = vadd.f32 %v6111, %v6217
      %v6312 = vadd.f32 %v6112, %v6220
      %v6313 = vadd.f32 %v6113, %v6223
      %v6314 = vadd.f32 %v6114, %v6226
      %v6315 = vadd.f32 %v6115, %v6229
      %v6316 = vadd.f32 %v6116, %v6232
      %v6317 = vadd.f32 %v6117, %v6235
      %v6318 = vadd.f32 %v6118, %v6238
      %v6319 = vadd.f32 %v6119, %v6241
      %v6320 = vadd.f32 %v6120, %v6244
      %v6321 = vadd.f32 %v6121, %v6247
      %v6322 = vadd.f32 %v6122, %v6250
      %v6323 = vadd.f32 %v6123, %v6253
      %v6324 = vadd.f32 %v6124, %v6256
      %v6325 = vadd.f32 %v6125, %v6259
      %v6326 = vadd.f32 %v6126, %v6262
      %v6327 = vadd.f32 %v6127, %v6265
      %v6328 = vadd.f32 %v6128, %v6268
      %v6329 = vadd.f32 %v6129, %v6271
      %v6330 = vadd.f32 %v6130, %v6274
      %v6331 = vadd.f32 %v6131, %v6277
      %v6332 = vadd.f32 %v6132, %v6280
      %v6333 = vadd.f32 %v6133, %v6283
      %v6334 = vadd.f32 %v6134, %v6286
      %v6335 = vadd.f32 %v6135, %v6289
      %v6336 = vadd.f32 %v6136, %v6292
      %v6337 = vadd.f32 %v6137, %v6295
      %v6338 = vadd.f32 %v6138, %v6298
      %v6339 = vadd.f32 %v6139, %v6301
      %v6340 = vadd.f32 %v6140, %v6304
      %v6341 = vadd.f32 %v6141, %v6307
      %v6342 = vadd.f32 %v6142, %v6310
      %v6343 = vld [vmem:[#allocation5 + $0x2] sm:$0xff]
      %v6344 = vld [vmem:[#allocation5 + $0xa] sm:$0xff]
      %v6345 = vld [vmem:[#allocation5 + $0x1a] sm:$0xff]
      %v6346 = vld [vmem:[#allocation5 + $0x22] sm:$0xff]
      %v6347 = vld [vmem:[#allocation5 + $0x32] sm:$0xff]
      %v6348 = vld [vmem:[#allocation5 + $0x3a] sm:$0xff]
      %v6349 = vld [vmem:[#allocation5 + $0x4a] sm:$0xff]
      %v6350 = vld [vmem:[#allocation5 + $0x52] sm:$0xff]
      %v6351 = vld [vmem:[#allocation5 + $0x62] sm:$0xff]
      %v6352 = vld [vmem:[#allocation5 + $0x6a] sm:$0xff]
      %v6353 = vld [vmem:[#allocation5 + $0x7a] sm:$0xff]
      %v6354 = vld [vmem:[#allocation5 + $0x82] sm:$0xff]
      %v6355 = vld [vmem:[#allocation5 + $0x92] sm:$0xff]
      %v6356 = vld [vmem:[#allocation5 + $0x9a] sm:$0xff]
      %v6357 = vld [vmem:[#allocation5 + $0xaa] sm:$0xff]
      %v6358 = vld [vmem:[#allocation5 + $0xb2] sm:$0xff]
      %v6359 = vld [vmem:[#allocation5 + $0xc2] sm:$0xff]
      %v6360 = vld [vmem:[#allocation5 + $0xca] sm:$0xff]
      %v6361 = vld [vmem:[#allocation5 + $0xda] sm:$0xff]
      %v6362 = vld [vmem:[#allocation5 + $0xe2] sm:$0xff]
      %v6363 = vld [vmem:[#allocation5 + $0xf2] sm:$0xff]
      %v6364 = vld [vmem:[#allocation5 + $0xfa] sm:$0xff]
      %v6365 = vld [vmem:[#allocation5 + $0x10a] sm:$0xff]
      %v6366 = vld [vmem:[#allocation5 + $0x112] sm:$0xff]
      %v6367 = vld [vmem:[#allocation5 + $0x122] sm:$0xff]
      %v6368 = vld [vmem:[#allocation5 + $0x12a] sm:$0xff]
      %v6369 = vld [vmem:[#allocation5 + $0x13a] sm:$0xff]
      %v6370 = vld [vmem:[#allocation5 + $0x142] sm:$0xff]
      %v6371 = vld [vmem:[#allocation5 + $0x152] sm:$0xff]
      %v6372 = vld [vmem:[#allocation5 + $0x15a] sm:$0xff]
      %v6373 = vld [vmem:[#allocation5 + $0x16a] sm:$0xff]
      %v6374 = vld [vmem:[#allocation5 + $0x172] sm:$0xff]
      %s6375 = scalar_lea.vmem %s2, 2
      %v6376 = vld [vmem:[%s6375] sm:$0x1]
      %v6378 = vlaneseq
      %v6379 = vshrl.u32 %v6378, 7
      %v6380 = vsub.s32 0, %v6379
      %v6381 = vrot.slane %v6376, %v6380
      %v6383 = vmul.f32 %v6343, %v6381
      %v6384 = vmul.f32 %v6344, %v6381
      %v6385 = vmul.f32 %v6345, %v6381
      %v6386 = vmul.f32 %v6346, %v6381
      %v6387 = vmul.f32 %v6347, %v6381
      %v6388 = vmul.f32 %v6348, %v6381
      %v6389 = vmul.f32 %v6349, %v6381
      %v6390 = vmul.f32 %v6350, %v6381
      %v6391 = vmul.f32 %v6351, %v6381
      %v6392 = vmul.f32 %v6352, %v6381
      %v6393 = vmul.f32 %v6353, %v6381
      %v6394 = vmul.f32 %v6354, %v6381
      %v6395 = vmul.f32 %v6355, %v6381
      %v6396 = vmul.f32 %v6356, %v6381
      %v6397 = vmul.f32 %v6357, %v6381
      %v6398 = vmul.f32 %v6358, %v6381
      %v6399 = vmul.f32 %v6359, %v6381
      %v6400 = vmul.f32 %v6360, %v6381
      %v6401 = vmul.f32 %v6361, %v6381
      %v6402 = vmul.f32 %v6362, %v6381
      %v6403 = vmul.f32 %v6363, %v6381
      %v6404 = vmul.f32 %v6364, %v6381
      %v6405 = vmul.f32 %v6365, %v6381
      %v6406 = vmul.f32 %v6366, %v6381
      %v6407 = vmul.f32 %v6367, %v6381
      %v6408 = vmul.f32 %v6368, %v6381
      %v6409 = vmul.f32 %v6369, %v6381
      %v6410 = vmul.f32 %v6370, %v6381
      %v6411 = vmul.f32 %v6371, %v6381
      %v6412 = vmul.f32 %v6372, %v6381
      %v6413 = vmul.f32 %v6373, %v6381
      %v6414 = vmul.f32 %v6374, %v6381
      %v6415 = vsel %vm315, %v6383, 0.0
      %6416 = vadd.xlane.f32.xlu0 %v6415
      %v6417 = vpop.xlane.xlu0 %6416
      %v6418 = vsel %vm315, %v6384, 0.0
      %6419 = vadd.xlane.f32.xlu0 %v6418
      %v6420 = vpop.xlane.xlu0 %6419
      %v6421 = vsel %vm315, %v6385, 0.0
      %6422 = vadd.xlane.f32.xlu0 %v6421
      %v6423 = vpop.xlane.xlu0 %6422
      %v6424 = vsel %vm315, %v6386, 0.0
      %6425 = vadd.xlane.f32.xlu0 %v6424
      %v6426 = vpop.xlane.xlu0 %6425
      %v6427 = vsel %vm315, %v6387, 0.0
      %6428 = vadd.xlane.f32.xlu0 %v6427
      %v6429 = vpop.xlane.xlu0 %6428
      %v6430 = vsel %vm315, %v6388, 0.0
      %6431 = vadd.xlane.f32.xlu0 %v6430
      %v6432 = vpop.xlane.xlu0 %6431
      %v6433 = vsel %vm315, %v6389, 0.0
      %6434 = vadd.xlane.f32.xlu0 %v6433
      %v6435 = vpop.xlane.xlu0 %6434
      %v6436 = vsel %vm315, %v6390, 0.0
      %6437 = vadd.xlane.f32.xlu0 %v6436
      %v6438 = vpop.xlane.xlu0 %6437
      %v6439 = vsel %vm315, %v6391, 0.0
      %6440 = vadd.xlane.f32.xlu0 %v6439
      %v6441 = vpop.xlane.xlu0 %6440
      %v6442 = vsel %vm315, %v6392, 0.0
      %6443 = vadd.xlane.f32.xlu0 %v6442
      %v6444 = vpop.xlane.xlu0 %6443
      %v6445 = vsel %vm315, %v6393, 0.0
      %6446 = vadd.xlane.f32.xlu0 %v6445
      %v6447 = vpop.xlane.xlu0 %6446
      %v6448 = vsel %vm315, %v6394, 0.0
      %6449 = vadd.xlane.f32.xlu0 %v6448
      %v6450 = vpop.xlane.xlu0 %6449
      %v6451 = vsel %vm315, %v6395, 0.0
      %6452 = vadd.xlane.f32.xlu0 %v6451
      %v6453 = vpop.xlane.xlu0 %6452
      %v6454 = vsel %vm315, %v6396, 0.0
      %6455 = vadd.xlane.f32.xlu0 %v6454
      %v6456 = vpop.xlane.xlu0 %6455
      %v6457 = vsel %vm315, %v6397, 0.0
      %6458 = vadd.xlane.f32.xlu0 %v6457
      %v6459 = vpop.xlane.xlu0 %6458
      %v6460 = vsel %vm315, %v6398, 0.0
      %6461 = vadd.xlane.f32.xlu0 %v6460
      %v6462 = vpop.xlane.xlu0 %6461
      %v6463 = vsel %vm315, %v6399, 0.0
      %6464 = vadd.xlane.f32.xlu0 %v6463
      %v6465 = vpop.xlane.xlu0 %6464
      %v6466 = vsel %vm315, %v6400, 0.0
      %6467 = vadd.xlane.f32.xlu0 %v6466
      %v6468 = vpop.xlane.xlu0 %6467
      %v6469 = vsel %vm315, %v6401, 0.0
      %6470 = vadd.xlane.f32.xlu0 %v6469
      %v6471 = vpop.xlane.xlu0 %6470
      %v6472 = vsel %vm315, %v6402, 0.0
      %6473 = vadd.xlane.f32.xlu0 %v6472
      %v6474 = vpop.xlane.xlu0 %6473
      %v6475 = vsel %vm315, %v6403, 0.0
      %6476 = vadd.xlane.f32.xlu0 %v6475
      %v6477 = vpop.xlane.xlu0 %6476
      %v6478 = vsel %vm315, %v6404, 0.0
      %6479 = vadd.xlane.f32.xlu0 %v6478
      %v6480 = vpop.xlane.xlu0 %6479
      %v6481 = vsel %vm315, %v6405, 0.0
      %6482 = vadd.xlane.f32.xlu0 %v6481
      %v6483 = vpop.xlane.xlu0 %6482
      %v6484 = vsel %vm315, %v6406, 0.0
      %6485 = vadd.xlane.f32.xlu0 %v6484
      %v6486 = vpop.xlane.xlu0 %6485
      %v6487 = vsel %vm315, %v6407, 0.0
      %6488 = vadd.xlane.f32.xlu0 %v6487
      %v6489 = vpop.xlane.xlu0 %6488
      %v6490 = vsel %vm315, %v6408, 0.0
      %6491 = vadd.xlane.f32.xlu0 %v6490
      %v6492 = vpop.xlane.xlu0 %6491
      %v6493 = vsel %vm315, %v6409, 0.0
      %6494 = vadd.xlane.f32.xlu0 %v6493
      %v6495 = vpop.xlane.xlu0 %6494
      %v6496 = vsel %vm315, %v6410, 0.0
      %6497 = vadd.xlane.f32.xlu0 %v6496
      %v6498 = vpop.xlane.xlu0 %6497
      %v6499 = vsel %vm315, %v6411, 0.0
      %6500 = vadd.xlane.f32.xlu0 %v6499
      %v6501 = vpop.xlane.xlu0 %6500
      %v6502 = vsel %vm315, %v6412, 0.0
      %6503 = vadd.xlane.f32.xlu0 %v6502
      %v6504 = vpop.xlane.xlu0 %6503
      %v6505 = vsel %vm315, %v6413, 0.0
      %6506 = vadd.xlane.f32.xlu0 %v6505
      %v6507 = vpop.xlane.xlu0 %6506
      %v6508 = vsel %vm315, %v6414, 0.0
      %6509 = vadd.xlane.f32.xlu0 %v6508
      %v6510 = vpop.xlane.xlu0 %6509
      %v6511 = vadd.f32 %v6311, %v6417
      %v6512 = vadd.f32 %v6312, %v6420
      %v6513 = vadd.f32 %v6313, %v6423
      %v6514 = vadd.f32 %v6314, %v6426
      %v6515 = vadd.f32 %v6315, %v6429
      %v6516 = vadd.f32 %v6316, %v6432
      %v6517 = vadd.f32 %v6317, %v6435
      %v6518 = vadd.f32 %v6318, %v6438
      %v6519 = vadd.f32 %v6319, %v6441
      %v6520 = vadd.f32 %v6320, %v6444
      %v6521 = vadd.f32 %v6321, %v6447
      %v6522 = vadd.f32 %v6322, %v6450
      %v6523 = vadd.f32 %v6323, %v6453
      %v6524 = vadd.f32 %v6324, %v6456
      %v6525 = vadd.f32 %v6325, %v6459
      %v6526 = vadd.f32 %v6326, %v6462
      %v6527 = vadd.f32 %v6327, %v6465
      %v6528 = vadd.f32 %v6328, %v6468
      %v6529 = vadd.f32 %v6329, %v6471
      %v6530 = vadd.f32 %v6330, %v6474
      %v6531 = vadd.f32 %v6331, %v6477
      %v6532 = vadd.f32 %v6332, %v6480
      %v6533 = vadd.f32 %v6333, %v6483
      %v6534 = vadd.f32 %v6334, %v6486
      %v6535 = vadd.f32 %v6335, %v6489
      %v6536 = vadd.f32 %v6336, %v6492
      %v6537 = vadd.f32 %v6337, %v6495
      %v6538 = vadd.f32 %v6338, %v6498
      %v6539 = vadd.f32 %v6339, %v6501
      %v6540 = vadd.f32 %v6340, %v6504
      %v6541 = vadd.f32 %v6341, %v6507
      %v6542 = vadd.f32 %v6342, %v6510
      %v6543 = vld [vmem:[%s5911] sm:$0xff]
      %v6544 = vld [vmem:[%s5911 + $0x8] sm:$0xff]
      %v6545 = vld [vmem:[%s5911 + $0x18] sm:$0xff]
      %v6546 = vld [vmem:[%s5911 + $0x20] sm:$0xff]
      %v6547 = vld [vmem:[%s5911 + $0x30] sm:$0xff]
      %v6548 = vld [vmem:[%s5911 + $0x38] sm:$0xff]
      %v6549 = vld [vmem:[%s5911 + $0x48] sm:$0xff]
      %v6550 = vld [vmem:[%s5911 + $0x50] sm:$0xff]
      %v6551 = vld [vmem:[%s5911 + $0x60] sm:$0xff]
      %v6552 = vld [vmem:[%s5911 + $0x68] sm:$0xff]
      %v6553 = vld [vmem:[%s5911 + $0x78] sm:$0xff]
      %v6554 = vld [vmem:[%s5911 + $0x80] sm:$0xff]
      %v6555 = vld [vmem:[%s5911 + $0x90] sm:$0xff]
      %v6556 = vld [vmem:[%s5911 + $0x98] sm:$0xff]
      %v6557 = vld [vmem:[%s5911 + $0xa8] sm:$0xff]
      %v6558 = vld [vmem:[%s5911 + $0xb0] sm:$0xff]
      %v6559 = vld [vmem:[%s5911 + $0xc0] sm:$0xff]
      %v6560 = vld [vmem:[%s5911 + $0xc8] sm:$0xff]
      %v6561 = vld [vmem:[%s5911 + $0xd8] sm:$0xff]
      %v6562 = vld [vmem:[%s5911 + $0xe0] sm:$0xff]
      %v6563 = vld [vmem:[%s5911 + $0xf0] sm:$0xff]
      %v6564 = vld [vmem:[%s5911 + $0xf8] sm:$0xff]
      %v6565 = vld [vmem:[%s5911 + $0x108] sm:$0xff]
      %v6566 = vld [vmem:[%s5911 + $0x110] sm:$0xff]
      %v6567 = vld [vmem:[%s5911 + $0x120] sm:$0xff]
      %v6568 = vld [vmem:[%s5911 + $0x128] sm:$0xff]
      %v6569 = vld [vmem:[%s5911 + $0x138] sm:$0xff]
      %v6570 = vld [vmem:[%s5911 + $0x140] sm:$0xff]
      %v6571 = vld [vmem:[%s5911 + $0x150] sm:$0xff]
      %v6572 = vld [vmem:[%s5911 + $0x158] sm:$0xff]
      %v6573 = vld [vmem:[%s5911 + $0x168] sm:$0xff]
      %v6574 = vld [vmem:[%s5911 + $0x170] sm:$0xff]
      %s6575 = scalar_lea.vmem %s2, 3
      %v6576 = vld [vmem:[%s6575] sm:$0x1]
      %v6578 = vlaneseq
      %v6579 = vshrl.u32 %v6578, 7
      %v6580 = vsub.s32 0, %v6579
      %v6581 = vrot.slane %v6576, %v6580
      %v6583 = vmul.f32 %v6543, %v6581
      %v6584 = vmul.f32 %v6544, %v6581
      %v6585 = vmul.f32 %v6545, %v6581
      %v6586 = vmul.f32 %v6546, %v6581
      %v6587 = vmul.f32 %v6547, %v6581
      %v6588 = vmul.f32 %v6548, %v6581
      %v6589 = vmul.f32 %v6549, %v6581
      %v6590 = vmul.f32 %v6550, %v6581
      %v6591 = vmul.f32 %v6551, %v6581
      %v6592 = vmul.f32 %v6552, %v6581
      %v6593 = vmul.f32 %v6553, %v6581
      %v6594 = vmul.f32 %v6554, %v6581
      %v6595 = vmul.f32 %v6555, %v6581
      %v6596 = vmul.f32 %v6556, %v6581
      %v6597 = vmul.f32 %v6557, %v6581
      %v6598 = vmul.f32 %v6558, %v6581
      %v6599 = vmul.f32 %v6559, %v6581
      %v6600 = vmul.f32 %v6560, %v6581
      %v6601 = vmul.f32 %v6561, %v6581
      %v6602 = vmul.f32 %v6562, %v6581
      %v6603 = vmul.f32 %v6563, %v6581
      %v6604 = vmul.f32 %v6564, %v6581
      %v6605 = vmul.f32 %v6565, %v6581
      %v6606 = vmul.f32 %v6566, %v6581
      %v6607 = vmul.f32 %v6567, %v6581
      %v6608 = vmul.f32 %v6568, %v6581
      %v6609 = vmul.f32 %v6569, %v6581
      %v6610 = vmul.f32 %v6570, %v6581
      %v6611 = vmul.f32 %v6571, %v6581
      %v6612 = vmul.f32 %v6572, %v6581
      %v6613 = vmul.f32 %v6573, %v6581
      %v6614 = vmul.f32 %v6574, %v6581
      %v6615 = vsel %vm315, %v6583, 0.0
      %6616 = vadd.xlane.f32.xlu0 %v6615
      %v6617 = vpop.xlane.xlu0 %6616
      %v6618 = vsel %vm315, %v6584, 0.0
      %6619 = vadd.xlane.f32.xlu0 %v6618
      %v6620 = vpop.xlane.xlu0 %6619
      %v6621 = vsel %vm315, %v6585, 0.0
      %6622 = vadd.xlane.f32.xlu0 %v6621
      %v6623 = vpop.xlane.xlu0 %6622
      %v6624 = vsel %vm315, %v6586, 0.0
      %6625 = vadd.xlane.f32.xlu0 %v6624
      %v6626 = vpop.xlane.xlu0 %6625
      %v6627 = vsel %vm315, %v6587, 0.0
      %6628 = vadd.xlane.f32.xlu0 %v6627
      %v6629 = vpop.xlane.xlu0 %6628
      %v6630 = vsel %vm315, %v6588, 0.0
      %6631 = vadd.xlane.f32.xlu0 %v6630
      %v6632 = vpop.xlane.xlu0 %6631
      %v6633 = vsel %vm315, %v6589, 0.0
      %6634 = vadd.xlane.f32.xlu0 %v6633
      %v6635 = vpop.xlane.xlu0 %6634
      %v6636 = vsel %vm315, %v6590, 0.0
      %6637 = vadd.xlane.f32.xlu0 %v6636
      %v6638 = vpop.xlane.xlu0 %6637
      %v6639 = vsel %vm315, %v6591, 0.0
      %6640 = vadd.xlane.f32.xlu0 %v6639
      %v6641 = vpop.xlane.xlu0 %6640
      %v6642 = vsel %vm315, %v6592, 0.0
      %6643 = vadd.xlane.f32.xlu0 %v6642
      %v6644 = vpop.xlane.xlu0 %6643
      %v6645 = vsel %vm315, %v6593, 0.0
      %6646 = vadd.xlane.f32.xlu0 %v6645
      %v6647 = vpop.xlane.xlu0 %6646
      %v6648 = vsel %vm315, %v6594, 0.0
      %6649 = vadd.xlane.f32.xlu0 %v6648
      %v6650 = vpop.xlane.xlu0 %6649
      %v6651 = vsel %vm315, %v6595, 0.0
      %6652 = vadd.xlane.f32.xlu0 %v6651
      %v6653 = vpop.xlane.xlu0 %6652
      %v6654 = vsel %vm315, %v6596, 0.0
      %6655 = vadd.xlane.f32.xlu0 %v6654
      %v6656 = vpop.xlane.xlu0 %6655
      %v6657 = vsel %vm315, %v6597, 0.0
      %6658 = vadd.xlane.f32.xlu0 %v6657
      %v6659 = vpop.xlane.xlu0 %6658
      %v6660 = vsel %vm315, %v6598, 0.0
      %6661 = vadd.xlane.f32.xlu0 %v6660
      %v6662 = vpop.xlane.xlu0 %6661
      %v6663 = vsel %vm315, %v6599, 0.0
      %6664 = vadd.xlane.f32.xlu0 %v6663
      %v6665 = vpop.xlane.xlu0 %6664
      %v6666 = vsel %vm315, %v6600, 0.0
      %6667 = vadd.xlane.f32.xlu0 %v6666
      %v6668 = vpop.xlane.xlu0 %6667
      %v6669 = vsel %vm315, %v6601, 0.0
      %6670 = vadd.xlane.f32.xlu0 %v6669
      %v6671 = vpop.xlane.xlu0 %6670
      %v6672 = vsel %vm315, %v6602, 0.0
      %6673 = vadd.xlane.f32.xlu0 %v6672
      %v6674 = vpop.xlane.xlu0 %6673
      %v6675 = vsel %vm315, %v6603, 0.0
      %6676 = vadd.xlane.f32.xlu0 %v6675
      %v6677 = vpop.xlane.xlu0 %6676
      %v6678 = vsel %vm315, %v6604, 0.0
      %6679 = vadd.xlane.f32.xlu0 %v6678
      %v6680 = vpop.xlane.xlu0 %6679
      %v6681 = vsel %vm315, %v6605, 0.0
      %6682 = vadd.xlane.f32.xlu0 %v6681
      %v6683 = vpop.xlane.xlu0 %6682
      %v6684 = vsel %vm315, %v6606, 0.0
      %6685 = vadd.xlane.f32.xlu0 %v6684
      %v6686 = vpop.xlane.xlu0 %6685
      %v6687 = vsel %vm315, %v6607, 0.0
      %6688 = vadd.xlane.f32.xlu0 %v6687
      %v6689 = vpop.xlane.xlu0 %6688
      %v6690 = vsel %vm315, %v6608, 0.0
      %6691 = vadd.xlane.f32.xlu0 %v6690
      %v6692 = vpop.xlane.xlu0 %6691
      %v6693 = vsel %vm315, %v6609, 0.0
      %6694 = vadd.xlane.f32.xlu0 %v6693
      %v6695 = vpop.xlane.xlu0 %6694
      %v6696 = vsel %vm315, %v6610, 0.0
      %6697 = vadd.xlane.f32.xlu0 %v6696
      %v6698 = vpop.xlane.xlu0 %6697
      %v6699 = vsel %vm315, %v6611, 0.0
      %6700 = vadd.xlane.f32.xlu0 %v6699
      %v6701 = vpop.xlane.xlu0 %6700
      %v6702 = vsel %vm315, %v6612, 0.0
      %6703 = vadd.xlane.f32.xlu0 %v6702
      %v6704 = vpop.xlane.xlu0 %6703
      %v6705 = vsel %vm315, %v6613, 0.0
      %6706 = vadd.xlane.f32.xlu0 %v6705
      %v6707 = vpop.xlane.xlu0 %6706
      %v6708 = vsel %vm315, %v6614, 0.0
      %6709 = vadd.xlane.f32.xlu0 %v6708
      %v6710 = vpop.xlane.xlu0 %6709
      %v6711 = vadd.f32 %v6511, %v6617
      %v6712 = vadd.f32 %v6512, %v6620
      %v6713 = vadd.f32 %v6513, %v6623
      %v6714 = vadd.f32 %v6514, %v6626
      %v6715 = vadd.f32 %v6515, %v6629
      %v6716 = vadd.f32 %v6516, %v6632
      %v6717 = vadd.f32 %v6517, %v6635
      %v6718 = vadd.f32 %v6518, %v6638
      %v6719 = vadd.f32 %v6519, %v6641
      %v6720 = vadd.f32 %v6520, %v6644
      %v6721 = vadd.f32 %v6521, %v6647
      %v6722 = vadd.f32 %v6522, %v6650
      %v6723 = vadd.f32 %v6523, %v6653
      %v6724 = vadd.f32 %v6524, %v6656
      %v6725 = vadd.f32 %v6525, %v6659
      %v6726 = vadd.f32 %v6526, %v6662
      %v6727 = vadd.f32 %v6527, %v6665
      %v6728 = vadd.f32 %v6528, %v6668
      %v6729 = vadd.f32 %v6529, %v6671
      %v6730 = vadd.f32 %v6530, %v6674
      %v6731 = vadd.f32 %v6531, %v6677
      %v6732 = vadd.f32 %v6532, %v6680
      %v6733 = vadd.f32 %v6533, %v6683
      %v6734 = vadd.f32 %v6534, %v6686
      %v6735 = vadd.f32 %v6535, %v6689
      %v6736 = vadd.f32 %v6536, %v6692
      %v6737 = vadd.f32 %v6537, %v6695
      %v6738 = vadd.f32 %v6538, %v6698
      %v6739 = vadd.f32 %v6539, %v6701
      %v6740 = vadd.f32 %v6540, %v6704
      %v6741 = vadd.f32 %v6541, %v6707
      %v6742 = vadd.f32 %v6542, %v6710
      %v6743 = vld [vmem:[%s5911 + $0x1] sm:$0xff]
      %v6744 = vld [vmem:[%s5911 + $0x9] sm:$0xff]
      %v6745 = vld [vmem:[%s5911 + $0x19] sm:$0xff]
      %v6746 = vld [vmem:[%s5911 + $0x21] sm:$0xff]
      %v6747 = vld [vmem:[%s5911 + $0x31] sm:$0xff]
      %v6748 = vld [vmem:[%s5911 + $0x39] sm:$0xff]
      %v6749 = vld [vmem:[%s5911 + $0x49] sm:$0xff]
      %v6750 = vld [vmem:[%s5911 + $0x51] sm:$0xff]
      %v6751 = vld [vmem:[%s5911 + $0x61] sm:$0xff]
      %v6752 = vld [vmem:[%s5911 + $0x69] sm:$0xff]
      %v6753 = vld [vmem:[%s5911 + $0x79] sm:$0xff]
      %v6754 = vld [vmem:[%s5911 + $0x81] sm:$0xff]
      %v6755 = vld [vmem:[%s5911 + $0x91] sm:$0xff]
      %v6756 = vld [vmem:[%s5911 + $0x99] sm:$0xff]
      %v6757 = vld [vmem:[%s5911 + $0xa9] sm:$0xff]
      %v6758 = vld [vmem:[%s5911 + $0xb1] sm:$0xff]
      %v6759 = vld [vmem:[%s5911 + $0xc1] sm:$0xff]
      %v6760 = vld [vmem:[%s5911 + $0xc9] sm:$0xff]
      %v6761 = vld [vmem:[%s5911 + $0xd9] sm:$0xff]
      %v6762 = vld [vmem:[%s5911 + $0xe1] sm:$0xff]
      %v6763 = vld [vmem:[%s5911 + $0xf1] sm:$0xff]
      %v6764 = vld [vmem:[%s5911 + $0xf9] sm:$0xff]
      %v6765 = vld [vmem:[%s5911 + $0x109] sm:$0xff]
      %v6766 = vld [vmem:[%s5911 + $0x111] sm:$0xff]
      %v6767 = vld [vmem:[%s5911 + $0x121] sm:$0xff]
      %v6768 = vld [vmem:[%s5911 + $0x129] sm:$0xff]
      %v6769 = vld [vmem:[%s5911 + $0x139] sm:$0xff]
      %v6770 = vld [vmem:[%s5911 + $0x141] sm:$0xff]
      %v6771 = vld [vmem:[%s5911 + $0x151] sm:$0xff]
      %v6772 = vld [vmem:[%s5911 + $0x159] sm:$0xff]
      %v6773 = vld [vmem:[%s5911 + $0x169] sm:$0xff]
      %v6774 = vld [vmem:[%s5911 + $0x171] sm:$0xff]
      %s6775 = scalar_lea.vmem %s2, 4
      %v6776 = vld [vmem:[%s6775] sm:$0x1]
      %v6778 = vlaneseq
      %v6779 = vshrl.u32 %v6778, 7
      %v6780 = vsub.s32 0, %v6779
      %v6781 = vrot.slane %v6776, %v6780
      %v6783 = vmul.f32 %v6743, %v6781
      %v6784 = vmul.f32 %v6744, %v6781
      %v6785 = vmul.f32 %v6745, %v6781
      %v6786 = vmul.f32 %v6746, %v6781
      %v6787 = vmul.f32 %v6747, %v6781
      %v6788 = vmul.f32 %v6748, %v6781
      %v6789 = vmul.f32 %v6749, %v6781
      %v6790 = vmul.f32 %v6750, %v6781
      %v6791 = vmul.f32 %v6751, %v6781
      %v6792 = vmul.f32 %v6752, %v6781
      %v6793 = vmul.f32 %v6753, %v6781
      %v6794 = vmul.f32 %v6754, %v6781
      %v6795 = vmul.f32 %v6755, %v6781
      %v6796 = vmul.f32 %v6756, %v6781
      %v6797 = vmul.f32 %v6757, %v6781
      %v6798 = vmul.f32 %v6758, %v6781
      %v6799 = vmul.f32 %v6759, %v6781
      %v6800 = vmul.f32 %v6760, %v6781
      %v6801 = vmul.f32 %v6761, %v6781
      %v6802 = vmul.f32 %v6762, %v6781
      %v6803 = vmul.f32 %v6763, %v6781
      %v6804 = vmul.f32 %v6764, %v6781
      %v6805 = vmul.f32 %v6765, %v6781
      %v6806 = vmul.f32 %v6766, %v6781
      %v6807 = vmul.f32 %v6767, %v6781
      %v6808 = vmul.f32 %v6768, %v6781
      %v6809 = vmul.f32 %v6769, %v6781
      %v6810 = vmul.f32 %v6770, %v6781
      %v6811 = vmul.f32 %v6771, %v6781
      %v6812 = vmul.f32 %v6772, %v6781
      %v6813 = vmul.f32 %v6773, %v6781
      %v6814 = vmul.f32 %v6774, %v6781
      %v6815 = vsel %vm315, %v6783, 0.0
      %6816 = vadd.xlane.f32.xlu0 %v6815
      %v6817 = vpop.xlane.xlu0 %6816
      %v6818 = vsel %vm315, %v6784, 0.0
      %6819 = vadd.xlane.f32.xlu0 %v6818
      %v6820 = vpop.xlane.xlu0 %6819
      %v6821 = vsel %vm315, %v6785, 0.0
      %6822 = vadd.xlane.f32.xlu0 %v6821
      %v6823 = vpop.xlane.xlu0 %6822
      %v6824 = vsel %vm315, %v6786, 0.0
      %6825 = vadd.xlane.f32.xlu0 %v6824
      %v6826 = vpop.xlane.xlu0 %6825
      %v6827 = vsel %vm315, %v6787, 0.0
      %6828 = vadd.xlane.f32.xlu0 %v6827
      %v6829 = vpop.xlane.xlu0 %6828
      %v6830 = vsel %vm315, %v6788, 0.0
      %6831 = vadd.xlane.f32.xlu0 %v6830
      %v6832 = vpop.xlane.xlu0 %6831
      %v6833 = vsel %vm315, %v6789, 0.0
      %6834 = vadd.xlane.f32.xlu0 %v6833
      %v6835 = vpop.xlane.xlu0 %6834
      %v6836 = vsel %vm315, %v6790, 0.0
      %6837 = vadd.xlane.f32.xlu0 %v6836
      %v6838 = vpop.xlane.xlu0 %6837
      %v6839 = vsel %vm315, %v6791, 0.0
      %6840 = vadd.xlane.f32.xlu0 %v6839
      %v6841 = vpop.xlane.xlu0 %6840
      %v6842 = vsel %vm315, %v6792, 0.0
      %6843 = vadd.xlane.f32.xlu0 %v6842
      %v6844 = vpop.xlane.xlu0 %6843
      %v6845 = vsel %vm315, %v6793, 0.0
      %6846 = vadd.xlane.f32.xlu0 %v6845
      %v6847 = vpop.xlane.xlu0 %6846
      %v6848 = vsel %vm315, %v6794, 0.0
      %6849 = vadd.xlane.f32.xlu0 %v6848
      %v6850 = vpop.xlane.xlu0 %6849
      %v6851 = vsel %vm315, %v6795, 0.0
      %6852 = vadd.xlane.f32.xlu0 %v6851
      %v6853 = vpop.xlane.xlu0 %6852
      %v6854 = vsel %vm315, %v6796, 0.0
      %6855 = vadd.xlane.f32.xlu0 %v6854
      %v6856 = vpop.xlane.xlu0 %6855
      %v6857 = vsel %vm315, %v6797, 0.0
      %6858 = vadd.xlane.f32.xlu0 %v6857
      %v6859 = vpop.xlane.xlu0 %6858
      %v6860 = vsel %vm315, %v6798, 0.0
      %6861 = vadd.xlane.f32.xlu0 %v6860
      %v6862 = vpop.xlane.xlu0 %6861
      %v6863 = vsel %vm315, %v6799, 0.0
      %6864 = vadd.xlane.f32.xlu0 %v6863
      %v6865 = vpop.xlane.xlu0 %6864
      %v6866 = vsel %vm315, %v6800, 0.0
      %6867 = vadd.xlane.f32.xlu0 %v6866
      %v6868 = vpop.xlane.xlu0 %6867
      %v6869 = vsel %vm315, %v6801, 0.0
      %6870 = vadd.xlane.f32.xlu0 %v6869
      %v6871 = vpop.xlane.xlu0 %6870
      %v6872 = vsel %vm315, %v6802, 0.0
      %6873 = vadd.xlane.f32.xlu0 %v6872
      %v6874 = vpop.xlane.xlu0 %6873
      %v6875 = vsel %vm315, %v6803, 0.0
      %6876 = vadd.xlane.f32.xlu0 %v6875
      %v6877 = vpop.xlane.xlu0 %6876
      %v6878 = vsel %vm315, %v6804, 0.0
      %6879 = vadd.xlane.f32.xlu0 %v6878
      %v6880 = vpop.xlane.xlu0 %6879
      %v6881 = vsel %vm315, %v6805, 0.0
      %6882 = vadd.xlane.f32.xlu0 %v6881
      %v6883 = vpop.xlane.xlu0 %6882
      %v6884 = vsel %vm315, %v6806, 0.0
      %6885 = vadd.xlane.f32.xlu0 %v6884
      %v6886 = vpop.xlane.xlu0 %6885
      %v6887 = vsel %vm315, %v6807, 0.0
      %6888 = vadd.xlane.f32.xlu0 %v6887
      %v6889 = vpop.xlane.xlu0 %6888
      %v6890 = vsel %vm315, %v6808, 0.0
      %6891 = vadd.xlane.f32.xlu0 %v6890
      %v6892 = vpop.xlane.xlu0 %6891
      %v6893 = vsel %vm315, %v6809, 0.0
      %6894 = vadd.xlane.f32.xlu0 %v6893
      %v6895 = vpop.xlane.xlu0 %6894
      %v6896 = vsel %vm315, %v6810, 0.0
      %6897 = vadd.xlane.f32.xlu0 %v6896
      %v6898 = vpop.xlane.xlu0 %6897
      %v6899 = vsel %vm315, %v6811, 0.0
      %6900 = vadd.xlane.f32.xlu0 %v6899
      %v6901 = vpop.xlane.xlu0 %6900
      %v6902 = vsel %vm315, %v6812, 0.0
      %6903 = vadd.xlane.f32.xlu0 %v6902
      %v6904 = vpop.xlane.xlu0 %6903
      %v6905 = vsel %vm315, %v6813, 0.0
      %6906 = vadd.xlane.f32.xlu0 %v6905
      %v6907 = vpop.xlane.xlu0 %6906
      %v6908 = vsel %vm315, %v6814, 0.0
      %6909 = vadd.xlane.f32.xlu0 %v6908
      %v6910 = vpop.xlane.xlu0 %6909
      %v6911 = vadd.f32 %v6711, %v6817
      %v6912 = vadd.f32 %v6712, %v6820
      %v6913 = vadd.f32 %v6713, %v6823
      %v6914 = vadd.f32 %v6714, %v6826
      %v6915 = vadd.f32 %v6715, %v6829
      %v6916 = vadd.f32 %v6716, %v6832
      %v6917 = vadd.f32 %v6717, %v6835
      %v6918 = vadd.f32 %v6718, %v6838
      %v6919 = vadd.f32 %v6719, %v6841
      %v6920 = vadd.f32 %v6720, %v6844
      %v6921 = vadd.f32 %v6721, %v6847
      %v6922 = vadd.f32 %v6722, %v6850
      %v6923 = vadd.f32 %v6723, %v6853
      %v6924 = vadd.f32 %v6724, %v6856
      %v6925 = vadd.f32 %v6725, %v6859
      %v6926 = vadd.f32 %v6726, %v6862
      %v6927 = vadd.f32 %v6727, %v6865
      %v6928 = vadd.f32 %v6728, %v6868
      %v6929 = vadd.f32 %v6729, %v6871
      %v6930 = vadd.f32 %v6730, %v6874
      %v6931 = vadd.f32 %v6731, %v6877
      %v6932 = vadd.f32 %v6732, %v6880
      %v6933 = vadd.f32 %v6733, %v6883
      %v6934 = vadd.f32 %v6734, %v6886
      %v6935 = vadd.f32 %v6735, %v6889
      %v6936 = vadd.f32 %v6736, %v6892
      %v6937 = vadd.f32 %v6737, %v6895
      %v6938 = vadd.f32 %v6738, %v6898
      %v6939 = vadd.f32 %v6739, %v6901
      %v6940 = vadd.f32 %v6740, %v6904
      %v6941 = vadd.f32 %v6741, %v6907
      %v6942 = vadd.f32 %v6742, %v6910
      %v6943 = vld [vmem:[%s5911 + $0x2] sm:$0xff]
      %v6944 = vld [vmem:[%s5911 + $0xa] sm:$0xff]
      %v6945 = vld [vmem:[%s5911 + $0x1a] sm:$0xff]
      %v6946 = vld [vmem:[%s5911 + $0x22] sm:$0xff]
      %v6947 = vld [vmem:[%s5911 + $0x32] sm:$0xff]
      %v6948 = vld [vmem:[%s5911 + $0x3a] sm:$0xff]
      %v6949 = vld [vmem:[%s5911 + $0x4a] sm:$0xff]
      %v6950 = vld [vmem:[%s5911 + $0x52] sm:$0xff]
      %v6951 = vld [vmem:[%s5911 + $0x62] sm:$0xff]
      %v6952 = vld [vmem:[%s5911 + $0x6a] sm:$0xff]
      %v6953 = vld [vmem:[%s5911 + $0x7a] sm:$0xff]
      %v6954 = vld [vmem:[%s5911 + $0x82] sm:$0xff]
      %v6955 = vld [vmem:[%s5911 + $0x92] sm:$0xff]
      %v6956 = vld [vmem:[%s5911 + $0x9a] sm:$0xff]
      %v6957 = vld [vmem:[%s5911 + $0xaa] sm:$0xff]
      %v6958 = vld [vmem:[%s5911 + $0xb2] sm:$0xff]
      %v6959 = vld [vmem:[%s5911 + $0xc2] sm:$0xff]
      %v6960 = vld [vmem:[%s5911 + $0xca] sm:$0xff]
      %v6961 = vld [vmem:[%s5911 + $0xda] sm:$0xff]
      %v6962 = vld [vmem:[%s5911 + $0xe2] sm:$0xff]
      %v6963 = vld [vmem:[%s5911 + $0xf2] sm:$0xff]
      %v6964 = vld [vmem:[%s5911 + $0xfa] sm:$0xff]
      %v6965 = vld [vmem:[%s5911 + $0x10a] sm:$0xff]
      %v6966 = vld [vmem:[%s5911 + $0x112] sm:$0xff]
      %v6967 = vld [vmem:[%s5911 + $0x122] sm:$0xff]
      %v6968 = vld [vmem:[%s5911 + $0x12a] sm:$0xff]
      %v6969 = vld [vmem:[%s5911 + $0x13a] sm:$0xff]
      %v6970 = vld [vmem:[%s5911 + $0x142] sm:$0xff]
      %v6971 = vld [vmem:[%s5911 + $0x152] sm:$0xff]
      %v6972 = vld [vmem:[%s5911 + $0x15a] sm:$0xff]
      %v6973 = vld [vmem:[%s5911 + $0x16a] sm:$0xff]
      %v6974 = vld [vmem:[%s5911 + $0x172] sm:$0xff]
      %s6975 = scalar_lea.vmem %s2, 5
      %v6976 = vld [vmem:[%s6975] sm:$0x1]
      %v6978 = vlaneseq
      %v6979 = vshrl.u32 %v6978, 7
      %v6980 = vsub.s32 0, %v6979
      %v6981 = vrot.slane %v6976, %v6980
      %v6983 = vmul.f32 %v6943, %v6981
      %v6984 = vmul.f32 %v6944, %v6981
      %v6985 = vmul.f32 %v6945, %v6981
      %v6986 = vmul.f32 %v6946, %v6981
      %v6987 = vmul.f32 %v6947, %v6981
      %v6988 = vmul.f32 %v6948, %v6981
      %v6989 = vmul.f32 %v6949, %v6981
      %v6990 = vmul.f32 %v6950, %v6981
      %v6991 = vmul.f32 %v6951, %v6981
      %v6992 = vmul.f32 %v6952, %v6981
      %v6993 = vmul.f32 %v6953, %v6981
      %v6994 = vmul.f32 %v6954, %v6981
      %v6995 = vmul.f32 %v6955, %v6981
      %v6996 = vmul.f32 %v6956, %v6981
      %v6997 = vmul.f32 %v6957, %v6981
      %v6998 = vmul.f32 %v6958, %v6981
      %v6999 = vmul.f32 %v6959, %v6981
      %v7000 = vmul.f32 %v6960, %v6981
      %v7001 = vmul.f32 %v6961, %v6981
      %v7002 = vmul.f32 %v6962, %v6981
      %v7003 = vmul.f32 %v6963, %v6981
      %v7004 = vmul.f32 %v6964, %v6981
      %v7005 = vmul.f32 %v6965, %v6981
      %v7006 = vmul.f32 %v6966, %v6981
      %v7007 = vmul.f32 %v6967, %v6981
      %v7008 = vmul.f32 %v6968, %v6981
      %v7009 = vmul.f32 %v6969, %v6981
      %v7010 = vmul.f32 %v6970, %v6981
      %v7011 = vmul.f32 %v6971, %v6981
      %v7012 = vmul.f32 %v6972, %v6981
      %v7013 = vmul.f32 %v6973, %v6981
      %v7014 = vmul.f32 %v6974, %v6981
      %v7015 = vsel %vm315, %v6983, 0.0
      %7016 = vadd.xlane.f32.xlu0 %v7015
      %v7017 = vpop.xlane.xlu0 %7016
      %v7018 = vsel %vm315, %v6984, 0.0
      %7019 = vadd.xlane.f32.xlu0 %v7018
      %v7020 = vpop.xlane.xlu0 %7019
      %v7021 = vsel %vm315, %v6985, 0.0
      %7022 = vadd.xlane.f32.xlu0 %v7021
      %v7023 = vpop.xlane.xlu0 %7022
      %v7024 = vsel %vm315, %v6986, 0.0
      %7025 = vadd.xlane.f32.xlu0 %v7024
      %v7026 = vpop.xlane.xlu0 %7025
      %v7027 = vsel %vm315, %v6987, 0.0
      %7028 = vadd.xlane.f32.xlu0 %v7027
      %v7029 = vpop.xlane.xlu0 %7028
      %v7030 = vsel %vm315, %v6988, 0.0
      %7031 = vadd.xlane.f32.xlu0 %v7030
      %v7032 = vpop.xlane.xlu0 %7031
      %v7033 = vsel %vm315, %v6989, 0.0
      %7034 = vadd.xlane.f32.xlu0 %v7033
      %v7035 = vpop.xlane.xlu0 %7034
      %v7036 = vsel %vm315, %v6990, 0.0
      %7037 = vadd.xlane.f32.xlu0 %v7036
      %v7038 = vpop.xlane.xlu0 %7037
      %v7039 = vsel %vm315, %v6991, 0.0
      %7040 = vadd.xlane.f32.xlu0 %v7039
      %v7041 = vpop.xlane.xlu0 %7040
      %v7042 = vsel %vm315, %v6992, 0.0
      %7043 = vadd.xlane.f32.xlu0 %v7042
      %v7044 = vpop.xlane.xlu0 %7043
      %v7045 = vsel %vm315, %v6993, 0.0
      %7046 = vadd.xlane.f32.xlu0 %v7045
      %v7047 = vpop.xlane.xlu0 %7046
      %v7048 = vsel %vm315, %v6994, 0.0
      %7049 = vadd.xlane.f32.xlu0 %v7048
      %v7050 = vpop.xlane.xlu0 %7049
      %v7051 = vsel %vm315, %v6995, 0.0
      %7052 = vadd.xlane.f32.xlu0 %v7051
      %v7053 = vpop.xlane.xlu0 %7052
      %v7054 = vsel %vm315, %v6996, 0.0
      %7055 = vadd.xlane.f32.xlu0 %v7054
      %v7056 = vpop.xlane.xlu0 %7055
      %v7057 = vsel %vm315, %v6997, 0.0
      %7058 = vadd.xlane.f32.xlu0 %v7057
      %v7059 = vpop.xlane.xlu0 %7058
      %v7060 = vsel %vm315, %v6998, 0.0
      %7061 = vadd.xlane.f32.xlu0 %v7060
      %v7062 = vpop.xlane.xlu0 %7061
      %v7063 = vsel %vm315, %v6999, 0.0
      %7064 = vadd.xlane.f32.xlu0 %v7063
      %v7065 = vpop.xlane.xlu0 %7064
      %v7066 = vsel %vm315, %v7000, 0.0
      %7067 = vadd.xlane.f32.xlu0 %v7066
      %v7068 = vpop.xlane.xlu0 %7067
      %v7069 = vsel %vm315, %v7001, 0.0
      %7070 = vadd.xlane.f32.xlu0 %v7069
      %v7071 = vpop.xlane.xlu0 %7070
      %v7072 = vsel %vm315, %v7002, 0.0
      %7073 = vadd.xlane.f32.xlu0 %v7072
      %v7074 = vpop.xlane.xlu0 %7073
      %v7075 = vsel %vm315, %v7003, 0.0
      %7076 = vadd.xlane.f32.xlu0 %v7075
      %v7077 = vpop.xlane.xlu0 %7076
      %v7078 = vsel %vm315, %v7004, 0.0
      %7079 = vadd.xlane.f32.xlu0 %v7078
      %v7080 = vpop.xlane.xlu0 %7079
      %v7081 = vsel %vm315, %v7005, 0.0
      %7082 = vadd.xlane.f32.xlu0 %v7081
      %v7083 = vpop.xlane.xlu0 %7082
      %v7084 = vsel %vm315, %v7006, 0.0
      %7085 = vadd.xlane.f32.xlu0 %v7084
      %v7086 = vpop.xlane.xlu0 %7085
      %v7087 = vsel %vm315, %v7007, 0.0
      %7088 = vadd.xlane.f32.xlu0 %v7087
      %v7089 = vpop.xlane.xlu0 %7088
      %v7090 = vsel %vm315, %v7008, 0.0
      %7091 = vadd.xlane.f32.xlu0 %v7090
      %v7092 = vpop.xlane.xlu0 %7091
      %v7093 = vsel %vm315, %v7009, 0.0
      %7094 = vadd.xlane.f32.xlu0 %v7093
      %v7095 = vpop.xlane.xlu0 %7094
      %v7096 = vsel %vm315, %v7010, 0.0
      %7097 = vadd.xlane.f32.xlu0 %v7096
      %v7098 = vpop.xlane.xlu0 %7097
      %v7099 = vsel %vm315, %v7011, 0.0
      %7100 = vadd.xlane.f32.xlu0 %v7099
      %v7101 = vpop.xlane.xlu0 %7100
      %v7102 = vsel %vm315, %v7012, 0.0
      %7103 = vadd.xlane.f32.xlu0 %v7102
      %v7104 = vpop.xlane.xlu0 %7103
      %v7105 = vsel %vm315, %v7013, 0.0
      %7106 = vadd.xlane.f32.xlu0 %v7105
      %v7107 = vpop.xlane.xlu0 %7106
      %v7108 = vsel %vm315, %v7014, 0.0
      %7109 = vadd.xlane.f32.xlu0 %v7108
      %v7110 = vpop.xlane.xlu0 %7109
      %v7111 = vadd.f32 %v6911, %v7017
      %v7112 = vadd.f32 %v6912, %v7020
      %v7113 = vadd.f32 %v6913, %v7023
      %v7114 = vadd.f32 %v6914, %v7026
      %v7115 = vadd.f32 %v6915, %v7029
      %v7116 = vadd.f32 %v6916, %v7032
      %v7117 = vadd.f32 %v6917, %v7035
      %v7118 = vadd.f32 %v6918, %v7038
      %v7119 = vadd.f32 %v6919, %v7041
      %v7120 = vadd.f32 %v6920, %v7044
      %v7121 = vadd.f32 %v6921, %v7047
      %v7122 = vadd.f32 %v6922, %v7050
      %v7123 = vadd.f32 %v6923, %v7053
      %v7124 = vadd.f32 %v6924, %v7056
      %v7125 = vadd.f32 %v6925, %v7059
      %v7126 = vadd.f32 %v6926, %v7062
      %v7127 = vadd.f32 %v6927, %v7065
      %v7128 = vadd.f32 %v6928, %v7068
      %v7129 = vadd.f32 %v6929, %v7071
      %v7130 = vadd.f32 %v6930, %v7074
      %v7131 = vadd.f32 %v6931, %v7077
      %v7132 = vadd.f32 %v6932, %v7080
      %v7133 = vadd.f32 %v6933, %v7083
      %v7134 = vadd.f32 %v6934, %v7086
      %v7135 = vadd.f32 %v6935, %v7089
      %v7136 = vadd.f32 %v6936, %v7092
      %v7137 = vadd.f32 %v6937, %v7095
      %v7138 = vadd.f32 %v6938, %v7098
      %v7139 = vadd.f32 %v6939, %v7101
      %v7140 = vadd.f32 %v6940, %v7104
      %v7141 = vadd.f32 %v6941, %v7107
      %v7142 = vadd.f32 %v6942, %v7110
      %s7143 = scalar_lea.vmem [#allocation5], 48
      %v7144 = vld [vmem:[%s7143] sm:$0xff]
      %v7145 = vld [vmem:[%s7143 + $0x8] sm:$0xff]
      %v7146 = vld [vmem:[%s7143 + $0x18] sm:$0xff]
      %v7147 = vld [vmem:[%s7143 + $0x20] sm:$0xff]
      %v7148 = vld [vmem:[%s7143 + $0x30] sm:$0xff]
      %v7149 = vld [vmem:[%s7143 + $0x38] sm:$0xff]
      %v7150 = vld [vmem:[%s7143 + $0x48] sm:$0xff]
      %v7151 = vld [vmem:[%s7143 + $0x50] sm:$0xff]
      %v7152 = vld [vmem:[%s7143 + $0x60] sm:$0xff]
      %v7153 = vld [vmem:[%s7143 + $0x68] sm:$0xff]
      %v7154 = vld [vmem:[%s7143 + $0x78] sm:$0xff]
      %v7155 = vld [vmem:[%s7143 + $0x80] sm:$0xff]
      %v7156 = vld [vmem:[%s7143 + $0x90] sm:$0xff]
      %v7157 = vld [vmem:[%s7143 + $0x98] sm:$0xff]
      %v7158 = vld [vmem:[%s7143 + $0xa8] sm:$0xff]
      %v7159 = vld [vmem:[%s7143 + $0xb0] sm:$0xff]
      %v7160 = vld [vmem:[%s7143 + $0xc0] sm:$0xff]
      %v7161 = vld [vmem:[%s7143 + $0xc8] sm:$0xff]
      %v7162 = vld [vmem:[%s7143 + $0xd8] sm:$0xff]
      %v7163 = vld [vmem:[%s7143 + $0xe0] sm:$0xff]
      %v7164 = vld [vmem:[%s7143 + $0xf0] sm:$0xff]
      %v7165 = vld [vmem:[%s7143 + $0xf8] sm:$0xff]
      %v7166 = vld [vmem:[%s7143 + $0x108] sm:$0xff]
      %v7167 = vld [vmem:[%s7143 + $0x110] sm:$0xff]
      %v7168 = vld [vmem:[%s7143 + $0x120] sm:$0xff]
      %v7169 = vld [vmem:[%s7143 + $0x128] sm:$0xff]
      %v7170 = vld [vmem:[%s7143 + $0x138] sm:$0xff]
      %v7171 = vld [vmem:[%s7143 + $0x140] sm:$0xff]
      %v7172 = vld [vmem:[%s7143 + $0x150] sm:$0xff]
      %v7173 = vld [vmem:[%s7143 + $0x158] sm:$0xff]
      %v7174 = vld [vmem:[%s7143 + $0x168] sm:$0xff]
      %v7175 = vld [vmem:[%s7143 + $0x170] sm:$0xff]
      %s7176 = scalar_lea.vmem %s2, 6
      %v7177 = vld [vmem:[%s7176] sm:$0x1]
      %v7179 = vlaneseq
      %v7180 = vshrl.u32 %v7179, 7
      %v7181 = vsub.s32 0, %v7180
      %v7182 = vrot.slane %v7177, %v7181
      %v7184 = vmul.f32 %v7144, %v7182
      %v7185 = vmul.f32 %v7145, %v7182
      %v7186 = vmul.f32 %v7146, %v7182
      %v7187 = vmul.f32 %v7147, %v7182
      %v7188 = vmul.f32 %v7148, %v7182
      %v7189 = vmul.f32 %v7149, %v7182
      %v7190 = vmul.f32 %v7150, %v7182
      %v7191 = vmul.f32 %v7151, %v7182
      %v7192 = vmul.f32 %v7152, %v7182
      %v7193 = vmul.f32 %v7153, %v7182
      %v7194 = vmul.f32 %v7154, %v7182
      %v7195 = vmul.f32 %v7155, %v7182
      %v7196 = vmul.f32 %v7156, %v7182
      %v7197 = vmul.f32 %v7157, %v7182
      %v7198 = vmul.f32 %v7158, %v7182
      %v7199 = vmul.f32 %v7159, %v7182
      %v7200 = vmul.f32 %v7160, %v7182
      %v7201 = vmul.f32 %v7161, %v7182
      %v7202 = vmul.f32 %v7162, %v7182
      %v7203 = vmul.f32 %v7163, %v7182
      %v7204 = vmul.f32 %v7164, %v7182
      %v7205 = vmul.f32 %v7165, %v7182
      %v7206 = vmul.f32 %v7166, %v7182
      %v7207 = vmul.f32 %v7167, %v7182
      %v7208 = vmul.f32 %v7168, %v7182
      %v7209 = vmul.f32 %v7169, %v7182
      %v7210 = vmul.f32 %v7170, %v7182
      %v7211 = vmul.f32 %v7171, %v7182
      %v7212 = vmul.f32 %v7172, %v7182
      %v7213 = vmul.f32 %v7173, %v7182
      %v7214 = vmul.f32 %v7174, %v7182
      %v7215 = vmul.f32 %v7175, %v7182
      %v7216 = vsel %vm315, %v7184, 0.0
      %7217 = vadd.xlane.f32.xlu0 %v7216
      %v7218 = vpop.xlane.xlu0 %7217
      %v7219 = vsel %vm315, %v7185, 0.0
      %7220 = vadd.xlane.f32.xlu0 %v7219
      %v7221 = vpop.xlane.xlu0 %7220
      %v7222 = vsel %vm315, %v7186, 0.0
      %7223 = vadd.xlane.f32.xlu0 %v7222
      %v7224 = vpop.xlane.xlu0 %7223
      %v7225 = vsel %vm315, %v7187, 0.0
      %7226 = vadd.xlane.f32.xlu0 %v7225
      %v7227 = vpop.xlane.xlu0 %7226
      %v7228 = vsel %vm315, %v7188, 0.0
      %7229 = vadd.xlane.f32.xlu0 %v7228
      %v7230 = vpop.xlane.xlu0 %7229
      %v7231 = vsel %vm315, %v7189, 0.0
      %7232 = vadd.xlane.f32.xlu0 %v7231
      %v7233 = vpop.xlane.xlu0 %7232
      %v7234 = vsel %vm315, %v7190, 0.0
      %7235 = vadd.xlane.f32.xlu0 %v7234
      %v7236 = vpop.xlane.xlu0 %7235
      %v7237 = vsel %vm315, %v7191, 0.0
      %7238 = vadd.xlane.f32.xlu0 %v7237
      %v7239 = vpop.xlane.xlu0 %7238
      %v7240 = vsel %vm315, %v7192, 0.0
      %7241 = vadd.xlane.f32.xlu0 %v7240
      %v7242 = vpop.xlane.xlu0 %7241
      %v7243 = vsel %vm315, %v7193, 0.0
      %7244 = vadd.xlane.f32.xlu0 %v7243
      %v7245 = vpop.xlane.xlu0 %7244
      %v7246 = vsel %vm315, %v7194, 0.0
      %7247 = vadd.xlane.f32.xlu0 %v7246
      %v7248 = vpop.xlane.xlu0 %7247
      %v7249 = vsel %vm315, %v7195, 0.0
      %7250 = vadd.xlane.f32.xlu0 %v7249
      %v7251 = vpop.xlane.xlu0 %7250
      %v7252 = vsel %vm315, %v7196, 0.0
      %7253 = vadd.xlane.f32.xlu0 %v7252
      %v7254 = vpop.xlane.xlu0 %7253
      %v7255 = vsel %vm315, %v7197, 0.0
      %7256 = vadd.xlane.f32.xlu0 %v7255
      %v7257 = vpop.xlane.xlu0 %7256
      %v7258 = vsel %vm315, %v7198, 0.0
      %7259 = vadd.xlane.f32.xlu0 %v7258
      %v7260 = vpop.xlane.xlu0 %7259
      %v7261 = vsel %vm315, %v7199, 0.0
      %7262 = vadd.xlane.f32.xlu0 %v7261
      %v7263 = vpop.xlane.xlu0 %7262
      %v7264 = vsel %vm315, %v7200, 0.0
      %7265 = vadd.xlane.f32.xlu0 %v7264
      %v7266 = vpop.xlane.xlu0 %7265
      %v7267 = vsel %vm315, %v7201, 0.0
      %7268 = vadd.xlane.f32.xlu0 %v7267
      %v7269 = vpop.xlane.xlu0 %7268
      %v7270 = vsel %vm315, %v7202, 0.0
      %7271 = vadd.xlane.f32.xlu0 %v7270
      %v7272 = vpop.xlane.xlu0 %7271
      %v7273 = vsel %vm315, %v7203, 0.0
      %7274 = vadd.xlane.f32.xlu0 %v7273
      %v7275 = vpop.xlane.xlu0 %7274
      %v7276 = vsel %vm315, %v7204, 0.0
      %7277 = vadd.xlane.f32.xlu0 %v7276
      %v7278 = vpop.xlane.xlu0 %7277
      %v7279 = vsel %vm315, %v7205, 0.0
      %7280 = vadd.xlane.f32.xlu0 %v7279
      %v7281 = vpop.xlane.xlu0 %7280
      %v7282 = vsel %vm315, %v7206, 0.0
      %7283 = vadd.xlane.f32.xlu0 %v7282
      %v7284 = vpop.xlane.xlu0 %7283
      %v7285 = vsel %vm315, %v7207, 0.0
      %7286 = vadd.xlane.f32.xlu0 %v7285
      %v7287 = vpop.xlane.xlu0 %7286
      %v7288 = vsel %vm315, %v7208, 0.0
      %7289 = vadd.xlane.f32.xlu0 %v7288
      %v7290 = vpop.xlane.xlu0 %7289
      %v7291 = vsel %vm315, %v7209, 0.0
      %7292 = vadd.xlane.f32.xlu0 %v7291
      %v7293 = vpop.xlane.xlu0 %7292
      %v7294 = vsel %vm315, %v7210, 0.0
      %7295 = vadd.xlane.f32.xlu0 %v7294
      %v7296 = vpop.xlane.xlu0 %7295
      %v7297 = vsel %vm315, %v7211, 0.0
      %7298 = vadd.xlane.f32.xlu0 %v7297
      %v7299 = vpop.xlane.xlu0 %7298
      %v7300 = vsel %vm315, %v7212, 0.0
      %7301 = vadd.xlane.f32.xlu0 %v7300
      %v7302 = vpop.xlane.xlu0 %7301
      %v7303 = vsel %vm315, %v7213, 0.0
      %7304 = vadd.xlane.f32.xlu0 %v7303
      %v7305 = vpop.xlane.xlu0 %7304
      %v7306 = vsel %vm315, %v7214, 0.0
      %7307 = vadd.xlane.f32.xlu0 %v7306
      %v7308 = vpop.xlane.xlu0 %7307
      %v7309 = vsel %vm315, %v7215, 0.0
      %7310 = vadd.xlane.f32.xlu0 %v7309
      %v7311 = vpop.xlane.xlu0 %7310
      %v7312 = vadd.f32 %v7111, %v7218
      %v7313 = vadd.f32 %v7112, %v7221
      %v7314 = vadd.f32 %v7113, %v7224
      %v7315 = vadd.f32 %v7114, %v7227
      %v7316 = vadd.f32 %v7115, %v7230
      %v7317 = vadd.f32 %v7116, %v7233
      %v7318 = vadd.f32 %v7117, %v7236
      %v7319 = vadd.f32 %v7118, %v7239
      %v7320 = vadd.f32 %v7119, %v7242
      %v7321 = vadd.f32 %v7120, %v7245
      %v7322 = vadd.f32 %v7121, %v7248
      %v7323 = vadd.f32 %v7122, %v7251
      %v7324 = vadd.f32 %v7123, %v7254
      %v7325 = vadd.f32 %v7124, %v7257
      %v7326 = vadd.f32 %v7125, %v7260
      %v7327 = vadd.f32 %v7126, %v7263
      %v7328 = vadd.f32 %v7127, %v7266
      %v7329 = vadd.f32 %v7128, %v7269
      %v7330 = vadd.f32 %v7129, %v7272
      %v7331 = vadd.f32 %v7130, %v7275
      %v7332 = vadd.f32 %v7131, %v7278
      %v7333 = vadd.f32 %v7132, %v7281
      %v7334 = vadd.f32 %v7133, %v7284
      %v7335 = vadd.f32 %v7134, %v7287
      %v7336 = vadd.f32 %v7135, %v7290
      %v7337 = vadd.f32 %v7136, %v7293
      %v7338 = vadd.f32 %v7137, %v7296
      %v7339 = vadd.f32 %v7138, %v7299
      %v7340 = vadd.f32 %v7139, %v7302
      %v7341 = vadd.f32 %v7140, %v7305
      %v7342 = vadd.f32 %v7141, %v7308
      %v7343 = vadd.f32 %v7142, %v7311
      %v7344 = vld [vmem:[%s7143 + $0x1] sm:$0xff]
      %v7345 = vld [vmem:[%s7143 + $0x9] sm:$0xff]
      %v7346 = vld [vmem:[%s7143 + $0x19] sm:$0xff]
      %v7347 = vld [vmem:[%s7143 + $0x21] sm:$0xff]
      %v7348 = vld [vmem:[%s7143 + $0x31] sm:$0xff]
      %v7349 = vld [vmem:[%s7143 + $0x39] sm:$0xff]
      %v7350 = vld [vmem:[%s7143 + $0x49] sm:$0xff]
      %v7351 = vld [vmem:[%s7143 + $0x51] sm:$0xff]
      %v7352 = vld [vmem:[%s7143 + $0x61] sm:$0xff]
      %v7353 = vld [vmem:[%s7143 + $0x69] sm:$0xff]
      %v7354 = vld [vmem:[%s7143 + $0x79] sm:$0xff]
      %v7355 = vld [vmem:[%s7143 + $0x81] sm:$0xff]
      %v7356 = vld [vmem:[%s7143 + $0x91] sm:$0xff]
      %v7357 = vld [vmem:[%s7143 + $0x99] sm:$0xff]
      %v7358 = vld [vmem:[%s7143 + $0xa9] sm:$0xff]
      %v7359 = vld [vmem:[%s7143 + $0xb1] sm:$0xff]
      %v7360 = vld [vmem:[%s7143 + $0xc1] sm:$0xff]
      %v7361 = vld [vmem:[%s7143 + $0xc9] sm:$0xff]
      %v7362 = vld [vmem:[%s7143 + $0xd9] sm:$0xff]
      %v7363 = vld [vmem:[%s7143 + $0xe1] sm:$0xff]
      %v7364 = vld [vmem:[%s7143 + $0xf1] sm:$0xff]
      %v7365 = vld [vmem:[%s7143 + $0xf9] sm:$0xff]
      %v7366 = vld [vmem:[%s7143 + $0x109] sm:$0xff]
      %v7367 = vld [vmem:[%s7143 + $0x111] sm:$0xff]
      %v7368 = vld [vmem:[%s7143 + $0x121] sm:$0xff]
      %v7369 = vld [vmem:[%s7143 + $0x129] sm:$0xff]
      %v7370 = vld [vmem:[%s7143 + $0x139] sm:$0xff]
      %v7371 = vld [vmem:[%s7143 + $0x141] sm:$0xff]
      %v7372 = vld [vmem:[%s7143 + $0x151] sm:$0xff]
      %v7373 = vld [vmem:[%s7143 + $0x159] sm:$0xff]
      %v7374 = vld [vmem:[%s7143 + $0x169] sm:$0xff]
      %v7375 = vld [vmem:[%s7143 + $0x171] sm:$0xff]
      %s7376 = scalar_lea.vmem %s2, 7
      %v7377 = vld [vmem:[%s7376] sm:$0x1]
      %v7379 = vlaneseq
      %v7380 = vshrl.u32 %v7379, 7
      %v7381 = vsub.s32 0, %v7380
      %v7382 = vrot.slane %v7377, %v7381
      %v7384 = vmul.f32 %v7344, %v7382
      %v7385 = vmul.f32 %v7345, %v7382
      %v7386 = vmul.f32 %v7346, %v7382
      %v7387 = vmul.f32 %v7347, %v7382
      %v7388 = vmul.f32 %v7348, %v7382
      %v7389 = vmul.f32 %v7349, %v7382
      %v7390 = vmul.f32 %v7350, %v7382
      %v7391 = vmul.f32 %v7351, %v7382
      %v7392 = vmul.f32 %v7352, %v7382
      %v7393 = vmul.f32 %v7353, %v7382
      %v7394 = vmul.f32 %v7354, %v7382
      %v7395 = vmul.f32 %v7355, %v7382
      %v7396 = vmul.f32 %v7356, %v7382
      %v7397 = vmul.f32 %v7357, %v7382
      %v7398 = vmul.f32 %v7358, %v7382
      %v7399 = vmul.f32 %v7359, %v7382
      %v7400 = vmul.f32 %v7360, %v7382
      %v7401 = vmul.f32 %v7361, %v7382
      %v7402 = vmul.f32 %v7362, %v7382
      %v7403 = vmul.f32 %v7363, %v7382
      %v7404 = vmul.f32 %v7364, %v7382
      %v7405 = vmul.f32 %v7365, %v7382
      %v7406 = vmul.f32 %v7366, %v7382
      %v7407 = vmul.f32 %v7367, %v7382
      %v7408 = vmul.f32 %v7368, %v7382
      %v7409 = vmul.f32 %v7369, %v7382
      %v7410 = vmul.f32 %v7370, %v7382
      %v7411 = vmul.f32 %v7371, %v7382
      %v7412 = vmul.f32 %v7372, %v7382
      %v7413 = vmul.f32 %v7373, %v7382
      %v7414 = vmul.f32 %v7374, %v7382
      %v7415 = vmul.f32 %v7375, %v7382
      %v7416 = vsel %vm315, %v7384, 0.0
      %7417 = vadd.xlane.f32.xlu0 %v7416
      %v7418 = vpop.xlane.xlu0 %7417
      %v7419 = vsel %vm315, %v7385, 0.0
      %7420 = vadd.xlane.f32.xlu0 %v7419
      %v7421 = vpop.xlane.xlu0 %7420
      %v7422 = vsel %vm315, %v7386, 0.0
      %7423 = vadd.xlane.f32.xlu0 %v7422
      %v7424 = vpop.xlane.xlu0 %7423
      %v7425 = vsel %vm315, %v7387, 0.0
      %7426 = vadd.xlane.f32.xlu0 %v7425
      %v7427 = vpop.xlane.xlu0 %7426
      %v7428 = vsel %vm315, %v7388, 0.0
      %7429 = vadd.xlane.f32.xlu0 %v7428
      %v7430 = vpop.xlane.xlu0 %7429
      %v7431 = vsel %vm315, %v7389, 0.0
      %7432 = vadd.xlane.f32.xlu0 %v7431
      %v7433 = vpop.xlane.xlu0 %7432
      %v7434 = vsel %vm315, %v7390, 0.0
      %7435 = vadd.xlane.f32.xlu0 %v7434
      %v7436 = vpop.xlane.xlu0 %7435
      %v7437 = vsel %vm315, %v7391, 0.0
      %7438 = vadd.xlane.f32.xlu0 %v7437
      %v7439 = vpop.xlane.xlu0 %7438
      %v7440 = vsel %vm315, %v7392, 0.0
      %7441 = vadd.xlane.f32.xlu0 %v7440
      %v7442 = vpop.xlane.xlu0 %7441
      %v7443 = vsel %vm315, %v7393, 0.0
      %7444 = vadd.xlane.f32.xlu0 %v7443
      %v7445 = vpop.xlane.xlu0 %7444
      %v7446 = vsel %vm315, %v7394, 0.0
      %7447 = vadd.xlane.f32.xlu0 %v7446
      %v7448 = vpop.xlane.xlu0 %7447
      %v7449 = vsel %vm315, %v7395, 0.0
      %7450 = vadd.xlane.f32.xlu0 %v7449
      %v7451 = vpop.xlane.xlu0 %7450
      %v7452 = vsel %vm315, %v7396, 0.0
      %7453 = vadd.xlane.f32.xlu0 %v7452
      %v7454 = vpop.xlane.xlu0 %7453
      %v7455 = vsel %vm315, %v7397, 0.0
      %7456 = vadd.xlane.f32.xlu0 %v7455
      %v7457 = vpop.xlane.xlu0 %7456
      %v7458 = vsel %vm315, %v7398, 0.0
      %7459 = vadd.xlane.f32.xlu0 %v7458
      %v7460 = vpop.xlane.xlu0 %7459
      %v7461 = vsel %vm315, %v7399, 0.0
      %7462 = vadd.xlane.f32.xlu0 %v7461
      %v7463 = vpop.xlane.xlu0 %7462
      %v7464 = vsel %vm315, %v7400, 0.0
      %7465 = vadd.xlane.f32.xlu0 %v7464
      %v7466 = vpop.xlane.xlu0 %7465
      %v7467 = vsel %vm315, %v7401, 0.0
      %7468 = vadd.xlane.f32.xlu0 %v7467
      %v7469 = vpop.xlane.xlu0 %7468
      %v7470 = vsel %vm315, %v7402, 0.0
      %7471 = vadd.xlane.f32.xlu0 %v7470
      %v7472 = vpop.xlane.xlu0 %7471
      %v7473 = vsel %vm315, %v7403, 0.0
      %7474 = vadd.xlane.f32.xlu0 %v7473
      %v7475 = vpop.xlane.xlu0 %7474
      %v7476 = vsel %vm315, %v7404, 0.0
      %7477 = vadd.xlane.f32.xlu0 %v7476
      %v7478 = vpop.xlane.xlu0 %7477
      %v7479 = vsel %vm315, %v7405, 0.0
      %7480 = vadd.xlane.f32.xlu0 %v7479
      %v7481 = vpop.xlane.xlu0 %7480
      %v7482 = vsel %vm315, %v7406, 0.0
      %7483 = vadd.xlane.f32.xlu0 %v7482
      %v7484 = vpop.xlane.xlu0 %7483
      %v7485 = vsel %vm315, %v7407, 0.0
      %7486 = vadd.xlane.f32.xlu0 %v7485
      %v7487 = vpop.xlane.xlu0 %7486
      %v7488 = vsel %vm315, %v7408, 0.0
      %7489 = vadd.xlane.f32.xlu0 %v7488
      %v7490 = vpop.xlane.xlu0 %7489
      %v7491 = vsel %vm315, %v7409, 0.0
      %7492 = vadd.xlane.f32.xlu0 %v7491
      %v7493 = vpop.xlane.xlu0 %7492
      %v7494 = vsel %vm315, %v7410, 0.0
      %7495 = vadd.xlane.f32.xlu0 %v7494
      %v7496 = vpop.xlane.xlu0 %7495
      %v7497 = vsel %vm315, %v7411, 0.0
      %7498 = vadd.xlane.f32.xlu0 %v7497
      %v7499 = vpop.xlane.xlu0 %7498
      %v7500 = vsel %vm315, %v7412, 0.0
      %7501 = vadd.xlane.f32.xlu0 %v7500
      %v7502 = vpop.xlane.xlu0 %7501
      %v7503 = vsel %vm315, %v7413, 0.0
      %7504 = vadd.xlane.f32.xlu0 %v7503
      %v7505 = vpop.xlane.xlu0 %7504
      %v7506 = vsel %vm315, %v7414, 0.0
      %7507 = vadd.xlane.f32.xlu0 %v7506
      %v7508 = vpop.xlane.xlu0 %7507
      %v7509 = vsel %vm315, %v7415, 0.0
      %7510 = vadd.xlane.f32.xlu0 %v7509
      %v7511 = vpop.xlane.xlu0 %7510
      %v7512 = vadd.f32 %v7312, %v7418
      %v7513 = vadd.f32 %v7313, %v7421
      %v7514 = vadd.f32 %v7314, %v7424
      %v7515 = vadd.f32 %v7315, %v7427
      %v7516 = vadd.f32 %v7316, %v7430
      %v7517 = vadd.f32 %v7317, %v7433
      %v7518 = vadd.f32 %v7318, %v7436
      %v7519 = vadd.f32 %v7319, %v7439
      %v7520 = vadd.f32 %v7320, %v7442
      %v7521 = vadd.f32 %v7321, %v7445
      %v7522 = vadd.f32 %v7322, %v7448
      %v7523 = vadd.f32 %v7323, %v7451
      %v7524 = vadd.f32 %v7324, %v7454
      %v7525 = vadd.f32 %v7325, %v7457
      %v7526 = vadd.f32 %v7326, %v7460
      %v7527 = vadd.f32 %v7327, %v7463
      %v7528 = vadd.f32 %v7328, %v7466
      %v7529 = vadd.f32 %v7329, %v7469
      %v7530 = vadd.f32 %v7330, %v7472
      %v7531 = vadd.f32 %v7331, %v7475
      %v7532 = vadd.f32 %v7332, %v7478
      %v7533 = vadd.f32 %v7333, %v7481
      %v7534 = vadd.f32 %v7334, %v7484
      %v7535 = vadd.f32 %v7335, %v7487
      %v7536 = vadd.f32 %v7336, %v7490
      %v7537 = vadd.f32 %v7337, %v7493
      %v7538 = vadd.f32 %v7338, %v7496
      %v7539 = vadd.f32 %v7339, %v7499
      %v7540 = vadd.f32 %v7340, %v7502
      %v7541 = vadd.f32 %v7341, %v7505
      %v7542 = vadd.f32 %v7342, %v7508
      %v7543 = vadd.f32 %v7343, %v7511
      %v7544 = vld [vmem:[%s7143 + $0x2] sm:$0xff]
      %v7545 = vld [vmem:[%s7143 + $0xa] sm:$0xff]
      %v7546 = vld [vmem:[%s7143 + $0x1a] sm:$0xff]
      %v7547 = vld [vmem:[%s7143 + $0x22] sm:$0xff]
      %v7548 = vld [vmem:[%s7143 + $0x32] sm:$0xff]
      %v7549 = vld [vmem:[%s7143 + $0x3a] sm:$0xff]
      %v7550 = vld [vmem:[%s7143 + $0x4a] sm:$0xff]
      %v7551 = vld [vmem:[%s7143 + $0x52] sm:$0xff]
      %v7552 = vld [vmem:[%s7143 + $0x62] sm:$0xff]
      %v7553 = vld [vmem:[%s7143 + $0x6a] sm:$0xff]
      %v7554 = vld [vmem:[%s7143 + $0x7a] sm:$0xff]
      %v7555 = vld [vmem:[%s7143 + $0x82] sm:$0xff]
      %v7556 = vld [vmem:[%s7143 + $0x92] sm:$0xff]
      %v7557 = vld [vmem:[%s7143 + $0x9a] sm:$0xff]
      %v7558 = vld [vmem:[%s7143 + $0xaa] sm:$0xff]
      %v7559 = vld [vmem:[%s7143 + $0xb2] sm:$0xff]
      %v7560 = vld [vmem:[%s7143 + $0xc2] sm:$0xff]
      %v7561 = vld [vmem:[%s7143 + $0xca] sm:$0xff]
      %v7562 = vld [vmem:[%s7143 + $0xda] sm:$0xff]
      %v7563 = vld [vmem:[%s7143 + $0xe2] sm:$0xff]
      %v7564 = vld [vmem:[%s7143 + $0xf2] sm:$0xff]
      %v7565 = vld [vmem:[%s7143 + $0xfa] sm:$0xff]
      %v7566 = vld [vmem:[%s7143 + $0x10a] sm:$0xff]
      %v7567 = vld [vmem:[%s7143 + $0x112] sm:$0xff]
      %v7568 = vld [vmem:[%s7143 + $0x122] sm:$0xff]
      %v7569 = vld [vmem:[%s7143 + $0x12a] sm:$0xff]
      %v7570 = vld [vmem:[%s7143 + $0x13a] sm:$0xff]
      %v7571 = vld [vmem:[%s7143 + $0x142] sm:$0xff]
      %v7572 = vld [vmem:[%s7143 + $0x152] sm:$0xff]
      %v7573 = vld [vmem:[%s7143 + $0x15a] sm:$0xff]
      %v7574 = vld [vmem:[%s7143 + $0x16a] sm:$0xff]
      %v7575 = vld [vmem:[%s7143 + $0x172] sm:$0xff]
      %s7576 = scalar_lea.vmem %s2, 8
      %v7577 = vld [vmem:[%s7576] sm:$0x1]
      %v7579 = vlaneseq
      %v7580 = vshrl.u32 %v7579, 7
      %v7581 = vsub.s32 0, %v7580
      %v7582 = vrot.slane %v7577, %v7581
      %v7584 = vmul.f32 %v7544, %v7582
      %v7585 = vmul.f32 %v7545, %v7582
      %v7586 = vmul.f32 %v7546, %v7582
      %v7587 = vmul.f32 %v7547, %v7582
      %v7588 = vmul.f32 %v7548, %v7582
      %v7589 = vmul.f32 %v7549, %v7582
      %v7590 = vmul.f32 %v7550, %v7582
      %v7591 = vmul.f32 %v7551, %v7582
      %v7592 = vmul.f32 %v7552, %v7582
      %v7593 = vmul.f32 %v7553, %v7582
      %v7594 = vmul.f32 %v7554, %v7582
      %v7595 = vmul.f32 %v7555, %v7582
      %v7596 = vmul.f32 %v7556, %v7582
      %v7597 = vmul.f32 %v7557, %v7582
      %v7598 = vmul.f32 %v7558, %v7582
      %v7599 = vmul.f32 %v7559, %v7582
      %v7600 = vmul.f32 %v7560, %v7582
      %v7601 = vmul.f32 %v7561, %v7582
      %v7602 = vmul.f32 %v7562, %v7582
      %v7603 = vmul.f32 %v7563, %v7582
      %v7604 = vmul.f32 %v7564, %v7582
      %v7605 = vmul.f32 %v7565, %v7582
      %v7606 = vmul.f32 %v7566, %v7582
      %v7607 = vmul.f32 %v7567, %v7582
      %v7608 = vmul.f32 %v7568, %v7582
      %v7609 = vmul.f32 %v7569, %v7582
      %v7610 = vmul.f32 %v7570, %v7582
      %v7611 = vmul.f32 %v7571, %v7582
      %v7612 = vmul.f32 %v7572, %v7582
      %v7613 = vmul.f32 %v7573, %v7582
      %v7614 = vmul.f32 %v7574, %v7582
      %v7615 = vmul.f32 %v7575, %v7582
      %v7616 = vsel %vm315, %v7584, 0.0
      %7617 = vadd.xlane.f32.xlu0 %v7616
      %v7618 = vpop.xlane.xlu0 %7617
      %v7619 = vsel %vm315, %v7585, 0.0
      %7620 = vadd.xlane.f32.xlu0 %v7619
      %v7621 = vpop.xlane.xlu0 %7620
      %v7622 = vsel %vm315, %v7586, 0.0
      %7623 = vadd.xlane.f32.xlu0 %v7622
      %v7624 = vpop.xlane.xlu0 %7623
      %v7625 = vsel %vm315, %v7587, 0.0
      %7626 = vadd.xlane.f32.xlu0 %v7625
      %v7627 = vpop.xlane.xlu0 %7626
      %v7628 = vsel %vm315, %v7588, 0.0
      %7629 = vadd.xlane.f32.xlu0 %v7628
      %v7630 = vpop.xlane.xlu0 %7629
      %v7631 = vsel %vm315, %v7589, 0.0
      %7632 = vadd.xlane.f32.xlu0 %v7631
      %v7633 = vpop.xlane.xlu0 %7632
      %v7634 = vsel %vm315, %v7590, 0.0
      %7635 = vadd.xlane.f32.xlu0 %v7634
      %v7636 = vpop.xlane.xlu0 %7635
      %v7637 = vsel %vm315, %v7591, 0.0
      %7638 = vadd.xlane.f32.xlu0 %v7637
      %v7639 = vpop.xlane.xlu0 %7638
      %v7640 = vsel %vm315, %v7592, 0.0
      %7641 = vadd.xlane.f32.xlu0 %v7640
      %v7642 = vpop.xlane.xlu0 %7641
      %v7643 = vsel %vm315, %v7593, 0.0
      %7644 = vadd.xlane.f32.xlu0 %v7643
      %v7645 = vpop.xlane.xlu0 %7644
      %v7646 = vsel %vm315, %v7594, 0.0
      %7647 = vadd.xlane.f32.xlu0 %v7646
      %v7648 = vpop.xlane.xlu0 %7647
      %v7649 = vsel %vm315, %v7595, 0.0
      %7650 = vadd.xlane.f32.xlu0 %v7649
      %v7651 = vpop.xlane.xlu0 %7650
      %v7652 = vsel %vm315, %v7596, 0.0
      %7653 = vadd.xlane.f32.xlu0 %v7652
      %v7654 = vpop.xlane.xlu0 %7653
      %v7655 = vsel %vm315, %v7597, 0.0
      %7656 = vadd.xlane.f32.xlu0 %v7655
      %v7657 = vpop.xlane.xlu0 %7656
      %v7658 = vsel %vm315, %v7598, 0.0
      %7659 = vadd.xlane.f32.xlu0 %v7658
      %v7660 = vpop.xlane.xlu0 %7659
      %v7661 = vsel %vm315, %v7599, 0.0
      %7662 = vadd.xlane.f32.xlu0 %v7661
      %v7663 = vpop.xlane.xlu0 %7662
      %v7664 = vsel %vm315, %v7600, 0.0
      %7665 = vadd.xlane.f32.xlu0 %v7664
      %v7666 = vpop.xlane.xlu0 %7665
      %v7667 = vsel %vm315, %v7601, 0.0
      %7668 = vadd.xlane.f32.xlu0 %v7667
      %v7669 = vpop.xlane.xlu0 %7668
      %v7670 = vsel %vm315, %v7602, 0.0
      %7671 = vadd.xlane.f32.xlu0 %v7670
      %v7672 = vpop.xlane.xlu0 %7671
      %v7673 = vsel %vm315, %v7603, 0.0
      %7674 = vadd.xlane.f32.xlu0 %v7673
      %v7675 = vpop.xlane.xlu0 %7674
      %v7676 = vsel %vm315, %v7604, 0.0
      %7677 = vadd.xlane.f32.xlu0 %v7676
      %v7678 = vpop.xlane.xlu0 %7677
      %v7679 = vsel %vm315, %v7605, 0.0
      %7680 = vadd.xlane.f32.xlu0 %v7679
      %v7681 = vpop.xlane.xlu0 %7680
      %v7682 = vsel %vm315, %v7606, 0.0
      %7683 = vadd.xlane.f32.xlu0 %v7682
      %v7684 = vpop.xlane.xlu0 %7683
      %v7685 = vsel %vm315, %v7607, 0.0
      %7686 = vadd.xlane.f32.xlu0 %v7685
      %v7687 = vpop.xlane.xlu0 %7686
      %v7688 = vsel %vm315, %v7608, 0.0
      %7689 = vadd.xlane.f32.xlu0 %v7688
      %v7690 = vpop.xlane.xlu0 %7689
      %v7691 = vsel %vm315, %v7609, 0.0
      %7692 = vadd.xlane.f32.xlu0 %v7691
      %v7693 = vpop.xlane.xlu0 %7692
      %v7694 = vsel %vm315, %v7610, 0.0
      %7695 = vadd.xlane.f32.xlu0 %v7694
      %v7696 = vpop.xlane.xlu0 %7695
      %v7697 = vsel %vm315, %v7611, 0.0
      %7698 = vadd.xlane.f32.xlu0 %v7697
      %v7699 = vpop.xlane.xlu0 %7698
      %v7700 = vsel %vm315, %v7612, 0.0
      %7701 = vadd.xlane.f32.xlu0 %v7700
      %v7702 = vpop.xlane.xlu0 %7701
      %v7703 = vsel %vm315, %v7613, 0.0
      %7704 = vadd.xlane.f32.xlu0 %v7703
      %v7705 = vpop.xlane.xlu0 %7704
      %v7706 = vsel %vm315, %v7614, 0.0
      %7707 = vadd.xlane.f32.xlu0 %v7706
      %v7708 = vpop.xlane.xlu0 %7707
      %v7709 = vsel %vm315, %v7615, 0.0
      %7710 = vadd.xlane.f32.xlu0 %v7709
      %v7711 = vpop.xlane.xlu0 %7710
      %v7712 = vadd.f32 %v7512, %v7618
      %v7713 = vadd.f32 %v7513, %v7621
      %v7714 = vadd.f32 %v7514, %v7624
      %v7715 = vadd.f32 %v7515, %v7627
      %v7716 = vadd.f32 %v7516, %v7630
      %v7717 = vadd.f32 %v7517, %v7633
      %v7718 = vadd.f32 %v7518, %v7636
      %v7719 = vadd.f32 %v7519, %v7639
      %v7720 = vadd.f32 %v7520, %v7642
      %v7721 = vadd.f32 %v7521, %v7645
      %v7722 = vadd.f32 %v7522, %v7648
      %v7723 = vadd.f32 %v7523, %v7651
      %v7724 = vadd.f32 %v7524, %v7654
      %v7725 = vadd.f32 %v7525, %v7657
      %v7726 = vadd.f32 %v7526, %v7660
      %v7727 = vadd.f32 %v7527, %v7663
      %v7728 = vadd.f32 %v7528, %v7666
      %v7729 = vadd.f32 %v7529, %v7669
      %v7730 = vadd.f32 %v7530, %v7672
      %v7731 = vadd.f32 %v7531, %v7675
      %v7732 = vadd.f32 %v7532, %v7678
      %v7733 = vadd.f32 %v7533, %v7681
      %v7734 = vadd.f32 %v7534, %v7684
      %v7735 = vadd.f32 %v7535, %v7687
      %v7736 = vadd.f32 %v7536, %v7690
      %v7737 = vadd.f32 %v7537, %v7693
      %v7738 = vadd.f32 %v7538, %v7696
      %v7739 = vadd.f32 %v7539, %v7699
      %v7740 = vadd.f32 %v7540, %v7702
      %v7741 = vadd.f32 %v7541, %v7705
      %v7742 = vadd.f32 %v7542, %v7708
      %v7743 = vadd.f32 %v7543, %v7711
      %vm7744 = vcmask 7168
      %7745 = vst.msk [vmem:[%s251] sm:$0xff] %vm7744, %v7712
      %7746 = vst.msk [vmem:[%s251 + $0x8] sm:$0xff] %vm7744, %v7713
      %7747 = vst.msk [vmem:[%s251 + $0x10] sm:$0xff] %vm7744, %v7714
      %7748 = vst.msk [vmem:[%s251 + $0x18] sm:$0xff] %vm7744, %v7715
      %7749 = vst.msk [vmem:[%s251 + $0x20] sm:$0xff] %vm7744, %v7716
      %7750 = vst.msk [vmem:[%s251 + $0x28] sm:$0xff] %vm7744, %v7717
      %7751 = vst.msk [vmem:[%s251 + $0x30] sm:$0xff] %vm7744, %v7718
      %7752 = vst.msk [vmem:[%s251 + $0x38] sm:$0xff] %vm7744, %v7719
      %7753 = vst.msk [vmem:[%s251 + $0x40] sm:$0xff] %vm7744, %v7720
      %7754 = vst.msk [vmem:[%s251 + $0x48] sm:$0xff] %vm7744, %v7721
      %7755 = vst.msk [vmem:[%s251 + $0x50] sm:$0xff] %vm7744, %v7722
      %7756 = vst.msk [vmem:[%s251 + $0x58] sm:$0xff] %vm7744, %v7723
      %7757 = vst.msk [vmem:[%s251 + $0x60] sm:$0xff] %vm7744, %v7724
      %7758 = vst.msk [vmem:[%s251 + $0x68] sm:$0xff] %vm7744, %v7725
      %7759 = vst.msk [vmem:[%s251 + $0x70] sm:$0xff] %vm7744, %v7726
      %7760 = vst.msk [vmem:[%s251 + $0x78] sm:$0xff] %vm7744, %v7727
      %7761 = vst.msk [vmem:[%s251 + $0x80] sm:$0xff] %vm7744, %v7728
      %7762 = vst.msk [vmem:[%s251 + $0x88] sm:$0xff] %vm7744, %v7729
      %7763 = vst.msk [vmem:[%s251 + $0x90] sm:$0xff] %vm7744, %v7730
      %7764 = vst.msk [vmem:[%s251 + $0x98] sm:$0xff] %vm7744, %v7731
      %7765 = vst.msk [vmem:[%s251 + $0xa0] sm:$0xff] %vm7744, %v7732
      %7766 = vst.msk [vmem:[%s251 + $0xa8] sm:$0xff] %vm7744, %v7733
      %7767 = vst.msk [vmem:[%s251 + $0xb0] sm:$0xff] %vm7744, %v7734
      %7768 = vst.msk [vmem:[%s251 + $0xb8] sm:$0xff] %vm7744, %v7735
      %7769 = vst.msk [vmem:[%s251 + $0xc0] sm:$0xff] %vm7744, %v7736
      %7770 = vst.msk [vmem:[%s251 + $0xc8] sm:$0xff] %vm7744, %v7737
      %7771 = vst.msk [vmem:[%s251 + $0xd0] sm:$0xff] %vm7744, %v7738
      %7772 = vst.msk [vmem:[%s251 + $0xd8] sm:$0xff] %vm7744, %v7739
      %7773 = vst.msk [vmem:[%s251 + $0xe0] sm:$0xff] %vm7744, %v7740
      %7774 = vst.msk [vmem:[%s251 + $0xe8] sm:$0xff] %vm7744, %v7741
      %7775 = vst.msk [vmem:[%s251 + $0xf0] sm:$0xff] %vm7744, %v7742
      %7776 = vst.msk [vmem:[%s251 + $0xf8] sm:$0xff] %vm7744, %v7743
      %p7777 = scmp.lt.s32.totalorder %s17, 1
      %s7778 = scalar_select %p7777, %s17, 1
      %s7779 = smul.addr %s7778, 32
      %s7780 = smul.addr %s7779, 8
      %s7781 = scalar_lea.vmem %s6, %s7780
      // Predicated region
      $region80: #{predictor_forward.1} parent=43 // pred_check
        %p7782 = pneg %p166
      $region81: #{predictor_forward.1} parent=43 // pred_check_branch
        %7784 = sbr.rel (%p7782) target = $region83
      $region82: #{predictor_forward.1} parent=43 // pred_region
        _
      $region83: #{predictor_forward.1} parent=43 // pred_fallthru
        _
    $region44: #{predictor_forward.1} parent=5 // pred_fallthru
      _
    %p7785 = scmp.le.s32.totalorder 2, %s12
    // Predicated region
    $region84: #{predictor_forward.1} parent=5 // pred_check
      %p7786 = pneg %p7785
    $region85: #{predictor_forward.1} parent=5 // pred_check_branch
      %7788 = sbr.rel (%p7786) target = $region87
    $region86: #{predictor_forward.1} parent=5 // pred_region
      %s7789 = ssub.s32 %s12, 2
      // Predicated region
      $region88: #{predictor_forward.1} parent=86 // pred_check
        %p7790 = pneg %p172
      $region89: #{predictor_forward.1} parent=86 // pred_check_branch
        %7792 = sbr.rel (%p7790) target = $region91
      $region90: #{predictor_forward.1} parent=86 // pred_region
        %p7793 = scmp.lt.s32.totalorder %s18, 1
        %s7794 = scalar_select %p7793, %s18, 1
        %s7795 = smul.addr %s7794, 32
        %s7796 = smul.addr %s7795, 8
        %s7797 = scalar_lea.vmem %s6, %s7796
      $region91: #{predictor_forward.1} parent=86 // pred_fallthru
        _
    $region87: #{predictor_forward.1} parent=5 // pred_fallthru
      _
  $region6: #{predictor_forward.1} parent=0 // loop_footer
    %s16 = sadd.s32 1, %s12
  $region7: #{predictor_forward.1} parent=0 // loop_footer_branch
    %11 = sbr.rel target = $region3
  $region8: #{predictor_forward.1} parent=0 // loop_exit
    _

</llo_original>
